<compile_context>
chip_gen: v5e
topology: v5e:2x2
jax: 0.10.0
libtpu: 0.0.40
codegen_flags: <defaults>
</compile_context>

<pallas_src>
import functools
import math

import jax
import jax.numpy as jnp
from jax.experimental import pallas as pl
from jax.experimental.pallas import tpu as pltpu

NEG_INF = -1e9  # finite large negative: avoids exp(-inf - (-inf)) = NaN


def _round_up(x, m):
    return (x + m - 1) // m * m


def _vmem_limit(block_bytes):
    # generous scoped-VMEM limit: 2x per-step blocks (double buffering) + slack
    return int(min(64 * 2**20, max(2 * block_bytes + 8 * 2**20, 32 * 2**20)))


def _const_spec(shape):
    zeros = (0,) * len(shape)
    return pl.BlockSpec(shape, lambda n, _z=zeros: _z)


# ----------------------------- in-kernel helpers ----------------------------

def _layer_norm(z, g, b):
    # LayerNorm over last dim, eps=1e-5 (PyTorch default), f32 math
    mu = jnp.mean(z, axis=-1, keepdims=True)
    var = jnp.mean(jnp.square(z - mu), axis=-1, keepdims=True)
    return (z - mu) * jax.lax.rsqrt(var + 1e-5) * g + b


def _mha(q, k, v, add_mask, out_w_bf, nhead):
    """Multi-head attention fused with the output projection.

    q:(Lq,E) k,v:(Lk,E) f32; add_mask broadcastable to (Lq,Lk);
    out_w_bf:(E,E) bf16.  Per-head heads are concatenated and out-projected
    with a SINGLE (Lq,E)@(E,E) matmul (no bias; caller adds it).
    """
    E = q.shape[-1]
    dh = E // nhead
    scale = 1.0 / math.sqrt(dh)
    qb = q.astype(jnp.bfloat16)
    kb = k.astype(jnp.bfloat16)
    vb = v.astype(jnp.bfloat16)
    heads = []
    for h in range(nhead):  # unrolled: nhead is a small static int
        sl = slice(h * dh, (h + 1) * dh)
        s = jnp.einsum("qd,kd->qk", qb[:, sl], kb[:, sl],
                       preferred_element_type=jnp.float32) * scale
        s = s + add_mask
        s = s - jnp.max(s, axis=-1, keepdims=True)
        p = jnp.exp(s)
        p = p * pl.reciprocal(jnp.sum(p, axis=-1, keepdims=True), approx=True)
        heads.append(jnp.einsum("qk,kd->qd", p.astype(jnp.bfloat16), vb[:, sl],
                                preferred_element_type=jnp.float32))
    o = jnp.concatenate(heads, axis=-1).astype(jnp.bfloat16)      # (Lq, E)
    return jnp.dot(o, out_w_bf, preferred_element_type=jnp.float32)


# ------------------------------ fused kernels -------------------------------

def _encoder_layer_kernel(x_ref, amask_ref, kpad_ref,
                          in_w, in_b, out_w, out_b,
                          n1w, n1b, l1w, l1b, l2w, l2b, n2w, n2b,
                          fnw, fnb, o_ref, *, nhead, final_ln):
    x = x_ref[0]                                          # (S, E) f32
    E = x.shape[-1]
    mask = amask_ref[...] + kpad_ref[0]                   # (S,S) + (1,S)
    xb = x.astype(jnp.bfloat16)
    qkv = jnp.dot(xb, in_w[...], preferred_element_type=jnp.float32) + in_b[...]
    a = _mha(qkv[:, :E], qkv[:, E:2 * E], qkv[:, 2 * E:], mask,
             out_w[...], nhead) + out_b[...]
    y = _layer_norm(x + a, n1w[...], n1b[...])
    h = jnp.maximum(
        jnp.dot(y.astype(jnp.bfloat16), l1w[...],
                preferred_element_type=jnp.float32) + l1b[...], 0.0)
    f = jnp.dot(h.astype(jnp.bfloat16), l2w[...],
                preferred_element_type=jnp.float32) + l2b[...]
    z = _layer_norm(y + f, n2w[...], n2b[...])
    if final_ln:                                          # static: last layer
        z = _layer_norm(z, fnw[...], fnb[...])
    o_ref[0] = z


def _decoder_layer_kernel(x_ref, mem_ref, tmask_ref, tkpad_ref, mkpad_ref,
                          sa_in_w, sa_in_b, sa_out_w, sa_out_b, n1w, n1b,
                          ca_q_w, ca_q_b, ca_kv_w, ca_kv_b, ca_out_w, ca_out_b,
                          n2w, n2b, l1w, l1b, l2w, l2b, n3w, n3b,
                          o_ref, *, nhead):
    x = x_ref[0]                                          # (T, E) f32
    mem = mem_ref[0]                                      # (S, E) f32
    E = x.shape[-1]
    self_mask = tmask_ref[...] + tkpad_ref[0]             # (T,T)
    cross_mask = mkpad_ref[0]                             # (1,S) broadcasts

    # self-attention (fused QKV) + add & norm1
    qkv = jnp.dot(x.astype(jnp.bfloat16), sa_in_w[...],
                  preferred_element_type=jnp.float32) + sa_in_b[...]
    sa = _mha(qkv[:, :E], qkv[:, E:2 * E], qkv[:, 2 * E:], self_mask,
              sa_out_w[...], nhead) + sa_out_b[...]
    y1 = _layer_norm(x + sa, n1w[...], n1b[...])

    # cross-attention (fused KV on memory) + add & norm2
    q = jnp.dot(y1.astype(jnp.bfloat16), ca_q_w[...],
                preferred_element_type=jnp.float32) + ca_q_b[...]
    kv = jnp.dot(mem.astype(jnp.bfloat16), ca_kv_w[...],
                 preferred_element_type=jnp.float32) + ca_kv_b[...]
    ca = _mha(q, kv[:, :E], kv[:, E:], cross_mask,
              ca_out_w[...], nhead) + ca_out_b[...]
    y2 = _layer_norm(y1 + ca, n2w[...], n2b[...])

    # feed-forward + add & norm3
    h = jnp.maximum(
        jnp.dot(y2.astype(jnp.bfloat16), l1w[...],
                preferred_element_type=jnp.float32) + l1b[...], 0.0)
    f = jnp.dot(h.astype(jnp.bfloat16), l2w[...],
                preferred_element_type=jnp.float32) + l2b[...]
    o_ref[0] = _layer_norm(y2 + f, n3w[...], n3b[...])


def _ln_generator_kernel(x_ref, g_ref, b_ref, w_ref, bias_ref, o_ref):
    y = _layer_norm(x_ref[...], g_ref[...], b_ref[...])          # (TM, E) f32
    o_ref[...] = jnp.dot(y.astype(jnp.bfloat16), w_ref[...],
                         preferred_element_type=jnp.float32) + bias_ref[...]


# ----------------------------- kernel wrappers -------------------------------

def encoder_layer(x, amask, kpad, p, enc_norm, nhead, final_ln):
    """x:(N,S,E) amask:(S,S) kpad:(N,1,S) -> (N,S,E). One pallas_call."""
    N, S, E = x.shape
    F = p["lin1_w"].shape[1]
    in_specs = [
        pl.BlockSpec((1, S, E), lambda n: (n, 0, 0)),      # x
        _const_spec((S, S)),                               # additive attn mask
        pl.BlockSpec((1, 1, S), lambda n: (n, 0, 0)),      # key padding
        _const_spec((E, 3 * E)), _const_spec((1, 3 * E)),  # fused QKV proj
        _const_spec((E, E)), _const_spec((1, E)),          # out proj
        _const_spec((1, E)), _const_spec((1, E)),          # norm1
        _const_spec((E, F)), _const_spec((1, F)),          # linear1
        _const_spec((F, E)), _const_spec((1, E)),          # linear2
        _const_spec((1, E)), _const_spec((1, E)),          # norm2
        _const_spec((1, E)), _const_spec((1, E)),          # encoder final norm
    ]
    flops = int(N * (6 * S * E * E + 4 * S * S * E + 2 * S * E * E + 4 * S * E * F))
    trans = int(N * (nhead * S * S + 8 * S))
    w_bytes = (4 * E * E + 2 * E * F) * 2 + (4 * E + F + 6 * E) * 4
    bytes_accessed = int(2 * N * S * E * 4 + N * S * 4 + S * S * 4 + w_bytes)
    blk_bytes = 2 * S * E * 4 + S * S * 4 + S * 4 + w_bytes
    return pl.pallas_call(
        functools.partial(_encoder_layer_kernel, nhead=nhead, final_ln=final_ln),
        grid=(N,),
        in_specs=in_specs,
        out_specs=pl.BlockSpec((1, S, E), lambda n: (n, 0, 0)),
        out_shape=jax.ShapeDtypeStruct((N, S, E), jnp.float32),
        compiler_params=pltpu.CompilerParams(
            dimension_semantics=("parallel",),
            vmem_limit_bytes=_vmem_limit(blk_bytes)),
        cost_estimate=pl.CostEstimate(flops=flops, transcendentals=trans,
                                      bytes_accessed=bytes_accessed),
    )(x, amask, kpad,
      p["self_attn"]["in_w"], p["self_attn"]["in_b"],
      p["self_attn"]["out_w"], p["self_attn"]["out_b"],
      p["norm1_w"], p["norm1_b"],
      p["lin1_w"], p["lin1_b"], p["lin2_w"], p["lin2_b"],
      p["norm2_w"], p["norm2_b"],
      enc_norm[0], enc_norm[1])


def decoder_layer(x, memory, tmask, tkpad, mkpad, p, nhead):
    """x:(N,T,E) memory:(N,S,E) -> (N,T,E). One pallas_call."""
    N, T, E = x.shape
    S = memory.shape[1]
    F = p["lin1_w"].shape[1]
    in_specs = [
        pl.BlockSpec((1, T, E), lambda n: (n, 0, 0)),      # x
        pl.BlockSpec((1, S, E), lambda n: (n, 0, 0)),      # memory
        _const_spec((T, T)),                               # tgt additive mask
        pl.BlockSpec((1, 1, T), lambda n: (n, 0, 0)),      # tgt key padding
        pl.BlockSpec((1, 1, S), lambda n: (n, 0, 0)),      # memory key padding
        _const_spec((E, 3 * E)), _const_spec((1, 3 * E)),  # self-attn fused QKV
        _const_spec((E, E)), _const_spec((1, E)),          # self-attn out proj
        _const_spec((1, E)), _const_spec((1, E)),          # norm1
        _const_spec((E, E)), _const_spec((1, E)),          # cross-attn Q proj
        _const_spec((E, 2 * E)), _const_spec((1, 2 * E)),  # cross-attn fused KV
        _const_spec((E, E)), _const_spec((1, E)),          # cross-attn out proj
        _const_spec((1, E)), _const_spec((1, E)),          # norm2
        _const_spec((E, F)), _const_spec((1, F)),          # linear1
        _const_spec((F, E)), _const_spec((1, E)),          # linear2
        _const_spec((1, E)), _const_spec((1, E)),          # norm3
    ]
    flops = int(N * (6 * T * E * E + 4 * T * T * E + 2 * T * E * E
                     + 2 * T * E * E + 4 * S * E * E + 4 * T * S * E
                     + 2 * T * E * E + 4 * T * E * F))
    trans = int(N * (nhead * (T * T + T * S) + 12 * T))
    w_bytes = (8 * E * E + 2 * E * F) * 2 + (8 * E + F + 8 * E) * 4
    bytes_accessed = int(N * (2 * T + S) * E * 4 + T * T * 4
                         + N * (T + S) * 4 + w_bytes)
    blk_bytes = (2 * T + S) * E * 4 + T * T * 4 + (T + S) * 4 + w_bytes
    return pl.pallas_call(
        functools.partial(_decoder_layer_kernel, nhead=nhead),
        grid=(N,),
        in_specs=in_specs,
        out_specs=pl.BlockSpec((1, T, E), lambda n: (n, 0, 0)),
        out_shape=jax.ShapeDtypeStruct((N, T, E), jnp.float32),
        compiler_params=pltpu.CompilerParams(
            dimension_semantics=("parallel",),
            vmem_limit_bytes=_vmem_limit(blk_bytes)),
        cost_estimate=pl.CostEstimate(flops=flops, transcendentals=trans,
                                      bytes_accessed=bytes_accessed),
    )(x, memory, tmask, tkpad, mkpad,
      p["self_attn"]["in_w"], p["self_attn"]["in_b"],
      p["self_attn"]["out_w"], p["self_attn"]["out_b"],
      p["norm1_w"], p["norm1_b"],
      p["cross_attn"]["q_w"], p["cross_attn"]["q_b"],
      p["cross_attn"]["kv_w"], p["cross_attn"]["kv_b"],
      p["cross_attn"]["out_w"], p["cross_attn"]["out_b"],
      p["norm2_w"], p["norm2_b"],
      p["lin1_w"], p["lin1_b"], p["lin2_w"], p["lin2_b"],
      p["norm3_w"], p["norm3_b"])


def ln_generator(x2d, g, b, w, bias):
    """Fused (decoder final LayerNorm + generator matmul), tiled over
    (row tiles, lane-dense vocab tiles)."""
    M, E = x2d.shape
    V = w.shape[1]
    TM = min(_round_up(M, 8), 256)
    Mp = _round_up(M, TM)
    TV = min(_round_up(V, 128), 1024)
    Vp = _round_up(V, TV)
    xp = jnp.pad(x2d, ((0, Mp - M), (0, 0))) if Mp != M else x2d
    wp = jnp.pad(w, ((0, 0), (0, Vp - V))) if Vp != V else w
    bp = jnp.pad(bias, ((0, 0), (0, Vp - V))) if Vp != V else bias

    flops = int(2 * Mp * E * Vp)
    bytes_accessed = int(Mp * E * 4 + E * Vp * 2 + Vp * 4 + Mp * Vp * 4)
    blk_bytes = TM * E * 4 + E * TV * 2 + TV * 4 + TM * TV * 4 + 2 * E * 4

    out = pl.pallas_call(
        _ln_generator_kernel,
        grid=(Mp // TM, Vp // TV),
        in_specs=[
            pl.BlockSpec((TM, E), lambda i, j: (i, 0)),    # x rows
            pl.BlockSpec((1, E), lambda i, j: (0, 0)),     # dec final norm w
            pl.BlockSpec((1, E), lambda i, j: (0, 0)),     # dec final norm b
            pl.BlockSpec((E, TV), lambda i, j: (0, j)),    # generator weight
            pl.BlockSpec((1, TV), lambda i, j: (0, j)),    # generator bias
        ],
        out_specs=pl.BlockSpec((TM, TV), lambda i, j: (i, j)),
        out_shape=jax.ShapeDtypeStruct((Mp, Vp), jnp.float32),
        compiler_params=pltpu.CompilerParams(
            dimension_semantics=("parallel", "parallel"),
            vmem_limit_bytes=_vmem_limit(blk_bytes)),
        cost_estimate=pl.CostEstimate(flops=flops, transcendentals=0,
                                      bytes_accessed=bytes_accessed),
    )(xp, g, b, wp, bp)
    return out[:M, :V]


# ----------------------------- transformer glue ------------------------------

def _additive_mask(m):
    """PyTorch attn_mask semantics: bool (True = disallowed) or additive float."""
    if m.dtype == jnp.bool_:
        return jnp.where(m, NEG_INF, 0.0).astype(jnp.float32)
    return jnp.maximum(m.astype(jnp.float32), NEG_INF)


def seq2seq_transformer_forward(params, src, trg, src_mask, tgt_mask,
                                src_padding_mask, tgt_padding_mask,
                                memory_key_padding_mask, nhead):
    S, N = src.shape
    T = trg.shape[0]
    E = params["src_emb"].shape[1]
    pe = params["pos_embedding"]                            # (maxlen, E)

    # token embedding * sqrt(E) + positional encoding, gathered batch-major
    # (no (S,N,E)->(N,S,E) HBM transpose); dropout == identity (eval).
    x_enc = params["src_emb"][src.T] * math.sqrt(E) + pe[:S]     # (N, S, E)
    x_dec = params["tgt_emb"][trg.T] * math.sqrt(E) + pe[:T]     # (N, T, E)

    src_amask = _additive_mask(src_mask)                    # (S, S)
    tgt_amask = _additive_mask(tgt_mask)                    # (T, T)
    src_kpad = jnp.where(src_padding_mask, NEG_INF, 0.0).astype(jnp.float32)[:, None, :]
    tgt_kpad = jnp.where(tgt_padding_mask, NEG_INF, 0.0).astype(jnp.float32)[:, None, :]
    mem_kpad = jnp.where(memory_key_padding_mask, NEG_INF, 0.0).astype(jnp.float32)[:, None, :]

    enc_norm = (params["enc_norm_w"], params["enc_norm_b"])
    n_enc = len(params["encoder_layers"])
    for li, lp in enumerate(params["encoder_layers"]):
        x_enc = encoder_layer(x_enc, src_amask, src_kpad, lp, enc_norm, nhead,
                              final_ln=(li == n_enc - 1))
    memory = x_enc                                          # final LN fused above

    for lp in params["decoder_layers"]:
        x_dec = decoder_layer(x_dec, memory, tgt_amask, tgt_kpad, mem_kpad, lp, nhead)

    logits = ln_generator(x_dec.reshape(N * T, E),
                          params["dec_norm_w"], params["dec_norm_b"],
                          params["gen_w"], params["gen_b"])             # (N*T, V)
    return jnp.transpose(logits.reshape(N, T, -1), (1, 0, 2))           # (T, N, V)


# ----------------------------- parameter init ------------------------------

def make_pos_embedding(emb_size, maxlen):
    den = jnp.exp(-jnp.arange(0, emb_size, 2, dtype=jnp.float32)
                  * math.log(10000.0) / emb_size)
    pos = jnp.arange(0, maxlen, dtype=jnp.float32).reshape(maxlen, 1)
    pe = jnp.zeros((maxlen, emb_size), jnp.float32)
    pe = pe.at[:, 0::2].set(jnp.sin(pos * den))
    pe = pe.at[:, 1::2].set(jnp.cos(pos * den))
    return pe                                               # (maxlen, E)


def init_params(key, num_enc, num_dec, emb_size, nhead,
                src_vocab, tgt_vocab, dim_ff, maxlen=64):
    keys = iter(jax.random.split(key, 512))

    def nrm(shape, scale=0.02, dtype=jnp.bfloat16):
        return (scale * jax.random.normal(next(keys), shape)).astype(dtype)

    def ones_e():
        return jnp.ones((1, emb_size), jnp.float32)

    def zeros_e():
        return jnp.zeros((1, emb_size), jnp.float32)

    # weights stored pre-transposed in (K, N) layout, bf16; biases/LN f32
    def self_attn_params():
        return dict(in_w=nrm((emb_size, 3 * emb_size)),     # == in_proj_weight.T
                    in_b=nrm((1, 3 * emb_size), dtype=jnp.float32),
                    out_w=nrm((emb_size, emb_size)),        # == out_proj.weight.T
                    out_b=nrm((1, emb_size), dtype=jnp.float32))

    def cross_attn_params():
        return dict(q_w=nrm((emb_size, emb_size)),          # in_proj_weight[:E].T
                    q_b=nrm((1, emb_size), dtype=jnp.float32),
                    kv_w=nrm((emb_size, 2 * emb_size)),     # in_proj_weight[E:].T
                    kv_b=nrm((1, 2 * emb_size), dtype=jnp.float32),
                    out_w=nrm((emb_size, emb_size)),
                    out_b=nrm((1, emb_size), dtype=jnp.float32))

    def ffn_params():
        return dict(lin1_w=nrm((emb_size, dim_ff)),
                    lin1_b=nrm((1, dim_ff), dtype=jnp.float32),
                    lin2_w=nrm((dim_ff, emb_size)),
                    lin2_b=nrm((1, emb_size), dtype=jnp.float32))

    encoder_layers = []
    for _ in range(num_enc):
        lp = dict(self_attn=self_attn_params())
        lp.update(ffn_params())
        lp.update(norm1_w=ones_e(), norm1_b=zeros_e(),
                  norm2_w=ones_e(), norm2_b=zeros_e())
        encoder_layers.append(lp)

    decoder_layers = []
    for _ in range(num_dec):
        lp = dict(self_attn=self_attn_params(), cross_attn=cross_attn_params())
        lp.update(ffn_params())
        lp.update(norm1_w=ones_e(), norm1_b=zeros_e(),
                  norm2_w=ones_e(), norm2_b=zeros_e(),
                  norm3_w=ones_e(), norm3_b=zeros_e())
        decoder_layers.append(lp)

    return dict(
        src_emb=nrm((src_vocab, emb_size), 1.0, jnp.float32),
        tgt_emb=nrm((tgt_vocab, emb_size), 1.0, jnp.float32),
        pos_embedding=make_pos_embedding(emb_size, maxlen),
        encoder_layers=encoder_layers,
        decoder_layers=decoder_layers,
        enc_norm_w=ones_e(), enc_norm_b=zeros_e(),
        dec_norm_w=ones_e(), dec_norm_b=zeros_e(),
        gen_w=nrm((emb_size, tgt_vocab)),                   # == generator.weight.T
        gen_b=nrm((1, tgt_vocab), dtype=jnp.float32),
    )


# --------------------------------- main -------------------------------------

if __name__ == "__main__":
    # small config: 2 enc / 2 dec layers, emb 32, 4 heads, ffn 64
    NUM_ENC, NUM_DEC = 2, 2
    EMB, NHEAD, FFN = 32, 4, 64
    SRC_VOCAB, TGT_VOCAB = 50, 40
    S, T, N = 10, 8, 2          # src len, tgt len, batch

    root = jax.random.PRNGKey(0)
    k_param, k_src, k_trg = jax.random.split(root, 3)
    params = init_params(k_param, NUM_ENC, NUM_DEC, EMB, NHEAD,
                         SRC_VOCAB, TGT_VOCAB, FFN, maxlen=64)

    src = jax.random.randint(k_src, (S, N), 0, SRC_VOCAB, dtype=jnp.int32)
    trg = jax.random.randint(k_trg, (T, N), 0, TGT_VOCAB, dtype=jnp.int32)

    src_mask = jnp.zeros((S, S), jnp.float32)
    tgt_mask = jnp.where(jnp.triu(jnp.ones((T, T), bool), k=1),
                         NEG_INF, 0.0).astype(jnp.float32)            # causal
    src_padding_mask = jnp.zeros((N, S), bool).at[1, S - 1].set(True)
    tgt_padding_mask = jnp.zeros((N, T), bool)
    memory_key_padding_mask = src_padding_mask

    fwd = jax.jit(seq2seq_transformer_forward, static_argnames=("nhead",))
    logits = fwd(params, src, trg, src_mask, tgt_mask,
                 src_padding_mask, tgt_padding_mask,
                 memory_key_padding_mask, nhead=NHEAD)
    jax.block_until_ready(logits)

    assert logits.shape == (T, N, TGT_VOCAB), logits.shape
    assert bool(jnp.all(jnp.isfinite(logits)))
    print("KERNEL_OK")
</pallas_src>

<mosaic_0001>
module attributes {stable_mosaic.version = 11 : i64} {
  func.func @_encoder_layer_kernel(%arg0: i32, %arg1: memref<1x10x32xf32, #tpu.memory_space<vmem>>, %arg2: memref<10x10xf32, #tpu.memory_space<vmem>>, %arg3: memref<1x1x10xf32, #tpu.memory_space<vmem>>, %arg4: memref<32x96xbf16, #tpu.memory_space<vmem>>, %arg5: memref<1x96xf32, #tpu.memory_space<vmem>>, %arg6: memref<32x32xbf16, #tpu.memory_space<vmem>>, %arg7: memref<1x32xf32, #tpu.memory_space<vmem>>, %arg8: memref<1x32xf32, #tpu.memory_space<vmem>>, %arg9: memref<1x32xf32, #tpu.memory_space<vmem>>, %arg10: memref<32x64xbf16, #tpu.memory_space<vmem>>, %arg11: memref<1x64xf32, #tpu.memory_space<vmem>>, %arg12: memref<64x32xbf16, #tpu.memory_space<vmem>>, %arg13: memref<1x32xf32, #tpu.memory_space<vmem>>, %arg14: memref<1x32xf32, #tpu.memory_space<vmem>>, %arg15: memref<1x32xf32, #tpu.memory_space<vmem>>, %arg16: memref<1x32xf32, #tpu.memory_space<vmem>>, %arg17: memref<1x32xf32, #tpu.memory_space<vmem>>, %arg18: memref<1x10x32xf32, #tpu.memory_space<vmem>>) attributes {dimension_semantics = [#tpu.dimension_semantics<parallel>], iteration_bounds = array<i64: 2>, scalar_prefetch = 0 : i64, scratch_operands = 0 : i64, tpu.core_type = #tpu.core_type<tc>, window_params = [{transform_indices = @transform_0, window_bounds = array<i64: 1, 10, 32>}, {pipeline_mode = #tpu.pipeline_mode<synchronous>, transform_indices = @transform_1, window_bounds = array<i64: 10, 10>}, {transform_indices = @transform_2, window_bounds = array<i64: 1, 1, 10>}, {pipeline_mode = #tpu.pipeline_mode<synchronous>, transform_indices = @transform_3, window_bounds = array<i64: 32, 96>}, {pipeline_mode = #tpu.pipeline_mode<synchronous>, transform_indices = @transform_4, window_bounds = array<i64: 1, 96>}, {pipeline_mode = #tpu.pipeline_mode<synchronous>, transform_indices = @transform_5, window_bounds = array<i64: 32, 32>}, {pipeline_mode = #tpu.pipeline_mode<synchronous>, transform_indices = @transform_6, window_bounds = array<i64: 1, 32>}, {pipeline_mode = #tpu.pipeline_mode<synchronous>, transform_indices = @transform_7, window_bounds = array<i64: 1, 32>}, {pipeline_mode = #tpu.pipeline_mode<synchronous>, transform_indices = @transform_8, window_bounds = array<i64: 1, 32>}, {pipeline_mode = #tpu.pipeline_mode<synchronous>, transform_indices = @transform_9, window_bounds = array<i64: 32, 64>}, {pipeline_mode = #tpu.pipeline_mode<synchronous>, transform_indices = @transform_10, window_bounds = array<i64: 1, 64>}, {pipeline_mode = #tpu.pipeline_mode<synchronous>, transform_indices = @transform_11, window_bounds = array<i64: 64, 32>}, {pipeline_mode = #tpu.pipeline_mode<synchronous>, transform_indices = @transform_12, window_bounds = array<i64: 1, 32>}, {pipeline_mode = #tpu.pipeline_mode<synchronous>, transform_indices = @transform_13, window_bounds = array<i64: 1, 32>}, {pipeline_mode = #tpu.pipeline_mode<synchronous>, transform_indices = @transform_14, window_bounds = array<i64: 1, 32>}, {pipeline_mode = #tpu.pipeline_mode<synchronous>, transform_indices = @transform_15, window_bounds = array<i64: 1, 32>}, {pipeline_mode = #tpu.pipeline_mode<synchronous>, transform_indices = @transform_16, window_bounds = array<i64: 1, 32>}, {transform_indices = @transform_17, window_bounds = array<i64: 1, 10, 32>}]} {
    %c0 = arith.constant 0 : index
    %c0_0 = arith.constant 0 : index
    %c0_1 = arith.constant 0 : index
    %0 = vector.load %arg1[%c0, %c0_0, %c0_1] : memref<1x10x32xf32, #tpu.memory_space<vmem>>, vector<1x10x32xf32>
    %1 = vector.shape_cast %0 : vector<1x10x32xf32> to vector<10x32xf32>
    %c0_2 = arith.constant 0 : index
    %c0_3 = arith.constant 0 : index
    %2 = vector.load %arg2[%c0_2, %c0_3] : memref<10x10xf32, #tpu.memory_space<vmem>>, vector<10x10xf32>
    %c0_4 = arith.constant 0 : index
    %c0_5 = arith.constant 0 : index
    %c0_6 = arith.constant 0 : index
    %3 = vector.load %arg3[%c0_4, %c0_5, %c0_6] : memref<1x1x10xf32, #tpu.memory_space<vmem>>, vector<1x1x10xf32>
    %4 = vector.shape_cast %3 : vector<1x1x10xf32> to vector<1x10xf32>
    %5 = vector.broadcast %4 : vector<1x10xf32> to vector<10x10xf32>
    %6 = arith.addf %2, %5 : vector<10x10xf32>
    %7 = arith.truncf %1 : vector<10x32xf32> to vector<10x32xbf16>
    %c0_7 = arith.constant 0 : index
    %c0_8 = arith.constant 0 : index
    %8 = vector.load %arg4[%c0_7, %c0_8] : memref<32x96xbf16, #tpu.memory_space<vmem>>, vector<32x96xbf16>
    %cst = arith.constant dense<0.000000e+00> : vector<10x96xf32>
    %9 = tpu.matmul %7, %8, %cst {dimension_numbers = #tpu.dot_dimension_numbers<[1], [0], [0], [1], [0, 0, 1, 1], [], []>} : vector<10x32xbf16>, vector<32x96xbf16>, vector<10x96xf32> -> vector<10x96xf32>
    %c0_9 = arith.constant 0 : index
    %c0_10 = arith.constant 0 : index
    %10 = vector.load %arg5[%c0_9, %c0_10] : memref<1x96xf32, #tpu.memory_space<vmem>>, vector<1x96xf32>
    %11 = vector.broadcast %10 : vector<1x96xf32> to vector<10x96xf32>
    %12 = arith.addf %9, %11 : vector<10x96xf32>
    %13 = vector.extract_strided_slice %12 {offsets = [0, 0], sizes = [10, 32], strides = [1, 1]} : vector<10x96xf32> to vector<10x32xf32>
    %14 = vector.extract_strided_slice %12 {offsets = [0, 32], sizes = [10, 32], strides = [1, 1]} : vector<10x96xf32> to vector<10x32xf32>
    %15 = vector.extract_strided_slice %12 {offsets = [0, 64], sizes = [10, 32], strides = [1, 1]} : vector<10x96xf32> to vector<10x32xf32>
    %c0_11 = arith.constant 0 : index
    %c0_12 = arith.constant 0 : index
    %16 = vector.load %arg6[%c0_11, %c0_12] : memref<32x32xbf16, #tpu.memory_space<vmem>>, vector<32x32xbf16>
    %17 = arith.truncf %13 : vector<10x32xf32> to vector<10x32xbf16>
    %18 = arith.truncf %14 : vector<10x32xf32> to vector<10x32xbf16>
    %19 = arith.truncf %15 : vector<10x32xf32> to vector<10x32xbf16>
    %20 = vector.extract_strided_slice %17 {offsets = [0, 0], sizes = [10, 8], strides = [1, 1]} : vector<10x32xbf16> to vector<10x8xbf16>
    %21 = vector.extract_strided_slice %18 {offsets = [0, 0], sizes = [10, 8], strides = [1, 1]} : vector<10x32xbf16> to vector<10x8xbf16>
    "tpu.trace_start"() <{level = 10 : i32, message = "qd,kd->qk"}> : () -> ()
    %cst_13 = arith.constant dense<0.000000e+00> : vector<10x10xf32>
    %22 = tpu.matmul %20, %21, %cst_13 {dimension_numbers = #tpu.dot_dimension_numbers<[1], [1], [0], [0], [0, 0, 1, 0], [], []>} : vector<10x8xbf16>, vector<10x8xbf16>, vector<10x10xf32> -> vector<10x10xf32>
    "tpu.trace_stop"() : () -> ()
    %cst_14 = arith.constant 0.353553385 : f32
    %23 = vector.broadcast %cst_14 : f32 to vector<10x10xf32>
    %24 = arith.mulf %22, %23 : vector<10x10xf32>
    %25 = arith.addf %24, %6 : vector<10x10xf32>
    %cst_15 = arith.constant dense<0xFF800000> : vector<10xf32>
    %26 = vector.multi_reduction <maximumf>, %25, %cst_15 [1] : vector<10x10xf32> to vector<10xf32>
    %27 = vector.shape_cast %26 : vector<10xf32> to vector<10x1xf32>
    %28 = vector.broadcast %27 : vector<10x1xf32> to vector<10x10xf32>
    %29 = arith.subf %25, %28 : vector<10x10xf32>
    %30 = math.exp %29 : vector<10x10xf32>
    %cst_16 = arith.constant dense<0.000000e+00> : vector<10xf32>
    %31 = vector.multi_reduction <add>, %30, %cst_16 [1] : vector<10x10xf32> to vector<10xf32>
    %32 = vector.shape_cast %31 : vector<10xf32> to vector<10x1xf32>
    %33 = tpu.reciprocal %32 {approx = true} : vector<10x1xf32> -> vector<10x1xf32>
    %34 = vector.broadcast %33 : vector<10x1xf32> to vector<10x10xf32>
    %35 = arith.mulf %30, %34 : vector<10x10xf32>
    %36 = arith.truncf %35 : vector<10x10xf32> to vector<10x10xbf16>
    %37 = vector.extract_strided_slice %19 {offsets = [0, 0], sizes = [10, 8], strides = [1, 1]} : vector<10x32xbf16> to vector<10x8xbf16>
    "tpu.trace_start"() <{level = 10 : i32, message = "qk,kd->qd"}> : () -> ()
    %cst_17 = arith.constant dense<0.000000e+00> : vector<10x8xf32>
    %38 = tpu.matmul %36, %37, %cst_17 {dimension_numbers = #tpu.dot_dimension_numbers<[1], [0], [0], [1], [0, 0, 1, 1], [], []>} : vector<10x10xbf16>, vector<10x8xbf16>, vector<10x8xf32> -> vector<10x8xf32>
    "tpu.trace_stop"() : () -> ()
    %39 = vector.extract_strided_slice %17 {offsets = [0, 8], sizes = [10, 8], strides = [1, 1]} : vector<10x32xbf16> to vector<10x8xbf16>
    %40 = vector.extract_strided_slice %18 {offsets = [0, 8], sizes = [10, 8], strides = [1, 1]} : vector<10x32xbf16> to vector<10x8xbf16>
    "tpu.trace_start"() <{level = 10 : i32, message = "qd,kd->qk"}> : () -> ()
    %cst_18 = arith.constant dense<0.000000e+00> : vector<10x10xf32>
    %41 = tpu.matmul %39, %40, %cst_18 {dimension_numbers = #tpu.dot_dimension_numbers<[1], [1], [0], [0], [0, 0, 1, 0], [], []>} : vector<10x8xbf16>, vector<10x8xbf16>, vector<10x10xf32> -> vector<10x10xf32>
    "tpu.trace_stop"() : () -> ()
    %cst_19 = arith.constant 0.353553385 : f32
    %42 = vector.broadcast %cst_19 : f32 to vector<10x10xf32>
    %43 = arith.mulf %41, %42 : vector<10x10xf32>
    %44 = arith.addf %43, %6 : vector<10x10xf32>
    %cst_20 = arith.constant dense<0xFF800000> : vector<10xf32>
    %45 = vector.multi_reduction <maximumf>, %44, %cst_20 [1] : vector<10x10xf32> to vector<10xf32>
    %46 = vector.shape_cast %45 : vector<10xf32> to vector<10x1xf32>
    %47 = vector.broadcast %46 : vector<10x1xf32> to vector<10x10xf32>
    %48 = arith.subf %44, %47 : vector<10x10xf32>
    %49 = math.exp %48 : vector<10x10xf32>
    %cst_21 = arith.constant dense<0.000000e+00> : vector<10xf32>
    %50 = vector.multi_reduction <add>, %49, %cst_21 [1] : vector<10x10xf32> to vector<10xf32>
    %51 = vector.shape_cast %50 : vector<10xf32> to vector<10x1xf32>
    %52 = tpu.reciprocal %51 {approx = true} : vector<10x1xf32> -> vector<10x1xf32>
    %53 = vector.broadcast %52 : vector<10x1xf32> to vector<10x10xf32>
    %54 = arith.mulf %49, %53 : vector<10x10xf32>
    %55 = arith.truncf %54 : vector<10x10xf32> to vector<10x10xbf16>
    %56 = vector.extract_strided_slice %19 {offsets = [0, 8], sizes = [10, 8], strides = [1, 1]} : vector<10x32xbf16> to vector<10x8xbf16>
    "tpu.trace_start"() <{level = 10 : i32, message = "qk,kd->qd"}> : () -> ()
    %cst_22 = arith.constant dense<0.000000e+00> : vector<10x8xf32>
    %57 = tpu.matmul %55, %56, %cst_22 {dimension_numbers = #tpu.dot_dimension_numbers<[1], [0], [0], [1], [0, 0, 1, 1], [], []>} : vector<10x10xbf16>, vector<10x8xbf16>, vector<10x8xf32> -> vector<10x8xf32>
    "tpu.trace_stop"() : () -> ()
    %58 = vector.extract_strided_slice %17 {offsets = [0, 16], sizes = [10, 8], strides = [1, 1]} : vector<10x32xbf16> to vector<10x8xbf16>
    %59 = vector.extract_strided_slice %18 {offsets = [0, 16], sizes = [10, 8], strides = [1, 1]} : vector<10x32xbf16> to vector<10x8xbf16>
    "tpu.trace_start"() <{level = 10 : i32, message = "qd,kd->qk"}> : () -> ()
    %cst_23 = arith.constant dense<0.000000e+00> : vector<10x10xf32>
    %60 = tpu.matmul %58, %59, %cst_23 {dimension_numbers = #tpu.dot_dimension_numbers<[1], [1], [0], [0], [0, 0, 1, 0], [], []>} : vector<10x8xbf16>, vector<10x8xbf16>, vector<10x10xf32> -> vector<10x10xf32>
    "tpu.trace_stop"() : () -> ()
    %cst_24 = arith.constant 0.353553385 : f32
    %61 = vector.broadcast %cst_24 : f32 to vector<10x10xf32>
    %62 = arith.mulf %60, %61 : vector<10x10xf32>
    %63 = arith.addf %62, %6 : vector<10x10xf32>
    %cst_25 = arith.constant dense<0xFF800000> : vector<10xf32>
    %64 = vector.multi_reduction <maximumf>, %63, %cst_25 [1] : vector<10x10xf32> to vector<10xf32>
    %65 = vector.shape_cast %64 : vector<10xf32> to vector<10x1xf32>
    %66 = vector.broadcast %65 : vector<10x1xf32> to vector<10x10xf32>
    %67 = arith.subf %63, %66 : vector<10x10xf32>
    %68 = math.exp %67 : vector<10x10xf32>
    %cst_26 = arith.constant dense<0.000000e+00> : vector<10xf32>
    %69 = vector.multi_reduction <add>, %68, %cst_26 [1] : vector<10x10xf32> to vector<10xf32>
    %70 = vector.shape_cast %69 : vector<10xf32> to vector<10x1xf32>
    %71 = tpu.reciprocal %70 {approx = true} : vector<10x1xf32> -> vector<10x1xf32>
    %72 = vector.broadcast %71 : vector<10x1xf32> to vector<10x10xf32>
    %73 = arith.mulf %68, %72 : vector<10x10xf32>
    %74 = arith.truncf %73 : vector<10x10xf32> to vector<10x10xbf16>
    %75 = vector.extract_strided_slice %19 {offsets = [0, 16], sizes = [10, 8], strides = [1, 1]} : vector<10x32xbf16> to vector<10x8xbf16>
    "tpu.trace_start"() <{level = 10 : i32, message = "qk,kd->qd"}> : () -> ()
    %cst_27 = arith.constant dense<0.000000e+00> : vector<10x8xf32>
    %76 = tpu.matmul %74, %75, %cst_27 {dimension_numbers = #tpu.dot_dimension_numbers<[1], [0], [0], [1], [0, 0, 1, 1], [], []>} : vector<10x10xbf16>, vector<10x8xbf16>, vector<10x8xf32> -> vector<10x8xf32>
    "tpu.trace_stop"() : () -> ()
    %77 = vector.extract_strided_slice %17 {offsets = [0, 24], sizes = [10, 8], strides = [1, 1]} : vector<10x32xbf16> to vector<10x8xbf16>
    %78 = vector.extract_strided_slice %18 {offsets = [0, 24], sizes = [10, 8], strides = [1, 1]} : vector<10x32xbf16> to vector<10x8xbf16>
    "tpu.trace_start"() <{level = 10 : i32, message = "qd,kd->qk"}> : () -> ()
    %cst_28 = arith.constant dense<0.000000e+00> : vector<10x10xf32>
    %79 = tpu.matmul %77, %78, %cst_28 {dimension_numbers = #tpu.dot_dimension_numbers<[1], [1], [0], [0], [0, 0, 1, 0], [], []>} : vector<10x8xbf16>, vector<10x8xbf16>, vector<10x10xf32> -> vector<10x10xf32>
    "tpu.trace_stop"() : () -> ()
    %cst_29 = arith.constant 0.353553385 : f32
    %80 = vector.broadcast %cst_29 : f32 to vector<10x10xf32>
    %81 = arith.mulf %79, %80 : vector<10x10xf32>
    %82 = arith.addf %81, %6 : vector<10x10xf32>
    %cst_30 = arith.constant dense<0xFF800000> : vector<10xf32>
    %83 = vector.multi_reduction <maximumf>, %82, %cst_30 [1] : vector<10x10xf32> to vector<10xf32>
    %84 = vector.shape_cast %83 : vector<10xf32> to vector<10x1xf32>
    %85 = vector.broadcast %84 : vector<10x1xf32> to vector<10x10xf32>
    %86 = arith.subf %82, %85 : vector<10x10xf32>
    %87 = math.exp %86 : vector<10x10xf32>
    %cst_31 = arith.constant dense<0.000000e+00> : vector<10xf32>
    %88 = vector.multi_reduction <add>, %87, %cst_31 [1] : vector<10x10xf32> to vector<10xf32>
    %89 = vector.shape_cast %88 : vector<10xf32> to vector<10x1xf32>
    %90 = tpu.reciprocal %89 {approx = true} : vector<10x1xf32> -> vector<10x1xf32>
    %91 = vector.broadcast %90 : vector<10x1xf32> to vector<10x10xf32>
    %92 = arith.mulf %87, %91 : vector<10x10xf32>
    %93 = arith.truncf %92 : vector<10x10xf32> to vector<10x10xbf16>
    %94 = vector.extract_strided_slice %19 {offsets = [0, 24], sizes = [10, 8], strides = [1, 1]} : vector<10x32xbf16> to vector<10x8xbf16>
    "tpu.trace_start"() <{level = 10 : i32, message = "qk,kd->qd"}> : () -> ()
    %cst_32 = arith.constant dense<0.000000e+00> : vector<10x8xf32>
    %95 = tpu.matmul %93, %94, %cst_32 {dimension_numbers = #tpu.dot_dimension_numbers<[1], [0], [0], [1], [0, 0, 1, 1], [], []>} : vector<10x10xbf16>, vector<10x8xbf16>, vector<10x8xf32> -> vector<10x8xf32>
    "tpu.trace_stop"() : () -> ()
    %96 = tpu.concatenate %38, %57, %76, %95 in 1 : vector<10x8xf32>, vector<10x8xf32>, vector<10x8xf32>, vector<10x8xf32> -> vector<10x32xf32>
    %97 = arith.truncf %96 : vector<10x32xf32> to vector<10x32xbf16>
    %cst_33 = arith.constant dense<0.000000e+00> : vector<10x32xf32>
    %98 = tpu.matmul %97, %16, %cst_33 {dimension_numbers = #tpu.dot_dimension_numbers<[1], [0], [0], [1], [0, 0, 1, 1], [], []>} : vector<10x32xbf16>, vector<32x32xbf16>, vector<10x32xf32> -> vector<10x32xf32>
    %c0_34 = arith.constant 0 : index
    %c0_35 = arith.constant 0 : index
    %99 = vector.load %arg7[%c0_34, %c0_35] : memref<1x32xf32, #tpu.memory_space<vmem>>, vector<1x32xf32>
    %100 = vector.broadcast %99 : vector<1x32xf32> to vector<10x32xf32>
    %101 = arith.addf %98, %100 : vector<10x32xf32>
    %102 = arith.addf %1, %101 : vector<10x32xf32>
    %c0_36 = arith.constant 0 : index
    %c0_37 = arith.constant 0 : index
    %103 = vector.load %arg8[%c0_36, %c0_37] : memref<1x32xf32, #tpu.memory_space<vmem>>, vector<1x32xf32>
    %c0_38 = arith.constant 0 : index
    %c0_39 = arith.constant 0 : index
    %104 = vector.load %arg9[%c0_38, %c0_39] : memref<1x32xf32, #tpu.memory_space<vmem>>, vector<1x32xf32>
    %cst_40 = arith.constant dense<0.000000e+00> : vector<10xf32>
    %105 = vector.multi_reduction <add>, %102, %cst_40 [1] : vector<10x32xf32> to vector<10xf32>
    %106 = vector.shape_cast %105 : vector<10xf32> to vector<10x1xf32>
    %cst_41 = arith.constant 3.200000e+01 : f32
    %107 = vector.broadcast %cst_41 : f32 to vector<10x1xf32>
    %108 = arith.divf %106, %107 : vector<10x1xf32>
    %109 = vector.broadcast %108 : vector<10x1xf32> to vector<10x32xf32>
    %110 = arith.subf %102, %109 : vector<10x32xf32>
    %111 = arith.mulf %110, %110 : vector<10x32xf32>
    %cst_42 = arith.constant dense<0.000000e+00> : vector<10xf32>
    %112 = vector.multi_reduction <add>, %111, %cst_42 [1] : vector<10x32xf32> to vector<10xf32>
    %113 = vector.shape_cast %112 : vector<10xf32> to vector<10x1xf32>
    %cst_43 = arith.constant 3.200000e+01 : f32
    %114 = vector.broadcast %cst_43 : f32 to vector<10x1xf32>
    %115 = arith.divf %113, %114 : vector<10x1xf32>
    %116 = vector.broadcast %108 : vector<10x1xf32> to vector<10x32xf32>
    %117 = arith.subf %102, %116 : vector<10x32xf32>
    %cst_44 = arith.constant 9.99999974E-6 : f32
    %118 = vector.broadcast %cst_44 : f32 to vector<10x1xf32>
    %119 = arith.addf %115, %118 : vector<10x1xf32>
    %120 = math.rsqrt %119 : vector<10x1xf32>
    %121 = vector.broadcast %120 : vector<10x1xf32> to vector<10x32xf32>
    %122 = arith.mulf %117, %121 : vector<10x32xf32>
    %123 = vector.broadcast %103 : vector<1x32xf32> to vector<10x32xf32>
    %124 = arith.mulf %122, %123 : vector<10x32xf32>
    %125 = vector.broadcast %104 : vector<1x32xf32> to vector<10x32xf32>
    %126 = arith.addf %124, %125 : vector<10x32xf32>
    %127 = arith.truncf %126 : vector<10x32xf32> to vector<10x32xbf16>
    %c0_45 = arith.constant 0 : index
    %c0_46 = arith.constant 0 : index
    %128 = vector.load %arg10[%c0_45, %c0_46] : memref<32x64xbf16, #tpu.memory_space<vmem>>, vector<32x64xbf16>
    %cst_47 = arith.constant dense<0.000000e+00> : vector<10x64xf32>
    %129 = tpu.matmul %127, %128, %cst_47 {dimension_numbers = #tpu.dot_dimension_numbers<[1], [0], [0], [1], [0, 0, 1, 1], [], []>} : vector<10x32xbf16>, vector<32x64xbf16>, vector<10x64xf32> -> vector<10x64xf32>
    %c0_48 = arith.constant 0 : index
    %c0_49 = arith.constant 0 : index
    %130 = vector.load %arg11[%c0_48, %c0_49] : memref<1x64xf32, #tpu.memory_space<vmem>>, vector<1x64xf32>
    %131 = vector.broadcast %130 : vector<1x64xf32> to vector<10x64xf32>
    %132 = arith.addf %129, %131 : vector<10x64xf32>
    %cst_50 = arith.constant 0.000000e+00 : f32
    %133 = vector.broadcast %cst_50 : f32 to vector<10x64xf32>
    %134 = arith.maximumf %132, %133 : vector<10x64xf32>
    %135 = arith.truncf %134 : vector<10x64xf32> to vector<10x64xbf16>
    %c0_51 = arith.constant 0 : index
    %c0_52 = arith.constant 0 : index
    %136 = vector.load %arg12[%c0_51, %c0_52] : memref<64x32xbf16, #tpu.memory_space<vmem>>, vector<64x32xbf16>
    %cst_53 = arith.constant dense<0.000000e+00> : vector<10x32xf32>
    %137 = tpu.matmul %135, %136, %cst_53 {dimension_numbers = #tpu.dot_dimension_numbers<[1], [0], [0], [1], [0, 0, 1, 1], [], []>} : vector<10x64xbf16>, vector<64x32xbf16>, vector<10x32xf32> -> vector<10x32xf32>
    %c0_54 = arith.constant 0 : index
    %c0_55 = arith.constant 0 : index
    %138 = vector.load %arg13[%c0_54, %c0_55] : memref<1x32xf32, #tpu.memory_space<vmem>>, vector<1x32xf32>
    %139 = vector.broadcast %138 : vector<1x32xf32> to vector<10x32xf32>
    %140 = arith.addf %137, %139 : vector<10x32xf32>
    %141 = arith.addf %126, %140 : vector<10x32xf32>
    %c0_56 = arith.constant 0 : index
    %c0_57 = arith.constant 0 : index
    %142 = vector.load %arg14[%c0_56, %c0_57] : memref<1x32xf32, #tpu.memory_space<vmem>>, vector<1x32xf32>
    %c0_58 = arith.constant 0 : index
    %c0_59 = arith.constant 0 : index
    %143 = vector.load %arg15[%c0_58, %c0_59] : memref<1x32xf32, #tpu.memory_space<vmem>>, vector<1x32xf32>
    %cst_60 = arith.constant dense<0.000000e+00> : vector<10xf32>
    %144 = vector.multi_reduction <add>, %141, %cst_60 [1] : vector<10x32xf32> to vector<10xf32>
    %145 = vector.shape_cast %144 : vector<10xf32> to vector<10x1xf32>
    %cst_61 = arith.constant 3.200000e+01 : f32
    %146 = vector.broadcast %cst_61 : f32 to vector<10x1xf32>
    %147 = arith.divf %145, %146 : vector<10x1xf32>
    %148 = vector.broadcast %147 : vector<10x1xf32> to vector<10x32xf32>
    %149 = arith.subf %141, %148 : vector<10x32xf32>
    %150 = arith.mulf %149, %149 : vector<10x32xf32>
    %cst_62 = arith.constant dense<0.000000e+00> : vector<10xf32>
    %151 = vector.multi_reduction <add>, %150, %cst_62 [1] : vector<10x32xf32> to vector<10xf32>
    %152 = vector.shape_cast %151 : vector<10xf32> to vector<10x1xf32>
    %cst_63 = arith.constant 3.200000e+01 : f32
    %153 = vector.broadcast %cst_63 : f32 to vector<10x1xf32>
    %154 = arith.divf %152, %153 : vector<10x1xf32>
    %155 = vector.broadcast %147 : vector<10x1xf32> to vector<10x32xf32>
    %156 = arith.subf %141, %155 : vector<10x32xf32>
    %cst_64 = arith.constant 9.99999974E-6 : f32
    %157 = vector.broadcast %cst_64 : f32 to vector<10x1xf32>
    %158 = arith.addf %154, %157 : vector<10x1xf32>
    %159 = math.rsqrt %158 : vector<10x1xf32>
    %160 = vector.broadcast %159 : vector<10x1xf32> to vector<10x32xf32>
    %161 = arith.mulf %156, %160 : vector<10x32xf32>
    %162 = vector.broadcast %142 : vector<1x32xf32> to vector<10x32xf32>
    %163 = arith.mulf %161, %162 : vector<10x32xf32>
    %164 = vector.broadcast %143 : vector<1x32xf32> to vector<10x32xf32>
    %165 = arith.addf %163, %164 : vector<10x32xf32>
    %c0_65 = arith.constant 0 : index
    %c0_66 = arith.constant 0 : index
    %c0_67 = arith.constant 0 : index
    %166 = vector.load %arg18[%c0_65, %c0_66, %c0_67] : memref<1x10x32xf32, #tpu.memory_space<vmem>>, vector<1x10x32xf32>
    %167 = vector.shape_cast %166 : vector<1x10x32xf32> to vector<10x32xf32>
    %168 = vector.shape_cast %165 : vector<10x32xf32> to vector<1x10x32xf32>
    tpu.vector_store %arg18[%c0_65, %c0_66, %c0_67], %168 {strides = array<i32>} : memref<1x10x32xf32, #tpu.memory_space<vmem>>, vector<1x10x32xf32>,
    return
  }
  func.func @transform_0(%arg0: i32) -> (i32, i32, i32) {
    %c0_i32 = arith.constant 0 : i32
    %c0_i32_0 = arith.constant 0 : i32
    %c0_i32_1 = arith.constant 0 : i32
    return %arg0, %c0_i32, %c0_i32_0 : i32, i32, i32
  }
  func.func @transform_1(%arg0: i32) -> (i32, i32) {
    %c0_i32 = arith.constant 0 : i32
    %c0_i32_0 = arith.constant 0 : i32
    %c0_i32_1 = arith.constant 0 : i32
    return %c0_i32, %c0_i32_0 : i32, i32
  }
  func.func @transform_2(%arg0: i32) -> (i32, i32, i32) {
    %c0_i32 = arith.constant 0 : i32
    %c0_i32_0 = arith.constant 0 : i32
    %c0_i32_1 = arith.constant 0 : i32
    return %arg0, %c0_i32, %c0_i32_0 : i32, i32, i32
  }
  func.func @transform_3(%arg0: i32) -> (i32, i32) {
    %c0_i32 = arith.constant 0 : i32
    %c0_i32_0 = arith.constant 0 : i32
    %c0_i32_1 = arith.constant 0 : i32
    return %c0_i32, %c0_i32_0 : i32, i32
  }
  func.func @transform_4(%arg0: i32) -> (i32, i32) {
    %c0_i32 = arith.constant 0 : i32
    %c0_i32_0 = arith.constant 0 : i32
    %c0_i32_1 = arith.constant 0 : i32
    return %c0_i32, %c0_i32_0 : i32, i32
  }
  func.func @transform_5(%arg0: i32) -> (i32, i32) {
    %c0_i32 = arith.constant 0 : i32
    %c0_i32_0 = arith.constant 0 : i32
    %c0_i32_1 = arith.constant 0 : i32
    return %c0_i32, %c0_i32_0 : i32, i32
  }
  func.func @transform_6(%arg0: i32) -> (i32, i32) {
    %c0_i32 = arith.constant 0 : i32
    %c0_i32_0 = arith.constant 0 : i32
    %c0_i32_1 = arith.constant 0 : i32
    return %c0_i32, %c0_i32_0 : i32, i32
  }
  func.func @transform_7(%arg0: i32) -> (i32, i32) {
    %c0_i32 = arith.constant 0 : i32
    %c0_i32_0 = arith.constant 0 : i32
    %c0_i32_1 = arith.constant 0 : i32
    return %c0_i32, %c0_i32_0 : i32, i32
  }
  func.func @transform_8(%arg0: i32) -> (i32, i32) {
    %c0_i32 = arith.constant 0 : i32
    %c0_i32_0 = arith.constant 0 : i32
    %c0_i32_1 = arith.constant 0 : i32
    return %c0_i32, %c0_i32_0 : i32, i32
  }
  func.func @transform_9(%arg0: i32) -> (i32, i32) {
    %c0_i32 = arith.constant 0 : i32
    %c0_i32_0 = arith.constant 0 : i32
    %c0_i32_1 = arith.constant 0 : i32
    return %c0_i32, %c0_i32_0 : i32, i32
  }
  func.func @transform_10(%arg0: i32) -> (i32, i32) {
    %c0_i32 = arith.constant 0 : i32
    %c0_i32_0 = arith.constant 0 : i32
    %c0_i32_1 = arith.constant 0 : i32
    return %c0_i32, %c0_i32_0 : i32, i32
  }
  func.func @transform_11(%arg0: i32) -> (i32, i32) {
    %c0_i32 = arith.constant 0 : i32
    %c0_i32_0 = arith.constant 0 : i32
    %c0_i32_1 = arith.constant 0 : i32
    return %c0_i32, %c0_i32_0 : i32, i32
  }
  func.func @transform_12(%arg0: i32) -> (i32, i32) {
    %c0_i32 = arith.constant 0 : i32
    %c0_i32_0 = arith.constant 0 : i32
    %c0_i32_1 = arith.constant 0 : i32
    return %c0_i32, %c0_i32_0 : i32, i32
  }
  func.func @transform_13(%arg0: i32) -> (i32, i32) {
    %c0_i32 = arith.constant 0 : i32
    %c0_i32_0 = arith.constant 0 : i32
    %c0_i32_1 = arith.constant 0 : i32
    return %c0_i32, %c0_i32_0 : i32, i32
  }
  func.func @transform_14(%arg0: i32) -> (i32, i32) {
    %c0_i32 = arith.constant 0 : i32
    %c0_i32_0 = arith.constant 0 : i32
    %c0_i32_1 = arith.constant 0 : i32
    return %c0_i32, %c0_i32_0 : i32, i32
  }
  func.func @transform_15(%arg0: i32) -> (i32, i32) {
    %c0_i32 = arith.constant 0 : i32
    %c0_i32_0 = arith.constant 0 : i32
    %c0_i32_1 = arith.constant 0 : i32
    return %c0_i32, %c0_i32_0 : i32, i32
  }
  func.func @transform_16(%arg0: i32) -> (i32, i32) {
    %c0_i32 = arith.constant 0 : i32
    %c0_i32_0 = arith.constant 0 : i32
    %c0_i32_1 = arith.constant 0 : i32
    return %c0_i32, %c0_i32_0 : i32, i32
  }
  func.func @transform_17(%arg0: i32) -> (i32, i32, i32) {
    %c0_i32 = arith.constant 0 : i32
    %c0_i32_0 = arith.constant 0 : i32
    %c0_i32_1 = arith.constant 0 : i32
    return %arg0, %c0_i32, %c0_i32_0 : i32, i32, i32
  }
}

module attributes {stable_mosaic.version = 11 : i64} {
  func.func @_encoder_layer_kernel(%arg0: i32, %arg1: memref<1x10x32xf32, #tpu.memory_space<vmem>>, %arg2: memref<10x10xf32, #tpu.memory_space<vmem>>, %arg3: memref<1x1x10xf32, #tpu.memory_space<vmem>>, %arg4: memref<32x96xbf16, #tpu.memory_space<vmem>>, %arg5: memref<1x96xf32, #tpu.memory_space<vmem>>, %arg6: memref<32x32xbf16, #tpu.memory_space<vmem>>, %arg7: memref<1x32xf32, #tpu.memory_space<vmem>>, %arg8: memref<1x32xf32, #tpu.memory_space<vmem>>, %arg9: memref<1x32xf32, #tpu.memory_space<vmem>>, %arg10: memref<32x64xbf16, #tpu.memory_space<vmem>>, %arg11: memref<1x64xf32, #tpu.memory_space<vmem>>, %arg12: memref<64x32xbf16, #tpu.memory_space<vmem>>, %arg13: memref<1x32xf32, #tpu.memory_space<vmem>>, %arg14: memref<1x32xf32, #tpu.memory_space<vmem>>, %arg15: memref<1x32xf32, #tpu.memory_space<vmem>>, %arg16: memref<1x32xf32, #tpu.memory_space<vmem>>, %arg17: memref<1x32xf32, #tpu.memory_space<vmem>>, %arg18: memref<1x10x32xf32, #tpu.memory_space<vmem>>) attributes {dimension_semantics = [#tpu.dimension_semantics<parallel>], iteration_bounds = array<i64: 2>, scalar_prefetch = 0 : i64, scratch_operands = 0 : i64, tpu.core_type = #tpu.core_type<tc>, window_params = [{transform_indices = @transform_0, window_bounds = array<i64: 1, 10, 32>}, {pipeline_mode = #tpu.pipeline_mode<synchronous>, transform_indices = @transform_1, window_bounds = array<i64: 10, 10>}, {transform_indices = @transform_2, window_bounds = array<i64: 1, 1, 10>}, {pipeline_mode = #tpu.pipeline_mode<synchronous>, transform_indices = @transform_3, window_bounds = array<i64: 32, 96>}, {pipeline_mode = #tpu.pipeline_mode<synchronous>, transform_indices = @transform_4, window_bounds = array<i64: 1, 96>}, {pipeline_mode = #tpu.pipeline_mode<synchronous>, transform_indices = @transform_5, window_bounds = array<i64: 32, 32>}, {pipeline_mode = #tpu.pipeline_mode<synchronous>, transform_indices = @transform_6, window_bounds = array<i64: 1, 32>}, {pipeline_mode = #tpu.pipeline_mode<synchronous>, transform_indices = @transform_7, window_bounds = array<i64: 1, 32>}, {pipeline_mode = #tpu.pipeline_mode<synchronous>, transform_indices = @transform_8, window_bounds = array<i64: 1, 32>}, {pipeline_mode = #tpu.pipeline_mode<synchronous>, transform_indices = @transform_9, window_bounds = array<i64: 32, 64>}, {pipeline_mode = #tpu.pipeline_mode<synchronous>, transform_indices = @transform_10, window_bounds = array<i64: 1, 64>}, {pipeline_mode = #tpu.pipeline_mode<synchronous>, transform_indices = @transform_11, window_bounds = array<i64: 64, 32>}, {pipeline_mode = #tpu.pipeline_mode<synchronous>, transform_indices = @transform_12, window_bounds = array<i64: 1, 32>}, {pipeline_mode = #tpu.pipeline_mode<synchronous>, transform_indices = @transform_13, window_bounds = array<i64: 1, 32>}, {pipeline_mode = #tpu.pipeline_mode<synchronous>, transform_indices = @transform_14, window_bounds = array<i64: 1, 32>}, {pipeline_mode = #tpu.pipeline_mode<synchronous>, transform_indices = @transform_15, window_bounds = array<i64: 1, 32>}, {pipeline_mode = #tpu.pipeline_mode<synchronous>, transform_indices = @transform_16, window_bounds = array<i64: 1, 32>}, {transform_indices = @transform_17, window_bounds = array<i64: 1, 10, 32>}]} {
    %c0 = arith.constant 0 : index
    %c0_0 = arith.constant 0 : index
    %c0_1 = arith.constant 0 : index
    %0 = vector.load %arg1[%c0, %c0_0, %c0_1] : memref<1x10x32xf32, #tpu.memory_space<vmem>>, vector<1x10x32xf32>
    %1 = vector.shape_cast %0 : vector<1x10x32xf32> to vector<10x32xf32>
    %c0_2 = arith.constant 0 : index
    %c0_3 = arith.constant 0 : index
    %2 = vector.load %arg2[%c0_2, %c0_3] : memref<10x10xf32, #tpu.memory_space<vmem>>, vector<10x10xf32>
    %c0_4 = arith.constant 0 : index
    %c0_5 = arith.constant 0 : index
    %c0_6 = arith.constant 0 : index
    %3 = vector.load %arg3[%c0_4, %c0_5, %c0_6] : memref<1x1x10xf32, #tpu.memory_space<vmem>>, vector<1x1x10xf32>
    %4 = vector.shape_cast %3 : vector<1x1x10xf32> to vector<1x10xf32>
    %5 = vector.broadcast %4 : vector<1x10xf32> to vector<10x10xf32>
    %6 = arith.addf %2, %5 : vector<10x10xf32>
    %7 = arith.truncf %1 : vector<10x32xf32> to vector<10x32xbf16>
    %c0_7 = arith.constant 0 : index
    %c0_8 = arith.constant 0 : index
    %8 = vector.load %arg4[%c0_7, %c0_8] : memref<32x96xbf16, #tpu.memory_space<vmem>>, vector<32x96xbf16>
    %cst = arith.constant dense<0.000000e+00> : vector<10x96xf32>
    %9 = tpu.matmul %7, %8, %cst {dimension_numbers = #tpu.dot_dimension_numbers<[1], [0], [0], [1], [0, 0, 1, 1], [], []>} : vector<10x32xbf16>, vector<32x96xbf16>, vector<10x96xf32> -> vector<10x96xf32>
    %c0_9 = arith.constant 0 : index
    %c0_10 = arith.constant 0 : index
    %10 = vector.load %arg5[%c0_9, %c0_10] : memref<1x96xf32, #tpu.memory_space<vmem>>, vector<1x96xf32>
    %11 = vector.broadcast %10 : vector<1x96xf32> to vector<10x96xf32>
    %12 = arith.addf %9, %11 : vector<10x96xf32>
    %13 = vector.extract_strided_slice %12 {offsets = [0, 0], sizes = [10, 32], strides = [1, 1]} : vector<10x96xf32> to vector<10x32xf32>
    %14 = vector.extract_strided_slice %12 {offsets = [0, 32], sizes = [10, 32], strides = [1, 1]} : vector<10x96xf32> to vector<10x32xf32>
    %15 = vector.extract_strided_slice %12 {offsets = [0, 64], sizes = [10, 32], strides = [1, 1]} : vector<10x96xf32> to vector<10x32xf32>
    %c0_11 = arith.constant 0 : index
    %c0_12 = arith.constant 0 : index
    %16 = vector.load %arg6[%c0_11, %c0_12] : memref<32x32xbf16, #tpu.memory_space<vmem>>, vector<32x32xbf16>
    %17 = arith.truncf %13 : vector<10x32xf32> to vector<10x32xbf16>
    %18 = arith.truncf %14 : vector<10x32xf32> to vector<10x32xbf16>
    %19 = arith.truncf %15 : vector<10x32xf32> to vector<10x32xbf16>
    %20 = vector.extract_strided_slice %17 {offsets = [0, 0], sizes = [10, 8], strides = [1, 1]} : vector<10x32xbf16> to vector<10x8xbf16>
    %21 = vector.extract_strided_slice %18 {offsets = [0, 0], sizes = [10, 8], strides = [1, 1]} : vector<10x32xbf16> to vector<10x8xbf16>
    "tpu.trace_start"() <{level = 10 : i32, message = "qd,kd->qk"}> : () -> ()
    %cst_13 = arith.constant dense<0.000000e+00> : vector<10x10xf32>
    %22 = tpu.matmul %20, %21, %cst_13 {dimension_numbers = #tpu.dot_dimension_numbers<[1], [1], [0], [0], [0, 0, 1, 0], [], []>} : vector<10x8xbf16>, vector<10x8xbf16>, vector<10x10xf32> -> vector<10x10xf32>
    "tpu.trace_stop"() : () -> ()
    %cst_14 = arith.constant 0.353553385 : f32
    %23 = vector.broadcast %cst_14 : f32 to vector<10x10xf32>
    %24 = arith.mulf %22, %23 : vector<10x10xf32>
    %25 = arith.addf %24, %6 : vector<10x10xf32>
    %cst_15 = arith.constant dense<0xFF800000> : vector<10xf32>
    %26 = vector.multi_reduction <maximumf>, %25, %cst_15 [1] : vector<10x10xf32> to vector<10xf32>
    %27 = vector.shape_cast %26 : vector<10xf32> to vector<10x1xf32>
    %28 = vector.broadcast %27 : vector<10x1xf32> to vector<10x10xf32>
    %29 = arith.subf %25, %28 : vector<10x10xf32>
    %30 = math.exp %29 : vector<10x10xf32>
    %cst_16 = arith.constant dense<0.000000e+00> : vector<10xf32>
    %31 = vector.multi_reduction <add>, %30, %cst_16 [1] : vector<10x10xf32> to vector<10xf32>
    %32 = vector.shape_cast %31 : vector<10xf32> to vector<10x1xf32>
    %33 = tpu.reciprocal %32 {approx = true} : vector<10x1xf32> -> vector<10x1xf32>
    %34 = vector.broadcast %33 : vector<10x1xf32> to vector<10x10xf32>
    %35 = arith.mulf %30, %34 : vector<10x10xf32>
    %36 = arith.truncf %35 : vector<10x10xf32> to vector<10x10xbf16>
    %37 = vector.extract_strided_slice %19 {offsets = [0, 0], sizes = [10, 8], strides = [1, 1]} : vector<10x32xbf16> to vector<10x8xbf16>
    "tpu.trace_start"() <{level = 10 : i32, message = "qk,kd->qd"}> : () -> ()
    %cst_17 = arith.constant dense<0.000000e+00> : vector<10x8xf32>
    %38 = tpu.matmul %36, %37, %cst_17 {dimension_numbers = #tpu.dot_dimension_numbers<[1], [0], [0], [1], [0, 0, 1, 1], [], []>} : vector<10x10xbf16>, vector<10x8xbf16>, vector<10x8xf32> -> vector<10x8xf32>
    "tpu.trace_stop"() : () -> ()
    %39 = vector.extract_strided_slice %17 {offsets = [0, 8], sizes = [10, 8], strides = [1, 1]} : vector<10x32xbf16> to vector<10x8xbf16>
    %40 = vector.extract_strided_slice %18 {offsets = [0, 8], sizes = [10, 8], strides = [1, 1]} : vector<10x32xbf16> to vector<10x8xbf16>
    "tpu.trace_start"() <{level = 10 : i32, message = "qd,kd->qk"}> : () -> ()
    %cst_18 = arith.constant dense<0.000000e+00> : vector<10x10xf32>
    %41 = tpu.matmul %39, %40, %cst_18 {dimension_numbers = #tpu.dot_dimension_numbers<[1], [1], [0], [0], [0, 0, 1, 0], [], []>} : vector<10x8xbf16>, vector<10x8xbf16>, vector<10x10xf32> -> vector<10x10xf32>
    "tpu.trace_stop"() : () -> ()
    %cst_19 = arith.constant 0.353553385 : f32
    %42 = vector.broadcast %cst_19 : f32 to vector<10x10xf32>
    %43 = arith.mulf %41, %42 : vector<10x10xf32>
    %44 = arith.addf %43, %6 : vector<10x10xf32>
    %cst_20 = arith.constant dense<0xFF800000> : vector<10xf32>
    %45 = vector.multi_reduction <maximumf>, %44, %cst_20 [1] : vector<10x10xf32> to vector<10xf32>
    %46 = vector.shape_cast %45 : vector<10xf32> to vector<10x1xf32>
    %47 = vector.broadcast %46 : vector<10x1xf32> to vector<10x10xf32>
    %48 = arith.subf %44, %47 : vector<10x10xf32>
    %49 = math.exp %48 : vector<10x10xf32>
    %cst_21 = arith.constant dense<0.000000e+00> : vector<10xf32>
    %50 = vector.multi_reduction <add>, %49, %cst_21 [1] : vector<10x10xf32> to vector<10xf32>
    %51 = vector.shape_cast %50 : vector<10xf32> to vector<10x1xf32>
    %52 = tpu.reciprocal %51 {approx = true} : vector<10x1xf32> -> vector<10x1xf32>
    %53 = vector.broadcast %52 : vector<10x1xf32> to vector<10x10xf32>
    %54 = arith.mulf %49, %53 : vector<10x10xf32>
    %55 = arith.truncf %54 : vector<10x10xf32> to vector<10x10xbf16>
    %56 = vector.extract_strided_slice %19 {offsets = [0, 8], sizes = [10, 8], strides = [1, 1]} : vector<10x32xbf16> to vector<10x8xbf16>
    "tpu.trace_start"() <{level = 10 : i32, message = "qk,kd->qd"}> : () -> ()
    %cst_22 = arith.constant dense<0.000000e+00> : vector<10x8xf32>
    %57 = tpu.matmul %55, %56, %cst_22 {dimension_numbers = #tpu.dot_dimension_numbers<[1], [0], [0], [1], [0, 0, 1, 1], [], []>} : vector<10x10xbf16>, vector<10x8xbf16>, vector<10x8xf32> -> vector<10x8xf32>
    "tpu.trace_stop"() : () -> ()
    %58 = vector.extract_strided_slice %17 {offsets = [0, 16], sizes = [10, 8], strides = [1, 1]} : vector<10x32xbf16> to vector<10x8xbf16>
    %59 = vector.extract_strided_slice %18 {offsets = [0, 16], sizes = [10, 8], strides = [1, 1]} : vector<10x32xbf16> to vector<10x8xbf16>
    "tpu.trace_start"() <{level = 10 : i32, message = "qd,kd->qk"}> : () -> ()
    %cst_23 = arith.constant dense<0.000000e+00> : vector<10x10xf32>
    %60 = tpu.matmul %58, %59, %cst_23 {dimension_numbers = #tpu.dot_dimension_numbers<[1], [1], [0], [0], [0, 0, 1, 0], [], []>} : vector<10x8xbf16>, vector<10x8xbf16>, vector<10x10xf32> -> vector<10x10xf32>
    "tpu.trace_stop"() : () -> ()
    %cst_24 = arith.constant 0.353553385 : f32
    %61 = vector.broadcast %cst_24 : f32 to vector<10x10xf32>
    %62 = arith.mulf %60, %61 : vector<10x10xf32>
    %63 = arith.addf %62, %6 : vector<10x10xf32>
    %cst_25 = arith.constant dense<0xFF800000> : vector<10xf32>
    %64 = vector.multi_reduction <maximumf>, %63, %cst_25 [1] : vector<10x10xf32> to vector<10xf32>
    %65 = vector.shape_cast %64 : vector<10xf32> to vector<10x1xf32>
    %66 = vector.broadcast %65 : vector<10x1xf32> to vector<10x10xf32>
    %67 = arith.subf %63, %66 : vector<10x10xf32>
    %68 = math.exp %67 : vector<10x10xf32>
    %cst_26 = arith.constant dense<0.000000e+00> : vector<10xf32>
    %69 = vector.multi_reduction <add>, %68, %cst_26 [1] : vector<10x10xf32> to vector<10xf32>
    %70 = vector.shape_cast %69 : vector<10xf32> to vector<10x1xf32>
    %71 = tpu.reciprocal %70 {approx = true} : vector<10x1xf32> -> vector<10x1xf32>
    %72 = vector.broadcast %71 : vector<10x1xf32> to vector<10x10xf32>
    %73 = arith.mulf %68, %72 : vector<10x10xf32>
    %74 = arith.truncf %73 : vector<10x10xf32> to vector<10x10xbf16>
    %75 = vector.extract_strided_slice %19 {offsets = [0, 16], sizes = [10, 8], strides = [1, 1]} : vector<10x32xbf16> to vector<10x8xbf16>
    "tpu.trace_start"() <{level = 10 : i32, message = "qk,kd->qd"}> : () -> ()
    %cst_27 = arith.constant dense<0.000000e+00> : vector<10x8xf32>
    %76 = tpu.matmul %74, %75, %cst_27 {dimension_numbers = #tpu.dot_dimension_numbers<[1], [0], [0], [1], [0, 0, 1, 1], [], []>} : vector<10x10xbf16>, vector<10x8xbf16>, vector<10x8xf32> -> vector<10x8xf32>
    "tpu.trace_stop"() : () -> ()
    %77 = vector.extract_strided_slice %17 {offsets = [0, 24], sizes = [10, 8], strides = [1, 1]} : vector<10x32xbf16> to vector<10x8xbf16>
    %78 = vector.extract_strided_slice %18 {offsets = [0, 24], sizes = [10, 8], strides = [1, 1]} : vector<10x32xbf16> to vector<10x8xbf16>
    "tpu.trace_start"() <{level = 10 : i32, message = "qd,kd->qk"}> : () -> ()
    %cst_28 = arith.constant dense<0.000000e+00> : vector<10x10xf32>
    %79 = tpu.matmul %77, %78, %cst_28 {dimension_numbers = #tpu.dot_dimension_numbers<[1], [1], [0], [0], [0, 0, 1, 0], [], []>} : vector<10x8xbf16>, vector<10x8xbf16>, vector<10x10xf32> -> vector<10x10xf32>
    "tpu.trace_stop"() : () -> ()
    %cst_29 = arith.constant 0.353553385 : f32
    %80 = vector.broadcast %cst_29 : f32 to vector<10x10xf32>
    %81 = arith.mulf %79, %80 : vector<10x10xf32>
    %82 = arith.addf %81, %6 : vector<10x10xf32>
    %cst_30 = arith.constant dense<0xFF800000> : vector<10xf32>
    %83 = vector.multi_reduction <maximumf>, %82, %cst_30 [1] : vector<10x10xf32> to vector<10xf32>
    %84 = vector.shape_cast %83 : vector<10xf32> to vector<10x1xf32>
    %85 = vector.broadcast %84 : vector<10x1xf32> to vector<10x10xf32>
    %86 = arith.subf %82, %85 : vector<10x10xf32>
    %87 = math.exp %86 : vector<10x10xf32>
    %cst_31 = arith.constant dense<0.000000e+00> : vector<10xf32>
    %88 = vector.multi_reduction <add>, %87, %cst_31 [1] : vector<10x10xf32> to vector<10xf32>
    %89 = vector.shape_cast %88 : vector<10xf32> to vector<10x1xf32>
    %90 = tpu.reciprocal %89 {approx = true} : vector<10x1xf32> -> vector<10x1xf32>
    %91 = vector.broadcast %90 : vector<10x1xf32> to vector<10x10xf32>
    %92 = arith.mulf %87, %91 : vector<10x10xf32>
    %93 = arith.truncf %92 : vector<10x10xf32> to vector<10x10xbf16>
    %94 = vector.extract_strided_slice %19 {offsets = [0, 24], sizes = [10, 8], strides = [1, 1]} : vector<10x32xbf16> to vector<10x8xbf16>
    "tpu.trace_start"() <{level = 10 : i32, message = "qk,kd->qd"}> : () -> ()
    %cst_32 = arith.constant dense<0.000000e+00> : vector<10x8xf32>
    %95 = tpu.matmul %93, %94, %cst_32 {dimension_numbers = #tpu.dot_dimension_numbers<[1], [0], [0], [1], [0, 0, 1, 1], [], []>} : vector<10x10xbf16>, vector<10x8xbf16>, vector<10x8xf32> -> vector<10x8xf32>
    "tpu.trace_stop"() : () -> ()
    %96 = tpu.concatenate %38, %57, %76, %95 in 1 : vector<10x8xf32>, vector<10x8xf32>, vector<10x8xf32>, vector<10x8xf32> -> vector<10x32xf32>
    %97 = arith.truncf %96 : vector<10x32xf32> to vector<10x32xbf16>
    %cst_33 = arith.constant dense<0.000000e+00> : vector<10x32xf32>
    %98 = tpu.matmul %97, %16, %cst_33 {dimension_numbers = #tpu.dot_dimension_numbers<[1], [0], [0], [1], [0, 0, 1, 1], [], []>} : vector<10x32xbf16>, vector<32x32xbf16>, vector<10x32xf32> -> vector<10x32xf32>
    %c0_34 = arith.constant 0 : index
    %c0_35 = arith.constant 0 : index
    %99 = vector.load %arg7[%c0_34, %c0_35] : memref<1x32xf32, #tpu.memory_space<vmem>>, vector<1x32xf32>
    %100 = vector.broadcast %99 : vector<1x32xf32> to vector<10x32xf32>
    %101 = arith.addf %98, %100 : vector<10x32xf32>
    %102 = arith.addf %1, %101 : vector<10x32xf32>
    %c0_36 = arith.constant 0 : index
    %c0_37 = arith.constant 0 : index
    %103 = vector.load %arg8[%c0_36, %c0_37] : memref<1x32xf32, #tpu.memory_space<vmem>>, vector<1x32xf32>
    %c0_38 = arith.constant 0 : index
    %c0_39 = arith.constant 0 : index
    %104 = vector.load %arg9[%c0_38, %c0_39] : memref<1x32xf32, #tpu.memory_space<vmem>>, vector<1x32xf32>
    %cst_40 = arith.constant dense<0.000000e+00> : vector<10xf32>
    %105 = vector.multi_reduction <add>, %102, %cst_40 [1] : vector<10x32xf32> to vector<10xf32>
    %106 = vector.shape_cast %105 : vector<10xf32> to vector<10x1xf32>
    %cst_41 = arith.constant 3.200000e+01 : f32
    %107 = vector.broadcast %cst_41 : f32 to vector<10x1xf32>
    %108 = arith.divf %106, %107 : vector<10x1xf32>
    %109 = vector.broadcast %108 : vector<10x1xf32> to vector<10x32xf32>
    %110 = arith.subf %102, %109 : vector<10x32xf32>
    %111 = arith.mulf %110, %110 : vector<10x32xf32>
    %cst_42 = arith.constant dense<0.000000e+00> : vector<10xf32>
    %112 = vector.multi_reduction <add>, %111, %cst_42 [1] : vector<10x32xf32> to vector<10xf32>
    %113 = vector.shape_cast %112 : vector<10xf32> to vector<10x1xf32>
    %cst_43 = arith.constant 3.200000e+01 : f32
    %114 = vector.broadcast %cst_43 : f32 to vector<10x1xf32>
    %115 = arith.divf %113, %114 : vector<10x1xf32>
    %116 = vector.broadcast %108 : vector<10x1xf32> to vector<10x32xf32>
    %117 = arith.subf %102, %116 : vector<10x32xf32>
    %cst_44 = arith.constant 9.99999974E-6 : f32
    %118 = vector.broadcast %cst_44 : f32 to vector<10x1xf32>
    %119 = arith.addf %115, %118 : vector<10x1xf32>
    %120 = math.rsqrt %119 : vector<10x1xf32>
    %121 = vector.broadcast %120 : vector<10x1xf32> to vector<10x32xf32>
    %122 = arith.mulf %117, %121 : vector<10x32xf32>
    %123 = vector.broadcast %103 : vector<1x32xf32> to vector<10x32xf32>
    %124 = arith.mulf %122, %123 : vector<10x32xf32>
    %125 = vector.broadcast %104 : vector<1x32xf32> to vector<10x32xf32>
    %126 = arith.addf %124, %125 : vector<10x32xf32>
    %127 = arith.truncf %126 : vector<10x32xf32> to vector<10x32xbf16>
    %c0_45 = arith.constant 0 : index
    %c0_46 = arith.constant 0 : index
    %128 = vector.load %arg10[%c0_45, %c0_46] : memref<32x64xbf16, #tpu.memory_space<vmem>>, vector<32x64xbf16>
    %cst_47 = arith.constant dense<0.000000e+00> : vector<10x64xf32>
    %129 = tpu.matmul %127, %128, %cst_47 {dimension_numbers = #tpu.dot_dimension_numbers<[1], [0], [0], [1], [0, 0, 1, 1], [], []>} : vector<10x32xbf16>, vector<32x64xbf16>, vector<10x64xf32> -> vector<10x64xf32>
    %c0_48 = arith.constant 0 : index
    %c0_49 = arith.constant 0 : index
    %130 = vector.load %arg11[%c0_48, %c0_49] : memref<1x64xf32, #tpu.memory_space<vmem>>, vector<1x64xf32>
    %131 = vector.broadcast %130 : vector<1x64xf32> to vector<10x64xf32>
    %132 = arith.addf %129, %131 : vector<10x64xf32>
    %cst_50 = arith.constant 0.000000e+00 : f32
    %133 = vector.broadcast %cst_50 : f32 to vector<10x64xf32>
    %134 = arith.maximumf %132, %133 : vector<10x64xf32>
    %135 = arith.truncf %134 : vector<10x64xf32> to vector<10x64xbf16>
    %c0_51 = arith.constant 0 : index
    %c0_52 = arith.constant 0 : index
    %136 = vector.load %arg12[%c0_51, %c0_52] : memref<64x32xbf16, #tpu.memory_space<vmem>>, vector<64x32xbf16>
    %cst_53 = arith.constant dense<0.000000e+00> : vector<10x32xf32>
    %137 = tpu.matmul %135, %136, %cst_53 {dimension_numbers = #tpu.dot_dimension_numbers<[1], [0], [0], [1], [0, 0, 1, 1], [], []>} : vector<10x64xbf16>, vector<64x32xbf16>, vector<10x32xf32> -> vector<10x32xf32>
    %c0_54 = arith.constant 0 : index
    %c0_55 = arith.constant 0 : index
    %138 = vector.load %arg13[%c0_54, %c0_55] : memref<1x32xf32, #tpu.memory_space<vmem>>, vector<1x32xf32>
    %139 = vector.broadcast %138 : vector<1x32xf32> to vector<10x32xf32>
    %140 = arith.addf %137, %139 : vector<10x32xf32>
    %141 = arith.addf %126, %140 : vector<10x32xf32>
    %c0_56 = arith.constant 0 : index
    %c0_57 = arith.constant 0 : index
    %142 = vector.load %arg14[%c0_56, %c0_57] : memref<1x32xf32, #tpu.memory_space<vmem>>, vector<1x32xf32>
    %c0_58 = arith.constant 0 : index
    %c0_59 = arith.constant 0 : index
    %143 = vector.load %arg15[%c0_58, %c0_59] : memref<1x32xf32, #tpu.memory_space<vmem>>, vector<1x32xf32>
    %cst_60 = arith.constant dense<0.000000e+00> : vector<10xf32>
    %144 = vector.multi_reduction <add>, %141, %cst_60 [1] : vector<10x32xf32> to vector<10xf32>
    %145 = vector.shape_cast %144 : vector<10xf32> to vector<10x1xf32>
    %cst_61 = arith.constant 3.200000e+01 : f32
    %146 = vector.broadcast %cst_61 : f32 to vector<10x1xf32>
    %147 = arith.divf %145, %146 : vector<10x1xf32>
    %148 = vector.broadcast %147 : vector<10x1xf32> to vector<10x32xf32>
    %149 = arith.subf %141, %148 : vector<10x32xf32>
    %150 = arith.mulf %149, %149 : vector<10x32xf32>
    %cst_62 = arith.constant dense<0.000000e+00> : vector<10xf32>
    %151 = vector.multi_reduction <add>, %150, %cst_62 [1] : vector<10x32xf32> to vector<10xf32>
    %152 = vector.shape_cast %151 : vector<10xf32> to vector<10x1xf32>
    %cst_63 = arith.constant 3.200000e+01 : f32
    %153 = vector.broadcast %cst_63 : f32 to vector<10x1xf32>
    %154 = arith.divf %152, %153 : vector<10x1xf32>
    %155 = vector.broadcast %147 : vector<10x1xf32> to vector<10x32xf32>
    %156 = arith.subf %141, %155 : vector<10x32xf32>
    %cst_64 = arith.constant 9.99999974E-6 : f32
    %157 = vector.broadcast %cst_64 : f32 to vector<10x1xf32>
    %158 = arith.addf %154, %157 : vector<10x1xf32>
    %159 = math.rsqrt %158 : vector<10x1xf32>
    %160 = vector.broadcast %159 : vector<10x1xf32> to vector<10x32xf32>
    %161 = arith.mulf %156, %160 : vector<10x32xf32>
    %162 = vector.broadcast %142 : vector<1x32xf32> to vector<10x32xf32>
    %163 = arith.mulf %161, %162 : vector<10x32xf32>
    %164 = vector.broadcast %143 : vector<1x32xf32> to vector<10x32xf32>
    %165 = arith.addf %163, %164 : vector<10x32xf32>
    %c0_65 = arith.constant 0 : index
    %c0_66 = arith.constant 0 : index
    %166 = vector.load %arg16[%c0_65, %c0_66] : memref<1x32xf32, #tpu.memory_space<vmem>>, vector<1x32xf32>
    %c0_67 = arith.constant 0 : index
    %c0_68 = arith.constant 0 : index
    %167 = vector.load %arg17[%c0_67, %c0_68] : memref<1x32xf32, #tpu.memory_space<vmem>>, vector<1x32xf32>
    %cst_69 = arith.constant dense<0.000000e+00> : vector<10xf32>
    %168 = vector.multi_reduction <add>, %165, %cst_69 [1] : vector<10x32xf32> to vector<10xf32>
    %169 = vector.shape_cast %168 : vector<10xf32> to vector<10x1xf32>
    %cst_70 = arith.constant 3.200000e+01 : f32
    %170 = vector.broadcast %cst_70 : f32 to vector<10x1xf32>
    %171 = arith.divf %169, %170 : vector<10x1xf32>
    %172 = vector.broadcast %171 : vector<10x1xf32> to vector<10x32xf32>
    %173 = arith.subf %165, %172 : vector<10x32xf32>
    %174 = arith.mulf %173, %173 : vector<10x32xf32>
    %cst_71 = arith.constant dense<0.000000e+00> : vector<10xf32>
    %175 = vector.multi_reduction <add>, %174, %cst_71 [1] : vector<10x32xf32> to vector<10xf32>
    %176 = vector.shape_cast %175 : vector<10xf32> to vector<10x1xf32>
    %cst_72 = arith.constant 3.200000e+01 : f32
    %177 = vector.broadcast %cst_72 : f32 to vector<10x1xf32>
    %178 = arith.divf %176, %177 : vector<10x1xf32>
    %179 = vector.broadcast %171 : vector<10x1xf32> to vector<10x32xf32>
    %180 = arith.subf %165, %179 : vector<10x32xf32>
    %cst_73 = arith.constant 9.99999974E-6 : f32
    %181 = vector.broadcast %cst_73 : f32 to vector<10x1xf32>
    %182 = arith.addf %178, %181 : vector<10x1xf32>
    %183 = math.rsqrt %182 : vector<10x1xf32>
    %184 = vector.broadcast %183 : vector<10x1xf32> to vector<10x32xf32>
    %185 = arith.mulf %180, %184 : vector<10x32xf32>
    %186 = vector.broadcast %166 : vector<1x32xf32> to vector<10x32xf32>
    %187 = arith.mulf %185, %186 : vector<10x32xf32>
    %188 = vector.broadcast %167 : vector<1x32xf32> to vector<10x32xf32>
    %189 = arith.addf %187, %188 : vector<10x32xf32>
    %c0_74 = arith.constant 0 : index
    %c0_75 = arith.constant 0 : index
    %c0_76 = arith.constant 0 : index
    %190 = vector.load %arg18[%c0_74, %c0_75, %c0_76] : memref<1x10x32xf32, #tpu.memory_space<vmem>>, vector<1x10x32xf32>
    %191 = vector.shape_cast %190 : vector<1x10x32xf32> to vector<10x32xf32>
    %192 = vector.shape_cast %189 : vector<10x32xf32> to vector<1x10x32xf32>
    tpu.vector_store %arg18[%c0_74, %c0_75, %c0_76], %192 {strides = array<i32>} : memref<1x10x32xf32, #tpu.memory_space<vmem>>, vector<1x10x32xf32>,
    return
  }
  func.func @transform_0(%arg0: i32) -> (i32, i32, i32) {
    %c0_i32 = arith.constant 0 : i32
    %c0_i32_0 = arith.constant 0 : i32
    %c0_i32_1 = arith.constant 0 : i32
    return %arg0, %c0_i32, %c0_i32_0 : i32, i32, i32
  }
  func.func @transform_1(%arg0: i32) -> (i32, i32) {
    %c0_i32 = arith.constant 0 : i32
    %c0_i32_0 = arith.constant 0 : i32
    %c0_i32_1 = arith.constant 0 : i32
    return %c0_i32, %c0_i32_0 : i32, i32
  }
  func.func @transform_2(%arg0: i32) -> (i32, i32, i32) {
    %c0_i32 = arith.constant 0 : i32
    %c0_i32_0 = arith.constant 0 : i32
    %c0_i32_1 = arith.constant 0 : i32
    return %arg0, %c0_i32, %c0_i32_0 : i32, i32, i32
  }
  func.func @transform_3(%arg0: i32) -> (i32, i32) {
    %c0_i32 = arith.constant 0 : i32
    %c0_i32_0 = arith.constant 0 : i32
    %c0_i32_1 = arith.constant 0 : i32
    return %c0_i32, %c0_i32_0 : i32, i32
  }
  func.func @transform_4(%arg0: i32) -> (i32, i32) {
    %c0_i32 = arith.constant 0 : i32
    %c0_i32_0 = arith.constant 0 : i32
    %c0_i32_1 = arith.constant 0 : i32
    return %c0_i32, %c0_i32_0 : i32, i32
  }
  func.func @transform_5(%arg0: i32) -> (i32, i32) {
    %c0_i32 = arith.constant 0 : i32
    %c0_i32_0 = arith.constant 0 : i32
    %c0_i32_1 = arith.constant 0 : i32
    return %c0_i32, %c0_i32_0 : i32, i32
  }
  func.func @transform_6(%arg0: i32) -> (i32, i32) {
    %c0_i32 = arith.constant 0 : i32
    %c0_i32_0 = arith.constant 0 : i32
    %c0_i32_1 = arith.constant 0 : i32
    return %c0_i32, %c0_i32_0 : i32, i32
  }
  func.func @transform_7(%arg0: i32) -> (i32, i32) {
    %c0_i32 = arith.constant 0 : i32
    %c0_i32_0 = arith.constant 0 : i32
    %c0_i32_1 = arith.constant 0 : i32
    return %c0_i32, %c0_i32_0 : i32, i32
  }
  func.func @transform_8(%arg0: i32) -> (i32, i32) {
    %c0_i32 = arith.constant 0 : i32
    %c0_i32_0 = arith.constant 0 : i32
    %c0_i32_1 = arith.constant 0 : i32
    return %c0_i32, %c0_i32_0 : i32, i32
  }
  func.func @transform_9(%arg0: i32) -> (i32, i32) {
    %c0_i32 = arith.constant 0 : i32
    %c0_i32_0 = arith.constant 0 : i32
    %c0_i32_1 = arith.constant 0 : i32
    return %c0_i32, %c0_i32_0 : i32, i32
  }
  func.func @transform_10(%arg0: i32) -> (i32, i32) {
    %c0_i32 = arith.constant 0 : i32
    %c0_i32_0 = arith.constant 0 : i32
    %c0_i32_1 = arith.constant 0 : i32
    return %c0_i32, %c0_i32_0 : i32, i32
  }
  func.func @transform_11(%arg0: i32) -> (i32, i32) {
    %c0_i32 = arith.constant 0 : i32
    %c0_i32_0 = arith.constant 0 : i32
    %c0_i32_1 = arith.constant 0 : i32
    return %c0_i32, %c0_i32_0 : i32, i32
  }
  func.func @transform_12(%arg0: i32) -> (i32, i32) {
    %c0_i32 = arith.constant 0 : i32
    %c0_i32_0 = arith.constant 0 : i32
    %c0_i32_1 = arith.constant 0 : i32
    return %c0_i32, %c0_i32_0 : i32, i32
  }
  func.func @transform_13(%arg0: i32) -> (i32, i32) {
    %c0_i32 = arith.constant 0 : i32
    %c0_i32_0 = arith.constant 0 : i32
    %c0_i32_1 = arith.constant 0 : i32
    return %c0_i32, %c0_i32_0 : i32, i32
  }
  func.func @transform_14(%arg0: i32) -> (i32, i32) {
    %c0_i32 = arith.constant 0 : i32
    %c0_i32_0 = arith.constant 0 : i32
    %c0_i32_1 = arith.constant 0 : i32
    return %c0_i32, %c0_i32_0 : i32, i32
  }
  func.func @transform_15(%arg0: i32) -> (i32, i32) {
    %c0_i32 = arith.constant 0 : i32
    %c0_i32_0 = arith.constant 0 : i32
    %c0_i32_1 = arith.constant 0 : i32
    return %c0_i32, %c0_i32_0 : i32, i32
  }
  func.func @transform_16(%arg0: i32) -> (i32, i32) {
    %c0_i32 = arith.constant 0 : i32
    %c0_i32_0 = arith.constant 0 : i32
    %c0_i32_1 = arith.constant 0 : i32
    return %c0_i32, %c0_i32_0 : i32, i32
  }
  func.func @transform_17(%arg0: i32) -> (i32, i32, i32) {
    %c0_i32 = arith.constant 0 : i32
    %c0_i32_0 = arith.constant 0 : i32
    %c0_i32_1 = arith.constant 0 : i32
    return %arg0, %c0_i32, %c0_i32_0 : i32, i32, i32
  }
}

module attributes {stable_mosaic.version = 11 : i64} {
  func.func @_decoder_layer_kernel(%arg0: i32, %arg1: memref<1x8x32xf32, #tpu.memory_space<vmem>>, %arg2: memref<1x10x32xf32, #tpu.memory_space<vmem>>, %arg3: memref<8x8xf32, #tpu.memory_space<vmem>>, %arg4: memref<1x1x8xf32, #tpu.memory_space<vmem>>, %arg5: memref<1x1x10xf32, #tpu.memory_space<vmem>>, %arg6: memref<32x96xbf16, #tpu.memory_space<vmem>>, %arg7: memref<1x96xf32, #tpu.memory_space<vmem>>, %arg8: memref<32x32xbf16, #tpu.memory_space<vmem>>, %arg9: memref<1x32xf32, #tpu.memory_space<vmem>>, %arg10: memref<1x32xf32, #tpu.memory_space<vmem>>, %arg11: memref<1x32xf32, #tpu.memory_space<vmem>>, %arg12: memref<32x32xbf16, #tpu.memory_space<vmem>>, %arg13: memref<1x32xf32, #tpu.memory_space<vmem>>, %arg14: memref<32x64xbf16, #tpu.memory_space<vmem>>, %arg15: memref<1x64xf32, #tpu.memory_space<vmem>>, %arg16: memref<32x32xbf16, #tpu.memory_space<vmem>>, %arg17: memref<1x32xf32, #tpu.memory_space<vmem>>, %arg18: memref<1x32xf32, #tpu.memory_space<vmem>>, %arg19: memref<1x32xf32, #tpu.memory_space<vmem>>, %arg20: memref<32x64xbf16, #tpu.memory_space<vmem>>, %arg21: memref<1x64xf32, #tpu.memory_space<vmem>>, %arg22: memref<64x32xbf16, #tpu.memory_space<vmem>>, %arg23: memref<1x32xf32, #tpu.memory_space<vmem>>, %arg24: memref<1x32xf32, #tpu.memory_space<vmem>>, %arg25: memref<1x32xf32, #tpu.memory_space<vmem>>, %arg26: memref<1x8x32xf32, #tpu.memory_space<vmem>>) attributes {dimension_semantics = [#tpu.dimension_semantics<parallel>], iteration_bounds = array<i64: 2>, scalar_prefetch = 0 : i64, scratch_operands = 0 : i64, tpu.core_type = #tpu.core_type<tc>, window_params = [{transform_indices = @transform_0, window_bounds = array<i64: 1, 8, 32>}, {transform_indices = @transform_1, window_bounds = array<i64: 1, 10, 32>}, {pipeline_mode = #tpu.pipeline_mode<synchronous>, transform_indices = @transform_2, window_bounds = array<i64: 8, 8>}, {transform_indices = @transform_3, window_bounds = array<i64: 1, 1, 8>}, {transform_indices = @transform_4, window_bounds = array<i64: 1, 1, 10>}, {pipeline_mode = #tpu.pipeline_mode<synchronous>, transform_indices = @transform_5, window_bounds = array<i64: 32, 96>}, {pipeline_mode = #tpu.pipeline_mode<synchronous>, transform_indices = @transform_6, window_bounds = array<i64: 1, 96>}, {pipeline_mode = #tpu.pipeline_mode<synchronous>, transform_indices = @transform_7, window_bounds = array<i64: 32, 32>}, {pipeline_mode = #tpu.pipeline_mode<synchronous>, transform_indices = @transform_8, window_bounds = array<i64: 1, 32>}, {pipeline_mode = #tpu.pipeline_mode<synchronous>, transform_indices = @transform_9, window_bounds = array<i64: 1, 32>}, {pipeline_mode = #tpu.pipeline_mode<synchronous>, transform_indices = @transform_10, window_bounds = array<i64: 1, 32>}, {pipeline_mode = #tpu.pipeline_mode<synchronous>, transform_indices = @transform_11, window_bounds = array<i64: 32, 32>}, {pipeline_mode = #tpu.pipeline_mode<synchronous>, transform_indices = @transform_12, window_bounds = array<i64: 1, 32>}, {pipeline_mode = #tpu.pipeline_mode<synchronous>, transform_indices = @transform_13, window_bounds = array<i64: 32, 64>}, {pipeline_mode = #tpu.pipeline_mode<synchronous>, transform_indices = @transform_14, window_bounds = array<i64: 1, 64>}, {pipeline_mode = #tpu.pipeline_mode<synchronous>, transform_indices = @transform_15, window_bounds = array<i64: 32, 32>}, {pipeline_mode = #tpu.pipeline_mode<synchronous>, transform_indices = @transform_16, window_bounds = array<i64: 1, 32>}, {pipeline_mode = #tpu.pipeline_mode<synchronous>, transform_indices = @transform_17, window_bounds = array<i64: 1, 32>}, {pipeline_mode = #tpu.pipeline_mode<synchronous>, transform_indices = @transform_18, window_bounds = array<i64: 1, 32>}, {pipeline_mode = #tpu.pipeline_mode<synchronous>, transform_indices = @transform_19, window_bounds = array<i64: 32, 64>}, {pipeline_mode = #tpu.pipeline_mode<synchronous>, transform_indices = @transform_20, window_bounds = array<i64: 1, 64>}, {pipeline_mode = #tpu.pipeline_mode<synchronous>, transform_indices = @transform_21, window_bounds = array<i64: 64, 32>}, {pipeline_mode = #tpu.pipeline_mode<synchronous>, transform_indices = @transform_22, window_bounds = array<i64: 1, 32>}, {pipeline_mode = #tpu.pipeline_mode<synchronous>, transform_indices = @transform_23, window_bounds = array<i64: 1, 32>}, {pipeline_mode = #tpu.pipeline_mode<synchronous>, transform_indices = @transform_24, window_bounds = array<i64: 1, 32>}, {transform_indices = @transform_25, window_bounds = array<i64: 1, 8, 32>}]} {
    %c0 = arith.constant 0 : index
    %c0_0 = arith.constant 0 : index
    %c0_1 = arith.constant 0 : index
    %0 = vector.load %arg1[%c0, %c0_0, %c0_1] : memref<1x8x32xf32, #tpu.memory_space<vmem>>, vector<1x8x32xf32>
    %1 = vector.shape_cast %0 : vector<1x8x32xf32> to vector<8x32xf32>
    %c0_2 = arith.constant 0 : index
    %c0_3 = arith.constant 0 : index
    %c0_4 = arith.constant 0 : index
    %2 = vector.load %arg2[%c0_2, %c0_3, %c0_4] : memref<1x10x32xf32, #tpu.memory_space<vmem>>, vector<1x10x32xf32>
    %3 = vector.shape_cast %2 : vector<1x10x32xf32> to vector<10x32xf32>
    %c0_5 = arith.constant 0 : index
    %c0_6 = arith.constant 0 : index
    %4 = vector.load %arg3[%c0_5, %c0_6] : memref<8x8xf32, #tpu.memory_space<vmem>>, vector<8x8xf32>
    %c0_7 = arith.constant 0 : index
    %c0_8 = arith.constant 0 : index
    %c0_9 = arith.constant 0 : index
    %5 = vector.load %arg4[%c0_7, %c0_8, %c0_9] : memref<1x1x8xf32, #tpu.memory_space<vmem>>, vector<1x1x8xf32>
    %6 = vector.shape_cast %5 : vector<1x1x8xf32> to vector<1x8xf32>
    %7 = vector.broadcast %6 : vector<1x8xf32> to vector<8x8xf32>
    %8 = arith.addf %4, %7 : vector<8x8xf32>
    %c0_10 = arith.constant 0 : index
    %c0_11 = arith.constant 0 : index
    %c0_12 = arith.constant 0 : index
    %9 = vector.load %arg5[%c0_10, %c0_11, %c0_12] : memref<1x1x10xf32, #tpu.memory_space<vmem>>, vector<1x1x10xf32>
    %10 = vector.shape_cast %9 : vector<1x1x10xf32> to vector<1x10xf32>
    %11 = arith.truncf %1 : vector<8x32xf32> to vector<8x32xbf16>
    %c0_13 = arith.constant 0 : index
    %c0_14 = arith.constant 0 : index
    %12 = vector.load %arg6[%c0_13, %c0_14] : memref<32x96xbf16, #tpu.memory_space<vmem>>, vector<32x96xbf16>
    %cst = arith.constant dense<0.000000e+00> : vector<8x96xf32>
    %13 = tpu.matmul %11, %12, %cst {dimension_numbers = #tpu.dot_dimension_numbers<[1], [0], [0], [1], [0, 0, 1, 1], [], []>} : vector<8x32xbf16>, vector<32x96xbf16>, vector<8x96xf32> -> vector<8x96xf32>
    %c0_15 = arith.constant 0 : index
    %c0_16 = arith.constant 0 : index
    %14 = vector.load %arg7[%c0_15, %c0_16] : memref<1x96xf32, #tpu.memory_space<vmem>>, vector<1x96xf32>
    %15 = vector.broadcast %14 : vector<1x96xf32> to vector<8x96xf32>
    %16 = arith.addf %13, %15 : vector<8x96xf32>
    %17 = vector.extract_strided_slice %16 {offsets = [0, 0], sizes = [8, 32], strides = [1, 1]} : vector<8x96xf32> to vector<8x32xf32>
    %18 = vector.extract_strided_slice %16 {offsets = [0, 32], sizes = [8, 32], strides = [1, 1]} : vector<8x96xf32> to vector<8x32xf32>
    %19 = vector.extract_strided_slice %16 {offsets = [0, 64], sizes = [8, 32], strides = [1, 1]} : vector<8x96xf32> to vector<8x32xf32>
    %c0_17 = arith.constant 0 : index
    %c0_18 = arith.constant 0 : index
    %20 = vector.load %arg8[%c0_17, %c0_18] : memref<32x32xbf16, #tpu.memory_space<vmem>>, vector<32x32xbf16>
    %21 = arith.truncf %17 : vector<8x32xf32> to vector<8x32xbf16>
    %22 = arith.truncf %18 : vector<8x32xf32> to vector<8x32xbf16>
    %23 = arith.truncf %19 : vector<8x32xf32> to vector<8x32xbf16>
    %24 = vector.extract_strided_slice %21 {offsets = [0, 0], sizes = [8, 8], strides = [1, 1]} : vector<8x32xbf16> to vector<8x8xbf16>
    %25 = vector.extract_strided_slice %22 {offsets = [0, 0], sizes = [8, 8], strides = [1, 1]} : vector<8x32xbf16> to vector<8x8xbf16>
    "tpu.trace_start"() <{level = 10 : i32, message = "qd,kd->qk"}> : () -> ()
    %cst_19 = arith.constant dense<0.000000e+00> : vector<8x8xf32>
    %26 = tpu.matmul %24, %25, %cst_19 {dimension_numbers = #tpu.dot_dimension_numbers<[1], [1], [0], [0], [0, 0, 1, 0], [], []>} : vector<8x8xbf16>, vector<8x8xbf16>, vector<8x8xf32> -> vector<8x8xf32>
    "tpu.trace_stop"() : () -> ()
    %cst_20 = arith.constant 0.353553385 : f32
    %27 = vector.broadcast %cst_20 : f32 to vector<8x8xf32>
    %28 = arith.mulf %26, %27 : vector<8x8xf32>
    %29 = arith.addf %28, %8 : vector<8x8xf32>
    %cst_21 = arith.constant dense<0xFF800000> : vector<8xf32>
    %30 = vector.multi_reduction <maximumf>, %29, %cst_21 [1] : vector<8x8xf32> to vector<8xf32>
    %31 = vector.shape_cast %30 : vector<8xf32> to vector<8x1xf32>
    %32 = vector.broadcast %31 : vector<8x1xf32> to vector<8x8xf32>
    %33 = arith.subf %29, %32 : vector<8x8xf32>
    %34 = math.exp %33 : vector<8x8xf32>
    %cst_22 = arith.constant dense<0.000000e+00> : vector<8xf32>
    %35 = vector.multi_reduction <add>, %34, %cst_22 [1] : vector<8x8xf32> to vector<8xf32>
    %36 = vector.shape_cast %35 : vector<8xf32> to vector<8x1xf32>
    %37 = tpu.reciprocal %36 {approx = true} : vector<8x1xf32> -> vector<8x1xf32>
    %38 = vector.broadcast %37 : vector<8x1xf32> to vector<8x8xf32>
    %39 = arith.mulf %34, %38 : vector<8x8xf32>
    %40 = arith.truncf %39 : vector<8x8xf32> to vector<8x8xbf16>
    %41 = vector.extract_strided_slice %23 {offsets = [0, 0], sizes = [8, 8], strides = [1, 1]} : vector<8x32xbf16> to vector<8x8xbf16>
    "tpu.trace_start"() <{level = 10 : i32, message = "qk,kd->qd"}> : () -> ()
    %cst_23 = arith.constant dense<0.000000e+00> : vector<8x8xf32>
    %42 = tpu.matmul %40, %41, %cst_23 {dimension_numbers = #tpu.dot_dimension_numbers<[1], [0], [0], [1], [0, 0, 1, 1], [], []>} : vector<8x8xbf16>, vector<8x8xbf16>, vector<8x8xf32> -> vector<8x8xf32>
    "tpu.trace_stop"() : () -> ()
    %43 = vector.extract_strided_slice %21 {offsets = [0, 8], sizes = [8, 8], strides = [1, 1]} : vector<8x32xbf16> to vector<8x8xbf16>
    %44 = vector.extract_strided_slice %22 {offsets = [0, 8], sizes = [8, 8], strides = [1, 1]} : vector<8x32xbf16> to vector<8x8xbf16>
    "tpu.trace_start"() <{level = 10 : i32, message = "qd,kd->qk"}> : () -> ()
    %cst_24 = arith.constant dense<0.000000e+00> : vector<8x8xf32>
    %45 = tpu.matmul %43, %44, %cst_24 {dimension_numbers = #tpu.dot_dimension_numbers<[1], [1], [0], [0], [0, 0, 1, 0], [], []>} : vector<8x8xbf16>, vector<8x8xbf16>, vector<8x8xf32> -> vector<8x8xf32>
    "tpu.trace_stop"() : () -> ()
    %cst_25 = arith.constant 0.353553385 : f32
    %46 = vector.broadcast %cst_25 : f32 to vector<8x8xf32>
    %47 = arith.mulf %45, %46 : vector<8x8xf32>
    %48 = arith.addf %47, %8 : vector<8x8xf32>
    %cst_26 = arith.constant dense<0xFF800000> : vector<8xf32>
    %49 = vector.multi_reduction <maximumf>, %48, %cst_26 [1] : vector<8x8xf32> to vector<8xf32>
    %50 = vector.shape_cast %49 : vector<8xf32> to vector<8x1xf32>
    %51 = vector.broadcast %50 : vector<8x1xf32> to vector<8x8xf32>
    %52 = arith.subf %48, %51 : vector<8x8xf32>
    %53 = math.exp %52 : vector<8x8xf32>
    %cst_27 = arith.constant dense<0.000000e+00> : vector<8xf32>
    %54 = vector.multi_reduction <add>, %53, %cst_27 [1] : vector<8x8xf32> to vector<8xf32>
    %55 = vector.shape_cast %54 : vector<8xf32> to vector<8x1xf32>
    %56 = tpu.reciprocal %55 {approx = true} : vector<8x1xf32> -> vector<8x1xf32>
    %57 = vector.broadcast %56 : vector<8x1xf32> to vector<8x8xf32>
    %58 = arith.mulf %53, %57 : vector<8x8xf32>
    %59 = arith.truncf %58 : vector<8x8xf32> to vector<8x8xbf16>
    %60 = vector.extract_strided_slice %23 {offsets = [0, 8], sizes = [8, 8], strides = [1, 1]} : vector<8x32xbf16> to vector<8x8xbf16>
    "tpu.trace_start"() <{level = 10 : i32, message = "qk,kd->qd"}> : () -> ()
    %cst_28 = arith.constant dense<0.000000e+00> : vector<8x8xf32>
    %61 = tpu.matmul %59, %60, %cst_28 {dimension_numbers = #tpu.dot_dimension_numbers<[1], [0], [0], [1], [0, 0, 1, 1], [], []>} : vector<8x8xbf16>, vector<8x8xbf16>, vector<8x8xf32> -> vector<8x8xf32>
    "tpu.trace_stop"() : () -> ()
    %62 = vector.extract_strided_slice %21 {offsets = [0, 16], sizes = [8, 8], strides = [1, 1]} : vector<8x32xbf16> to vector<8x8xbf16>
    %63 = vector.extract_strided_slice %22 {offsets = [0, 16], sizes = [8, 8], strides = [1, 1]} : vector<8x32xbf16> to vector<8x8xbf16>
    "tpu.trace_start"() <{level = 10 : i32, message = "qd,kd->qk"}> : () -> ()
    %cst_29 = arith.constant dense<0.000000e+00> : vector<8x8xf32>
    %64 = tpu.matmul %62, %63, %cst_29 {dimension_numbers = #tpu.dot_dimension_numbers<[1], [1], [0], [0], [0, 0, 1, 0], [], []>} : vector<8x8xbf16>, vector<8x8xbf16>, vector<8x8xf32> -> vector<8x8xf32>
    "tpu.trace_stop"() : () -> ()
    %cst_30 = arith.constant 0.353553385 : f32
    %65 = vector.broadcast %cst_30 : f32 to vector<8x8xf32>
    %66 = arith.mulf %64, %65 : vector<8x8xf32>
    %67 = arith.addf %66, %8 : vector<8x8xf32>
    %cst_31 = arith.constant dense<0xFF800000> : vector<8xf32>
    %68 = vector.multi_reduction <maximumf>, %67, %cst_31 [1] : vector<8x8xf32> to vector<8xf32>
    %69 = vector.shape_cast %68 : vector<8xf32> to vector<8x1xf32>
    %70 = vector.broadcast %69 : vector<8x1xf32> to vector<8x8xf32>
    %71 = arith.subf %67, %70 : vector<8x8xf32>
    %72 = math.exp %71 : vector<8x8xf32>
    %cst_32 = arith.constant dense<0.000000e+00> : vector<8xf32>
    %73 = vector.multi_reduction <add>, %72, %cst_32 [1] : vector<8x8xf32> to vector<8xf32>
    %74 = vector.shape_cast %73 : vector<8xf32> to vector<8x1xf32>
    %75 = tpu.reciprocal %74 {approx = true} : vector<8x1xf32> -> vector<8x1xf32>
    %76 = vector.broadcast %75 : vector<8x1xf32> to vector<8x8xf32>
    %77 = arith.mulf %72, %76 : vector<8x8xf32>
    %78 = arith.truncf %77 : vector<8x8xf32> to vector<8x8xbf16>
    %79 = vector.extract_strided_slice %23 {offsets = [0, 16], sizes = [8, 8], strides = [1, 1]} : vector<8x32xbf16> to vector<8x8xbf16>
    "tpu.trace_start"() <{level = 10 : i32, message = "qk,kd->qd"}> : () -> ()
    %cst_33 = arith.constant dense<0.000000e+00> : vector<8x8xf32>
    %80 = tpu.matmul %78, %79, %cst_33 {dimension_numbers = #tpu.dot_dimension_numbers<[1], [0], [0], [1], [0, 0, 1, 1], [], []>} : vector<8x8xbf16>, vector<8x8xbf16>, vector<8x8xf32> -> vector<8x8xf32>
    "tpu.trace_stop"() : () -> ()
    %81 = vector.extract_strided_slice %21 {offsets = [0, 24], sizes = [8, 8], strides = [1, 1]} : vector<8x32xbf16> to vector<8x8xbf16>
    %82 = vector.extract_strided_slice %22 {offsets = [0, 24], sizes = [8, 8], strides = [1, 1]} : vector<8x32xbf16> to vector<8x8xbf16>
    "tpu.trace_start"() <{level = 10 : i32, message = "qd,kd->qk"}> : () -> ()
    %cst_34 = arith.constant dense<0.000000e+00> : vector<8x8xf32>
    %83 = tpu.matmul %81, %82, %cst_34 {dimension_numbers = #tpu.dot_dimension_numbers<[1], [1], [0], [0], [0, 0, 1, 0], [], []>} : vector<8x8xbf16>, vector<8x8xbf16>, vector<8x8xf32> -> vector<8x8xf32>
    "tpu.trace_stop"() : () -> ()
    %cst_35 = arith.constant 0.353553385 : f32
    %84 = vector.broadcast %cst_35 : f32 to vector<8x8xf32>
    %85 = arith.mulf %83, %84 : vector<8x8xf32>
    %86 = arith.addf %85, %8 : vector<8x8xf32>
    %cst_36 = arith.constant dense<0xFF800000> : vector<8xf32>
    %87 = vector.multi_reduction <maximumf>, %86, %cst_36 [1] : vector<8x8xf32> to vector<8xf32>
    %88 = vector.shape_cast %87 : vector<8xf32> to vector<8x1xf32>
    %89 = vector.broadcast %88 : vector<8x1xf32> to vector<8x8xf32>
    %90 = arith.subf %86, %89 : vector<8x8xf32>
    %91 = math.exp %90 : vector<8x8xf32>
    %cst_37 = arith.constant dense<0.000000e+00> : vector<8xf32>
    %92 = vector.multi_reduction <add>, %91, %cst_37 [1] : vector<8x8xf32> to vector<8xf32>
    %93 = vector.shape_cast %92 : vector<8xf32> to vector<8x1xf32>
    %94 = tpu.reciprocal %93 {approx = true} : vector<8x1xf32> -> vector<8x1xf32>
    %95 = vector.broadcast %94 : vector<8x1xf32> to vector<8x8xf32>
    %96 = arith.mulf %91, %95 : vector<8x8xf32>
    %97 = arith.truncf %96 : vector<8x8xf32> to vector<8x8xbf16>
    %98 = vector.extract_strided_slice %23 {offsets = [0, 24], sizes = [8, 8], strides = [1, 1]} : vector<8x32xbf16> to vector<8x8xbf16>
    "tpu.trace_start"() <{level = 10 : i32, message = "qk,kd->qd"}> : () -> ()
    %cst_38 = arith.constant dense<0.000000e+00> : vector<8x8xf32>
    %99 = tpu.matmul %97, %98, %cst_38 {dimension_numbers = #tpu.dot_dimension_numbers<[1], [0], [0], [1], [0, 0, 1, 1], [], []>} : vector<8x8xbf16>, vector<8x8xbf16>, vector<8x8xf32> -> vector<8x8xf32>
    "tpu.trace_stop"() : () -> ()
    %100 = tpu.concatenate %42, %61, %80, %99 in 1 : vector<8x8xf32>, vector<8x8xf32>, vector<8x8xf32>, vector<8x8xf32> -> vector<8x32xf32>
    %101 = arith.truncf %100 : vector<8x32xf32> to vector<8x32xbf16>
    %cst_39 = arith.constant dense<0.000000e+00> : vector<8x32xf32>
    %102 = tpu.matmul %101, %20, %cst_39 {dimension_numbers = #tpu.dot_dimension_numbers<[1], [0], [0], [1], [0, 0, 1, 1], [], []>} : vector<8x32xbf16>, vector<32x32xbf16>, vector<8x32xf32> -> vector<8x32xf32>
    %c0_40 = arith.constant 0 : index
    %c0_41 = arith.constant 0 : index
    %103 = vector.load %arg9[%c0_40, %c0_41] : memref<1x32xf32, #tpu.memory_space<vmem>>, vector<1x32xf32>
    %104 = vector.broadcast %103 : vector<1x32xf32> to vector<8x32xf32>
    %105 = arith.addf %102, %104 : vector<8x32xf32>
    %106 = arith.addf %1, %105 : vector<8x32xf32>
    %c0_42 = arith.constant 0 : index
    %c0_43 = arith.constant 0 : index
    %107 = vector.load %arg10[%c0_42, %c0_43] : memref<1x32xf32, #tpu.memory_space<vmem>>, vector<1x32xf32>
    %c0_44 = arith.constant 0 : index
    %c0_45 = arith.constant 0 : index
    %108 = vector.load %arg11[%c0_44, %c0_45] : memref<1x32xf32, #tpu.memory_space<vmem>>, vector<1x32xf32>
    %cst_46 = arith.constant dense<0.000000e+00> : vector<8xf32>
    %109 = vector.multi_reduction <add>, %106, %cst_46 [1] : vector<8x32xf32> to vector<8xf32>
    %110 = vector.shape_cast %109 : vector<8xf32> to vector<8x1xf32>
    %cst_47 = arith.constant 3.200000e+01 : f32
    %111 = vector.broadcast %cst_47 : f32 to vector<8x1xf32>
    %112 = arith.divf %110, %111 : vector<8x1xf32>
    %113 = vector.broadcast %112 : vector<8x1xf32> to vector<8x32xf32>
    %114 = arith.subf %106, %113 : vector<8x32xf32>
    %115 = arith.mulf %114, %114 : vector<8x32xf32>
    %cst_48 = arith.constant dense<0.000000e+00> : vector<8xf32>
    %116 = vector.multi_reduction <add>, %115, %cst_48 [1] : vector<8x32xf32> to vector<8xf32>
    %117 = vector.shape_cast %116 : vector<8xf32> to vector<8x1xf32>
    %cst_49 = arith.constant 3.200000e+01 : f32
    %118 = vector.broadcast %cst_49 : f32 to vector<8x1xf32>
    %119 = arith.divf %117, %118 : vector<8x1xf32>
    %120 = vector.broadcast %112 : vector<8x1xf32> to vector<8x32xf32>
    %121 = arith.subf %106, %120 : vector<8x32xf32>
    %cst_50 = arith.constant 9.99999974E-6 : f32
    %122 = vector.broadcast %cst_50 : f32 to vector<8x1xf32>
    %123 = arith.addf %119, %122 : vector<8x1xf32>
    %124 = math.rsqrt %123 : vector<8x1xf32>
    %125 = vector.broadcast %124 : vector<8x1xf32> to vector<8x32xf32>
    %126 = arith.mulf %121, %125 : vector<8x32xf32>
    %127 = vector.broadcast %107 : vector<1x32xf32> to vector<8x32xf32>
    %128 = arith.mulf %126, %127 : vector<8x32xf32>
    %129 = vector.broadcast %108 : vector<1x32xf32> to vector<8x32xf32>
    %130 = arith.addf %128, %129 : vector<8x32xf32>
    %131 = arith.truncf %130 : vector<8x32xf32> to vector<8x32xbf16>
    %c0_51 = arith.constant 0 : index
    %c0_52 = arith.constant 0 : index
    %132 = vector.load %arg12[%c0_51, %c0_52] : memref<32x32xbf16, #tpu.memory_space<vmem>>, vector<32x32xbf16>
    %cst_53 = arith.constant dense<0.000000e+00> : vector<8x32xf32>
    %133 = tpu.matmul %131, %132, %cst_53 {dimension_numbers = #tpu.dot_dimension_numbers<[1], [0], [0], [1], [0, 0, 1, 1], [], []>} : vector<8x32xbf16>, vector<32x32xbf16>, vector<8x32xf32> -> vector<8x32xf32>
    %c0_54 = arith.constant 0 : index
    %c0_55 = arith.constant 0 : index
    %134 = vector.load %arg13[%c0_54, %c0_55] : memref<1x32xf32, #tpu.memory_space<vmem>>, vector<1x32xf32>
    %135 = vector.broadcast %134 : vector<1x32xf32> to vector<8x32xf32>
    %136 = arith.addf %133, %135 : vector<8x32xf32>
    %137 = arith.truncf %3 : vector<10x32xf32> to vector<10x32xbf16>
    %c0_56 = arith.constant 0 : index
    %c0_57 = arith.constant 0 : index
    %138 = vector.load %arg14[%c0_56, %c0_57] : memref<32x64xbf16, #tpu.memory_space<vmem>>, vector<32x64xbf16>
    %cst_58 = arith.constant dense<0.000000e+00> : vector<10x64xf32>
    %139 = tpu.matmul %137, %138, %cst_58 {dimension_numbers = #tpu.dot_dimension_numbers<[1], [0], [0], [1], [0, 0, 1, 1], [], []>} : vector<10x32xbf16>, vector<32x64xbf16>, vector<10x64xf32> -> vector<10x64xf32>
    %c0_59 = arith.constant 0 : index
    %c0_60 = arith.constant 0 : index
    %140 = vector.load %arg15[%c0_59, %c0_60] : memref<1x64xf32, #tpu.memory_space<vmem>>, vector<1x64xf32>
    %141 = vector.broadcast %140 : vector<1x64xf32> to vector<10x64xf32>
    %142 = arith.addf %139, %141 : vector<10x64xf32>
    %143 = vector.extract_strided_slice %142 {offsets = [0, 0], sizes = [10, 32], strides = [1, 1]} : vector<10x64xf32> to vector<10x32xf32>
    %144 = vector.extract_strided_slice %142 {offsets = [0, 32], sizes = [10, 32], strides = [1, 1]} : vector<10x64xf32> to vector<10x32xf32>
    %c0_61 = arith.constant 0 : index
    %c0_62 = arith.constant 0 : index
    %145 = vector.load %arg16[%c0_61, %c0_62] : memref<32x32xbf16, #tpu.memory_space<vmem>>, vector<32x32xbf16>
    %146 = arith.truncf %136 : vector<8x32xf32> to vector<8x32xbf16>
    %147 = arith.truncf %143 : vector<10x32xf32> to vector<10x32xbf16>
    %148 = arith.truncf %144 : vector<10x32xf32> to vector<10x32xbf16>
    %149 = vector.extract_strided_slice %146 {offsets = [0, 0], sizes = [8, 8], strides = [1, 1]} : vector<8x32xbf16> to vector<8x8xbf16>
    %150 = vector.extract_strided_slice %147 {offsets = [0, 0], sizes = [10, 8], strides = [1, 1]} : vector<10x32xbf16> to vector<10x8xbf16>
    "tpu.trace_start"() <{level = 10 : i32, message = "qd,kd->qk"}> : () -> ()
    %cst_63 = arith.constant dense<0.000000e+00> : vector<8x10xf32>
    %151 = tpu.matmul %149, %150, %cst_63 {dimension_numbers = #tpu.dot_dimension_numbers<[1], [1], [0], [0], [0, 0, 1, 0], [], []>} : vector<8x8xbf16>, vector<10x8xbf16>, vector<8x10xf32> -> vector<8x10xf32>
    "tpu.trace_stop"() : () -> ()
    %cst_64 = arith.constant 0.353553385 : f32
    %152 = vector.broadcast %cst_64 : f32 to vector<8x10xf32>
    %153 = arith.mulf %151, %152 : vector<8x10xf32>
    %154 = vector.broadcast %10 : vector<1x10xf32> to vector<8x10xf32>
    %155 = arith.addf %153, %154 : vector<8x10xf32>
    %cst_65 = arith.constant dense<0xFF800000> : vector<8xf32>
    %156 = vector.multi_reduction <maximumf>, %155, %cst_65 [1] : vector<8x10xf32> to vector<8xf32>
    %157 = vector.shape_cast %156 : vector<8xf32> to vector<8x1xf32>
    %158 = vector.broadcast %157 : vector<8x1xf32> to vector<8x10xf32>
    %159 = arith.subf %155, %158 : vector<8x10xf32>
    %160 = math.exp %159 : vector<8x10xf32>
    %cst_66 = arith.constant dense<0.000000e+00> : vector<8xf32>
    %161 = vector.multi_reduction <add>, %160, %cst_66 [1] : vector<8x10xf32> to vector<8xf32>
    %162 = vector.shape_cast %161 : vector<8xf32> to vector<8x1xf32>
    %163 = tpu.reciprocal %162 {approx = true} : vector<8x1xf32> -> vector<8x1xf32>
    %164 = vector.broadcast %163 : vector<8x1xf32> to vector<8x10xf32>
    %165 = arith.mulf %160, %164 : vector<8x10xf32>
    %166 = arith.truncf %165 : vector<8x10xf32> to vector<8x10xbf16>
    %167 = vector.extract_strided_slice %148 {offsets = [0, 0], sizes = [10, 8], strides = [1, 1]} : vector<10x32xbf16> to vector<10x8xbf16>
    "tpu.trace_start"() <{level = 10 : i32, message = "qk,kd->qd"}> : () -> ()
    %cst_67 = arith.constant dense<0.000000e+00> : vector<8x8xf32>
    %168 = tpu.matmul %166, %167, %cst_67 {dimension_numbers = #tpu.dot_dimension_numbers<[1], [0], [0], [1], [0, 0, 1, 1], [], []>} : vector<8x10xbf16>, vector<10x8xbf16>, vector<8x8xf32> -> vector<8x8xf32>
    "tpu.trace_stop"() : () -> ()
    %169 = vector.extract_strided_slice %146 {offsets = [0, 8], sizes = [8, 8], strides = [1, 1]} : vector<8x32xbf16> to vector<8x8xbf16>
    %170 = vector.extract_strided_slice %147 {offsets = [0, 8], sizes = [10, 8], strides = [1, 1]} : vector<10x32xbf16> to vector<10x8xbf16>
    "tpu.trace_start"() <{level = 10 : i32, message = "qd,kd->qk"}> : () -> ()
    %cst_68 = arith.constant dense<0.000000e+00> : vector<8x10xf32>
    %171 = tpu.matmul %169, %170, %cst_68 {dimension_numbers = #tpu.dot_dimension_numbers<[1], [1], [0], [0], [0, 0, 1, 0], [], []>} : vector<8x8xbf16>, vector<10x8xbf16>, vector<8x10xf32> -> vector<8x10xf32>
    "tpu.trace_stop"() : () -> ()
    %cst_69 = arith.constant 0.353553385 : f32
    %172 = vector.broadcast %cst_69 : f32 to vector<8x10xf32>
    %173 = arith.mulf %171, %172 : vector<8x10xf32>
    %174 = vector.broadcast %10 : vector<1x10xf32> to vector<8x10xf32>
    %175 = arith.addf %173, %174 : vector<8x10xf32>
    %cst_70 = arith.constant dense<0xFF800000> : vector<8xf32>
    %176 = vector.multi_reduction <maximumf>, %175, %cst_70 [1] : vector<8x10xf32> to vector<8xf32>
    %177 = vector.shape_cast %176 : vector<8xf32> to vector<8x1xf32>
    %178 = vector.broadcast %177 : vector<8x1xf32> to vector<8x10xf32>
    %179 = arith.subf %175, %178 : vector<8x10xf32>
    %180 = math.exp %179 : vector<8x10xf32>
    %cst_71 = arith.constant dense<0.000000e+00> : vector<8xf32>
    %181 = vector.multi_reduction <add>, %180, %cst_71 [1] : vector<8x10xf32> to vector<8xf32>
    %182 = vector.shape_cast %181 : vector<8xf32> to vector<8x1xf32>
    %183 = tpu.reciprocal %182 {approx = true} : vector<8x1xf32> -> vector<8x1xf32>
    %184 = vector.broadcast %183 : vector<8x1xf32> to vector<8x10xf32>
    %185 = arith.mulf %180, %184 : vector<8x10xf32>
    %186 = arith.truncf %185 : vector<8x10xf32> to vector<8x10xbf16>
    %187 = vector.extract_strided_slice %148 {offsets = [0, 8], sizes = [10, 8], strides = [1, 1]} : vector<10x32xbf16> to vector<10x8xbf16>
    "tpu.trace_start"() <{level = 10 : i32, message = "qk,kd->qd"}> : () -> ()
    %cst_72 = arith.constant dense<0.000000e+00> : vector<8x8xf32>
    %188 = tpu.matmul %186, %187, %cst_72 {dimension_numbers = #tpu.dot_dimension_numbers<[1], [0], [0], [1], [0, 0, 1, 1], [], []>} : vector<8x10xbf16>, vector<10x8xbf16>, vector<8x8xf32> -> vector<8x8xf32>
    "tpu.trace_stop"() : () -> ()
    %189 = vector.extract_strided_slice %146 {offsets = [0, 16], sizes = [8, 8], strides = [1, 1]} : vector<8x32xbf16> to vector<8x8xbf16>
    %190 = vector.extract_strided_slice %147 {offsets = [0, 16], sizes = [10, 8], strides = [1, 1]} : vector<10x32xbf16> to vector<10x8xbf16>
    "tpu.trace_start"() <{level = 10 : i32, message = "qd,kd->qk"}> : () -> ()
    %cst_73 = arith.constant dense<0.000000e+00> : vector<8x10xf32>
    %191 = tpu.matmul %189, %190, %cst_73 {dimension_numbers = #tpu.dot_dimension_numbers<[1], [1], [0], [0], [0, 0, 1, 0], [], []>} : vector<8x8xbf16>, vector<10x8xbf16>, vector<8x10xf32> -> vector<8x10xf32>
    "tpu.trace_stop"() : () -> ()
    %cst_74 = arith.constant 0.353553385 : f32
    %192 = vector.broadcast %cst_74 : f32 to vector<8x10xf32>
    %193 = arith.mulf %191, %192 : vector<8x10xf32>
    %194 = vector.broadcast %10 : vector<1x10xf32> to vector<8x10xf32>
    %195 = arith.addf %193, %194 : vector<8x10xf32>
    %cst_75 = arith.constant dense<0xFF800000> : vector<8xf32>
    %196 = vector.multi_reduction <maximumf>, %195, %cst_75 [1] : vector<8x10xf32> to vector<8xf32>
    %197 = vector.shape_cast %196 : vector<8xf32> to vector<8x1xf32>
    %198 = vector.broadcast %197 : vector<8x1xf32> to vector<8x10xf32>
    %199 = arith.subf %195, %198 : vector<8x10xf32>
    %200 = math.exp %199 : vector<8x10xf32>
    %cst_76 = arith.constant dense<0.000000e+00> : vector<8xf32>
    %201 = vector.multi_reduction <add>, %200, %cst_76 [1] : vector<8x10xf32> to vector<8xf32>
    %202 = vector.shape_cast %201 : vector<8xf32> to vector<8x1xf32>
    %203 = tpu.reciprocal %202 {approx = true} : vector<8x1xf32> -> vector<8x1xf32>
    %204 = vector.broadcast %203 : vector<8x1xf32> to vector<8x10xf32>
    %205 = arith.mulf %200, %204 : vector<8x10xf32>
    %206 = arith.truncf %205 : vector<8x10xf32> to vector<8x10xbf16>
    %207 = vector.extract_strided_slice %148 {offsets = [0, 16], sizes = [10, 8], strides = [1, 1]} : vector<10x32xbf16> to vector<10x8xbf16>
    "tpu.trace_start"() <{level = 10 : i32, message = "qk,kd->qd"}> : () -> ()
    %cst_77 = arith.constant dense<0.000000e+00> : vector<8x8xf32>
    %208 = tpu.matmul %206, %207, %cst_77 {dimension_numbers = #tpu.dot_dimension_numbers<[1], [0], [0], [1], [0, 0, 1, 1], [], []>} : vector<8x10xbf16>, vector<10x8xbf16>, vector<8x8xf32> -> vector<8x8xf32>
    "tpu.trace_stop"() : () -> ()
    %209 = vector.extract_strided_slice %146 {offsets = [0, 24], sizes = [8, 8], strides = [1, 1]} : vector<8x32xbf16> to vector<8x8xbf16>
    %210 = vector.extract_strided_slice %147 {offsets = [0, 24], sizes = [10, 8], strides = [1, 1]} : vector<10x32xbf16> to vector<10x8xbf16>
    "tpu.trace_start"() <{level = 10 : i32, message = "qd,kd->qk"}> : () -> ()
    %cst_78 = arith.constant dense<0.000000e+00> : vector<8x10xf32>
    %211 = tpu.matmul %209, %210, %cst_78 {dimension_numbers = #tpu.dot_dimension_numbers<[1], [1], [0], [0], [0, 0, 1, 0], [], []>} : vector<8x8xbf16>, vector<10x8xbf16>, vector<8x10xf32> -> vector<8x10xf32>
    "tpu.trace_stop"() : () -> ()
    %cst_79 = arith.constant 0.353553385 : f32
    %212 = vector.broadcast %cst_79 : f32 to vector<8x10xf32>
    %213 = arith.mulf %211, %212 : vector<8x10xf32>
    %214 = vector.broadcast %10 : vector<1x10xf32> to vector<8x10xf32>
    %215 = arith.addf %213, %214 : vector<8x10xf32>
    %cst_80 = arith.constant dense<0xFF800000> : vector<8xf32>
    %216 = vector.multi_reduction <maximumf>, %215, %cst_80 [1] : vector<8x10xf32> to vector<8xf32>
    %217 = vector.shape_cast %216 : vector<8xf32> to vector<8x1xf32>
    %218 = vector.broadcast %217 : vector<8x1xf32> to vector<8x10xf32>
    %219 = arith.subf %215, %218 : vector<8x10xf32>
    %220 = math.exp %219 : vector<8x10xf32>
    %cst_81 = arith.constant dense<0.000000e+00> : vector<8xf32>
    %221 = vector.multi_reduction <add>, %220, %cst_81 [1] : vector<8x10xf32> to vector<8xf32>
    %222 = vector.shape_cast %221 : vector<8xf32> to vector<8x1xf32>
    %223 = tpu.reciprocal %222 {approx = true} : vector<8x1xf32> -> vector<8x1xf32>
    %224 = vector.broadcast %223 : vector<8x1xf32> to vector<8x10xf32>
    %225 = arith.mulf %220, %224 : vector<8x10xf32>
    %226 = arith.truncf %225 : vector<8x10xf32> to vector<8x10xbf16>
    %227 = vector.extract_strided_slice %148 {offsets = [0, 24], sizes = [10, 8], strides = [1, 1]} : vector<10x32xbf16> to vector<10x8xbf16>
    "tpu.trace_start"() <{level = 10 : i32, message = "qk,kd->qd"}> : () -> ()
    %cst_82 = arith.constant dense<0.000000e+00> : vector<8x8xf32>
    %228 = tpu.matmul %226, %227, %cst_82 {dimension_numbers = #tpu.dot_dimension_numbers<[1], [0], [0], [1], [0, 0, 1, 1], [], []>} : vector<8x10xbf16>, vector<10x8xbf16>, vector<8x8xf32> -> vector<8x8xf32>
    "tpu.trace_stop"() : () -> ()
    %229 = tpu.concatenate %168, %188, %208, %228 in 1 : vector<8x8xf32>, vector<8x8xf32>, vector<8x8xf32>, vector<8x8xf32> -> vector<8x32xf32>
    %230 = arith.truncf %229 : vector<8x32xf32> to vector<8x32xbf16>
    %cst_83 = arith.constant dense<0.000000e+00> : vector<8x32xf32>
    %231 = tpu.matmul %230, %145, %cst_83 {dimension_numbers = #tpu.dot_dimension_numbers<[1], [0], [0], [1], [0, 0, 1, 1], [], []>} : vector<8x32xbf16>, vector<32x32xbf16>, vector<8x32xf32> -> vector<8x32xf32>
    %c0_84 = arith.constant 0 : index
    %c0_85 = arith.constant 0 : index
    %232 = vector.load %arg17[%c0_84, %c0_85] : memref<1x32xf32, #tpu.memory_space<vmem>>, vector<1x32xf32>
    %233 = vector.broadcast %232 : vector<1x32xf32> to vector<8x32xf32>
    %234 = arith.addf %231, %233 : vector<8x32xf32>
    %235 = arith.addf %130, %234 : vector<8x32xf32>
    %c0_86 = arith.constant 0 : index
    %c0_87 = arith.constant 0 : index
    %236 = vector.load %arg18[%c0_86, %c0_87] : memref<1x32xf32, #tpu.memory_space<vmem>>, vector<1x32xf32>
    %c0_88 = arith.constant 0 : index
    %c0_89 = arith.constant 0 : index
    %237 = vector.load %arg19[%c0_88, %c0_89] : memref<1x32xf32, #tpu.memory_space<vmem>>, vector<1x32xf32>
    %cst_90 = arith.constant dense<0.000000e+00> : vector<8xf32>
    %238 = vector.multi_reduction <add>, %235, %cst_90 [1] : vector<8x32xf32> to vector<8xf32>
    %239 = vector.shape_cast %238 : vector<8xf32> to vector<8x1xf32>
    %cst_91 = arith.constant 3.200000e+01 : f32
    %240 = vector.broadcast %cst_91 : f32 to vector<8x1xf32>
    %241 = arith.divf %239, %240 : vector<8x1xf32>
    %242 = vector.broadcast %241 : vector<8x1xf32> to vector<8x32xf32>
    %243 = arith.subf %235, %242 : vector<8x32xf32>
    %244 = arith.mulf %243, %243 : vector<8x32xf32>
    %cst_92 = arith.constant dense<0.000000e+00> : vector<8xf32>
    %245 = vector.multi_reduction <add>, %244, %cst_92 [1] : vector<8x32xf32> to vector<8xf32>
    %246 = vector.shape_cast %245 : vector<8xf32> to vector<8x1xf32>
    %cst_93 = arith.constant 3.200000e+01 : f32
    %247 = vector.broadcast %cst_93 : f32 to vector<8x1xf32>
    %248 = arith.divf %246, %247 : vector<8x1xf32>
    %249 = vector.broadcast %241 : vector<8x1xf32> to vector<8x32xf32>
    %250 = arith.subf %235, %249 : vector<8x32xf32>
    %cst_94 = arith.constant 9.99999974E-6 : f32
    %251 = vector.broadcast %cst_94 : f32 to vector<8x1xf32>
    %252 = arith.addf %248, %251 : vector<8x1xf32>
    %253 = math.rsqrt %252 : vector<8x1xf32>
    %254 = vector.broadcast %253 : vector<8x1xf32> to vector<8x32xf32>
    %255 = arith.mulf %250, %254 : vector<8x32xf32>
    %256 = vector.broadcast %236 : vector<1x32xf32> to vector<8x32xf32>
    %257 = arith.mulf %255, %256 : vector<8x32xf32>
    %258 = vector.broadcast %237 : vector<1x32xf32> to vector<8x32xf32>
    %259 = arith.addf %257, %258 : vector<8x32xf32>
    %260 = arith.truncf %259 : vector<8x32xf32> to vector<8x32xbf16>
    %c0_95 = arith.constant 0 : index
    %c0_96 = arith.constant 0 : index
    %261 = vector.load %arg20[%c0_95, %c0_96] : memref<32x64xbf16, #tpu.memory_space<vmem>>, vector<32x64xbf16>
    %cst_97 = arith.constant dense<0.000000e+00> : vector<8x64xf32>
    %262 = tpu.matmul %260, %261, %cst_97 {dimension_numbers = #tpu.dot_dimension_numbers<[1], [0], [0], [1], [0, 0, 1, 1], [], []>} : vector<8x32xbf16>, vector<32x64xbf16>, vector<8x64xf32> -> vector<8x64xf32>
    %c0_98 = arith.constant 0 : index
    %c0_99 = arith.constant 0 : index
    %263 = vector.load %arg21[%c0_98, %c0_99] : memref<1x64xf32, #tpu.memory_space<vmem>>, vector<1x64xf32>
    %264 = vector.broadcast %263 : vector<1x64xf32> to vector<8x64xf32>
    %265 = arith.addf %262, %264 : vector<8x64xf32>
    %cst_100 = arith.constant 0.000000e+00 : f32
    %266 = vector.broadcast %cst_100 : f32 to vector<8x64xf32>
    %267 = arith.maximumf %265, %266 : vector<8x64xf32>
    %268 = arith.truncf %267 : vector<8x64xf32> to vector<8x64xbf16>
    %c0_101 = arith.constant 0 : index
    %c0_102 = arith.constant 0 : index
    %269 = vector.load %arg22[%c0_101, %c0_102] : memref<64x32xbf16, #tpu.memory_space<vmem>>, vector<64x32xbf16>
    %cst_103 = arith.constant dense<0.000000e+00> : vector<8x32xf32>
    %270 = tpu.matmul %268, %269, %cst_103 {dimension_numbers = #tpu.dot_dimension_numbers<[1], [0], [0], [1], [0, 0, 1, 1], [], []>} : vector<8x64xbf16>, vector<64x32xbf16>, vector<8x32xf32> -> vector<8x32xf32>
    %c0_104 = arith.constant 0 : index
    %c0_105 = arith.constant 0 : index
    %271 = vector.load %arg23[%c0_104, %c0_105] : memref<1x32xf32, #tpu.memory_space<vmem>>, vector<1x32xf32>
    %272 = vector.broadcast %271 : vector<1x32xf32> to vector<8x32xf32>
    %273 = arith.addf %270, %272 : vector<8x32xf32>
    %274 = arith.addf %259, %273 : vector<8x32xf32>
    %c0_106 = arith.constant 0 : index
    %c0_107 = arith.constant 0 : index
    %275 = vector.load %arg24[%c0_106, %c0_107] : memref<1x32xf32, #tpu.memory_space<vmem>>, vector<1x32xf32>
    %c0_108 = arith.constant 0 : index
    %c0_109 = arith.constant 0 : index
    %276 = vector.load %arg25[%c0_108, %c0_109] : memref<1x32xf32, #tpu.memory_space<vmem>>, vector<1x32xf32>
    %cst_110 = arith.constant dense<0.000000e+00> : vector<8xf32>
    %277 = vector.multi_reduction <add>, %274, %cst_110 [1] : vector<8x32xf32> to vector<8xf32>
    %278 = vector.shape_cast %277 : vector<8xf32> to vector<8x1xf32>
    %cst_111 = arith.constant 3.200000e+01 : f32
    %279 = vector.broadcast %cst_111 : f32 to vector<8x1xf32>
    %280 = arith.divf %278, %279 : vector<8x1xf32>
    %281 = vector.broadcast %280 : vector<8x1xf32> to vector<8x32xf32>
    %282 = arith.subf %274, %281 : vector<8x32xf32>
    %283 = arith.mulf %282, %282 : vector<8x32xf32>
    %cst_112 = arith.constant dense<0.000000e+00> : vector<8xf32>
    %284 = vector.multi_reduction <add>, %283, %cst_112 [1] : vector<8x32xf32> to vector<8xf32>
    %285 = vector.shape_cast %284 : vector<8xf32> to vector<8x1xf32>
    %cst_113 = arith.constant 3.200000e+01 : f32
    %286 = vector.broadcast %cst_113 : f32 to vector<8x1xf32>
    %287 = arith.divf %285, %286 : vector<8x1xf32>
    %288 = vector.broadcast %280 : vector<8x1xf32> to vector<8x32xf32>
    %289 = arith.subf %274, %288 : vector<8x32xf32>
    %cst_114 = arith.constant 9.99999974E-6 : f32
    %290 = vector.broadcast %cst_114 : f32 to vector<8x1xf32>
    %291 = arith.addf %287, %290 : vector<8x1xf32>
    %292 = math.rsqrt %291 : vector<8x1xf32>
    %293 = vector.broadcast %292 : vector<8x1xf32> to vector<8x32xf32>
    %294 = arith.mulf %289, %293 : vector<8x32xf32>
    %295 = vector.broadcast %275 : vector<1x32xf32> to vector<8x32xf32>
    %296 = arith.mulf %294, %295 : vector<8x32xf32>
    %297 = vector.broadcast %276 : vector<1x32xf32> to vector<8x32xf32>
    %298 = arith.addf %296, %297 : vector<8x32xf32>
    %c0_115 = arith.constant 0 : index
    %c0_116 = arith.constant 0 : index
    %c0_117 = arith.constant 0 : index
    %299 = vector.load %arg26[%c0_115, %c0_116, %c0_117] : memref<1x8x32xf32, #tpu.memory_space<vmem>>, vector<1x8x32xf32>
    %300 = vector.shape_cast %299 : vector<1x8x32xf32> to vector<8x32xf32>
    %301 = vector.shape_cast %298 : vector<8x32xf32> to vector<1x8x32xf32>
    tpu.vector_store %arg26[%c0_115, %c0_116, %c0_117], %301 {strides = array<i32>} : memref<1x8x32xf32, #tpu.memory_space<vmem>>, vector<1x8x32xf32>,
    return
  }
  func.func @transform_0(%arg0: i32) -> (i32, i32, i32) {
    %c0_i32 = arith.constant 0 : i32
    %c0_i32_0 = arith.constant 0 : i32
    %c0_i32_1 = arith.constant 0 : i32
    return %arg0, %c0_i32, %c0_i32_0 : i32, i32, i32
  }
  func.func @transform_1(%arg0: i32) -> (i32, i32, i32) {
    %c0_i32 = arith.constant 0 : i32
    %c0_i32_0 = arith.constant 0 : i32
    %c0_i32_1 = arith.constant 0 : i32
    return %arg0, %c0_i32, %c0_i32_0 : i32, i32, i32
  }
  func.func @transform_2(%arg0: i32) -> (i32, i32) {
    %c0_i32 = arith.constant 0 : i32
    %c0_i32_0 = arith.constant 0 : i32
    %c0_i32_1 = arith.constant 0 : i32
    return %c0_i32, %c0_i32_0 : i32, i32
  }
  func.func @transform_3(%arg0: i32) -> (i32, i32, i32) {
    %c0_i32 = arith.constant 0 : i32
    %c0_i32_0 = arith.constant 0 : i32
    %c0_i32_1 = arith.constant 0 : i32
    return %arg0, %c0_i32, %c0_i32_0 : i32, i32, i32
  }
  func.func @transform_4(%arg0: i32) -> (i32, i32, i32) {
    %c0_i32 = arith.constant 0 : i32
    %c0_i32_0 = arith.constant 0 : i32
    %c0_i32_1 = arith.constant 0 : i32
    return %arg0, %c0_i32, %c0_i32_0 : i32, i32, i32
  }
  func.func @transform_5(%arg0: i32) -> (i32, i32) {
    %c0_i32 = arith.constant 0 : i32
    %c0_i32_0 = arith.constant 0 : i32
    %c0_i32_1 = arith.constant 0 : i32
    return %c0_i32, %c0_i32_0 : i32, i32
  }
  func.func @transform_6(%arg0: i32) -> (i32, i32) {
    %c0_i32 = arith.constant 0 : i32
    %c0_i32_0 = arith.constant 0 : i32
    %c0_i32_1 = arith.constant 0 : i32
    return %c0_i32, %c0_i32_0 : i32, i32
  }
  func.func @transform_7(%arg0: i32) -> (i32, i32) {
    %c0_i32 = arith.constant 0 : i32
    %c0_i32_0 = arith.constant 0 : i32
    %c0_i32_1 = arith.constant 0 : i32
    return %c0_i32, %c0_i32_0 : i32, i32
  }
  func.func @transform_8(%arg0: i32) -> (i32, i32) {
    %c0_i32 = arith.constant 0 : i32
    %c0_i32_0 = arith.constant 0 : i32
    %c0_i32_1 = arith.constant 0 : i32
    return %c0_i32, %c0_i32_0 : i32, i32
  }
  func.func @transform_9(%arg0: i32) -> (i32, i32) {
    %c0_i32 = arith.constant 0 : i32
    %c0_i32_0 = arith.constant 0 : i32
    %c0_i32_1 = arith.constant 0 : i32
    return %c0_i32, %c0_i32_0 : i32, i32
  }
  func.func @transform_10(%arg0: i32) -> (i32, i32) {
    %c0_i32 = arith.constant 0 : i32
    %c0_i32_0 = arith.constant 0 : i32
    %c0_i32_1 = arith.constant 0 : i32
    return %c0_i32, %c0_i32_0 : i32, i32
  }
  func.func @transform_11(%arg0: i32) -> (i32, i32) {
    %c0_i32 = arith.constant 0 : i32
    %c0_i32_0 = arith.constant 0 : i32
    %c0_i32_1 = arith.constant 0 : i32
    return %c0_i32, %c0_i32_0 : i32, i32
  }
  func.func @transform_12(%arg0: i32) -> (i32, i32) {
    %c0_i32 = arith.constant 0 : i32
    %c0_i32_0 = arith.constant 0 : i32
    %c0_i32_1 = arith.constant 0 : i32
    return %c0_i32, %c0_i32_0 : i32, i32
  }
  func.func @transform_13(%arg0: i32) -> (i32, i32) {
    %c0_i32 = arith.constant 0 : i32
    %c0_i32_0 = arith.constant 0 : i32
    %c0_i32_1 = arith.constant 0 : i32
    return %c0_i32, %c0_i32_0 : i32, i32
  }
  func.func @transform_14(%arg0: i32) -> (i32, i32) {
    %c0_i32 = arith.constant 0 : i32
    %c0_i32_0 = arith.constant 0 : i32
    %c0_i32_1 = arith.constant 0 : i32
    return %c0_i32, %c0_i32_0 : i32, i32
  }
  func.func @transform_15(%arg0: i32) -> (i32, i32) {
    %c0_i32 = arith.constant 0 : i32
    %c0_i32_0 = arith.constant 0 : i32
    %c0_i32_1 = arith.constant 0 : i32
    return %c0_i32, %c0_i32_0 : i32, i32
  }
  func.func @transform_16(%arg0: i32) -> (i32, i32) {
    %c0_i32 = arith.constant 0 : i32
    %c0_i32_0 = arith.constant 0 : i32
    %c0_i32_1 = arith.constant 0 : i32
    return %c0_i32, %c0_i32_0 : i32, i32
  }
  func.func @transform_17(%arg0: i32) -> (i32, i32) {
    %c0_i32 = arith.constant 0 : i32
    %c0_i32_0 = arith.constant 0 : i32
    %c0_i32_1 = arith.constant 0 : i32
    return %c0_i32, %c0_i32_0 : i32, i32
  }
  func.func @transform_18(%arg0: i32) -> (i32, i32) {
    %c0_i32 = arith.constant 0 : i32
    %c0_i32_0 = arith.constant 0 : i32
    %c0_i32_1 = arith.constant 0 : i32
    return %c0_i32, %c0_i32_0 : i32, i32
  }
  func.func @transform_19(%arg0: i32) -> (i32, i32) {
    %c0_i32 = arith.constant 0 : i32
    %c0_i32_0 = arith.constant 0 : i32
    %c0_i32_1 = arith.constant 0 : i32
    return %c0_i32, %c0_i32_0 : i32, i32
  }
  func.func @transform_20(%arg0: i32) -> (i32, i32) {
    %c0_i32 = arith.constant 0 : i32
    %c0_i32_0 = arith.constant 0 : i32
    %c0_i32_1 = arith.constant 0 : i32
    return %c0_i32, %c0_i32_0 : i32, i32
  }
  func.func @transform_21(%arg0: i32) -> (i32, i32) {
    %c0_i32 = arith.constant 0 : i32
    %c0_i32_0 = arith.constant 0 : i32
    %c0_i32_1 = arith.constant 0 : i32
    return %c0_i32, %c0_i32_0 : i32, i32
  }
  func.func @transform_22(%arg0: i32) -> (i32, i32) {
    %c0_i32 = arith.constant 0 : i32
    %c0_i32_0 = arith.constant 0 : i32
    %c0_i32_1 = arith.constant 0 : i32
    return %c0_i32, %c0_i32_0 : i32, i32
  }
  func.func @transform_23(%arg0: i32) -> (i32, i32) {
    %c0_i32 = arith.constant 0 : i32
    %c0_i32_0 = arith.constant 0 : i32
    %c0_i32_1 = arith.constant 0 : i32
    return %c0_i32, %c0_i32_0 : i32, i32
  }
  func.func @transform_24(%arg0: i32) -> (i32, i32) {
    %c0_i32 = arith.constant 0 : i32
    %c0_i32_0 = arith.constant 0 : i32
    %c0_i32_1 = arith.constant 0 : i32
    return %c0_i32, %c0_i32_0 : i32, i32
  }
  func.func @transform_25(%arg0: i32) -> (i32, i32, i32) {
    %c0_i32 = arith.constant 0 : i32
    %c0_i32_0 = arith.constant 0 : i32
    %c0_i32_1 = arith.constant 0 : i32
    return %arg0, %c0_i32, %c0_i32_0 : i32, i32, i32
  }
}

module attributes {stable_mosaic.version = 11 : i64} {
  func.func @_decoder_layer_kernel(%arg0: i32, %arg1: memref<1x8x32xf32, #tpu.memory_space<vmem>>, %arg2: memref<1x10x32xf32, #tpu.memory_space<vmem>>, %arg3: memref<8x8xf32, #tpu.memory_space<vmem>>, %arg4: memref<1x1x8xf32, #tpu.memory_space<vmem>>, %arg5: memref<1x1x10xf32, #tpu.memory_space<vmem>>, %arg6: memref<32x96xbf16, #tpu.memory_space<vmem>>, %arg7: memref<1x96xf32, #tpu.memory_space<vmem>>, %arg8: memref<32x32xbf16, #tpu.memory_space<vmem>>, %arg9: memref<1x32xf32, #tpu.memory_space<vmem>>, %arg10: memref<1x32xf32, #tpu.memory_space<vmem>>, %arg11: memref<1x32xf32, #tpu.memory_space<vmem>>, %arg12: memref<32x32xbf16, #tpu.memory_space<vmem>>, %arg13: memref<1x32xf32, #tpu.memory_space<vmem>>, %arg14: memref<32x64xbf16, #tpu.memory_space<vmem>>, %arg15: memref<1x64xf32, #tpu.memory_space<vmem>>, %arg16: memref<32x32xbf16, #tpu.memory_space<vmem>>, %arg17: memref<1x32xf32, #tpu.memory_space<vmem>>, %arg18: memref<1x32xf32, #tpu.memory_space<vmem>>, %arg19: memref<1x32xf32, #tpu.memory_space<vmem>>, %arg20: memref<32x64xbf16, #tpu.memory_space<vmem>>, %arg21: memref<1x64xf32, #tpu.memory_space<vmem>>, %arg22: memref<64x32xbf16, #tpu.memory_space<vmem>>, %arg23: memref<1x32xf32, #tpu.memory_space<vmem>>, %arg24: memref<1x32xf32, #tpu.memory_space<vmem>>, %arg25: memref<1x32xf32, #tpu.memory_space<vmem>>, %arg26: memref<1x8x32xf32, #tpu.memory_space<vmem>>) attributes {dimension_semantics = [#tpu.dimension_semantics<parallel>], iteration_bounds = array<i64: 2>, scalar_prefetch = 0 : i64, scratch_operands = 0 : i64, tpu.core_type = #tpu.core_type<tc>, window_params = [{transform_indices = @transform_0, window_bounds = array<i64: 1, 8, 32>}, {transform_indices = @transform_1, window_bounds = array<i64: 1, 10, 32>}, {pipeline_mode = #tpu.pipeline_mode<synchronous>, transform_indices = @transform_2, window_bounds = array<i64: 8, 8>}, {transform_indices = @transform_3, window_bounds = array<i64: 1, 1, 8>}, {transform_indices = @transform_4, window_bounds = array<i64: 1, 1, 10>}, {pipeline_mode = #tpu.pipeline_mode<synchronous>, transform_indices = @transform_5, window_bounds = array<i64: 32, 96>}, {pipeline_mode = #tpu.pipeline_mode<synchronous>, transform_indices = @transform_6, window_bounds = array<i64: 1, 96>}, {pipeline_mode = #tpu.pipeline_mode<synchronous>, transform_indices = @transform_7, window_bounds = array<i64: 32, 32>}, {pipeline_mode = #tpu.pipeline_mode<synchronous>, transform_indices = @transform_8, window_bounds = array<i64: 1, 32>}, {pipeline_mode = #tpu.pipeline_mode<synchronous>, transform_indices = @transform_9, window_bounds = array<i64: 1, 32>}, {pipeline_mode = #tpu.pipeline_mode<synchronous>, transform_indices = @transform_10, window_bounds = array<i64: 1, 32>}, {pipeline_mode = #tpu.pipeline_mode<synchronous>, transform_indices = @transform_11, window_bounds = array<i64: 32, 32>}, {pipeline_mode = #tpu.pipeline_mode<synchronous>, transform_indices = @transform_12, window_bounds = array<i64: 1, 32>}, {pipeline_mode = #tpu.pipeline_mode<synchronous>, transform_indices = @transform_13, window_bounds = array<i64: 32, 64>}, {pipeline_mode = #tpu.pipeline_mode<synchronous>, transform_indices = @transform_14, window_bounds = array<i64: 1, 64>}, {pipeline_mode = #tpu.pipeline_mode<synchronous>, transform_indices = @transform_15, window_bounds = array<i64: 32, 32>}, {pipeline_mode = #tpu.pipeline_mode<synchronous>, transform_indices = @transform_16, window_bounds = array<i64: 1, 32>}, {pipeline_mode = #tpu.pipeline_mode<synchronous>, transform_indices = @transform_17, window_bounds = array<i64: 1, 32>}, {pipeline_mode = #tpu.pipeline_mode<synchronous>, transform_indices = @transform_18, window_bounds = array<i64: 1, 32>}, {pipeline_mode = #tpu.pipeline_mode<synchronous>, transform_indices = @transform_19, window_bounds = array<i64: 32, 64>}, {pipeline_mode = #tpu.pipeline_mode<synchronous>, transform_indices = @transform_20, window_bounds = array<i64: 1, 64>}, {pipeline_mode = #tpu.pipeline_mode<synchronous>, transform_indices = @transform_21, window_bounds = array<i64: 64, 32>}, {pipeline_mode = #tpu.pipeline_mode<synchronous>, transform_indices = @transform_22, window_bounds = array<i64: 1, 32>}, {pipeline_mode = #tpu.pipeline_mode<synchronous>, transform_indices = @transform_23, window_bounds = array<i64: 1, 32>}, {pipeline_mode = #tpu.pipeline_mode<synchronous>, transform_indices = @transform_24, window_bounds = array<i64: 1, 32>}, {transform_indices = @transform_25, window_bounds = array<i64: 1, 8, 32>}]} {
    %c0 = arith.constant 0 : index
    %c0_0 = arith.constant 0 : index
    %c0_1 = arith.constant 0 : index
    %0 = vector.load %arg1[%c0, %c0_0, %c0_1] : memref<1x8x32xf32, #tpu.memory_space<vmem>>, vector<1x8x32xf32>
    %1 = vector.shape_cast %0 : vector<1x8x32xf32> to vector<8x32xf32>
    %c0_2 = arith.constant 0 : index
    %c0_3 = arith.constant 0 : index
    %c0_4 = arith.constant 0 : index
    %2 = vector.load %arg2[%c0_2, %c0_3, %c0_4] : memref<1x10x32xf32, #tpu.memory_space<vmem>>, vector<1x10x32xf32>
    %3 = vector.shape_cast %2 : vector<1x10x32xf32> to vector<10x32xf32>
    %c0_5 = arith.constant 0 : index
    %c0_6 = arith.constant 0 : index
    %4 = vector.load %arg3[%c0_5, %c0_6] : memref<8x8xf32, #tpu.memory_space<vmem>>, vector<8x8xf32>
    %c0_7 = arith.constant 0 : index
    %c0_8 = arith.constant 0 : index
    %c0_9 = arith.constant 0 : index
    %5 = vector.load %arg4[%c0_7, %c0_8, %c0_9] : memref<1x1x8xf32, #tpu.memory_space<vmem>>, vector<1x1x8xf32>
    %6 = vector.shape_cast %5 : vector<1x1x8xf32> to vector<1x8xf32>
    %7 = vector.broadcast %6 : vector<1x8xf32> to vector<8x8xf32>
    %8 = arith.addf %4, %7 : vector<8x8xf32>
    %c0_10 = arith.constant 0 : index
    %c0_11 = arith.constant 0 : index
    %c0_12 = arith.constant 0 : index
    %9 = vector.load %arg5[%c0_10, %c0_11, %c0_12] : memref<1x1x10xf32, #tpu.memory_space<vmem>>, vector<1x1x10xf32>
    %10 = vector.shape_cast %9 : vector<1x1x10xf32> to vector<1x10xf32>
    %11 = arith.truncf %1 : vector<8x32xf32> to vector<8x32xbf16>
    %c0_13 = arith.constant 0 : index
    %c0_14 = arith.constant 0 : index
    %12 = vector.load %arg6[%c0_13, %c0_14] : memref<32x96xbf16, #tpu.memory_space<vmem>>, vector<32x96xbf16>
    %cst = arith.constant dense<0.000000e+00> : vector<8x96xf32>
    %13 = tpu.matmul %11, %12, %cst {dimension_numbers = #tpu.dot_dimension_numbers<[1], [0], [0], [1], [0, 0, 1, 1], [], []>} : vector<8x32xbf16>, vector<32x96xbf16>, vector<8x96xf32> -> vector<8x96xf32>
    %c0_15 = arith.constant 0 : index
    %c0_16 = arith.constant 0 : index
    %14 = vector.load %arg7[%c0_15, %c0_16] : memref<1x96xf32, #tpu.memory_space<vmem>>, vector<1x96xf32>
    %15 = vector.broadcast %14 : vector<1x96xf32> to vector<8x96xf32>
    %16 = arith.addf %13, %15 : vector<8x96xf32>
    %17 = vector.extract_strided_slice %16 {offsets = [0, 0], sizes = [8, 32], strides = [1, 1]} : vector<8x96xf32> to vector<8x32xf32>
    %18 = vector.extract_strided_slice %16 {offsets = [0, 32], sizes = [8, 32], strides = [1, 1]} : vector<8x96xf32> to vector<8x32xf32>
    %19 = vector.extract_strided_slice %16 {offsets = [0, 64], sizes = [8, 32], strides = [1, 1]} : vector<8x96xf32> to vector<8x32xf32>
    %c0_17 = arith.constant 0 : index
    %c0_18 = arith.constant 0 : index
    %20 = vector.load %arg8[%c0_17, %c0_18] : memref<32x32xbf16, #tpu.memory_space<vmem>>, vector<32x32xbf16>
    %21 = arith.truncf %17 : vector<8x32xf32> to vector<8x32xbf16>
    %22 = arith.truncf %18 : vector<8x32xf32> to vector<8x32xbf16>
    %23 = arith.truncf %19 : vector<8x32xf32> to vector<8x32xbf16>
    %24 = vector.extract_strided_slice %21 {offsets = [0, 0], sizes = [8, 8], strides = [1, 1]} : vector<8x32xbf16> to vector<8x8xbf16>
    %25 = vector.extract_strided_slice %22 {offsets = [0, 0], sizes = [8, 8], strides = [1, 1]} : vector<8x32xbf16> to vector<8x8xbf16>
    "tpu.trace_start"() <{level = 10 : i32, message = "qd,kd->qk"}> : () -> ()
    %cst_19 = arith.constant dense<0.000000e+00> : vector<8x8xf32>
    %26 = tpu.matmul %24, %25, %cst_19 {dimension_numbers = #tpu.dot_dimension_numbers<[1], [1], [0], [0], [0, 0, 1, 0], [], []>} : vector<8x8xbf16>, vector<8x8xbf16>, vector<8x8xf32> -> vector<8x8xf32>
    "tpu.trace_stop"() : () -> ()
    %cst_20 = arith.constant 0.353553385 : f32
    %27 = vector.broadcast %cst_20 : f32 to vector<8x8xf32>
    %28 = arith.mulf %26, %27 : vector<8x8xf32>
    %29 = arith.addf %28, %8 : vector<8x8xf32>
    %cst_21 = arith.constant dense<0xFF800000> : vector<8xf32>
    %30 = vector.multi_reduction <maximumf>, %29, %cst_21 [1] : vector<8x8xf32> to vector<8xf32>
    %31 = vector.shape_cast %30 : vector<8xf32> to vector<8x1xf32>
    %32 = vector.broadcast %31 : vector<8x1xf32> to vector<8x8xf32>
    %33 = arith.subf %29, %32 : vector<8x8xf32>
    %34 = math.exp %33 : vector<8x8xf32>
    %cst_22 = arith.constant dense<0.000000e+00> : vector<8xf32>
    %35 = vector.multi_reduction <add>, %34, %cst_22 [1] : vector<8x8xf32> to vector<8xf32>
    %36 = vector.shape_cast %35 : vector<8xf32> to vector<8x1xf32>
    %37 = tpu.reciprocal %36 {approx = true} : vector<8x1xf32> -> vector<8x1xf32>
    %38 = vector.broadcast %37 : vector<8x1xf32> to vector<8x8xf32>
    %39 = arith.mulf %34, %38 : vector<8x8xf32>
    %40 = arith.truncf %39 : vector<8x8xf32> to vector<8x8xbf16>
    %41 = vector.extract_strided_slice %23 {offsets = [0, 0], sizes = [8, 8], strides = [1, 1]} : vector<8x32xbf16> to vector<8x8xbf16>
    "tpu.trace_start"() <{level = 10 : i32, message = "qk,kd->qd"}> : () -> ()
    %cst_23 = arith.constant dense<0.000000e+00> : vector<8x8xf32>
    %42 = tpu.matmul %40, %41, %cst_23 {dimension_numbers = #tpu.dot_dimension_numbers<[1], [0], [0], [1], [0, 0, 1, 1], [], []>} : vector<8x8xbf16>, vector<8x8xbf16>, vector<8x8xf32> -> vector<8x8xf32>
    "tpu.trace_stop"() : () -> ()
    %43 = vector.extract_strided_slice %21 {offsets = [0, 8], sizes = [8, 8], strides = [1, 1]} : vector<8x32xbf16> to vector<8x8xbf16>
    %44 = vector.extract_strided_slice %22 {offsets = [0, 8], sizes = [8, 8], strides = [1, 1]} : vector<8x32xbf16> to vector<8x8xbf16>
    "tpu.trace_start"() <{level = 10 : i32, message = "qd,kd->qk"}> : () -> ()
    %cst_24 = arith.constant dense<0.000000e+00> : vector<8x8xf32>
    %45 = tpu.matmul %43, %44, %cst_24 {dimension_numbers = #tpu.dot_dimension_numbers<[1], [1], [0], [0], [0, 0, 1, 0], [], []>} : vector<8x8xbf16>, vector<8x8xbf16>, vector<8x8xf32> -> vector<8x8xf32>
    "tpu.trace_stop"() : () -> ()
    %cst_25 = arith.constant 0.353553385 : f32
    %46 = vector.broadcast %cst_25 : f32 to vector<8x8xf32>
    %47 = arith.mulf %45, %46 : vector<8x8xf32>
    %48 = arith.addf %47, %8 : vector<8x8xf32>
    %cst_26 = arith.constant dense<0xFF800000> : vector<8xf32>
    %49 = vector.multi_reduction <maximumf>, %48, %cst_26 [1] : vector<8x8xf32> to vector<8xf32>
    %50 = vector.shape_cast %49 : vector<8xf32> to vector<8x1xf32>
    %51 = vector.broadcast %50 : vector<8x1xf32> to vector<8x8xf32>
    %52 = arith.subf %48, %51 : vector<8x8xf32>
    %53 = math.exp %52 : vector<8x8xf32>
    %cst_27 = arith.constant dense<0.000000e+00> : vector<8xf32>
    %54 = vector.multi_reduction <add>, %53, %cst_27 [1] : vector<8x8xf32> to vector<8xf32>
    %55 = vector.shape_cast %54 : vector<8xf32> to vector<8x1xf32>
    %56 = tpu.reciprocal %55 {approx = true} : vector<8x1xf32> -> vector<8x1xf32>
    %57 = vector.broadcast %56 : vector<8x1xf32> to vector<8x8xf32>
    %58 = arith.mulf %53, %57 : vector<8x8xf32>
    %59 = arith.truncf %58 : vector<8x8xf32> to vector<8x8xbf16>
    %60 = vector.extract_strided_slice %23 {offsets = [0, 8], sizes = [8, 8], strides = [1, 1]} : vector<8x32xbf16> to vector<8x8xbf16>
    "tpu.trace_start"() <{level = 10 : i32, message = "qk,kd->qd"}> : () -> ()
    %cst_28 = arith.constant dense<0.000000e+00> : vector<8x8xf32>
    %61 = tpu.matmul %59, %60, %cst_28 {dimension_numbers = #tpu.dot_dimension_numbers<[1], [0], [0], [1], [0, 0, 1, 1], [], []>} : vector<8x8xbf16>, vector<8x8xbf16>, vector<8x8xf32> -> vector<8x8xf32>
    "tpu.trace_stop"() : () -> ()
    %62 = vector.extract_strided_slice %21 {offsets = [0, 16], sizes = [8, 8], strides = [1, 1]} : vector<8x32xbf16> to vector<8x8xbf16>
    %63 = vector.extract_strided_slice %22 {offsets = [0, 16], sizes = [8, 8], strides = [1, 1]} : vector<8x32xbf16> to vector<8x8xbf16>
    "tpu.trace_start"() <{level = 10 : i32, message = "qd,kd->qk"}> : () -> ()
    %cst_29 = arith.constant dense<0.000000e+00> : vector<8x8xf32>
    %64 = tpu.matmul %62, %63, %cst_29 {dimension_numbers = #tpu.dot_dimension_numbers<[1], [1], [0], [0], [0, 0, 1, 0], [], []>} : vector<8x8xbf16>, vector<8x8xbf16>, vector<8x8xf32> -> vector<8x8xf32>
    "tpu.trace_stop"() : () -> ()
    %cst_30 = arith.constant 0.353553385 : f32
    %65 = vector.broadcast %cst_30 : f32 to vector<8x8xf32>
    %66 = arith.mulf %64, %65 : vector<8x8xf32>
    %67 = arith.addf %66, %8 : vector<8x8xf32>
    %cst_31 = arith.constant dense<0xFF800000> : vector<8xf32>
    %68 = vector.multi_reduction <maximumf>, %67, %cst_31 [1] : vector<8x8xf32> to vector<8xf32>
    %69 = vector.shape_cast %68 : vector<8xf32> to vector<8x1xf32>
    %70 = vector.broadcast %69 : vector<8x1xf32> to vector<8x8xf32>
    %71 = arith.subf %67, %70 : vector<8x8xf32>
    %72 = math.exp %71 : vector<8x8xf32>
    %cst_32 = arith.constant dense<0.000000e+00> : vector<8xf32>
    %73 = vector.multi_reduction <add>, %72, %cst_32 [1] : vector<8x8xf32> to vector<8xf32>
    %74 = vector.shape_cast %73 : vector<8xf32> to vector<8x1xf32>
    %75 = tpu.reciprocal %74 {approx = true} : vector<8x1xf32> -> vector<8x1xf32>
    %76 = vector.broadcast %75 : vector<8x1xf32> to vector<8x8xf32>
    %77 = arith.mulf %72, %76 : vector<8x8xf32>
    %78 = arith.truncf %77 : vector<8x8xf32> to vector<8x8xbf16>
    %79 = vector.extract_strided_slice %23 {offsets = [0, 16], sizes = [8, 8], strides = [1, 1]} : vector<8x32xbf16> to vector<8x8xbf16>
    "tpu.trace_start"() <{level = 10 : i32, message = "qk,kd->qd"}> : () -> ()
    %cst_33 = arith.constant dense<0.000000e+00> : vector<8x8xf32>
    %80 = tpu.matmul %78, %79, %cst_33 {dimension_numbers = #tpu.dot_dimension_numbers<[1], [0], [0], [1], [0, 0, 1, 1], [], []>} : vector<8x8xbf16>, vector<8x8xbf16>, vector<8x8xf32> -> vector<8x8xf32>
    "tpu.trace_stop"() : () -> ()
    %81 = vector.extract_strided_slice %21 {offsets = [0, 24], sizes = [8, 8], strides = [1, 1]} : vector<8x32xbf16> to vector<8x8xbf16>
    %82 = vector.extract_strided_slice %22 {offsets = [0, 24], sizes = [8, 8], strides = [1, 1]} : vector<8x32xbf16> to vector<8x8xbf16>
    "tpu.trace_start"() <{level = 10 : i32, message = "qd,kd->qk"}> : () -> ()
    %cst_34 = arith.constant dense<0.000000e+00> : vector<8x8xf32>
    %83 = tpu.matmul %81, %82, %cst_34 {dimension_numbers = #tpu.dot_dimension_numbers<[1], [1], [0], [0], [0, 0, 1, 0], [], []>} : vector<8x8xbf16>, vector<8x8xbf16>, vector<8x8xf32> -> vector<8x8xf32>
    "tpu.trace_stop"() : () -> ()
    %cst_35 = arith.constant 0.353553385 : f32
    %84 = vector.broadcast %cst_35 : f32 to vector<8x8xf32>
    %85 = arith.mulf %83, %84 : vector<8x8xf32>
    %86 = arith.addf %85, %8 : vector<8x8xf32>
    %cst_36 = arith.constant dense<0xFF800000> : vector<8xf32>
    %87 = vector.multi_reduction <maximumf>, %86, %cst_36 [1] : vector<8x8xf32> to vector<8xf32>
    %88 = vector.shape_cast %87 : vector<8xf32> to vector<8x1xf32>
    %89 = vector.broadcast %88 : vector<8x1xf32> to vector<8x8xf32>
    %90 = arith.subf %86, %89 : vector<8x8xf32>
    %91 = math.exp %90 : vector<8x8xf32>
    %cst_37 = arith.constant dense<0.000000e+00> : vector<8xf32>
    %92 = vector.multi_reduction <add>, %91, %cst_37 [1] : vector<8x8xf32> to vector<8xf32>
    %93 = vector.shape_cast %92 : vector<8xf32> to vector<8x1xf32>
    %94 = tpu.reciprocal %93 {approx = true} : vector<8x1xf32> -> vector<8x1xf32>
    %95 = vector.broadcast %94 : vector<8x1xf32> to vector<8x8xf32>
    %96 = arith.mulf %91, %95 : vector<8x8xf32>
    %97 = arith.truncf %96 : vector<8x8xf32> to vector<8x8xbf16>
    %98 = vector.extract_strided_slice %23 {offsets = [0, 24], sizes = [8, 8], strides = [1, 1]} : vector<8x32xbf16> to vector<8x8xbf16>
    "tpu.trace_start"() <{level = 10 : i32, message = "qk,kd->qd"}> : () -> ()
    %cst_38 = arith.constant dense<0.000000e+00> : vector<8x8xf32>
    %99 = tpu.matmul %97, %98, %cst_38 {dimension_numbers = #tpu.dot_dimension_numbers<[1], [0], [0], [1], [0, 0, 1, 1], [], []>} : vector<8x8xbf16>, vector<8x8xbf16>, vector<8x8xf32> -> vector<8x8xf32>
    "tpu.trace_stop"() : () -> ()
    %100 = tpu.concatenate %42, %61, %80, %99 in 1 : vector<8x8xf32>, vector<8x8xf32>, vector<8x8xf32>, vector<8x8xf32> -> vector<8x32xf32>
    %101 = arith.truncf %100 : vector<8x32xf32> to vector<8x32xbf16>
    %cst_39 = arith.constant dense<0.000000e+00> : vector<8x32xf32>
    %102 = tpu.matmul %101, %20, %cst_39 {dimension_numbers = #tpu.dot_dimension_numbers<[1], [0], [0], [1], [0, 0, 1, 1], [], []>} : vector<8x32xbf16>, vector<32x32xbf16>, vector<8x32xf32> -> vector<8x32xf32>
    %c0_40 = arith.constant 0 : index
    %c0_41 = arith.constant 0 : index
    %103 = vector.load %arg9[%c0_40, %c0_41] : memref<1x32xf32, #tpu.memory_space<vmem>>, vector<1x32xf32>
    %104 = vector.broadcast %103 : vector<1x32xf32> to vector<8x32xf32>
    %105 = arith.addf %102, %104 : vector<8x32xf32>
    %106 = arith.addf %1, %105 : vector<8x32xf32>
    %c0_42 = arith.constant 0 : index
    %c0_43 = arith.constant 0 : index
    %107 = vector.load %arg10[%c0_42, %c0_43] : memref<1x32xf32, #tpu.memory_space<vmem>>, vector<1x32xf32>
    %c0_44 = arith.constant 0 : index
    %c0_45 = arith.constant 0 : index
    %108 = vector.load %arg11[%c0_44, %c0_45] : memref<1x32xf32, #tpu.memory_space<vmem>>, vector<1x32xf32>
    %cst_46 = arith.constant dense<0.000000e+00> : vector<8xf32>
    %109 = vector.multi_reduction <add>, %106, %cst_46 [1] : vector<8x32xf32> to vector<8xf32>
    %110 = vector.shape_cast %109 : vector<8xf32> to vector<8x1xf32>
    %cst_47 = arith.constant 3.200000e+01 : f32
    %111 = vector.broadcast %cst_47 : f32 to vector<8x1xf32>
    %112 = arith.divf %110, %111 : vector<8x1xf32>
    %113 = vector.broadcast %112 : vector<8x1xf32> to vector<8x32xf32>
    %114 = arith.subf %106, %113 : vector<8x32xf32>
    %115 = arith.mulf %114, %114 : vector<8x32xf32>
    %cst_48 = arith.constant dense<0.000000e+00> : vector<8xf32>
    %116 = vector.multi_reduction <add>, %115, %cst_48 [1] : vector<8x32xf32> to vector<8xf32>
    %117 = vector.shape_cast %116 : vector<8xf32> to vector<8x1xf32>
    %cst_49 = arith.constant 3.200000e+01 : f32
    %118 = vector.broadcast %cst_49 : f32 to vector<8x1xf32>
    %119 = arith.divf %117, %118 : vector<8x1xf32>
    %120 = vector.broadcast %112 : vector<8x1xf32> to vector<8x32xf32>
    %121 = arith.subf %106, %120 : vector<8x32xf32>
    %cst_50 = arith.constant 9.99999974E-6 : f32
    %122 = vector.broadcast %cst_50 : f32 to vector<8x1xf32>
    %123 = arith.addf %119, %122 : vector<8x1xf32>
    %124 = math.rsqrt %123 : vector<8x1xf32>
    %125 = vector.broadcast %124 : vector<8x1xf32> to vector<8x32xf32>
    %126 = arith.mulf %121, %125 : vector<8x32xf32>
    %127 = vector.broadcast %107 : vector<1x32xf32> to vector<8x32xf32>
    %128 = arith.mulf %126, %127 : vector<8x32xf32>
    %129 = vector.broadcast %108 : vector<1x32xf32> to vector<8x32xf32>
    %130 = arith.addf %128, %129 : vector<8x32xf32>
    %131 = arith.truncf %130 : vector<8x32xf32> to vector<8x32xbf16>
    %c0_51 = arith.constant 0 : index
    %c0_52 = arith.constant 0 : index
    %132 = vector.load %arg12[%c0_51, %c0_52] : memref<32x32xbf16, #tpu.memory_space<vmem>>, vector<32x32xbf16>
    %cst_53 = arith.constant dense<0.000000e+00> : vector<8x32xf32>
    %133 = tpu.matmul %131, %132, %cst_53 {dimension_numbers = #tpu.dot_dimension_numbers<[1], [0], [0], [1], [0, 0, 1, 1], [], []>} : vector<8x32xbf16>, vector<32x32xbf16>, vector<8x32xf32> -> vector<8x32xf32>
    %c0_54 = arith.constant 0 : index
    %c0_55 = arith.constant 0 : index
    %134 = vector.load %arg13[%c0_54, %c0_55] : memref<1x32xf32, #tpu.memory_space<vmem>>, vector<1x32xf32>
    %135 = vector.broadcast %134 : vector<1x32xf32> to vector<8x32xf32>
    %136 = arith.addf %133, %135 : vector<8x32xf32>
    %137 = arith.truncf %3 : vector<10x32xf32> to vector<10x32xbf16>
    %c0_56 = arith.constant 0 : index
    %c0_57 = arith.constant 0 : index
    %138 = vector.load %arg14[%c0_56, %c0_57] : memref<32x64xbf16, #tpu.memory_space<vmem>>, vector<32x64xbf16>
    %cst_58 = arith.constant dense<0.000000e+00> : vector<10x64xf32>
    %139 = tpu.matmul %137, %138, %cst_58 {dimension_numbers = #tpu.dot_dimension_numbers<[1], [0], [0], [1], [0, 0, 1, 1], [], []>} : vector<10x32xbf16>, vector<32x64xbf16>, vector<10x64xf32> -> vector<10x64xf32>
    %c0_59 = arith.constant 0 : index
    %c0_60 = arith.constant 0 : index
    %140 = vector.load %arg15[%c0_59, %c0_60] : memref<1x64xf32, #tpu.memory_space<vmem>>, vector<1x64xf32>
    %141 = vector.broadcast %140 : vector<1x64xf32> to vector<10x64xf32>
    %142 = arith.addf %139, %141 : vector<10x64xf32>
    %143 = vector.extract_strided_slice %142 {offsets = [0, 0], sizes = [10, 32], strides = [1, 1]} : vector<10x64xf32> to vector<10x32xf32>
    %144 = vector.extract_strided_slice %142 {offsets = [0, 32], sizes = [10, 32], strides = [1, 1]} : vector<10x64xf32> to vector<10x32xf32>
    %c0_61 = arith.constant 0 : index
    %c0_62 = arith.constant 0 : index
    %145 = vector.load %arg16[%c0_61, %c0_62] : memref<32x32xbf16, #tpu.memory_space<vmem>>, vector<32x32xbf16>
    %146 = arith.truncf %136 : vector<8x32xf32> to vector<8x32xbf16>
    %147 = arith.truncf %143 : vector<10x32xf32> to vector<10x32xbf16>
    %148 = arith.truncf %144 : vector<10x32xf32> to vector<10x32xbf16>
    %149 = vector.extract_strided_slice %146 {offsets = [0, 0], sizes = [8, 8], strides = [1, 1]} : vector<8x32xbf16> to vector<8x8xbf16>
    %150 = vector.extract_strided_slice %147 {offsets = [0, 0], sizes = [10, 8], strides = [1, 1]} : vector<10x32xbf16> to vector<10x8xbf16>
    "tpu.trace_start"() <{level = 10 : i32, message = "qd,kd->qk"}> : () -> ()
    %cst_63 = arith.constant dense<0.000000e+00> : vector<8x10xf32>
    %151 = tpu.matmul %149, %150, %cst_63 {dimension_numbers = #tpu.dot_dimension_numbers<[1], [1], [0], [0], [0, 0, 1, 0], [], []>} : vector<8x8xbf16>, vector<10x8xbf16>, vector<8x10xf32> -> vector<8x10xf32>
    "tpu.trace_stop"() : () -> ()
    %cst_64 = arith.constant 0.353553385 : f32
    %152 = vector.broadcast %cst_64 : f32 to vector<8x10xf32>
    %153 = arith.mulf %151, %152 : vector<8x10xf32>
    %154 = vector.broadcast %10 : vector<1x10xf32> to vector<8x10xf32>
    %155 = arith.addf %153, %154 : vector<8x10xf32>
    %cst_65 = arith.constant dense<0xFF800000> : vector<8xf32>
    %156 = vector.multi_reduction <maximumf>, %155, %cst_65 [1] : vector<8x10xf32> to vector<8xf32>
    %157 = vector.shape_cast %156 : vector<8xf32> to vector<8x1xf32>
    %158 = vector.broadcast %157 : vector<8x1xf32> to vector<8x10xf32>
    %159 = arith.subf %155, %158 : vector<8x10xf32>
    %160 = math.exp %159 : vector<8x10xf32>
    %cst_66 = arith.constant dense<0.000000e+00> : vector<8xf32>
    %161 = vector.multi_reduction <add>, %160, %cst_66 [1] : vector<8x10xf32> to vector<8xf32>
    %162 = vector.shape_cast %161 : vector<8xf32> to vector<8x1xf32>
    %163 = tpu.reciprocal %162 {approx = true} : vector<8x1xf32> -> vector<8x1xf32>
    %164 = vector.broadcast %163 : vector<8x1xf32> to vector<8x10xf32>
    %165 = arith.mulf %160, %164 : vector<8x10xf32>
    %166 = arith.truncf %165 : vector<8x10xf32> to vector<8x10xbf16>
    %167 = vector.extract_strided_slice %148 {offsets = [0, 0], sizes = [10, 8], strides = [1, 1]} : vector<10x32xbf16> to vector<10x8xbf16>
    "tpu.trace_start"() <{level = 10 : i32, message = "qk,kd->qd"}> : () -> ()
    %cst_67 = arith.constant dense<0.000000e+00> : vector<8x8xf32>
    %168 = tpu.matmul %166, %167, %cst_67 {dimension_numbers = #tpu.dot_dimension_numbers<[1], [0], [0], [1], [0, 0, 1, 1], [], []>} : vector<8x10xbf16>, vector<10x8xbf16>, vector<8x8xf32> -> vector<8x8xf32>
    "tpu.trace_stop"() : () -> ()
    %169 = vector.extract_strided_slice %146 {offsets = [0, 8], sizes = [8, 8], strides = [1, 1]} : vector<8x32xbf16> to vector<8x8xbf16>
    %170 = vector.extract_strided_slice %147 {offsets = [0, 8], sizes = [10, 8], strides = [1, 1]} : vector<10x32xbf16> to vector<10x8xbf16>
    "tpu.trace_start"() <{level = 10 : i32, message = "qd,kd->qk"}> : () -> ()
    %cst_68 = arith.constant dense<0.000000e+00> : vector<8x10xf32>
    %171 = tpu.matmul %169, %170, %cst_68 {dimension_numbers = #tpu.dot_dimension_numbers<[1], [1], [0], [0], [0, 0, 1, 0], [], []>} : vector<8x8xbf16>, vector<10x8xbf16>, vector<8x10xf32> -> vector<8x10xf32>
    "tpu.trace_stop"() : () -> ()
    %cst_69 = arith.constant 0.353553385 : f32
    %172 = vector.broadcast %cst_69 : f32 to vector<8x10xf32>
    %173 = arith.mulf %171, %172 : vector<8x10xf32>
    %174 = vector.broadcast %10 : vector<1x10xf32> to vector<8x10xf32>
    %175 = arith.addf %173, %174 : vector<8x10xf32>
    %cst_70 = arith.constant dense<0xFF800000> : vector<8xf32>
    %176 = vector.multi_reduction <maximumf>, %175, %cst_70 [1] : vector<8x10xf32> to vector<8xf32>
    %177 = vector.shape_cast %176 : vector<8xf32> to vector<8x1xf32>
    %178 = vector.broadcast %177 : vector<8x1xf32> to vector<8x10xf32>
    %179 = arith.subf %175, %178 : vector<8x10xf32>
    %180 = math.exp %179 : vector<8x10xf32>
    %cst_71 = arith.constant dense<0.000000e+00> : vector<8xf32>
    %181 = vector.multi_reduction <add>, %180, %cst_71 [1] : vector<8x10xf32> to vector<8xf32>
    %182 = vector.shape_cast %181 : vector<8xf32> to vector<8x1xf32>
    %183 = tpu.reciprocal %182 {approx = true} : vector<8x1xf32> -> vector<8x1xf32>
    %184 = vector.broadcast %183 : vector<8x1xf32> to vector<8x10xf32>
    %185 = arith.mulf %180, %184 : vector<8x10xf32>
    %186 = arith.truncf %185 : vector<8x10xf32> to vector<8x10xbf16>
    %187 = vector.extract_strided_slice %148 {offsets = [0, 8], sizes = [10, 8], strides = [1, 1]} : vector<10x32xbf16> to vector<10x8xbf16>
    "tpu.trace_start"() <{level = 10 : i32, message = "qk,kd->qd"}> : () -> ()
    %cst_72 = arith.constant dense<0.000000e+00> : vector<8x8xf32>
    %188 = tpu.matmul %186, %187, %cst_72 {dimension_numbers = #tpu.dot_dimension_numbers<[1], [0], [0], [1], [0, 0, 1, 1], [], []>} : vector<8x10xbf16>, vector<10x8xbf16>, vector<8x8xf32> -> vector<8x8xf32>
    "tpu.trace_stop"() : () -> ()
    %189 = vector.extract_strided_slice %146 {offsets = [0, 16], sizes = [8, 8], strides = [1, 1]} : vector<8x32xbf16> to vector<8x8xbf16>
    %190 = vector.extract_strided_slice %147 {offsets = [0, 16], sizes = [10, 8], strides = [1, 1]} : vector<10x32xbf16> to vector<10x8xbf16>
    "tpu.trace_start"() <{level = 10 : i32, message = "qd,kd->qk"}> : () -> ()
    %cst_73 = arith.constant dense<0.000000e+00> : vector<8x10xf32>
    %191 = tpu.matmul %189, %190, %cst_73 {dimension_numbers = #tpu.dot_dimension_numbers<[1], [1], [0], [0], [0, 0, 1, 0], [], []>} : vector<8x8xbf16>, vector<10x8xbf16>, vector<8x10xf32> -> vector<8x10xf32>
    "tpu.trace_stop"() : () -> ()
    %cst_74 = arith.constant 0.353553385 : f32
    %192 = vector.broadcast %cst_74 : f32 to vector<8x10xf32>
    %193 = arith.mulf %191, %192 : vector<8x10xf32>
    %194 = vector.broadcast %10 : vector<1x10xf32> to vector<8x10xf32>
    %195 = arith.addf %193, %194 : vector<8x10xf32>
    %cst_75 = arith.constant dense<0xFF800000> : vector<8xf32>
    %196 = vector.multi_reduction <maximumf>, %195, %cst_75 [1] : vector<8x10xf32> to vector<8xf32>
    %197 = vector.shape_cast %196 : vector<8xf32> to vector<8x1xf32>
    %198 = vector.broadcast %197 : vector<8x1xf32> to vector<8x10xf32>
    %199 = arith.subf %195, %198 : vector<8x10xf32>
    %200 = math.exp %199 : vector<8x10xf32>
    %cst_76 = arith.constant dense<0.000000e+00> : vector<8xf32>
    %201 = vector.multi_reduction <add>, %200, %cst_76 [1] : vector<8x10xf32> to vector<8xf32>
    %202 = vector.shape_cast %201 : vector<8xf32> to vector<8x1xf32>
    %203 = tpu.reciprocal %202 {approx = true} : vector<8x1xf32> -> vector<8x1xf32>
    %204 = vector.broadcast %203 : vector<8x1xf32> to vector<8x10xf32>
    %205 = arith.mulf %200, %204 : vector<8x10xf32>
    %206 = arith.truncf %205 : vector<8x10xf32> to vector<8x10xbf16>
    %207 = vector.extract_strided_slice %148 {offsets = [0, 16], sizes = [10, 8], strides = [1, 1]} : vector<10x32xbf16> to vector<10x8xbf16>
    "tpu.trace_start"() <{level = 10 : i32, message = "qk,kd->qd"}> : () -> ()
    %cst_77 = arith.constant dense<0.000000e+00> : vector<8x8xf32>
    %208 = tpu.matmul %206, %207, %cst_77 {dimension_numbers = #tpu.dot_dimension_numbers<[1], [0], [0], [1], [0, 0, 1, 1], [], []>} : vector<8x10xbf16>, vector<10x8xbf16>, vector<8x8xf32> -> vector<8x8xf32>
    "tpu.trace_stop"() : () -> ()
    %209 = vector.extract_strided_slice %146 {offsets = [0, 24], sizes = [8, 8], strides = [1, 1]} : vector<8x32xbf16> to vector<8x8xbf16>
    %210 = vector.extract_strided_slice %147 {offsets = [0, 24], sizes = [10, 8], strides = [1, 1]} : vector<10x32xbf16> to vector<10x8xbf16>
    "tpu.trace_start"() <{level = 10 : i32, message = "qd,kd->qk"}> : () -> ()
    %cst_78 = arith.constant dense<0.000000e+00> : vector<8x10xf32>
    %211 = tpu.matmul %209, %210, %cst_78 {dimension_numbers = #tpu.dot_dimension_numbers<[1], [1], [0], [0], [0, 0, 1, 0], [], []>} : vector<8x8xbf16>, vector<10x8xbf16>, vector<8x10xf32> -> vector<8x10xf32>
    "tpu.trace_stop"() : () -> ()
    %cst_79 = arith.constant 0.353553385 : f32
    %212 = vector.broadcast %cst_79 : f32 to vector<8x10xf32>
    %213 = arith.mulf %211, %212 : vector<8x10xf32>
    %214 = vector.broadcast %10 : vector<1x10xf32> to vector<8x10xf32>
    %215 = arith.addf %213, %214 : vector<8x10xf32>
    %cst_80 = arith.constant dense<0xFF800000> : vector<8xf32>
    %216 = vector.multi_reduction <maximumf>, %215, %cst_80 [1] : vector<8x10xf32> to vector<8xf32>
    %217 = vector.shape_cast %216 : vector<8xf32> to vector<8x1xf32>
    %218 = vector.broadcast %217 : vector<8x1xf32> to vector<8x10xf32>
    %219 = arith.subf %215, %218 : vector<8x10xf32>
    %220 = math.exp %219 : vector<8x10xf32>
    %cst_81 = arith.constant dense<0.000000e+00> : vector<8xf32>
    %221 = vector.multi_reduction <add>, %220, %cst_81 [1] : vector<8x10xf32> to vector<8xf32>
    %222 = vector.shape_cast %221 : vector<8xf32> to vector<8x1xf32>
    %223 = tpu.reciprocal %222 {approx = true} : vector<8x1xf32> -> vector<8x1xf32>
    %224 = vector.broadcast %223 : vector<8x1xf32> to vector<8x10xf32>
    %225 = arith.mulf %220, %224 : vector<8x10xf32>
    %226 = arith.truncf %225 : vector<8x10xf32> to vector<8x10xbf16>
    %227 = vector.extract_strided_slice %148 {offsets = [0, 24], sizes = [10, 8], strides = [1, 1]} : vector<10x32xbf16> to vector<10x8xbf16>
    "tpu.trace_start"() <{level = 10 : i32, message = "qk,kd->qd"}> : () -> ()
    %cst_82 = arith.constant dense<0.000000e+00> : vector<8x8xf32>
    %228 = tpu.matmul %226, %227, %cst_82 {dimension_numbers = #tpu.dot_dimension_numbers<[1], [0], [0], [1], [0, 0, 1, 1], [], []>} : vector<8x10xbf16>, vector<10x8xbf16>, vector<8x8xf32> -> vector<8x8xf32>
    "tpu.trace_stop"() : () -> ()
    %229 = tpu.concatenate %168, %188, %208, %228 in 1 : vector<8x8xf32>, vector<8x8xf32>, vector<8x8xf32>, vector<8x8xf32> -> vector<8x32xf32>
    %230 = arith.truncf %229 : vector<8x32xf32> to vector<8x32xbf16>
    %cst_83 = arith.constant dense<0.000000e+00> : vector<8x32xf32>
    %231 = tpu.matmul %230, %145, %cst_83 {dimension_numbers = #tpu.dot_dimension_numbers<[1], [0], [0], [1], [0, 0, 1, 1], [], []>} : vector<8x32xbf16>, vector<32x32xbf16>, vector<8x32xf32> -> vector<8x32xf32>
    %c0_84 = arith.constant 0 : index
    %c0_85 = arith.constant 0 : index
    %232 = vector.load %arg17[%c0_84, %c0_85] : memref<1x32xf32, #tpu.memory_space<vmem>>, vector<1x32xf32>
    %233 = vector.broadcast %232 : vector<1x32xf32> to vector<8x32xf32>
    %234 = arith.addf %231, %233 : vector<8x32xf32>
    %235 = arith.addf %130, %234 : vector<8x32xf32>
    %c0_86 = arith.constant 0 : index
    %c0_87 = arith.constant 0 : index
    %236 = vector.load %arg18[%c0_86, %c0_87] : memref<1x32xf32, #tpu.memory_space<vmem>>, vector<1x32xf32>
    %c0_88 = arith.constant 0 : index
    %c0_89 = arith.constant 0 : index
    %237 = vector.load %arg19[%c0_88, %c0_89] : memref<1x32xf32, #tpu.memory_space<vmem>>, vector<1x32xf32>
    %cst_90 = arith.constant dense<0.000000e+00> : vector<8xf32>
    %238 = vector.multi_reduction <add>, %235, %cst_90 [1] : vector<8x32xf32> to vector<8xf32>
    %239 = vector.shape_cast %238 : vector<8xf32> to vector<8x1xf32>
    %cst_91 = arith.constant 3.200000e+01 : f32
    %240 = vector.broadcast %cst_91 : f32 to vector<8x1xf32>
    %241 = arith.divf %239, %240 : vector<8x1xf32>
    %242 = vector.broadcast %241 : vector<8x1xf32> to vector<8x32xf32>
    %243 = arith.subf %235, %242 : vector<8x32xf32>
    %244 = arith.mulf %243, %243 : vector<8x32xf32>
    %cst_92 = arith.constant dense<0.000000e+00> : vector<8xf32>
    %245 = vector.multi_reduction <add>, %244, %cst_92 [1] : vector<8x32xf32> to vector<8xf32>
    %246 = vector.shape_cast %245 : vector<8xf32> to vector<8x1xf32>
    %cst_93 = arith.constant 3.200000e+01 : f32
    %247 = vector.broadcast %cst_93 : f32 to vector<8x1xf32>
    %248 = arith.divf %246, %247 : vector<8x1xf32>
    %249 = vector.broadcast %241 : vector<8x1xf32> to vector<8x32xf32>
    %250 = arith.subf %235, %249 : vector<8x32xf32>
    %cst_94 = arith.constant 9.99999974E-6 : f32
    %251 = vector.broadcast %cst_94 : f32 to vector<8x1xf32>
    %252 = arith.addf %248, %251 : vector<8x1xf32>
    %253 = math.rsqrt %252 : vector<8x1xf32>
    %254 = vector.broadcast %253 : vector<8x1xf32> to vector<8x32xf32>
    %255 = arith.mulf %250, %254 : vector<8x32xf32>
    %256 = vector.broadcast %236 : vector<1x32xf32> to vector<8x32xf32>
    %257 = arith.mulf %255, %256 : vector<8x32xf32>
    %258 = vector.broadcast %237 : vector<1x32xf32> to vector<8x32xf32>
    %259 = arith.addf %257, %258 : vector<8x32xf32>
    %260 = arith.truncf %259 : vector<8x32xf32> to vector<8x32xbf16>
    %c0_95 = arith.constant 0 : index
    %c0_96 = arith.constant 0 : index
    %261 = vector.load %arg20[%c0_95, %c0_96] : memref<32x64xbf16, #tpu.memory_space<vmem>>, vector<32x64xbf16>
    %cst_97 = arith.constant dense<0.000000e+00> : vector<8x64xf32>
    %262 = tpu.matmul %260, %261, %cst_97 {dimension_numbers = #tpu.dot_dimension_numbers<[1], [0], [0], [1], [0, 0, 1, 1], [], []>} : vector<8x32xbf16>, vector<32x64xbf16>, vector<8x64xf32> -> vector<8x64xf32>
    %c0_98 = arith.constant 0 : index
    %c0_99 = arith.constant 0 : index
    %263 = vector.load %arg21[%c0_98, %c0_99] : memref<1x64xf32, #tpu.memory_space<vmem>>, vector<1x64xf32>
    %264 = vector.broadcast %263 : vector<1x64xf32> to vector<8x64xf32>
    %265 = arith.addf %262, %264 : vector<8x64xf32>
    %cst_100 = arith.constant 0.000000e+00 : f32
    %266 = vector.broadcast %cst_100 : f32 to vector<8x64xf32>
    %267 = arith.maximumf %265, %266 : vector<8x64xf32>
    %268 = arith.truncf %267 : vector<8x64xf32> to vector<8x64xbf16>
    %c0_101 = arith.constant 0 : index
    %c0_102 = arith.constant 0 : index
    %269 = vector.load %arg22[%c0_101, %c0_102] : memref<64x32xbf16, #tpu.memory_space<vmem>>, vector<64x32xbf16>
    %cst_103 = arith.constant dense<0.000000e+00> : vector<8x32xf32>
    %270 = tpu.matmul %268, %269, %cst_103 {dimension_numbers = #tpu.dot_dimension_numbers<[1], [0], [0], [1], [0, 0, 1, 1], [], []>} : vector<8x64xbf16>, vector<64x32xbf16>, vector<8x32xf32> -> vector<8x32xf32>
    %c0_104 = arith.constant 0 : index
    %c0_105 = arith.constant 0 : index
    %271 = vector.load %arg23[%c0_104, %c0_105] : memref<1x32xf32, #tpu.memory_space<vmem>>, vector<1x32xf32>
    %272 = vector.broadcast %271 : vector<1x32xf32> to vector<8x32xf32>
    %273 = arith.addf %270, %272 : vector<8x32xf32>
    %274 = arith.addf %259, %273 : vector<8x32xf32>
    %c0_106 = arith.constant 0 : index
    %c0_107 = arith.constant 0 : index
    %275 = vector.load %arg24[%c0_106, %c0_107] : memref<1x32xf32, #tpu.memory_space<vmem>>, vector<1x32xf32>
    %c0_108 = arith.constant 0 : index
    %c0_109 = arith.constant 0 : index
    %276 = vector.load %arg25[%c0_108, %c0_109] : memref<1x32xf32, #tpu.memory_space<vmem>>, vector<1x32xf32>
    %cst_110 = arith.constant dense<0.000000e+00> : vector<8xf32>
    %277 = vector.multi_reduction <add>, %274, %cst_110 [1] : vector<8x32xf32> to vector<8xf32>
    %278 = vector.shape_cast %277 : vector<8xf32> to vector<8x1xf32>
    %cst_111 = arith.constant 3.200000e+01 : f32
    %279 = vector.broadcast %cst_111 : f32 to vector<8x1xf32>
    %280 = arith.divf %278, %279 : vector<8x1xf32>
    %281 = vector.broadcast %280 : vector<8x1xf32> to vector<8x32xf32>
    %282 = arith.subf %274, %281 : vector<8x32xf32>
    %283 = arith.mulf %282, %282 : vector<8x32xf32>
    %cst_112 = arith.constant dense<0.000000e+00> : vector<8xf32>
    %284 = vector.multi_reduction <add>, %283, %cst_112 [1] : vector<8x32xf32> to vector<8xf32>
    %285 = vector.shape_cast %284 : vector<8xf32> to vector<8x1xf32>
    %cst_113 = arith.constant 3.200000e+01 : f32
    %286 = vector.broadcast %cst_113 : f32 to vector<8x1xf32>
    %287 = arith.divf %285, %286 : vector<8x1xf32>
    %288 = vector.broadcast %280 : vector<8x1xf32> to vector<8x32xf32>
    %289 = arith.subf %274, %288 : vector<8x32xf32>
    %cst_114 = arith.constant 9.99999974E-6 : f32
    %290 = vector.broadcast %cst_114 : f32 to vector<8x1xf32>
    %291 = arith.addf %287, %290 : vector<8x1xf32>
    %292 = math.rsqrt %291 : vector<8x1xf32>
    %293 = vector.broadcast %292 : vector<8x1xf32> to vector<8x32xf32>
    %294 = arith.mulf %289, %293 : vector<8x32xf32>
    %295 = vector.broadcast %275 : vector<1x32xf32> to vector<8x32xf32>
    %296 = arith.mulf %294, %295 : vector<8x32xf32>
    %297 = vector.broadcast %276 : vector<1x32xf32> to vector<8x32xf32>
    %298 = arith.addf %296, %297 : vector<8x32xf32>
    %c0_115 = arith.constant 0 : index
    %c0_116 = arith.constant 0 : index
    %c0_117 = arith.constant 0 : index
    %299 = vector.load %arg26[%c0_115, %c0_116, %c0_117] : memref<1x8x32xf32, #tpu.memory_space<vmem>>, vector<1x8x32xf32>
    %300 = vector.shape_cast %299 : vector<1x8x32xf32> to vector<8x32xf32>
    %301 = vector.shape_cast %298 : vector<8x32xf32> to vector<1x8x32xf32>
    tpu.vector_store %arg26[%c0_115, %c0_116, %c0_117], %301 {strides = array<i32>} : memref<1x8x32xf32, #tpu.memory_space<vmem>>, vector<1x8x32xf32>,
    return
  }
  func.func @transform_0(%arg0: i32) -> (i32, i32, i32) {
    %c0_i32 = arith.constant 0 : i32
    %c0_i32_0 = arith.constant 0 : i32
    %c0_i32_1 = arith.constant 0 : i32
    return %arg0, %c0_i32, %c0_i32_0 : i32, i32, i32
  }
  func.func @transform_1(%arg0: i32) -> (i32, i32, i32) {
    %c0_i32 = arith.constant 0 : i32
    %c0_i32_0 = arith.constant 0 : i32
    %c0_i32_1 = arith.constant 0 : i32
    return %arg0, %c0_i32, %c0_i32_0 : i32, i32, i32
  }
  func.func @transform_2(%arg0: i32) -> (i32, i32) {
    %c0_i32 = arith.constant 0 : i32
    %c0_i32_0 = arith.constant 0 : i32
    %c0_i32_1 = arith.constant 0 : i32
    return %c0_i32, %c0_i32_0 : i32, i32
  }
  func.func @transform_3(%arg0: i32) -> (i32, i32, i32) {
    %c0_i32 = arith.constant 0 : i32
    %c0_i32_0 = arith.constant 0 : i32
    %c0_i32_1 = arith.constant 0 : i32
    return %arg0, %c0_i32, %c0_i32_0 : i32, i32, i32
  }
  func.func @transform_4(%arg0: i32) -> (i32, i32, i32) {
    %c0_i32 = arith.constant 0 : i32
    %c0_i32_0 = arith.constant 0 : i32
    %c0_i32_1 = arith.constant 0 : i32
    return %arg0, %c0_i32, %c0_i32_0 : i32, i32, i32
  }
  func.func @transform_5(%arg0: i32) -> (i32, i32) {
    %c0_i32 = arith.constant 0 : i32
    %c0_i32_0 = arith.constant 0 : i32
    %c0_i32_1 = arith.constant 0 : i32
    return %c0_i32, %c0_i32_0 : i32, i32
  }
  func.func @transform_6(%arg0: i32) -> (i32, i32) {
    %c0_i32 = arith.constant 0 : i32
    %c0_i32_0 = arith.constant 0 : i32
    %c0_i32_1 = arith.constant 0 : i32
    return %c0_i32, %c0_i32_0 : i32, i32
  }
  func.func @transform_7(%arg0: i32) -> (i32, i32) {
    %c0_i32 = arith.constant 0 : i32
    %c0_i32_0 = arith.constant 0 : i32
    %c0_i32_1 = arith.constant 0 : i32
    return %c0_i32, %c0_i32_0 : i32, i32
  }
  func.func @transform_8(%arg0: i32) -> (i32, i32) {
    %c0_i32 = arith.constant 0 : i32
    %c0_i32_0 = arith.constant 0 : i32
    %c0_i32_1 = arith.constant 0 : i32
    return %c0_i32, %c0_i32_0 : i32, i32
  }
  func.func @transform_9(%arg0: i32) -> (i32, i32) {
    %c0_i32 = arith.constant 0 : i32
    %c0_i32_0 = arith.constant 0 : i32
    %c0_i32_1 = arith.constant 0 : i32
    return %c0_i32, %c0_i32_0 : i32, i32
  }
  func.func @transform_10(%arg0: i32) -> (i32, i32) {
    %c0_i32 = arith.constant 0 : i32
    %c0_i32_0 = arith.constant 0 : i32
    %c0_i32_1 = arith.constant 0 : i32
    return %c0_i32, %c0_i32_0 : i32, i32
  }
  func.func @transform_11(%arg0: i32) -> (i32, i32) {
    %c0_i32 = arith.constant 0 : i32
    %c0_i32_0 = arith.constant 0 : i32
    %c0_i32_1 = arith.constant 0 : i32
    return %c0_i32, %c0_i32_0 : i32, i32
  }
  func.func @transform_12(%arg0: i32) -> (i32, i32) {
    %c0_i32 = arith.constant 0 : i32
    %c0_i32_0 = arith.constant 0 : i32
    %c0_i32_1 = arith.constant 0 : i32
    return %c0_i32, %c0_i32_0 : i32, i32
  }
  func.func @transform_13(%arg0: i32) -> (i32, i32) {
    %c0_i32 = arith.constant 0 : i32
    %c0_i32_0 = arith.constant 0 : i32
    %c0_i32_1 = arith.constant 0 : i32
    return %c0_i32, %c0_i32_0 : i32, i32
  }
  func.func @transform_14(%arg0: i32) -> (i32, i32) {
    %c0_i32 = arith.constant 0 : i32
    %c0_i32_0 = arith.constant 0 : i32
    %c0_i32_1 = arith.constant 0 : i32
    return %c0_i32, %c0_i32_0 : i32, i32
  }
  func.func @transform_15(%arg0: i32) -> (i32, i32) {
    %c0_i32 = arith.constant 0 : i32
    %c0_i32_0 = arith.constant 0 : i32
    %c0_i32_1 = arith.constant 0 : i32
    return %c0_i32, %c0_i32_0 : i32, i32
  }
  func.func @transform_16(%arg0: i32) -> (i32, i32) {
    %c0_i32 = arith.constant 0 : i32
    %c0_i32_0 = arith.constant 0 : i32
    %c0_i32_1 = arith.constant 0 : i32
    return %c0_i32, %c0_i32_0 : i32, i32
  }
  func.func @transform_17(%arg0: i32) -> (i32, i32) {
    %c0_i32 = arith.constant 0 : i32
    %c0_i32_0 = arith.constant 0 : i32
    %c0_i32_1 = arith.constant 0 : i32
    return %c0_i32, %c0_i32_0 : i32, i32
  }
  func.func @transform_18(%arg0: i32) -> (i32, i32) {
    %c0_i32 = arith.constant 0 : i32
    %c0_i32_0 = arith.constant 0 : i32
    %c0_i32_1 = arith.constant 0 : i32
    return %c0_i32, %c0_i32_0 : i32, i32
  }
  func.func @transform_19(%arg0: i32) -> (i32, i32) {
    %c0_i32 = arith.constant 0 : i32
    %c0_i32_0 = arith.constant 0 : i32
    %c0_i32_1 = arith.constant 0 : i32
    return %c0_i32, %c0_i32_0 : i32, i32
  }
  func.func @transform_20(%arg0: i32) -> (i32, i32) {
    %c0_i32 = arith.constant 0 : i32
    %c0_i32_0 = arith.constant 0 : i32
    %c0_i32_1 = arith.constant 0 : i32
    return %c0_i32, %c0_i32_0 : i32, i32
  }
  func.func @transform_21(%arg0: i32) -> (i32, i32) {
    %c0_i32 = arith.constant 0 : i32
    %c0_i32_0 = arith.constant 0 : i32
    %c0_i32_1 = arith.constant 0 : i32
    return %c0_i32, %c0_i32_0 : i32, i32
  }
  func.func @transform_22(%arg0: i32) -> (i32, i32) {
    %c0_i32 = arith.constant 0 : i32
    %c0_i32_0 = arith.constant 0 : i32
    %c0_i32_1 = arith.constant 0 : i32
    return %c0_i32, %c0_i32_0 : i32, i32
  }
  func.func @transform_23(%arg0: i32) -> (i32, i32) {
    %c0_i32 = arith.constant 0 : i32
    %c0_i32_0 = arith.constant 0 : i32
    %c0_i32_1 = arith.constant 0 : i32
    return %c0_i32, %c0_i32_0 : i32, i32
  }
  func.func @transform_24(%arg0: i32) -> (i32, i32) {
    %c0_i32 = arith.constant 0 : i32
    %c0_i32_0 = arith.constant 0 : i32
    %c0_i32_1 = arith.constant 0 : i32
    return %c0_i32, %c0_i32_0 : i32, i32
  }
  func.func @transform_25(%arg0: i32) -> (i32, i32, i32) {
    %c0_i32 = arith.constant 0 : i32
    %c0_i32_0 = arith.constant 0 : i32
    %c0_i32_1 = arith.constant 0 : i32
    return %arg0, %c0_i32, %c0_i32_0 : i32, i32, i32
  }
}

module attributes {stable_mosaic.version = 11 : i64} {
  func.func @_ln_generator_kernel(%arg0: i32, %arg1: i32, %arg2: memref<16x32xf32, #tpu.memory_space<vmem>>, %arg3: memref<1x32xf32, #tpu.memory_space<vmem>>, %arg4: memref<1x32xf32, #tpu.memory_space<vmem>>, %arg5: memref<32x128xbf16, #tpu.memory_space<vmem>>, %arg6: memref<1x128xf32, #tpu.memory_space<vmem>>, %arg7: memref<16x128xf32, #tpu.memory_space<vmem>>) attributes {dimension_semantics = [#tpu.dimension_semantics<parallel>, #tpu.dimension_semantics<parallel>], iteration_bounds = array<i64: 1, 1>, scalar_prefetch = 0 : i64, scratch_operands = 0 : i64, tpu.core_type = #tpu.core_type<tc>, window_params = [{transform_indices = @transform_0, window_bounds = array<i64: 16, 32>}, {pipeline_mode = #tpu.pipeline_mode<synchronous>, transform_indices = @transform_1, window_bounds = array<i64: 1, 32>}, {pipeline_mode = #tpu.pipeline_mode<synchronous>, transform_indices = @transform_2, window_bounds = array<i64: 1, 32>}, {transform_indices = @transform_3, window_bounds = array<i64: 32, 128>}, {transform_indices = @transform_4, window_bounds = array<i64: 1, 128>}, {transform_indices = @transform_5, window_bounds = array<i64: 16, 128>}]} {
    %c0 = arith.constant 0 : index
    %c0_0 = arith.constant 0 : index
    %0 = vector.load %arg2[%c0, %c0_0] : memref<16x32xf32, #tpu.memory_space<vmem>>, vector<16x32xf32>
    %c0_1 = arith.constant 0 : index
    %c0_2 = arith.constant 0 : index
    %1 = vector.load %arg3[%c0_1, %c0_2] : memref<1x32xf32, #tpu.memory_space<vmem>>, vector<1x32xf32>
    %c0_3 = arith.constant 0 : index
    %c0_4 = arith.constant 0 : index
    %2 = vector.load %arg4[%c0_3, %c0_4] : memref<1x32xf32, #tpu.memory_space<vmem>>, vector<1x32xf32>
    %cst = arith.constant dense<0.000000e+00> : vector<16xf32>
    %3 = vector.multi_reduction <add>, %0, %cst [1] : vector<16x32xf32> to vector<16xf32>
    %4 = vector.shape_cast %3 : vector<16xf32> to vector<16x1xf32>
    %cst_5 = arith.constant 3.200000e+01 : f32
    %5 = vector.broadcast %cst_5 : f32 to vector<16x1xf32>
    %6 = arith.divf %4, %5 : vector<16x1xf32>
    %7 = vector.broadcast %6 : vector<16x1xf32> to vector<16x32xf32>
    %8 = arith.subf %0, %7 : vector<16x32xf32>
    %9 = arith.mulf %8, %8 : vector<16x32xf32>
    %cst_6 = arith.constant dense<0.000000e+00> : vector<16xf32>
    %10 = vector.multi_reduction <add>, %9, %cst_6 [1] : vector<16x32xf32> to vector<16xf32>
    %11 = vector.shape_cast %10 : vector<16xf32> to vector<16x1xf32>
    %cst_7 = arith.constant 3.200000e+01 : f32
    %12 = vector.broadcast %cst_7 : f32 to vector<16x1xf32>
    %13 = arith.divf %11, %12 : vector<16x1xf32>
    %14 = vector.broadcast %6 : vector<16x1xf32> to vector<16x32xf32>
    %15 = arith.subf %0, %14 : vector<16x32xf32>
    %cst_8 = arith.constant 9.99999974E-6 : f32
    %16 = vector.broadcast %cst_8 : f32 to vector<16x1xf32>
    %17 = arith.addf %13, %16 : vector<16x1xf32>
    %18 = math.rsqrt %17 : vector<16x1xf32>
    %19 = vector.broadcast %18 : vector<16x1xf32> to vector<16x32xf32>
    %20 = arith.mulf %15, %19 : vector<16x32xf32>
    %21 = vector.broadcast %1 : vector<1x32xf32> to vector<16x32xf32>
    %22 = arith.mulf %20, %21 : vector<16x32xf32>
    %23 = vector.broadcast %2 : vector<1x32xf32> to vector<16x32xf32>
    %24 = arith.addf %22, %23 : vector<16x32xf32>
    %25 = arith.truncf %24 : vector<16x32xf32> to vector<16x32xbf16>
    %c0_9 = arith.constant 0 : index
    %c0_10 = arith.constant 0 : index
    %26 = vector.load %arg5[%c0_9, %c0_10] : memref<32x128xbf16, #tpu.memory_space<vmem>>, vector<32x128xbf16>
    %cst_11 = arith.constant dense<0.000000e+00> : vector<16x128xf32>
    %27 = tpu.matmul %25, %26, %cst_11 {dimension_numbers = #tpu.dot_dimension_numbers<[1], [0], [0], [1], [0, 0, 1, 1], [], []>} : vector<16x32xbf16>, vector<32x128xbf16>, vector<16x128xf32> -> vector<16x128xf32>
    %c0_12 = arith.constant 0 : index
    %c0_13 = arith.constant 0 : index
    %28 = vector.load %arg6[%c0_12, %c0_13] : memref<1x128xf32, #tpu.memory_space<vmem>>, vector<1x128xf32>
    %29 = vector.broadcast %28 : vector<1x128xf32> to vector<16x128xf32>
    %30 = arith.addf %27, %29 : vector<16x128xf32>
    %c0_14 = arith.constant 0 : index
    %c0_15 = arith.constant 0 : index
    %31 = vector.load %arg7[%c0_14, %c0_15] : memref<16x128xf32, #tpu.memory_space<vmem>>, vector<16x128xf32>
    tpu.vector_store %arg7[%c0_14, %c0_15], %30 {strides = array<i32>} : memref<16x128xf32, #tpu.memory_space<vmem>>, vector<16x128xf32>,
    return
  }
  func.func @transform_0(%arg0: i32, %arg1: i32) -> (i32, i32) {
    %c0_i32 = arith.constant 0 : i32
    %c0_i32_0 = arith.constant 0 : i32
    return %arg0, %c0_i32 : i32, i32
  }
  func.func @transform_1(%arg0: i32, %arg1: i32) -> (i32, i32) {
    %c0_i32 = arith.constant 0 : i32
    %c0_i32_0 = arith.constant 0 : i32
    %c0_i32_1 = arith.constant 0 : i32
    return %c0_i32, %c0_i32_0 : i32, i32
  }
  func.func @transform_2(%arg0: i32, %arg1: i32) -> (i32, i32) {
    %c0_i32 = arith.constant 0 : i32
    %c0_i32_0 = arith.constant 0 : i32
    %c0_i32_1 = arith.constant 0 : i32
    return %c0_i32, %c0_i32_0 : i32, i32
  }
  func.func @transform_3(%arg0: i32, %arg1: i32) -> (i32, i32) {
    %c0_i32 = arith.constant 0 : i32
    %c0_i32_0 = arith.constant 0 : i32
    return %c0_i32, %arg1 : i32, i32
  }
  func.func @transform_4(%arg0: i32, %arg1: i32) -> (i32, i32) {
    %c0_i32 = arith.constant 0 : i32
    %c0_i32_0 = arith.constant 0 : i32
    return %c0_i32, %arg1 : i32, i32
  }
  func.func @transform_5(%arg0: i32, %arg1: i32) -> (i32, i32) {
    %c0_i32 = arith.constant 0 : i32
    return %arg0, %arg1 : i32, i32
  }
}

</mosaic_0001>

<llo_original>
// kernel: seq2seq_transformer_forward.5
$region0: #{seq2seq_transformer_forward.5}
  #allocation0 [shape = 'u32[]', space=smem, size = 0x4, offset = 0x4, fixed_abs, tag = 'smem constant byte address 0x4 - core index']
  #allocation1 [shape = 'u32[72,128]{1,0:T(1,128)}', space=vmem, size = 0x9000, scoped, tag = 'internal scratch']
  %s0 = inlined_call_operand.vmem [shape: f32[2,10,32], index: 0, kind: input, shape index: {}]
  %s1 = inlined_call_operand.vmem [shape: f32[10,10], index: 1, kind: input, shape index: {}]
  %s2 = inlined_call_operand.vmem [shape: f32[2,1,10], index: 2, kind: input, shape index: {}]
  %s3 = inlined_call_operand.vmem [shape: bf16[32,96], index: 3, kind: input, shape index: {}]
  %s4 = inlined_call_operand.vmem [shape: f32[1,96], index: 4, kind: input, shape index: {}]
  %s5 = inlined_call_operand.vmem [shape: bf16[32,32], index: 5, kind: input, shape index: {}]
  %s6 = inlined_call_operand.vmem [shape: f32[1,32], index: 6, kind: input, shape index: {}]
  %s7 = inlined_call_operand.vmem [shape: f32[1,32], index: 7, kind: input, shape index: {}]
  %s8 = inlined_call_operand.vmem [shape: f32[1,32], index: 8, kind: input, shape index: {}]
  %s9 = inlined_call_operand.vmem [shape: bf16[32,64], index: 9, kind: input, shape index: {}]
  %s10 = inlined_call_operand.vmem [shape: f32[1,64], index: 10, kind: input, shape index: {}]
  %s11 = inlined_call_operand.vmem [shape: bf16[64,32], index: 11, kind: input, shape index: {}]
  %s12 = inlined_call_operand.vmem [shape: f32[1,32], index: 12, kind: input, shape index: {}]
  %s13 = inlined_call_operand.vmem [shape: f32[1,32], index: 13, kind: input, shape index: {}]
  %s14 = inlined_call_operand.vmem [shape: f32[1,32], index: 14, kind: input, shape index: {}]
  %s15 = inlined_call_operand.vmem [shape: f32[1,32], index: 15, kind: input, shape index: {}]
  %s16 = inlined_call_operand.vmem [shape: f32[1,32], index: 16, kind: input, shape index: {}]
  %s17 = inlined_call_operand.vmem [shape: f32[2,10,32], index: 17, kind: output, shape index: {}]
  %s18 = sld [smem:[#allocation0]]
  $region101: #{seq2seq_transformer_forward.5} parent=0
    _
  %s20 = ssub.s32 1, %s18
  %s21 = scalar_select 0, %s20, %s18
  loop: start=0, step=1, limit=4
  $region2: #{seq2seq_transformer_forward.5} parent=0 // loop_pre_header
    _
  $region3: #{seq2seq_transformer_forward.5} parent=0 // loop_header
    %s23 = sphi 0, %s27
    %p24 = scmp.ge.s32.totalorder %s23, 4
    %s33 = sphi 0, %s35
    %s36 = sphi 0, %s33
    %s37 = sphi 0, %s36
    %s53 = sphi 0, %s37
    %s57 = sphi 0, %s57
    %s59 = sphi 0, %s57
    %s60 = sphi 0, %s59
    %s74 = sphi 0, %s60
    %s80 = sphi 0, %s82
    %s83 = sphi 0, %s80
    %s84 = sphi 0, %s83
    %s100 = sphi 0, %s84
    %s104 = sphi 0, %s104
    %s106 = sphi 0, %s104
    %s107 = sphi 0, %s106
    %s121 = sphi 0, %s107
    %s125 = sphi 0, %s125
    %s127 = sphi 0, %s125
    %s128 = sphi 0, %s127
    %s142 = sphi 0, %s128
    %s146 = sphi 0, %s146
    %s148 = sphi 0, %s146
    %s149 = sphi 0, %s148
    %s163 = sphi 0, %s149
    %s167 = sphi 0, %s167
    %s169 = sphi 0, %s167
    %s170 = sphi 0, %s169
    %s184 = sphi 0, %s170
    %s188 = sphi 0, %s188
    %s190 = sphi 0, %s188
    %s191 = sphi 0, %s190
    %s205 = sphi 0, %s191
    %s209 = sphi 0, %s209
    %s211 = sphi 0, %s209
    %s212 = sphi 0, %s211
    %s226 = sphi 0, %s212
    %s230 = sphi 0, %s230
    %s232 = sphi 0, %s230
    %s233 = sphi 0, %s232
    %s247 = sphi 0, %s233
    %s251 = sphi 0, %s251
    %s253 = sphi 0, %s251
    %s254 = sphi 0, %s253
    %s268 = sphi 0, %s254
    %s272 = sphi 0, %s272
    %s274 = sphi 0, %s272
    %s275 = sphi 0, %s274
    %s289 = sphi 0, %s275
    %s293 = sphi 0, %s293
    %s295 = sphi 0, %s293
    %s296 = sphi 0, %s295
    %s310 = sphi 0, %s296
    %s314 = sphi 0, %s314
    %s316 = sphi 0, %s314
    %s317 = sphi 0, %s316
    %s331 = sphi 0, %s317
    %s335 = sphi 0, %s335
    %s337 = sphi 0, %s335
    %s338 = sphi 0, %s337
    %s352 = sphi 0, %s338
    %s356 = sphi 0, %s356
    %s358 = sphi 0, %s356
    %s359 = sphi 0, %s358
    %s373 = sphi 0, %s359
    %s377 = sphi 0, %s377
    %s379 = sphi 0, %s377
    %s380 = sphi 0, %s379
    %s394 = sphi 0, %s380
    %s400 = sphi 0, %s402
    %s403 = sphi 0, %s400
    %s404 = sphi 0, %s403
    %s420 = sphi 0, %s404
  $region4: #{seq2seq_transformer_forward.5} parent=0 // loop_header_branch
    %26 = sbr.rel (%p24) target = $region8
  $region5: #{seq2seq_transformer_forward.5} parent=0 // loop_body
    %s28 = ssub.s32 %s23, 1
    %s29 = ssub.s32 %s23, 2
    %s30 = sadd.s32 %s23, 1
    %s31 = ssub.s32 %s23, %s30
    %p32 = scmp.eq.s32.totalorder %s31, 0
    %s34 = sadd.s32 %s33, 1
    %s35 = scalar_select %p32, %s33, %s34
    %p38 = pneg %p32
    %p39 = scmp.eq.s32.totalorder %s23, 1
    %p40 = por %p38, %p39
    %p41 = scmp.ne.s32.totalorder %s33, %s36
    %p42 = scmp.eq.s32.totalorder %s23, 0
    %p43 = por %p41, %p42
    %p44 = scmp.ne.s32.totalorder %s33, %s36
    %p45 = scmp.eq.s32.totalorder %s28, 1
    %p46 = por %p44, %p45
    %p47 = scmp.ne.s32.totalorder %s36, %s37
    %p48 = scmp.eq.s32.totalorder %s28, 0
    %p49 = por %p47, %p48
    %p50 = scmp.ne.s32.totalorder %s36, %s37
    %p51 = scmp.eq.s32.totalorder %s29, 1
    %p52 = por %p50, %p51
    %p54 = scmp.ne.s32.totalorder %s37, %s53
    %p55 = scmp.eq.s32.totalorder %s29, 0
    %p56 = por %p54, %p55
    %s58 = sadd.s32 %s57, 1
    %p61 = scmp.eq.s32.totalorder %s23, 1
    %p62 = scmp.ne.s32.totalorder %s57, %s59
    %p63 = scmp.eq.s32.totalorder %s23, 0
    %p64 = por %p62, %p63
    %p65 = scmp.ne.s32.totalorder %s57, %s59
    %p66 = scmp.eq.s32.totalorder %s28, 1
    %p67 = por %p65, %p66
    %p68 = scmp.ne.s32.totalorder %s59, %s60
    %p69 = scmp.eq.s32.totalorder %s28, 0
    %p70 = por %p68, %p69
    %p71 = scmp.ne.s32.totalorder %s59, %s60
    %p72 = scmp.eq.s32.totalorder %s29, 1
    %p73 = por %p71, %p72
    %p75 = scmp.ne.s32.totalorder %s60, %s74
    %p76 = scmp.eq.s32.totalorder %s29, 0
    %p77 = por %p75, %p76
    %s78 = ssub.s32 %s23, %s30
    %p79 = scmp.eq.s32.totalorder %s78, 0
    %s81 = sadd.s32 %s80, 1
    %s82 = scalar_select %p79, %s80, %s81
    %p85 = pneg %p79
    %p86 = scmp.eq.s32.totalorder %s23, 1
    %p87 = por %p85, %p86
    %p88 = scmp.ne.s32.totalorder %s80, %s83
    %p89 = scmp.eq.s32.totalorder %s23, 0
    %p90 = por %p88, %p89
    %p91 = scmp.ne.s32.totalorder %s80, %s83
    %p92 = scmp.eq.s32.totalorder %s28, 1
    %p93 = por %p91, %p92
    %p94 = scmp.ne.s32.totalorder %s83, %s84
    %p95 = scmp.eq.s32.totalorder %s28, 0
    %p96 = por %p94, %p95
    %p97 = scmp.ne.s32.totalorder %s83, %s84
    %p98 = scmp.eq.s32.totalorder %s29, 1
    %p99 = por %p97, %p98
    %p101 = scmp.ne.s32.totalorder %s84, %s100
    %p102 = scmp.eq.s32.totalorder %s29, 0
    %p103 = por %p101, %p102
    %s105 = sadd.s32 %s104, 1
    %p108 = scmp.eq.s32.totalorder %s23, 1
    %p109 = scmp.ne.s32.totalorder %s104, %s106
    %p110 = scmp.eq.s32.totalorder %s23, 0
    %p111 = por %p109, %p110
    %p112 = scmp.ne.s32.totalorder %s104, %s106
    %p113 = scmp.eq.s32.totalorder %s28, 1
    %p114 = por %p112, %p113
    %p115 = scmp.ne.s32.totalorder %s106, %s107
    %p116 = scmp.eq.s32.totalorder %s28, 0
    %p117 = por %p115, %p116
    %p118 = scmp.ne.s32.totalorder %s106, %s107
    %p119 = scmp.eq.s32.totalorder %s29, 1
    %p120 = por %p118, %p119
    %p122 = scmp.ne.s32.totalorder %s107, %s121
    %p123 = scmp.eq.s32.totalorder %s29, 0
    %p124 = por %p122, %p123
    %s126 = sadd.s32 %s125, 1
    %p129 = scmp.eq.s32.totalorder %s23, 1
    %p130 = scmp.ne.s32.totalorder %s125, %s127
    %p131 = scmp.eq.s32.totalorder %s23, 0
    %p132 = por %p130, %p131
    %p133 = scmp.ne.s32.totalorder %s125, %s127
    %p134 = scmp.eq.s32.totalorder %s28, 1
    %p135 = por %p133, %p134
    %p136 = scmp.ne.s32.totalorder %s127, %s128
    %p137 = scmp.eq.s32.totalorder %s28, 0
    %p138 = por %p136, %p137
    %p139 = scmp.ne.s32.totalorder %s127, %s128
    %p140 = scmp.eq.s32.totalorder %s29, 1
    %p141 = por %p139, %p140
    %p143 = scmp.ne.s32.totalorder %s128, %s142
    %p144 = scmp.eq.s32.totalorder %s29, 0
    %p145 = por %p143, %p144
    %s147 = sadd.s32 %s146, 1
    %p150 = scmp.eq.s32.totalorder %s23, 1
    %p151 = scmp.ne.s32.totalorder %s146, %s148
    %p152 = scmp.eq.s32.totalorder %s23, 0
    %p153 = por %p151, %p152
    %p154 = scmp.ne.s32.totalorder %s146, %s148
    %p155 = scmp.eq.s32.totalorder %s28, 1
    %p156 = por %p154, %p155
    %p157 = scmp.ne.s32.totalorder %s148, %s149
    %p158 = scmp.eq.s32.totalorder %s28, 0
    %p159 = por %p157, %p158
    %p160 = scmp.ne.s32.totalorder %s148, %s149
    %p161 = scmp.eq.s32.totalorder %s29, 1
    %p162 = por %p160, %p161
    %p164 = scmp.ne.s32.totalorder %s149, %s163
    %p165 = scmp.eq.s32.totalorder %s29, 0
    %p166 = por %p164, %p165
    %s168 = sadd.s32 %s167, 1
    %p171 = scmp.eq.s32.totalorder %s23, 1
    %p172 = scmp.ne.s32.totalorder %s167, %s169
    %p173 = scmp.eq.s32.totalorder %s23, 0
    %p174 = por %p172, %p173
    %p175 = scmp.ne.s32.totalorder %s167, %s169
    %p176 = scmp.eq.s32.totalorder %s28, 1
    %p177 = por %p175, %p176
    %p178 = scmp.ne.s32.totalorder %s169, %s170
    %p179 = scmp.eq.s32.totalorder %s28, 0
    %p180 = por %p178, %p179
    %p181 = scmp.ne.s32.totalorder %s169, %s170
    %p182 = scmp.eq.s32.totalorder %s29, 1
    %p183 = por %p181, %p182
    %p185 = scmp.ne.s32.totalorder %s170, %s184
    %p186 = scmp.eq.s32.totalorder %s29, 0
    %p187 = por %p185, %p186
    %s189 = sadd.s32 %s188, 1
    %p192 = scmp.eq.s32.totalorder %s23, 1
    %p193 = scmp.ne.s32.totalorder %s188, %s190
    %p194 = scmp.eq.s32.totalorder %s23, 0
    %p195 = por %p193, %p194
    %p196 = scmp.ne.s32.totalorder %s188, %s190
    %p197 = scmp.eq.s32.totalorder %s28, 1
    %p198 = por %p196, %p197
    %p199 = scmp.ne.s32.totalorder %s190, %s191
    %p200 = scmp.eq.s32.totalorder %s28, 0
    %p201 = por %p199, %p200
    %p202 = scmp.ne.s32.totalorder %s190, %s191
    %p203 = scmp.eq.s32.totalorder %s29, 1
    %p204 = por %p202, %p203
    %p206 = scmp.ne.s32.totalorder %s191, %s205
    %p207 = scmp.eq.s32.totalorder %s29, 0
    %p208 = por %p206, %p207
    %s210 = sadd.s32 %s209, 1
    %p213 = scmp.eq.s32.totalorder %s23, 1
    %p214 = scmp.ne.s32.totalorder %s209, %s211
    %p215 = scmp.eq.s32.totalorder %s23, 0
    %p216 = por %p214, %p215
    %p217 = scmp.ne.s32.totalorder %s209, %s211
    %p218 = scmp.eq.s32.totalorder %s28, 1
    %p219 = por %p217, %p218
    %p220 = scmp.ne.s32.totalorder %s211, %s212
    %p221 = scmp.eq.s32.totalorder %s28, 0
    %p222 = por %p220, %p221
    %p223 = scmp.ne.s32.totalorder %s211, %s212
    %p224 = scmp.eq.s32.totalorder %s29, 1
    %p225 = por %p223, %p224
    %p227 = scmp.ne.s32.totalorder %s212, %s226
    %p228 = scmp.eq.s32.totalorder %s29, 0
    %p229 = por %p227, %p228
    %s231 = sadd.s32 %s230, 1
    %p234 = scmp.eq.s32.totalorder %s23, 1
    %p235 = scmp.ne.s32.totalorder %s230, %s232
    %p236 = scmp.eq.s32.totalorder %s23, 0
    %p237 = por %p235, %p236
    %p238 = scmp.ne.s32.totalorder %s230, %s232
    %p239 = scmp.eq.s32.totalorder %s28, 1
    %p240 = por %p238, %p239
    %p241 = scmp.ne.s32.totalorder %s232, %s233
    %p242 = scmp.eq.s32.totalorder %s28, 0
    %p243 = por %p241, %p242
    %p244 = scmp.ne.s32.totalorder %s232, %s233
    %p245 = scmp.eq.s32.totalorder %s29, 1
    %p246 = por %p244, %p245
    %p248 = scmp.ne.s32.totalorder %s233, %s247
    %p249 = scmp.eq.s32.totalorder %s29, 0
    %p250 = por %p248, %p249
    %s252 = sadd.s32 %s251, 1
    %p255 = scmp.eq.s32.totalorder %s23, 1
    %p256 = scmp.ne.s32.totalorder %s251, %s253
    %p257 = scmp.eq.s32.totalorder %s23, 0
    %p258 = por %p256, %p257
    %p259 = scmp.ne.s32.totalorder %s251, %s253
    %p260 = scmp.eq.s32.totalorder %s28, 1
    %p261 = por %p259, %p260
    %p262 = scmp.ne.s32.totalorder %s253, %s254
    %p263 = scmp.eq.s32.totalorder %s28, 0
    %p264 = por %p262, %p263
    %p265 = scmp.ne.s32.totalorder %s253, %s254
    %p266 = scmp.eq.s32.totalorder %s29, 1
    %p267 = por %p265, %p266
    %p269 = scmp.ne.s32.totalorder %s254, %s268
    %p270 = scmp.eq.s32.totalorder %s29, 0
    %p271 = por %p269, %p270
    %s273 = sadd.s32 %s272, 1
    %p276 = scmp.eq.s32.totalorder %s23, 1
    %p277 = scmp.ne.s32.totalorder %s272, %s274
    %p278 = scmp.eq.s32.totalorder %s23, 0
    %p279 = por %p277, %p278
    %p280 = scmp.ne.s32.totalorder %s272, %s274
    %p281 = scmp.eq.s32.totalorder %s28, 1
    %p282 = por %p280, %p281
    %p283 = scmp.ne.s32.totalorder %s274, %s275
    %p284 = scmp.eq.s32.totalorder %s28, 0
    %p285 = por %p283, %p284
    %p286 = scmp.ne.s32.totalorder %s274, %s275
    %p287 = scmp.eq.s32.totalorder %s29, 1
    %p288 = por %p286, %p287
    %p290 = scmp.ne.s32.totalorder %s275, %s289
    %p291 = scmp.eq.s32.totalorder %s29, 0
    %p292 = por %p290, %p291
    %s294 = sadd.s32 %s293, 1
    %p297 = scmp.eq.s32.totalorder %s23, 1
    %p298 = scmp.ne.s32.totalorder %s293, %s295
    %p299 = scmp.eq.s32.totalorder %s23, 0
    %p300 = por %p298, %p299
    %p301 = scmp.ne.s32.totalorder %s293, %s295
    %p302 = scmp.eq.s32.totalorder %s28, 1
    %p303 = por %p301, %p302
    %p304 = scmp.ne.s32.totalorder %s295, %s296
    %p305 = scmp.eq.s32.totalorder %s28, 0
    %p306 = por %p304, %p305
    %p307 = scmp.ne.s32.totalorder %s295, %s296
    %p308 = scmp.eq.s32.totalorder %s29, 1
    %p309 = por %p307, %p308
    %p311 = scmp.ne.s32.totalorder %s296, %s310
    %p312 = scmp.eq.s32.totalorder %s29, 0
    %p313 = por %p311, %p312
    %s315 = sadd.s32 %s314, 1
    %p318 = scmp.eq.s32.totalorder %s23, 1
    %p319 = scmp.ne.s32.totalorder %s314, %s316
    %p320 = scmp.eq.s32.totalorder %s23, 0
    %p321 = por %p319, %p320
    %p322 = scmp.ne.s32.totalorder %s314, %s316
    %p323 = scmp.eq.s32.totalorder %s28, 1
    %p324 = por %p322, %p323
    %p325 = scmp.ne.s32.totalorder %s316, %s317
    %p326 = scmp.eq.s32.totalorder %s28, 0
    %p327 = por %p325, %p326
    %p328 = scmp.ne.s32.totalorder %s316, %s317
    %p329 = scmp.eq.s32.totalorder %s29, 1
    %p330 = por %p328, %p329
    %p332 = scmp.ne.s32.totalorder %s317, %s331
    %p333 = scmp.eq.s32.totalorder %s29, 0
    %p334 = por %p332, %p333
    %s336 = sadd.s32 %s335, 1
    %p339 = scmp.eq.s32.totalorder %s23, 1
    %p340 = scmp.ne.s32.totalorder %s335, %s337
    %p341 = scmp.eq.s32.totalorder %s23, 0
    %p342 = por %p340, %p341
    %p343 = scmp.ne.s32.totalorder %s335, %s337
    %p344 = scmp.eq.s32.totalorder %s28, 1
    %p345 = por %p343, %p344
    %p346 = scmp.ne.s32.totalorder %s337, %s338
    %p347 = scmp.eq.s32.totalorder %s28, 0
    %p348 = por %p346, %p347
    %p349 = scmp.ne.s32.totalorder %s337, %s338
    %p350 = scmp.eq.s32.totalorder %s29, 1
    %p351 = por %p349, %p350
    %p353 = scmp.ne.s32.totalorder %s338, %s352
    %p354 = scmp.eq.s32.totalorder %s29, 0
    %p355 = por %p353, %p354
    %s357 = sadd.s32 %s356, 1
    %p360 = scmp.eq.s32.totalorder %s23, 1
    %p361 = scmp.ne.s32.totalorder %s356, %s358
    %p362 = scmp.eq.s32.totalorder %s23, 0
    %p363 = por %p361, %p362
    %p364 = scmp.ne.s32.totalorder %s356, %s358
    %p365 = scmp.eq.s32.totalorder %s28, 1
    %p366 = por %p364, %p365
    %p367 = scmp.ne.s32.totalorder %s358, %s359
    %p368 = scmp.eq.s32.totalorder %s28, 0
    %p369 = por %p367, %p368
    %p370 = scmp.ne.s32.totalorder %s358, %s359
    %p371 = scmp.eq.s32.totalorder %s29, 1
    %p372 = por %p370, %p371
    %p374 = scmp.ne.s32.totalorder %s359, %s373
    %p375 = scmp.eq.s32.totalorder %s29, 0
    %p376 = por %p374, %p375
    %s378 = sadd.s32 %s377, 1
    %p381 = scmp.eq.s32.totalorder %s23, 1
    %p382 = scmp.ne.s32.totalorder %s377, %s379
    %p383 = scmp.eq.s32.totalorder %s23, 0
    %p384 = por %p382, %p383
    %p385 = scmp.ne.s32.totalorder %s377, %s379
    %p386 = scmp.eq.s32.totalorder %s28, 1
    %p387 = por %p385, %p386
    %p388 = scmp.ne.s32.totalorder %s379, %s380
    %p389 = scmp.eq.s32.totalorder %s28, 0
    %p390 = por %p388, %p389
    %p391 = scmp.ne.s32.totalorder %s379, %s380
    %p392 = scmp.eq.s32.totalorder %s29, 1
    %p393 = por %p391, %p392
    %p395 = scmp.ne.s32.totalorder %s380, %s394
    %p396 = scmp.eq.s32.totalorder %s29, 0
    %p397 = por %p395, %p396
    %s398 = ssub.s32 %s23, %s30
    %p399 = scmp.eq.s32.totalorder %s398, 0
    %s401 = sadd.s32 %s400, 1
    %s402 = scalar_select %p399, %s400, %s401
    %p405 = pneg %p399
    %p406 = scmp.eq.s32.totalorder %s23, 1
    %p407 = por %p405, %p406
    %p408 = scmp.ne.s32.totalorder %s400, %s403
    %p409 = scmp.eq.s32.totalorder %s23, 0
    %p410 = por %p408, %p409
    %p411 = scmp.ne.s32.totalorder %s400, %s403
    %p412 = scmp.eq.s32.totalorder %s28, 1
    %p413 = por %p411, %p412
    %p414 = scmp.ne.s32.totalorder %s403, %s404
    %p415 = scmp.eq.s32.totalorder %s28, 0
    %p416 = por %p414, %p415
    %p417 = scmp.ne.s32.totalorder %s403, %s404
    %p418 = scmp.eq.s32.totalorder %s29, 1
    %p419 = por %p417, %p418
    %p421 = scmp.ne.s32.totalorder %s404, %s420
    %p422 = scmp.eq.s32.totalorder %s29, 0
    %p423 = por %p421, %p422
    %p424 = scmp.le.s32.totalorder 1, %s23
    %p425 = scmp.lt.s32.totalorder %s23, 3
    %p426 = pnand %p424, %p425
    %p427 = pneg %p426
    // Predicated region
    $region9: #{seq2seq_transformer_forward.5} parent=5 // pred_check
      _
    $region10: #{seq2seq_transformer_forward.5} parent=5 // pred_check_branch
      %429 = sbr.rel (%p426) target = $region12
    $region11: #{seq2seq_transformer_forward.5} parent=5 // pred_region
      %s430 = ssub.s32 %s23, 1
      // Predicated region
      $region13: #{seq2seq_transformer_forward.5} parent=11 // pred_check
        %p431 = pneg %p70
      $region14: #{seq2seq_transformer_forward.5} parent=11 // pred_check_branch
        %433 = sbr.rel (%p431) target = $region16
      $region15: #{seq2seq_transformer_forward.5} parent=11 // pred_region
        _
      $region16: #{seq2seq_transformer_forward.5} parent=11 // pred_fallthru
        _
      // Predicated region
      $region17: #{seq2seq_transformer_forward.5} parent=11 // pred_check
        %p434 = pneg %p117
      $region18: #{seq2seq_transformer_forward.5} parent=11 // pred_check_branch
        %436 = sbr.rel (%p434) target = $region20
      $region19: #{seq2seq_transformer_forward.5} parent=11 // pred_region
        _
      $region20: #{seq2seq_transformer_forward.5} parent=11 // pred_fallthru
        _
      // Predicated region
      $region21: #{seq2seq_transformer_forward.5} parent=11 // pred_check
        %p437 = pneg %p138
      $region22: #{seq2seq_transformer_forward.5} parent=11 // pred_check_branch
        %439 = sbr.rel (%p437) target = $region24
      $region23: #{seq2seq_transformer_forward.5} parent=11 // pred_region
        _
      $region24: #{seq2seq_transformer_forward.5} parent=11 // pred_fallthru
        _
      // Predicated region
      $region25: #{seq2seq_transformer_forward.5} parent=11 // pred_check
        %p440 = pneg %p159
      $region26: #{seq2seq_transformer_forward.5} parent=11 // pred_check_branch
        %442 = sbr.rel (%p440) target = $region28
      $region27: #{seq2seq_transformer_forward.5} parent=11 // pred_region
        _
      $region28: #{seq2seq_transformer_forward.5} parent=11 // pred_fallthru
        _
      // Predicated region
      $region29: #{seq2seq_transformer_forward.5} parent=11 // pred_check
        %p443 = pneg %p180
      $region30: #{seq2seq_transformer_forward.5} parent=11 // pred_check_branch
        %445 = sbr.rel (%p443) target = $region32
      $region31: #{seq2seq_transformer_forward.5} parent=11 // pred_region
        _
      $region32: #{seq2seq_transformer_forward.5} parent=11 // pred_fallthru
        _
      // Predicated region
      $region33: #{seq2seq_transformer_forward.5} parent=11 // pred_check
        %p446 = pneg %p201
      $region34: #{seq2seq_transformer_forward.5} parent=11 // pred_check_branch
        %448 = sbr.rel (%p446) target = $region36
      $region35: #{seq2seq_transformer_forward.5} parent=11 // pred_region
        _
      $region36: #{seq2seq_transformer_forward.5} parent=11 // pred_fallthru
        _
      // Predicated region
      $region37: #{seq2seq_transformer_forward.5} parent=11 // pred_check
        %p449 = pneg %p222
      $region38: #{seq2seq_transformer_forward.5} parent=11 // pred_check_branch
        %451 = sbr.rel (%p449) target = $region40
      $region39: #{seq2seq_transformer_forward.5} parent=11 // pred_region
        _
      $region40: #{seq2seq_transformer_forward.5} parent=11 // pred_fallthru
        _
      // Predicated region
      $region41: #{seq2seq_transformer_forward.5} parent=11 // pred_check
        %p452 = pneg %p243
      $region42: #{seq2seq_transformer_forward.5} parent=11 // pred_check_branch
        %454 = sbr.rel (%p452) target = $region44
      $region43: #{seq2seq_transformer_forward.5} parent=11 // pred_region
        _
      $region44: #{seq2seq_transformer_forward.5} parent=11 // pred_fallthru
        _
      // Predicated region
      $region45: #{seq2seq_transformer_forward.5} parent=11 // pred_check
        %p455 = pneg %p264
      $region46: #{seq2seq_transformer_forward.5} parent=11 // pred_check_branch
        %457 = sbr.rel (%p455) target = $region48
      $region47: #{seq2seq_transformer_forward.5} parent=11 // pred_region
        _
      $region48: #{seq2seq_transformer_forward.5} parent=11 // pred_fallthru
        _
      // Predicated region
      $region49: #{seq2seq_transformer_forward.5} parent=11 // pred_check
        %p458 = pneg %p285
      $region50: #{seq2seq_transformer_forward.5} parent=11 // pred_check_branch
        %460 = sbr.rel (%p458) target = $region52
      $region51: #{seq2seq_transformer_forward.5} parent=11 // pred_region
        _
      $region52: #{seq2seq_transformer_forward.5} parent=11 // pred_fallthru
        _
      // Predicated region
      $region53: #{seq2seq_transformer_forward.5} parent=11 // pred_check
        %p461 = pneg %p306
      $region54: #{seq2seq_transformer_forward.5} parent=11 // pred_check_branch
        %463 = sbr.rel (%p461) target = $region56
      $region55: #{seq2seq_transformer_forward.5} parent=11 // pred_region
        _
      $region56: #{seq2seq_transformer_forward.5} parent=11 // pred_fallthru
        _
      // Predicated region
      $region57: #{seq2seq_transformer_forward.5} parent=11 // pred_check
        %p464 = pneg %p327
      $region58: #{seq2seq_transformer_forward.5} parent=11 // pred_check_branch
        %466 = sbr.rel (%p464) target = $region60
      $region59: #{seq2seq_transformer_forward.5} parent=11 // pred_region
        _
      $region60: #{seq2seq_transformer_forward.5} parent=11 // pred_fallthru
        _
      // Predicated region
      $region61: #{seq2seq_transformer_forward.5} parent=11 // pred_check
        %p467 = pneg %p348
      $region62: #{seq2seq_transformer_forward.5} parent=11 // pred_check_branch
        %469 = sbr.rel (%p467) target = $region64
      $region63: #{seq2seq_transformer_forward.5} parent=11 // pred_region
        _
      $region64: #{seq2seq_transformer_forward.5} parent=11 // pred_fallthru
        _
      // Predicated region
      $region65: #{seq2seq_transformer_forward.5} parent=11 // pred_check
        %p470 = pneg %p369
      $region66: #{seq2seq_transformer_forward.5} parent=11 // pred_check_branch
        %472 = sbr.rel (%p470) target = $region68
      $region67: #{seq2seq_transformer_forward.5} parent=11 // pred_region
        _
      $region68: #{seq2seq_transformer_forward.5} parent=11 // pred_fallthru
        _
      // Predicated region
      $region69: #{seq2seq_transformer_forward.5} parent=11 // pred_check
        %p473 = pneg %p390
      $region70: #{seq2seq_transformer_forward.5} parent=11 // pred_check_branch
        %475 = sbr.rel (%p473) target = $region72
      $region71: #{seq2seq_transformer_forward.5} parent=11 // pred_region
        _
      $region72: #{seq2seq_transformer_forward.5} parent=11 // pred_fallthru
        _
    $region12: #{seq2seq_transformer_forward.5} parent=5 // pred_fallthru
      _
    %p476 = scmp.lt.s32.totalorder %s23, 2
    // Predicated region
    $region73: #{seq2seq_transformer_forward.5} parent=5 // pred_check
      %p477 = pneg %p476
    $region74: #{seq2seq_transformer_forward.5} parent=5 // pred_check_branch
      %479 = sbr.rel (%p477) target = $region76
    $region75: #{seq2seq_transformer_forward.5} parent=5 // pred_region
      // Predicated region
      $region77: #{seq2seq_transformer_forward.5} parent=75 // pred_check
        %p480 = pneg %p43
      $region78: #{seq2seq_transformer_forward.5} parent=75 // pred_check_branch
        %482 = sbr.rel (%p480) target = $region80
      $region79: #{seq2seq_transformer_forward.5} parent=75 // pred_region
        %p483 = scmp.lt.s32.totalorder %s23, 1
        %s484 = scalar_select %p483, %s23, 1
        %s485 = smul.addr %s484, 2
        %s486 = smul.addr %s485, 8
        %s487 = scalar_lea.vmem %s0, %s486
      $region80: #{seq2seq_transformer_forward.5} parent=75 // pred_fallthru
        _
      // Predicated region
      $region81: #{seq2seq_transformer_forward.5} parent=75 // pred_check
        %p488 = pneg %p90
      $region82: #{seq2seq_transformer_forward.5} parent=75 // pred_check_branch
        %490 = sbr.rel (%p488) target = $region84
      $region83: #{seq2seq_transformer_forward.5} parent=75 // pred_region
        %p491 = scmp.lt.s32.totalorder %s23, 1
        %s492 = scalar_select %p491, %s23, 1
        %s493 = scalar_lea.vmem %s2, %s492
      $region84: #{seq2seq_transformer_forward.5} parent=75 // pred_fallthru
        _
    $region76: #{seq2seq_transformer_forward.5} parent=5 // pred_fallthru
      _
    %p494 = scmp.le.s32.totalorder 1, %s23
    %p495 = scmp.lt.s32.totalorder %s23, 3
    %p496 = pnand %p494, %p495
    %p497 = pneg %p496
    // Predicated region
    $region85: #{seq2seq_transformer_forward.5} parent=5 // pred_check
      _
    $region86: #{seq2seq_transformer_forward.5} parent=5 // pred_check_branch
      %499 = sbr.rel (%p496) target = $region88
    $region87: #{seq2seq_transformer_forward.5} parent=5 // pred_region
      %s500 = ssub.s32 %s23, 1
      %p501 = scmp.lt.s32.totalorder %s28, 1
      %s502 = scalar_select %p501, %s28, 1
      %s503 = smul.addr %s502, 2
      %s504 = smul.addr %s503, 8
      %s505 = scalar_lea.vmem %s0, %s504
      %p506 = pneg %p49
      %p507 = pneg %p46
      %p508 = pneg %p70
      %p509 = pneg %p67
      %p510 = scmp.lt.s32.totalorder %s28, 1
      %s511 = scalar_select %p510, %s28, 1
      %s512 = scalar_lea.vmem %s2, %s511
      %p513 = pneg %p96
      %p514 = pneg %p93
      %p515 = pneg %p117
      %p516 = pneg %p114
      %p517 = pneg %p138
      %p518 = pneg %p135
      %p519 = pneg %p159
      %p520 = pneg %p156
      %p521 = pneg %p180
      %p522 = pneg %p177
      %p523 = pneg %p201
      %p524 = pneg %p198
      %p525 = pneg %p222
      %p526 = pneg %p219
      %p527 = pneg %p243
      %p528 = pneg %p240
      %p529 = pneg %p264
      %p530 = pneg %p261
      %p531 = pneg %p285
      %p532 = pneg %p282
      %p533 = pneg %p306
      %p534 = pneg %p303
      %p535 = pneg %p327
      %p536 = pneg %p324
      %p537 = pneg %p348
      %p538 = pneg %p345
      %p539 = pneg %p369
      %p540 = pneg %p366
      %p541 = pneg %p390
      %p542 = pneg %p387
      %p543 = pneg %p416
      %p544 = pneg %p413
      %p545 = scmp.lt.s32.totalorder %s28, 1
      %s546 = scalar_select %p545, %s28, 1
      %s547 = smul.addr %s546, 2
      %s548 = smul.addr %s547, 8
      %s549 = scalar_lea.vmem %s17, %s548
      %p550 = scmp.lt.s32.totalorder %s28, 1
      %s551 = scalar_select %p550, %s28, 1
      %s552 = smul.addr %s551, 2
      %s553 = smul.addr %s552, 8
      %s554 = scalar_lea.vmem %s0, %s553
      %p555 = scmp.lt.s32.totalorder %s28, 1
      %s556 = scalar_select %p555, %s28, 1
      %s557 = scalar_lea.vmem %s2, %s556
      %p558 = scmp.lt.s32.totalorder %s28, 1
      %s559 = scalar_select %p558, %s28, 1
      %s560 = smul.addr %s559, 2
      %s561 = smul.addr %s560, 8
      %s562 = scalar_lea.vmem %s17, %s561
      %v564 = vld [vmem:[%s554] sm:$0xff]
      %v565 = vld [vmem:[%s554 + $0x8] sm:$0x3]
      %v566 = vld [vmem:[%s1] sm:$0xff]
      %v567 = vld [vmem:[%s1 + $0x8] sm:$0x3]
      %v568 = vld [vmem:[%s557] sm:$0x1]
      %v570 = vperm.slane %v568, 0
      %v572 = vadd.f32 %v566, %v570
      %v573 = vadd.f32 %v567, %v570
      %v574 = vpack.c.bf16 %v565, %v564
      %v575 = vld [vmem:[%s3] sm:$0xf]
      %v576 = vld [vmem:[%s3 + $0x4] sm:$0xf]
      %v577 = vld [vmem:[%s3 + $0x8] sm:$0xf]
      %v578 = vld [vmem:[%s3 + $0xc] sm:$0xf]
      %v579 = vld [vmem:[%s4] sm:$0x1]
      %v581 = vperm.slane %v579, 0
      %v587 = vunpack.c.l.b16 %v575
      %v588 = vunpack.c.l.b16 %v576
      %v589 = vunpack.c.l.b16 %v577
      %v590 = vunpack.c.l.b16 %v578
      %v591 = vpack.c.b16 %v588, %v587
      %v592 = vpack.c.b16 %v590, %v589
      %vm595 = vcmask 261120
      %v597 = vsel %vm595, %v574, 0
      %599 = vmatpush.bf16.msra.mxu0 0
      %600 = vmatpush.bf16.msra.mxu0 0
      %601 = vmatpush.bf16.msra.mxu0 0
      %602 = vmatpush.bf16.msra.mxu0 0
      %603 = vmatpush.bf16.msra.mxu0 0
      %604 = vmatpush.bf16.msra.mxu0 0
      %605 = vmatpush.bf16.msra.mxu0 %v592
      %606 = vmatpush.bf16.msra.mxu0 %v591
      %607 = vmatmul.bf16.gmra.mxu0 %v597
      %v608 = vpop.f32.mrf.mxu0
      %v609 = vadd.f32 %v581, %v608
      %v610 = vpop.f32.mrf.mxu0
      %v611 = vadd.f32 %v581, %v610
      %612 = vdwg.mxu0
      %v613 = vld [vmem:[%s5] sm:$0xf]
      %v614 = vld [vmem:[%s5 + $0x4] sm:$0xf]
      %v615 = vld [vmem:[%s5 + $0x8] sm:$0xf]
      %v616 = vld [vmem:[%s5 + $0xc] sm:$0xf]
      %v617 = vpack.c.bf16 %v609, %v609
      %v618 = vpack.c.bf16 %v611, %v611
      %v621 = vunpack.c.l.b16 %v617
      %v622 = vunpack.c.l.b16 %v618
      %v623 = vpack.c.b16 %v622, %v621
      %624 = vrot.lane.b32.xlu0 %v623, 96
      %v625 = vpop.permute.xlu0 %624
      %vm626 = vcmask 64512
      %v628 = vsel %vm626, %v623, 0
      %v631 = vsel %vm626, %v625, 0
      %633 = vmatpush.bf16.xpose.msra.mxu0 0
      %634 = vmatpush.bf16.xpose.msra.mxu0 0
      %635 = vmatpush.bf16.xpose.msra.mxu0 0
      %636 = vmatpush.bf16.xpose.msra.mxu0 0
      %637 = vmatpush.bf16.xpose.msra.mxu0 0
      %638 = vmatpush.bf16.xpose.msra.mxu0 0
      %639 = vmatpush.bf16.xpose.msra.mxu0 0
      %640 = vmatpush.bf16.xpose.msra.mxu0 %v631
      %641 = vmatmul.bf16.gmra.mxu0 %v628
      %v642 = vpop.f32.mrf.mxu0
      %v643 = vadd.f32 0.0, %v642
      %v644 = vpop.f32.mrf.mxu0
      %v645 = vadd.f32 0.0, %v644
      %646 = vdwg.mxu0
      %v647 = vmul.f32 %v643, 0.35355338
      %v648 = vmul.f32 %v645, 0.35355338
      %v649 = vadd.f32 %v647, %v572
      %v650 = vadd.f32 %v648, %v573
      %vm651 = vcmask 80896
      %v652 = vsel %vm651, %v649, -inf
      %653 = vmax.xlane.f32.xlu0 %v652
      %v654 = vpop.xlane.xlu0 %653
      %vm655 = vcmask 74752
      %v656 = vsel %vm655, %v650, -inf
      %657 = vmax.xlane.f32.xlu0 %v656
      %v658 = vpop.xlane.xlu0 %657
      %v659 = vsub.f32 %v649, %v654
      %v660 = vsub.f32 %v650, %v658
      %v661 = vmul.f32 %v659, 1.442695
      %v662 = vpow.pop %v661
      %v663 = vmul.f32 %v660, 1.442695
      %v664 = vpow.pop %v663
      %v665 = vsel %vm651, %v662, 0.0
      %666 = vadd.xlane.f32.xlu0 %v665
      %v667 = vpop.xlane.xlu0 %666
      %v668 = vsel %vm655, %v664, 0.0
      %669 = vadd.xlane.f32.xlu0 %v668
      %v670 = vpop.xlane.xlu0 %669
      %v671 = vrcp.pop %v667
      %v672 = vrcp.pop %v670
      %v673 = vmul.f32 %v662, %v671
      %v674 = vmul.f32 %v664, %v672
      %v675 = vpack.c.bf16 %v674, %v673
      %676 = vrot.lane.b32.xlu0 %v623, 64
      %v677 = vpop.permute.xlu0 %676
      %v679 = vsel %vm651, %v675, 0
      %vm681 = vcmask 1044480
      %v683 = vsel %vm681, %v677, 0
      %685 = vmatpush.bf16.msra.mxu0 0
      %686 = vmatpush.bf16.msra.mxu0 0
      %687 = vmatpush.bf16.msra.mxu0 0
      %688 = vmatpush.bf16.msra.mxu0 0
      %689 = vmatpush.bf16.msra.mxu0 0
      %690 = vmatpush.bf16.msra.mxu0 0
      %691 = vmatpush.bf16.msra.mxu0 0
      %692 = vmatpush.bf16.msra.mxu0 %v683
      %693 = vmatmul.bf16.gmra.mxu0 %v679
      %v694 = vpop.f32.mrf.mxu0
      %v695 = vadd.f32 0.0, %v694
      %v696 = vpop.f32.mrf.mxu0
      %v697 = vadd.f32 0.0, %v696
      %698 = vdwg.mxu0
      %699 = vrot.lane.b32.xlu0 %v623, 120
      %v700 = vpop.permute.xlu0 %699
      %701 = vrot.lane.b32.xlu0 %v623, 88
      %v702 = vpop.permute.xlu0 %701
      %v704 = vsel %vm626, %v700, 0
      %v707 = vsel %vm626, %v702, 0
      %709 = vmatpush.bf16.xpose.msra.mxu0 0
      %710 = vmatpush.bf16.xpose.msra.mxu0 0
      %711 = vmatpush.bf16.xpose.msra.mxu0 0
      %712 = vmatpush.bf16.xpose.msra.mxu0 0
      %713 = vmatpush.bf16.xpose.msra.mxu0 0
      %714 = vmatpush.bf16.xpose.msra.mxu0 0
      %715 = vmatpush.bf16.xpose.msra.mxu0 0
      %716 = vmatpush.bf16.xpose.msra.mxu0 %v707
      %717 = vmatmul.bf16.gmra.mxu0 %v704
      %v718 = vpop.f32.mrf.mxu0
      %v719 = vadd.f32 0.0, %v718
      %v720 = vpop.f32.mrf.mxu0
      %v721 = vadd.f32 0.0, %v720
      %722 = vdwg.mxu0
      %v723 = vmul.f32 %v719, 0.35355338
      %v724 = vmul.f32 %v721, 0.35355338
      %v725 = vadd.f32 %v723, %v572
      %v726 = vadd.f32 %v724, %v573
      %v727 = vsel %vm651, %v725, -inf
      %728 = vmax.xlane.f32.xlu0 %v727
      %v729 = vpop.xlane.xlu0 %728
      %v730 = vsel %vm655, %v726, -inf
      %731 = vmax.xlane.f32.xlu0 %v730
      %v732 = vpop.xlane.xlu0 %731
      %v733 = vsub.f32 %v725, %v729
      %v734 = vsub.f32 %v726, %v732
      %v735 = vmul.f32 %v733, 1.442695
      %v736 = vpow.pop %v735
      %v737 = vmul.f32 %v734, 1.442695
      %v738 = vpow.pop %v737
      %v739 = vsel %vm651, %v736, 0.0
      %740 = vadd.xlane.f32.xlu0 %v739
      %v741 = vpop.xlane.xlu0 %740
      %v742 = vsel %vm655, %v738, 0.0
      %743 = vadd.xlane.f32.xlu0 %v742
      %v744 = vpop.xlane.xlu0 %743
      %v745 = vrcp.pop %v741
      %v746 = vrcp.pop %v744
      %v747 = vmul.f32 %v736, %v745
      %v748 = vmul.f32 %v738, %v746
      %v749 = vpack.c.bf16 %v748, %v747
      %750 = vrot.lane.b32.xlu0 %v623, 56
      %v751 = vpop.permute.xlu0 %750
      %v753 = vsel %vm651, %v749, 0
      %v756 = vsel %vm681, %v751, 0
      %758 = vmatpush.bf16.msra.mxu0 0
      %759 = vmatpush.bf16.msra.mxu0 0
      %760 = vmatpush.bf16.msra.mxu0 0
      %761 = vmatpush.bf16.msra.mxu0 0
      %762 = vmatpush.bf16.msra.mxu0 0
      %763 = vmatpush.bf16.msra.mxu0 0
      %764 = vmatpush.bf16.msra.mxu0 0
      %765 = vmatpush.bf16.msra.mxu0 %v756
      %766 = vmatmul.bf16.gmra.mxu0 %v753
      %v767 = vpop.f32.mrf.mxu0
      %v768 = vadd.f32 0.0, %v767
      %v769 = vpop.f32.mrf.mxu0
      %v770 = vadd.f32 0.0, %v769
      %771 = vdwg.mxu0
      %772 = vrot.lane.b32.xlu0 %v623, 112
      %v773 = vpop.permute.xlu0 %772
      %774 = vrot.lane.b32.xlu0 %v623, 80
      %v775 = vpop.permute.xlu0 %774
      %v777 = vsel %vm626, %v773, 0
      %v780 = vsel %vm626, %v775, 0
      %782 = vmatpush.bf16.xpose.msra.mxu0 0
      %783 = vmatpush.bf16.xpose.msra.mxu0 0
      %784 = vmatpush.bf16.xpose.msra.mxu0 0
      %785 = vmatpush.bf16.xpose.msra.mxu0 0
      %786 = vmatpush.bf16.xpose.msra.mxu0 0
      %787 = vmatpush.bf16.xpose.msra.mxu0 0
      %788 = vmatpush.bf16.xpose.msra.mxu0 0
      %789 = vmatpush.bf16.xpose.msra.mxu0 %v780
      %790 = vmatmul.bf16.gmra.mxu0 %v777
      %v791 = vpop.f32.mrf.mxu0
      %v792 = vadd.f32 0.0, %v791
      %v793 = vpop.f32.mrf.mxu0
      %v794 = vadd.f32 0.0, %v793
      %795 = vdwg.mxu0
      %v796 = vmul.f32 %v792, 0.35355338
      %v797 = vmul.f32 %v794, 0.35355338
      %v798 = vadd.f32 %v796, %v572
      %v799 = vadd.f32 %v797, %v573
      %v800 = vsel %vm651, %v798, -inf
      %801 = vmax.xlane.f32.xlu0 %v800
      %v802 = vpop.xlane.xlu0 %801
      %v803 = vsel %vm655, %v799, -inf
      %804 = vmax.xlane.f32.xlu0 %v803
      %v805 = vpop.xlane.xlu0 %804
      %v806 = vsub.f32 %v798, %v802
      %v807 = vsub.f32 %v799, %v805
      %v808 = vmul.f32 %v806, 1.442695
      %v809 = vpow.pop %v808
      %v810 = vmul.f32 %v807, 1.442695
      %v811 = vpow.pop %v810
      %v812 = vsel %vm651, %v809, 0.0
      %813 = vadd.xlane.f32.xlu0 %v812
      %v814 = vpop.xlane.xlu0 %813
      %v815 = vsel %vm655, %v811, 0.0
      %816 = vadd.xlane.f32.xlu0 %v815
      %v817 = vpop.xlane.xlu0 %816
      %v818 = vrcp.pop %v814
      %v819 = vrcp.pop %v817
      %v820 = vmul.f32 %v809, %v818
      %v821 = vmul.f32 %v811, %v819
      %v822 = vpack.c.bf16 %v821, %v820
      %823 = vrot.lane.b32.xlu0 %v623, 48
      %v824 = vpop.permute.xlu0 %823
      %v826 = vsel %vm651, %v822, 0
      %v829 = vsel %vm681, %v824, 0
      %831 = vmatpush.bf16.msra.mxu0 0
      %832 = vmatpush.bf16.msra.mxu0 0
      %833 = vmatpush.bf16.msra.mxu0 0
      %834 = vmatpush.bf16.msra.mxu0 0
      %835 = vmatpush.bf16.msra.mxu0 0
      %836 = vmatpush.bf16.msra.mxu0 0
      %837 = vmatpush.bf16.msra.mxu0 0
      %838 = vmatpush.bf16.msra.mxu0 %v829
      %839 = vmatmul.bf16.gmra.mxu0 %v826
      %v840 = vpop.f32.mrf.mxu0
      %v841 = vadd.f32 0.0, %v840
      %v842 = vpop.f32.mrf.mxu0
      %v843 = vadd.f32 0.0, %v842
      %844 = vdwg.mxu0
      %845 = vrot.lane.b32.xlu0 %v623, 104
      %v846 = vpop.permute.xlu0 %845
      %847 = vrot.lane.b32.xlu0 %v623, 72
      %v848 = vpop.permute.xlu0 %847
      %v850 = vsel %vm626, %v846, 0
      %v853 = vsel %vm626, %v848, 0
      %855 = vmatpush.bf16.xpose.msra.mxu0 0
      %856 = vmatpush.bf16.xpose.msra.mxu0 0
      %857 = vmatpush.bf16.xpose.msra.mxu0 0
      %858 = vmatpush.bf16.xpose.msra.mxu0 0
      %859 = vmatpush.bf16.xpose.msra.mxu0 0
      %860 = vmatpush.bf16.xpose.msra.mxu0 0
      %861 = vmatpush.bf16.xpose.msra.mxu0 0
      %862 = vmatpush.bf16.xpose.msra.mxu0 %v853
      %863 = vmatmul.bf16.gmra.mxu0 %v850
      %v864 = vpop.f32.mrf.mxu0
      %v865 = vadd.f32 0.0, %v864
      %v866 = vpop.f32.mrf.mxu0
      %v867 = vadd.f32 0.0, %v866
      %868 = vdwg.mxu0
      %v869 = vmul.f32 %v865, 0.35355338
      %v870 = vmul.f32 %v867, 0.35355338
      %v871 = vadd.f32 %v869, %v572
      %v872 = vadd.f32 %v870, %v573
      %v873 = vsel %vm651, %v871, -inf
      %874 = vmax.xlane.f32.xlu0 %v873
      %v875 = vpop.xlane.xlu0 %874
      %v876 = vsel %vm655, %v872, -inf
      %877 = vmax.xlane.f32.xlu0 %v876
      %v878 = vpop.xlane.xlu0 %877
      %v879 = vsub.f32 %v871, %v875
      %v880 = vsub.f32 %v872, %v878
      %v881 = vmul.f32 %v879, 1.442695
      %v882 = vpow.pop %v881
      %v883 = vmul.f32 %v880, 1.442695
      %v884 = vpow.pop %v883
      %v885 = vsel %vm651, %v882, 0.0
      %886 = vadd.xlane.f32.xlu0 %v885
      %v887 = vpop.xlane.xlu0 %886
      %v888 = vsel %vm655, %v884, 0.0
      %889 = vadd.xlane.f32.xlu0 %v888
      %v890 = vpop.xlane.xlu0 %889
      %v891 = vrcp.pop %v887
      %v892 = vrcp.pop %v890
      %v893 = vmul.f32 %v882, %v891
      %v894 = vmul.f32 %v884, %v892
      %v895 = vpack.c.bf16 %v894, %v893
      %896 = vrot.lane.b32.xlu0 %v623, 40
      %v897 = vpop.permute.xlu0 %896
      %v899 = vsel %vm651, %v895, 0
      %v902 = vsel %vm681, %v897, 0
      %904 = vmatpush.bf16.msra.mxu0 0
      %905 = vmatpush.bf16.msra.mxu0 0
      %906 = vmatpush.bf16.msra.mxu0 0
      %907 = vmatpush.bf16.msra.mxu0 0
      %908 = vmatpush.bf16.msra.mxu0 0
      %909 = vmatpush.bf16.msra.mxu0 0
      %910 = vmatpush.bf16.msra.mxu0 0
      %911 = vmatpush.bf16.msra.mxu0 %v902
      %912 = vmatmul.bf16.gmra.mxu0 %v899
      %v913 = vpop.f32.mrf.mxu0
      %v914 = vadd.f32 0.0, %v913
      %v915 = vpop.f32.mrf.mxu0
      %v916 = vadd.f32 0.0, %v915
      %917 = vdwg.mxu0
      %920 = vrot.lane.b32.xlu0 %v768, 8
      %v921 = vpop.permute.xlu0 %920
      %922 = vrot.lane.b32.xlu0 %v770, 8
      %v923 = vpop.permute.xlu0 %922
      %928 = vrot.lane.b32.xlu0 %v841, 16
      %v929 = vpop.permute.xlu0 %928
      %930 = vrot.lane.b32.xlu0 %v843, 16
      %v931 = vpop.permute.xlu0 %930
      %936 = vrot.lane.b32.xlu0 %v914, 24
      %v937 = vpop.permute.xlu0 %936
      %938 = vrot.lane.b32.xlu0 %v916, 24
      %v939 = vpop.permute.xlu0 %938
      %v942 = vsel %vm626, %v695, %v921
      %v943 = vsel %vm626, %v697, %v923
      %vm944 = vcmask 130048
      %v945 = vsel %vm944, %v942, %v929
      %v946 = vsel %vm944, %v943, %v931
      %vm947 = vcmask 195584
      %v948 = vsel %vm947, %v945, %v937
      %v949 = vsel %vm947, %v946, %v939
      %v950 = vpack.c.bf16 %v949, %v948
      %v951 = vld [vmem:[%s6] sm:$0x1]
      %v953 = vperm.slane %v951, 0
      %v959 = vunpack.c.l.b16 %v613
      %v960 = vunpack.c.l.b16 %v614
      %v961 = vunpack.c.l.b16 %v615
      %v962 = vunpack.c.l.b16 %v616
      %v963 = vpack.c.b16 %v960, %v959
      %v964 = vpack.c.b16 %v962, %v961
      %v968 = vsel %vm595, %v950, 0
      %970 = vmatpush.bf16.msra.mxu0 0
      %971 = vmatpush.bf16.msra.mxu0 0
      %972 = vmatpush.bf16.msra.mxu0 0
      %973 = vmatpush.bf16.msra.mxu0 0
      %974 = vmatpush.bf16.msra.mxu0 0
      %975 = vmatpush.bf16.msra.mxu0 0
      %976 = vmatpush.bf16.msra.mxu0 %v964
      %977 = vmatpush.bf16.msra.mxu0 %v963
      %978 = vmatmul.bf16.gmra.mxu0 %v968
      %v979 = vpop.f32.mrf.mxu0
      %v980 = vadd.f32 %v953, %v979
      %v981 = vpop.f32.mrf.mxu0
      %v982 = vadd.f32 %v953, %v981
      %983 = vdwg.mxu0
      %v984 = vadd.f32 %v564, %v980
      %v985 = vadd.f32 %v565, %v982
      %v986 = vld [vmem:[%s7] sm:$0x1]
      %v987 = vld [vmem:[%s8] sm:$0x1]
      %v988 = vsel %vm595, %v984, 0.0
      %989 = vadd.xlane.f32.xlu0 %v988
      %v990 = vpop.xlane.xlu0 %989
      %vm991 = vcmask 254976
      %v992 = vsel %vm991, %v985, 0.0
      %993 = vadd.xlane.f32.xlu0 %v992
      %v994 = vpop.xlane.xlu0 %993
      %v995 = vrcp.pop 32.0
      %v996 = vmul.f32 32.0, %v995
      %v997 = vsub.f32 1.0, %v996
      %v998 = vmul.f32 %v995, %v997
      %v999 = vadd.f32 %v995, %v998
      %vm1000 = vweird.f32 %v995
      %v1001 = vsel %vm1000, %v995, %v999
      %v1002 = vmul.f32 %v990, %v1001
      %v1003 = vmul.f32 %v994, %v1001
      %v1004 = vsub.f32 %v984, %v1002
      %v1005 = vsub.f32 %v985, %v1003
      %v1006 = vmul.f32 %v1004, %v1004
      %v1007 = vmul.f32 %v1005, %v1005
      %v1008 = vsel %vm595, %v1006, 0.0
      %1009 = vadd.xlane.f32.xlu0 %v1008
      %v1010 = vpop.xlane.xlu0 %1009
      %v1011 = vsel %vm991, %v1007, 0.0
      %1012 = vadd.xlane.f32.xlu0 %v1011
      %v1013 = vpop.xlane.xlu0 %1012
      %v1014 = vmul.f32 %v1010, %v1001
      %v1015 = vmul.f32 %v1013, %v1001
      %v1016 = vadd.f32 %v1014, 1e-05
      %v1017 = vadd.f32 %v1015, 1e-05
      %v1018 = vrsqrt.pop %v1016
      %v1019 = vmul.f32 %v1018, %v1016
      %v1020 = vmul.f32 %v1019, %v1018
      %v1021 = vmul.f32 0.5, %v1020
      %v1022 = vsub.f32 1.5, %v1021
      %v1023 = vmul.f32 %v1018, %v1022
      %vm1024 = vweird.f32 %v1016
      %vm1025 = vweird.f32 %v1018
      %vm1026 = vmor %vm1024, %vm1025
      %v1027 = vsel %vm1026, %v1018, %v1023
      %v1028 = vrsqrt.pop %v1017
      %v1029 = vmul.f32 %v1028, %v1017
      %v1030 = vmul.f32 %v1029, %v1028
      %v1031 = vmul.f32 0.5, %v1030
      %v1032 = vsub.f32 1.5, %v1031
      %v1033 = vmul.f32 %v1028, %v1032
      %vm1034 = vweird.f32 %v1017
      %vm1035 = vweird.f32 %v1028
      %vm1036 = vmor %vm1034, %vm1035
      %v1037 = vsel %vm1036, %v1028, %v1033
      %v1038 = vmul.f32 %v1004, %v1027
      %v1039 = vmul.f32 %v1005, %v1037
      %v1041 = vperm.slane %v986, 0
      %v1043 = vmul.f32 %v1038, %v1041
      %v1044 = vmul.f32 %v1039, %v1041
      %v1046 = vperm.slane %v987, 0
      %v1048 = vadd.f32 %v1043, %v1046
      %v1049 = vadd.f32 %v1044, %v1046
      %v1050 = vpack.c.bf16 %v1049, %v1048
      %v1051 = vld [vmem:[%s9] sm:$0xf]
      %v1052 = vld [vmem:[%s9 + $0x4] sm:$0xf]
      %v1053 = vld [vmem:[%s9 + $0x8] sm:$0xf]
      %v1054 = vld [vmem:[%s9 + $0xc] sm:$0xf]
      %v1055 = vld [vmem:[%s10] sm:$0x1]
      %v1057 = vperm.slane %v1055, 0
      %v1063 = vunpack.c.l.b16 %v1051
      %v1064 = vunpack.c.l.b16 %v1052
      %v1065 = vunpack.c.l.b16 %v1053
      %v1066 = vunpack.c.l.b16 %v1054
      %v1067 = vpack.c.b16 %v1064, %v1063
      %v1068 = vpack.c.b16 %v1066, %v1065
      %v1072 = vsel %vm595, %v1050, 0
      %1074 = vmatpush.bf16.msra.mxu0 0
      %1075 = vmatpush.bf16.msra.mxu0 0
      %1076 = vmatpush.bf16.msra.mxu0 0
      %1077 = vmatpush.bf16.msra.mxu0 0
      %1078 = vmatpush.bf16.msra.mxu0 0
      %1079 = vmatpush.bf16.msra.mxu0 0
      %1080 = vmatpush.bf16.msra.mxu0 %v1068
      %1081 = vmatpush.bf16.msra.mxu0 %v1067
      %1082 = vmatmul.bf16.gmra.mxu0 %v1072
      %v1083 = vpop.f32.mrf.mxu0
      %v1084 = vadd.f32 %v1057, %v1083
      %v1085 = vpop.f32.mrf.mxu0
      %v1086 = vadd.f32 %v1057, %v1085
      %1087 = vdwg.mxu0
      %v1088 = vmax.f32 %v1084, 0.0
      %v1089 = vmax.f32 %v1086, 0.0
      %v1090 = vpack.c.bf16 %v1089, %v1088
      %v1091 = vld [vmem:[%s11] sm:$0xf]
      %v1092 = vld [vmem:[%s11 + $0x4] sm:$0xf]
      %v1093 = vld [vmem:[%s11 + $0x8] sm:$0xf]
      %v1094 = vld [vmem:[%s11 + $0xc] sm:$0xf]
      %v1095 = vld [vmem:[%s11 + $0x10] sm:$0xf]
      %v1096 = vld [vmem:[%s11 + $0x14] sm:$0xf]
      %v1097 = vld [vmem:[%s11 + $0x18] sm:$0xf]
      %v1098 = vld [vmem:[%s11 + $0x1c] sm:$0xf]
      %v1099 = vld [vmem:[%s12] sm:$0x1]
      %v1101 = vperm.slane %v1099, 0
      %v1111 = vunpack.c.l.b16 %v1091
      %v1112 = vunpack.c.l.b16 %v1092
      %v1113 = vunpack.c.l.b16 %v1093
      %v1114 = vunpack.c.l.b16 %v1094
      %v1115 = vunpack.c.l.b16 %v1095
      %v1116 = vunpack.c.l.b16 %v1096
      %v1117 = vunpack.c.l.b16 %v1097
      %v1118 = vunpack.c.l.b16 %v1098
      %v1119 = vpack.c.b16 %v1112, %v1111
      %v1120 = vpack.c.b16 %v1114, %v1113
      %v1121 = vpack.c.b16 %v1116, %v1115
      %v1122 = vpack.c.b16 %v1118, %v1117
      %vm1127 = vcmask 523264
      %v1129 = vsel %vm1127, %v1090, 0
      %1131 = vmatpush.bf16.msra.mxu0 0
      %1132 = vmatpush.bf16.msra.mxu0 0
      %1133 = vmatpush.bf16.msra.mxu0 0
      %1134 = vmatpush.bf16.msra.mxu0 0
      %1135 = vmatpush.bf16.msra.mxu0 %v1122
      %1136 = vmatpush.bf16.msra.mxu0 %v1121
      %1137 = vmatpush.bf16.msra.mxu0 %v1120
      %1138 = vmatpush.bf16.msra.mxu0 %v1119
      %1139 = vmatmul.bf16.gmra.mxu0 %v1129
      %v1140 = vpop.f32.mrf.mxu0
      %v1141 = vadd.f32 %v1101, %v1140
      %v1142 = vpop.f32.mrf.mxu0
      %v1143 = vadd.f32 %v1101, %v1142
      %1144 = vdwg.mxu0
      %v1145 = vadd.f32 %v1048, %v1141
      %v1146 = vadd.f32 %v1049, %v1143
      %v1147 = vld [vmem:[%s13] sm:$0x1]
      %v1148 = vld [vmem:[%s14] sm:$0x1]
      %v1149 = vsel %vm595, %v1145, 0.0
      %1150 = vadd.xlane.f32.xlu0 %v1149
      %v1151 = vpop.xlane.xlu0 %1150
      %v1152 = vsel %vm991, %v1146, 0.0
      %1153 = vadd.xlane.f32.xlu0 %v1152
      %v1154 = vpop.xlane.xlu0 %1153
      %v1155 = vmul.f32 %v1151, %v1001
      %v1156 = vmul.f32 %v1154, %v1001
      %v1157 = vsub.f32 %v1145, %v1155
      %v1158 = vsub.f32 %v1146, %v1156
      %v1159 = vmul.f32 %v1157, %v1157
      %v1160 = vmul.f32 %v1158, %v1158
      %v1161 = vsel %vm595, %v1159, 0.0
      %1162 = vadd.xlane.f32.xlu0 %v1161
      %v1163 = vpop.xlane.xlu0 %1162
      %v1164 = vsel %vm991, %v1160, 0.0
      %1165 = vadd.xlane.f32.xlu0 %v1164
      %v1166 = vpop.xlane.xlu0 %1165
      %v1167 = vmul.f32 %v1163, %v1001
      %v1168 = vmul.f32 %v1166, %v1001
      %v1169 = vadd.f32 %v1167, 1e-05
      %v1170 = vadd.f32 %v1168, 1e-05
      %v1171 = vrsqrt.pop %v1169
      %v1172 = vmul.f32 %v1171, %v1169
      %v1173 = vmul.f32 %v1172, %v1171
      %v1174 = vmul.f32 0.5, %v1173
      %v1175 = vsub.f32 1.5, %v1174
      %v1176 = vmul.f32 %v1171, %v1175
      %vm1177 = vweird.f32 %v1169
      %vm1178 = vweird.f32 %v1171
      %vm1179 = vmor %vm1177, %vm1178
      %v1180 = vsel %vm1179, %v1171, %v1176
      %v1181 = vrsqrt.pop %v1170
      %v1182 = vmul.f32 %v1181, %v1170
      %v1183 = vmul.f32 %v1182, %v1181
      %v1184 = vmul.f32 0.5, %v1183
      %v1185 = vsub.f32 1.5, %v1184
      %v1186 = vmul.f32 %v1181, %v1185
      %vm1187 = vweird.f32 %v1170
      %vm1188 = vweird.f32 %v1181
      %vm1189 = vmor %vm1187, %vm1188
      %v1190 = vsel %vm1189, %v1181, %v1186
      %v1191 = vmul.f32 %v1157, %v1180
      %v1192 = vmul.f32 %v1158, %v1190
      %v1194 = vperm.slane %v1147, 0
      %v1196 = vmul.f32 %v1191, %v1194
      %v1197 = vmul.f32 %v1192, %v1194
      %v1199 = vperm.slane %v1148, 0
      %v1201 = vadd.f32 %v1196, %v1199
      %v1202 = vadd.f32 %v1197, %v1199
      %1203 = vst.msk [vmem:[%s562] sm:$0xff] %vm595, %v1201
      %1204 = vst.msk [vmem:[%s562 + $0x8] sm:$0x3] %vm991, %v1202
      %p1205 = scmp.lt.s32.totalorder %s28, 1
      %s1206 = scalar_select %p1205, %s28, 1
      %s1207 = smul.addr %s1206, 2
      %s1208 = smul.addr %s1207, 8
      %s1209 = scalar_lea.vmem %s17, %s1208
      // Predicated region
      $region89: #{seq2seq_transformer_forward.5} parent=87 // pred_check
        %p1210 = pneg %p413
      $region90: #{seq2seq_transformer_forward.5} parent=87 // pred_check_branch
        %1212 = sbr.rel (%p1210) target = $region92
      $region91: #{seq2seq_transformer_forward.5} parent=87 // pred_region
        _
      $region92: #{seq2seq_transformer_forward.5} parent=87 // pred_fallthru
        _
    $region88: #{seq2seq_transformer_forward.5} parent=5 // pred_fallthru
      _
    %p1213 = scmp.le.s32.totalorder 2, %s23
    // Predicated region
    $region93: #{seq2seq_transformer_forward.5} parent=5 // pred_check
      %p1214 = pneg %p1213
    $region94: #{seq2seq_transformer_forward.5} parent=5 // pred_check_branch
      %1216 = sbr.rel (%p1214) target = $region96
    $region95: #{seq2seq_transformer_forward.5} parent=5 // pred_region
      %s1217 = ssub.s32 %s23, 2
      // Predicated region
      $region97: #{seq2seq_transformer_forward.5} parent=95 // pred_check
        %p1218 = pneg %p419
      $region98: #{seq2seq_transformer_forward.5} parent=95 // pred_check_branch
        %1220 = sbr.rel (%p1218) target = $region100
      $region99: #{seq2seq_transformer_forward.5} parent=95 // pred_region
        %p1221 = scmp.lt.s32.totalorder %s29, 1
        %s1222 = scalar_select %p1221, %s29, 1
        %s1223 = smul.addr %s1222, 2
        %s1224 = smul.addr %s1223, 8
        %s1225 = scalar_lea.vmem %s17, %s1224
      $region100: #{seq2seq_transformer_forward.5} parent=95 // pred_fallthru
        _
    $region96: #{seq2seq_transformer_forward.5} parent=5 // pred_fallthru
      _
  $region6: #{seq2seq_transformer_forward.5} parent=0 // loop_footer
    %s27 = sadd.s32 1, %s23
  $region7: #{seq2seq_transformer_forward.5} parent=0 // loop_footer_branch
    %22 = sbr.rel target = $region3
  $region8: #{seq2seq_transformer_forward.5} parent=0 // loop_exit
    _

// kernel: seq2seq_transformer_forward.6
$region0: #{seq2seq_transformer_forward.6}
  #allocation0 [shape = 'u32[]', space=smem, size = 0x4, offset = 0x4, fixed_abs, tag = 'smem constant byte address 0x4 - core index']
  #allocation1 [shape = 'u32[72,128]{1,0:T(1,128)}', space=vmem, size = 0x9000, scoped, tag = 'internal scratch']
  %s0 = inlined_call_operand.vmem [shape: f32[2,10,32], index: 0, kind: input, shape index: {}]
  %s1 = inlined_call_operand.vmem [shape: f32[10,10], index: 1, kind: input, shape index: {}]
  %s2 = inlined_call_operand.vmem [shape: f32[2,1,10], index: 2, kind: input, shape index: {}]
  %s3 = inlined_call_operand.vmem [shape: bf16[32,96], index: 3, kind: input, shape index: {}]
  %s4 = inlined_call_operand.vmem [shape: f32[1,96], index: 4, kind: input, shape index: {}]
  %s5 = inlined_call_operand.vmem [shape: bf16[32,32], index: 5, kind: input, shape index: {}]
  %s6 = inlined_call_operand.vmem [shape: f32[1,32], index: 6, kind: input, shape index: {}]
  %s7 = inlined_call_operand.vmem [shape: f32[1,32], index: 7, kind: input, shape index: {}]
  %s8 = inlined_call_operand.vmem [shape: f32[1,32], index: 8, kind: input, shape index: {}]
  %s9 = inlined_call_operand.vmem [shape: bf16[32,64], index: 9, kind: input, shape index: {}]
  %s10 = inlined_call_operand.vmem [shape: f32[1,64], index: 10, kind: input, shape index: {}]
  %s11 = inlined_call_operand.vmem [shape: bf16[64,32], index: 11, kind: input, shape index: {}]
  %s12 = inlined_call_operand.vmem [shape: f32[1,32], index: 12, kind: input, shape index: {}]
  %s13 = inlined_call_operand.vmem [shape: f32[1,32], index: 13, kind: input, shape index: {}]
  %s14 = inlined_call_operand.vmem [shape: f32[1,32], index: 14, kind: input, shape index: {}]
  %s15 = inlined_call_operand.vmem [shape: f32[1,32], index: 15, kind: input, shape index: {}]
  %s16 = inlined_call_operand.vmem [shape: f32[1,32], index: 16, kind: input, shape index: {}]
  %s17 = inlined_call_operand.vmem [shape: f32[2,10,32], index: 17, kind: output, shape index: {}]
  %s18 = sld [smem:[#allocation0]]
  $region101: #{seq2seq_transformer_forward.6} parent=0
    _
  %s20 = ssub.s32 1, %s18
  %s21 = scalar_select 0, %s20, %s18
  loop: start=0, step=1, limit=4
  $region2: #{seq2seq_transformer_forward.6} parent=0 // loop_pre_header
    _
  $region3: #{seq2seq_transformer_forward.6} parent=0 // loop_header
    %s23 = sphi 0, %s27
    %p24 = scmp.ge.s32.totalorder %s23, 4
    %s33 = sphi 0, %s35
    %s36 = sphi 0, %s33
    %s37 = sphi 0, %s36
    %s53 = sphi 0, %s37
    %s57 = sphi 0, %s57
    %s59 = sphi 0, %s57
    %s60 = sphi 0, %s59
    %s74 = sphi 0, %s60
    %s80 = sphi 0, %s82
    %s83 = sphi 0, %s80
    %s84 = sphi 0, %s83
    %s100 = sphi 0, %s84
    %s104 = sphi 0, %s104
    %s106 = sphi 0, %s104
    %s107 = sphi 0, %s106
    %s121 = sphi 0, %s107
    %s125 = sphi 0, %s125
    %s127 = sphi 0, %s125
    %s128 = sphi 0, %s127
    %s142 = sphi 0, %s128
    %s146 = sphi 0, %s146
    %s148 = sphi 0, %s146
    %s149 = sphi 0, %s148
    %s163 = sphi 0, %s149
    %s167 = sphi 0, %s167
    %s169 = sphi 0, %s167
    %s170 = sphi 0, %s169
    %s184 = sphi 0, %s170
    %s188 = sphi 0, %s188
    %s190 = sphi 0, %s188
    %s191 = sphi 0, %s190
    %s205 = sphi 0, %s191
    %s209 = sphi 0, %s209
    %s211 = sphi 0, %s209
    %s212 = sphi 0, %s211
    %s226 = sphi 0, %s212
    %s230 = sphi 0, %s230
    %s232 = sphi 0, %s230
    %s233 = sphi 0, %s232
    %s247 = sphi 0, %s233
    %s251 = sphi 0, %s251
    %s253 = sphi 0, %s251
    %s254 = sphi 0, %s253
    %s268 = sphi 0, %s254
    %s272 = sphi 0, %s272
    %s274 = sphi 0, %s272
    %s275 = sphi 0, %s274
    %s289 = sphi 0, %s275
    %s293 = sphi 0, %s293
    %s295 = sphi 0, %s293
    %s296 = sphi 0, %s295
    %s310 = sphi 0, %s296
    %s314 = sphi 0, %s314
    %s316 = sphi 0, %s314
    %s317 = sphi 0, %s316
    %s331 = sphi 0, %s317
    %s335 = sphi 0, %s335
    %s337 = sphi 0, %s335
    %s338 = sphi 0, %s337
    %s352 = sphi 0, %s338
    %s356 = sphi 0, %s356
    %s358 = sphi 0, %s356
    %s359 = sphi 0, %s358
    %s373 = sphi 0, %s359
    %s377 = sphi 0, %s377
    %s379 = sphi 0, %s377
    %s380 = sphi 0, %s379
    %s394 = sphi 0, %s380
    %s400 = sphi 0, %s402
    %s403 = sphi 0, %s400
    %s404 = sphi 0, %s403
    %s420 = sphi 0, %s404
  $region4: #{seq2seq_transformer_forward.6} parent=0 // loop_header_branch
    %26 = sbr.rel (%p24) target = $region8
  $region5: #{seq2seq_transformer_forward.6} parent=0 // loop_body
    %s28 = ssub.s32 %s23, 1
    %s29 = ssub.s32 %s23, 2
    %s30 = sadd.s32 %s23, 1
    %s31 = ssub.s32 %s23, %s30
    %p32 = scmp.eq.s32.totalorder %s31, 0
    %s34 = sadd.s32 %s33, 1
    %s35 = scalar_select %p32, %s33, %s34
    %p38 = pneg %p32
    %p39 = scmp.eq.s32.totalorder %s23, 1
    %p40 = por %p38, %p39
    %p41 = scmp.ne.s32.totalorder %s33, %s36
    %p42 = scmp.eq.s32.totalorder %s23, 0
    %p43 = por %p41, %p42
    %p44 = scmp.ne.s32.totalorder %s33, %s36
    %p45 = scmp.eq.s32.totalorder %s28, 1
    %p46 = por %p44, %p45
    %p47 = scmp.ne.s32.totalorder %s36, %s37
    %p48 = scmp.eq.s32.totalorder %s28, 0
    %p49 = por %p47, %p48
    %p50 = scmp.ne.s32.totalorder %s36, %s37
    %p51 = scmp.eq.s32.totalorder %s29, 1
    %p52 = por %p50, %p51
    %p54 = scmp.ne.s32.totalorder %s37, %s53
    %p55 = scmp.eq.s32.totalorder %s29, 0
    %p56 = por %p54, %p55
    %s58 = sadd.s32 %s57, 1
    %p61 = scmp.eq.s32.totalorder %s23, 1
    %p62 = scmp.ne.s32.totalorder %s57, %s59
    %p63 = scmp.eq.s32.totalorder %s23, 0
    %p64 = por %p62, %p63
    %p65 = scmp.ne.s32.totalorder %s57, %s59
    %p66 = scmp.eq.s32.totalorder %s28, 1
    %p67 = por %p65, %p66
    %p68 = scmp.ne.s32.totalorder %s59, %s60
    %p69 = scmp.eq.s32.totalorder %s28, 0
    %p70 = por %p68, %p69
    %p71 = scmp.ne.s32.totalorder %s59, %s60
    %p72 = scmp.eq.s32.totalorder %s29, 1
    %p73 = por %p71, %p72
    %p75 = scmp.ne.s32.totalorder %s60, %s74
    %p76 = scmp.eq.s32.totalorder %s29, 0
    %p77 = por %p75, %p76
    %s78 = ssub.s32 %s23, %s30
    %p79 = scmp.eq.s32.totalorder %s78, 0
    %s81 = sadd.s32 %s80, 1
    %s82 = scalar_select %p79, %s80, %s81
    %p85 = pneg %p79
    %p86 = scmp.eq.s32.totalorder %s23, 1
    %p87 = por %p85, %p86
    %p88 = scmp.ne.s32.totalorder %s80, %s83
    %p89 = scmp.eq.s32.totalorder %s23, 0
    %p90 = por %p88, %p89
    %p91 = scmp.ne.s32.totalorder %s80, %s83
    %p92 = scmp.eq.s32.totalorder %s28, 1
    %p93 = por %p91, %p92
    %p94 = scmp.ne.s32.totalorder %s83, %s84
    %p95 = scmp.eq.s32.totalorder %s28, 0
    %p96 = por %p94, %p95
    %p97 = scmp.ne.s32.totalorder %s83, %s84
    %p98 = scmp.eq.s32.totalorder %s29, 1
    %p99 = por %p97, %p98
    %p101 = scmp.ne.s32.totalorder %s84, %s100
    %p102 = scmp.eq.s32.totalorder %s29, 0
    %p103 = por %p101, %p102
    %s105 = sadd.s32 %s104, 1
    %p108 = scmp.eq.s32.totalorder %s23, 1
    %p109 = scmp.ne.s32.totalorder %s104, %s106
    %p110 = scmp.eq.s32.totalorder %s23, 0
    %p111 = por %p109, %p110
    %p112 = scmp.ne.s32.totalorder %s104, %s106
    %p113 = scmp.eq.s32.totalorder %s28, 1
    %p114 = por %p112, %p113
    %p115 = scmp.ne.s32.totalorder %s106, %s107
    %p116 = scmp.eq.s32.totalorder %s28, 0
    %p117 = por %p115, %p116
    %p118 = scmp.ne.s32.totalorder %s106, %s107
    %p119 = scmp.eq.s32.totalorder %s29, 1
    %p120 = por %p118, %p119
    %p122 = scmp.ne.s32.totalorder %s107, %s121
    %p123 = scmp.eq.s32.totalorder %s29, 0
    %p124 = por %p122, %p123
    %s126 = sadd.s32 %s125, 1
    %p129 = scmp.eq.s32.totalorder %s23, 1
    %p130 = scmp.ne.s32.totalorder %s125, %s127
    %p131 = scmp.eq.s32.totalorder %s23, 0
    %p132 = por %p130, %p131
    %p133 = scmp.ne.s32.totalorder %s125, %s127
    %p134 = scmp.eq.s32.totalorder %s28, 1
    %p135 = por %p133, %p134
    %p136 = scmp.ne.s32.totalorder %s127, %s128
    %p137 = scmp.eq.s32.totalorder %s28, 0
    %p138 = por %p136, %p137
    %p139 = scmp.ne.s32.totalorder %s127, %s128
    %p140 = scmp.eq.s32.totalorder %s29, 1
    %p141 = por %p139, %p140
    %p143 = scmp.ne.s32.totalorder %s128, %s142
    %p144 = scmp.eq.s32.totalorder %s29, 0
    %p145 = por %p143, %p144
    %s147 = sadd.s32 %s146, 1
    %p150 = scmp.eq.s32.totalorder %s23, 1
    %p151 = scmp.ne.s32.totalorder %s146, %s148
    %p152 = scmp.eq.s32.totalorder %s23, 0
    %p153 = por %p151, %p152
    %p154 = scmp.ne.s32.totalorder %s146, %s148
    %p155 = scmp.eq.s32.totalorder %s28, 1
    %p156 = por %p154, %p155
    %p157 = scmp.ne.s32.totalorder %s148, %s149
    %p158 = scmp.eq.s32.totalorder %s28, 0
    %p159 = por %p157, %p158
    %p160 = scmp.ne.s32.totalorder %s148, %s149
    %p161 = scmp.eq.s32.totalorder %s29, 1
    %p162 = por %p160, %p161
    %p164 = scmp.ne.s32.totalorder %s149, %s163
    %p165 = scmp.eq.s32.totalorder %s29, 0
    %p166 = por %p164, %p165
    %s168 = sadd.s32 %s167, 1
    %p171 = scmp.eq.s32.totalorder %s23, 1
    %p172 = scmp.ne.s32.totalorder %s167, %s169
    %p173 = scmp.eq.s32.totalorder %s23, 0
    %p174 = por %p172, %p173
    %p175 = scmp.ne.s32.totalorder %s167, %s169
    %p176 = scmp.eq.s32.totalorder %s28, 1
    %p177 = por %p175, %p176
    %p178 = scmp.ne.s32.totalorder %s169, %s170
    %p179 = scmp.eq.s32.totalorder %s28, 0
    %p180 = por %p178, %p179
    %p181 = scmp.ne.s32.totalorder %s169, %s170
    %p182 = scmp.eq.s32.totalorder %s29, 1
    %p183 = por %p181, %p182
    %p185 = scmp.ne.s32.totalorder %s170, %s184
    %p186 = scmp.eq.s32.totalorder %s29, 0
    %p187 = por %p185, %p186
    %s189 = sadd.s32 %s188, 1
    %p192 = scmp.eq.s32.totalorder %s23, 1
    %p193 = scmp.ne.s32.totalorder %s188, %s190
    %p194 = scmp.eq.s32.totalorder %s23, 0
    %p195 = por %p193, %p194
    %p196 = scmp.ne.s32.totalorder %s188, %s190
    %p197 = scmp.eq.s32.totalorder %s28, 1
    %p198 = por %p196, %p197
    %p199 = scmp.ne.s32.totalorder %s190, %s191
    %p200 = scmp.eq.s32.totalorder %s28, 0
    %p201 = por %p199, %p200
    %p202 = scmp.ne.s32.totalorder %s190, %s191
    %p203 = scmp.eq.s32.totalorder %s29, 1
    %p204 = por %p202, %p203
    %p206 = scmp.ne.s32.totalorder %s191, %s205
    %p207 = scmp.eq.s32.totalorder %s29, 0
    %p208 = por %p206, %p207
    %s210 = sadd.s32 %s209, 1
    %p213 = scmp.eq.s32.totalorder %s23, 1
    %p214 = scmp.ne.s32.totalorder %s209, %s211
    %p215 = scmp.eq.s32.totalorder %s23, 0
    %p216 = por %p214, %p215
    %p217 = scmp.ne.s32.totalorder %s209, %s211
    %p218 = scmp.eq.s32.totalorder %s28, 1
    %p219 = por %p217, %p218
    %p220 = scmp.ne.s32.totalorder %s211, %s212
    %p221 = scmp.eq.s32.totalorder %s28, 0
    %p222 = por %p220, %p221
    %p223 = scmp.ne.s32.totalorder %s211, %s212
    %p224 = scmp.eq.s32.totalorder %s29, 1
    %p225 = por %p223, %p224
    %p227 = scmp.ne.s32.totalorder %s212, %s226
    %p228 = scmp.eq.s32.totalorder %s29, 0
    %p229 = por %p227, %p228
    %s231 = sadd.s32 %s230, 1
    %p234 = scmp.eq.s32.totalorder %s23, 1
    %p235 = scmp.ne.s32.totalorder %s230, %s232
    %p236 = scmp.eq.s32.totalorder %s23, 0
    %p237 = por %p235, %p236
    %p238 = scmp.ne.s32.totalorder %s230, %s232
    %p239 = scmp.eq.s32.totalorder %s28, 1
    %p240 = por %p238, %p239
    %p241 = scmp.ne.s32.totalorder %s232, %s233
    %p242 = scmp.eq.s32.totalorder %s28, 0
    %p243 = por %p241, %p242
    %p244 = scmp.ne.s32.totalorder %s232, %s233
    %p245 = scmp.eq.s32.totalorder %s29, 1
    %p246 = por %p244, %p245
    %p248 = scmp.ne.s32.totalorder %s233, %s247
    %p249 = scmp.eq.s32.totalorder %s29, 0
    %p250 = por %p248, %p249
    %s252 = sadd.s32 %s251, 1
    %p255 = scmp.eq.s32.totalorder %s23, 1
    %p256 = scmp.ne.s32.totalorder %s251, %s253
    %p257 = scmp.eq.s32.totalorder %s23, 0
    %p258 = por %p256, %p257
    %p259 = scmp.ne.s32.totalorder %s251, %s253
    %p260 = scmp.eq.s32.totalorder %s28, 1
    %p261 = por %p259, %p260
    %p262 = scmp.ne.s32.totalorder %s253, %s254
    %p263 = scmp.eq.s32.totalorder %s28, 0
    %p264 = por %p262, %p263
    %p265 = scmp.ne.s32.totalorder %s253, %s254
    %p266 = scmp.eq.s32.totalorder %s29, 1
    %p267 = por %p265, %p266
    %p269 = scmp.ne.s32.totalorder %s254, %s268
    %p270 = scmp.eq.s32.totalorder %s29, 0
    %p271 = por %p269, %p270
    %s273 = sadd.s32 %s272, 1
    %p276 = scmp.eq.s32.totalorder %s23, 1
    %p277 = scmp.ne.s32.totalorder %s272, %s274
    %p278 = scmp.eq.s32.totalorder %s23, 0
    %p279 = por %p277, %p278
    %p280 = scmp.ne.s32.totalorder %s272, %s274
    %p281 = scmp.eq.s32.totalorder %s28, 1
    %p282 = por %p280, %p281
    %p283 = scmp.ne.s32.totalorder %s274, %s275
    %p284 = scmp.eq.s32.totalorder %s28, 0
    %p285 = por %p283, %p284
    %p286 = scmp.ne.s32.totalorder %s274, %s275
    %p287 = scmp.eq.s32.totalorder %s29, 1
    %p288 = por %p286, %p287
    %p290 = scmp.ne.s32.totalorder %s275, %s289
    %p291 = scmp.eq.s32.totalorder %s29, 0
    %p292 = por %p290, %p291
    %s294 = sadd.s32 %s293, 1
    %p297 = scmp.eq.s32.totalorder %s23, 1
    %p298 = scmp.ne.s32.totalorder %s293, %s295
    %p299 = scmp.eq.s32.totalorder %s23, 0
    %p300 = por %p298, %p299
    %p301 = scmp.ne.s32.totalorder %s293, %s295
    %p302 = scmp.eq.s32.totalorder %s28, 1
    %p303 = por %p301, %p302
    %p304 = scmp.ne.s32.totalorder %s295, %s296
    %p305 = scmp.eq.s32.totalorder %s28, 0
    %p306 = por %p304, %p305
    %p307 = scmp.ne.s32.totalorder %s295, %s296
    %p308 = scmp.eq.s32.totalorder %s29, 1
    %p309 = por %p307, %p308
    %p311 = scmp.ne.s32.totalorder %s296, %s310
    %p312 = scmp.eq.s32.totalorder %s29, 0
    %p313 = por %p311, %p312
    %s315 = sadd.s32 %s314, 1
    %p318 = scmp.eq.s32.totalorder %s23, 1
    %p319 = scmp.ne.s32.totalorder %s314, %s316
    %p320 = scmp.eq.s32.totalorder %s23, 0
    %p321 = por %p319, %p320
    %p322 = scmp.ne.s32.totalorder %s314, %s316
    %p323 = scmp.eq.s32.totalorder %s28, 1
    %p324 = por %p322, %p323
    %p325 = scmp.ne.s32.totalorder %s316, %s317
    %p326 = scmp.eq.s32.totalorder %s28, 0
    %p327 = por %p325, %p326
    %p328 = scmp.ne.s32.totalorder %s316, %s317
    %p329 = scmp.eq.s32.totalorder %s29, 1
    %p330 = por %p328, %p329
    %p332 = scmp.ne.s32.totalorder %s317, %s331
    %p333 = scmp.eq.s32.totalorder %s29, 0
    %p334 = por %p332, %p333
    %s336 = sadd.s32 %s335, 1
    %p339 = scmp.eq.s32.totalorder %s23, 1
    %p340 = scmp.ne.s32.totalorder %s335, %s337
    %p341 = scmp.eq.s32.totalorder %s23, 0
    %p342 = por %p340, %p341
    %p343 = scmp.ne.s32.totalorder %s335, %s337
    %p344 = scmp.eq.s32.totalorder %s28, 1
    %p345 = por %p343, %p344
    %p346 = scmp.ne.s32.totalorder %s337, %s338
    %p347 = scmp.eq.s32.totalorder %s28, 0
    %p348 = por %p346, %p347
    %p349 = scmp.ne.s32.totalorder %s337, %s338
    %p350 = scmp.eq.s32.totalorder %s29, 1
    %p351 = por %p349, %p350
    %p353 = scmp.ne.s32.totalorder %s338, %s352
    %p354 = scmp.eq.s32.totalorder %s29, 0
    %p355 = por %p353, %p354
    %s357 = sadd.s32 %s356, 1
    %p360 = scmp.eq.s32.totalorder %s23, 1
    %p361 = scmp.ne.s32.totalorder %s356, %s358
    %p362 = scmp.eq.s32.totalorder %s23, 0
    %p363 = por %p361, %p362
    %p364 = scmp.ne.s32.totalorder %s356, %s358
    %p365 = scmp.eq.s32.totalorder %s28, 1
    %p366 = por %p364, %p365
    %p367 = scmp.ne.s32.totalorder %s358, %s359
    %p368 = scmp.eq.s32.totalorder %s28, 0
    %p369 = por %p367, %p368
    %p370 = scmp.ne.s32.totalorder %s358, %s359
    %p371 = scmp.eq.s32.totalorder %s29, 1
    %p372 = por %p370, %p371
    %p374 = scmp.ne.s32.totalorder %s359, %s373
    %p375 = scmp.eq.s32.totalorder %s29, 0
    %p376 = por %p374, %p375
    %s378 = sadd.s32 %s377, 1
    %p381 = scmp.eq.s32.totalorder %s23, 1
    %p382 = scmp.ne.s32.totalorder %s377, %s379
    %p383 = scmp.eq.s32.totalorder %s23, 0
    %p384 = por %p382, %p383
    %p385 = scmp.ne.s32.totalorder %s377, %s379
    %p386 = scmp.eq.s32.totalorder %s28, 1
    %p387 = por %p385, %p386
    %p388 = scmp.ne.s32.totalorder %s379, %s380
    %p389 = scmp.eq.s32.totalorder %s28, 0
    %p390 = por %p388, %p389
    %p391 = scmp.ne.s32.totalorder %s379, %s380
    %p392 = scmp.eq.s32.totalorder %s29, 1
    %p393 = por %p391, %p392
    %p395 = scmp.ne.s32.totalorder %s380, %s394
    %p396 = scmp.eq.s32.totalorder %s29, 0
    %p397 = por %p395, %p396
    %s398 = ssub.s32 %s23, %s30
    %p399 = scmp.eq.s32.totalorder %s398, 0
    %s401 = sadd.s32 %s400, 1
    %s402 = scalar_select %p399, %s400, %s401
    %p405 = pneg %p399
    %p406 = scmp.eq.s32.totalorder %s23, 1
    %p407 = por %p405, %p406
    %p408 = scmp.ne.s32.totalorder %s400, %s403
    %p409 = scmp.eq.s32.totalorder %s23, 0
    %p410 = por %p408, %p409
    %p411 = scmp.ne.s32.totalorder %s400, %s403
    %p412 = scmp.eq.s32.totalorder %s28, 1
    %p413 = por %p411, %p412
    %p414 = scmp.ne.s32.totalorder %s403, %s404
    %p415 = scmp.eq.s32.totalorder %s28, 0
    %p416 = por %p414, %p415
    %p417 = scmp.ne.s32.totalorder %s403, %s404
    %p418 = scmp.eq.s32.totalorder %s29, 1
    %p419 = por %p417, %p418
    %p421 = scmp.ne.s32.totalorder %s404, %s420
    %p422 = scmp.eq.s32.totalorder %s29, 0
    %p423 = por %p421, %p422
    %p424 = scmp.le.s32.totalorder 1, %s23
    %p425 = scmp.lt.s32.totalorder %s23, 3
    %p426 = pnand %p424, %p425
    %p427 = pneg %p426
    // Predicated region
    $region9: #{seq2seq_transformer_forward.6} parent=5 // pred_check
      _
    $region10: #{seq2seq_transformer_forward.6} parent=5 // pred_check_branch
      %429 = sbr.rel (%p426) target = $region12
    $region11: #{seq2seq_transformer_forward.6} parent=5 // pred_region
      %s430 = ssub.s32 %s23, 1
      // Predicated region
      $region13: #{seq2seq_transformer_forward.6} parent=11 // pred_check
        %p431 = pneg %p70
      $region14: #{seq2seq_transformer_forward.6} parent=11 // pred_check_branch
        %433 = sbr.rel (%p431) target = $region16
      $region15: #{seq2seq_transformer_forward.6} parent=11 // pred_region
        _
      $region16: #{seq2seq_transformer_forward.6} parent=11 // pred_fallthru
        _
      // Predicated region
      $region17: #{seq2seq_transformer_forward.6} parent=11 // pred_check
        %p434 = pneg %p117
      $region18: #{seq2seq_transformer_forward.6} parent=11 // pred_check_branch
        %436 = sbr.rel (%p434) target = $region20
      $region19: #{seq2seq_transformer_forward.6} parent=11 // pred_region
        _
      $region20: #{seq2seq_transformer_forward.6} parent=11 // pred_fallthru
        _
      // Predicated region
      $region21: #{seq2seq_transformer_forward.6} parent=11 // pred_check
        %p437 = pneg %p138
      $region22: #{seq2seq_transformer_forward.6} parent=11 // pred_check_branch
        %439 = sbr.rel (%p437) target = $region24
      $region23: #{seq2seq_transformer_forward.6} parent=11 // pred_region
        _
      $region24: #{seq2seq_transformer_forward.6} parent=11 // pred_fallthru
        _
      // Predicated region
      $region25: #{seq2seq_transformer_forward.6} parent=11 // pred_check
        %p440 = pneg %p159
      $region26: #{seq2seq_transformer_forward.6} parent=11 // pred_check_branch
        %442 = sbr.rel (%p440) target = $region28
      $region27: #{seq2seq_transformer_forward.6} parent=11 // pred_region
        _
      $region28: #{seq2seq_transformer_forward.6} parent=11 // pred_fallthru
        _
      // Predicated region
      $region29: #{seq2seq_transformer_forward.6} parent=11 // pred_check
        %p443 = pneg %p180
      $region30: #{seq2seq_transformer_forward.6} parent=11 // pred_check_branch
        %445 = sbr.rel (%p443) target = $region32
      $region31: #{seq2seq_transformer_forward.6} parent=11 // pred_region
        _
      $region32: #{seq2seq_transformer_forward.6} parent=11 // pred_fallthru
        _
      // Predicated region
      $region33: #{seq2seq_transformer_forward.6} parent=11 // pred_check
        %p446 = pneg %p201
      $region34: #{seq2seq_transformer_forward.6} parent=11 // pred_check_branch
        %448 = sbr.rel (%p446) target = $region36
      $region35: #{seq2seq_transformer_forward.6} parent=11 // pred_region
        _
      $region36: #{seq2seq_transformer_forward.6} parent=11 // pred_fallthru
        _
      // Predicated region
      $region37: #{seq2seq_transformer_forward.6} parent=11 // pred_check
        %p449 = pneg %p222
      $region38: #{seq2seq_transformer_forward.6} parent=11 // pred_check_branch
        %451 = sbr.rel (%p449) target = $region40
      $region39: #{seq2seq_transformer_forward.6} parent=11 // pred_region
        _
      $region40: #{seq2seq_transformer_forward.6} parent=11 // pred_fallthru
        _
      // Predicated region
      $region41: #{seq2seq_transformer_forward.6} parent=11 // pred_check
        %p452 = pneg %p243
      $region42: #{seq2seq_transformer_forward.6} parent=11 // pred_check_branch
        %454 = sbr.rel (%p452) target = $region44
      $region43: #{seq2seq_transformer_forward.6} parent=11 // pred_region
        _
      $region44: #{seq2seq_transformer_forward.6} parent=11 // pred_fallthru
        _
      // Predicated region
      $region45: #{seq2seq_transformer_forward.6} parent=11 // pred_check
        %p455 = pneg %p264
      $region46: #{seq2seq_transformer_forward.6} parent=11 // pred_check_branch
        %457 = sbr.rel (%p455) target = $region48
      $region47: #{seq2seq_transformer_forward.6} parent=11 // pred_region
        _
      $region48: #{seq2seq_transformer_forward.6} parent=11 // pred_fallthru
        _
      // Predicated region
      $region49: #{seq2seq_transformer_forward.6} parent=11 // pred_check
        %p458 = pneg %p285
      $region50: #{seq2seq_transformer_forward.6} parent=11 // pred_check_branch
        %460 = sbr.rel (%p458) target = $region52
      $region51: #{seq2seq_transformer_forward.6} parent=11 // pred_region
        _
      $region52: #{seq2seq_transformer_forward.6} parent=11 // pred_fallthru
        _
      // Predicated region
      $region53: #{seq2seq_transformer_forward.6} parent=11 // pred_check
        %p461 = pneg %p306
      $region54: #{seq2seq_transformer_forward.6} parent=11 // pred_check_branch
        %463 = sbr.rel (%p461) target = $region56
      $region55: #{seq2seq_transformer_forward.6} parent=11 // pred_region
        _
      $region56: #{seq2seq_transformer_forward.6} parent=11 // pred_fallthru
        _
      // Predicated region
      $region57: #{seq2seq_transformer_forward.6} parent=11 // pred_check
        %p464 = pneg %p327
      $region58: #{seq2seq_transformer_forward.6} parent=11 // pred_check_branch
        %466 = sbr.rel (%p464) target = $region60
      $region59: #{seq2seq_transformer_forward.6} parent=11 // pred_region
        _
      $region60: #{seq2seq_transformer_forward.6} parent=11 // pred_fallthru
        _
      // Predicated region
      $region61: #{seq2seq_transformer_forward.6} parent=11 // pred_check
        %p467 = pneg %p348
      $region62: #{seq2seq_transformer_forward.6} parent=11 // pred_check_branch
        %469 = sbr.rel (%p467) target = $region64
      $region63: #{seq2seq_transformer_forward.6} parent=11 // pred_region
        _
      $region64: #{seq2seq_transformer_forward.6} parent=11 // pred_fallthru
        _
      // Predicated region
      $region65: #{seq2seq_transformer_forward.6} parent=11 // pred_check
        %p470 = pneg %p369
      $region66: #{seq2seq_transformer_forward.6} parent=11 // pred_check_branch
        %472 = sbr.rel (%p470) target = $region68
      $region67: #{seq2seq_transformer_forward.6} parent=11 // pred_region
        _
      $region68: #{seq2seq_transformer_forward.6} parent=11 // pred_fallthru
        _
      // Predicated region
      $region69: #{seq2seq_transformer_forward.6} parent=11 // pred_check
        %p473 = pneg %p390
      $region70: #{seq2seq_transformer_forward.6} parent=11 // pred_check_branch
        %475 = sbr.rel (%p473) target = $region72
      $region71: #{seq2seq_transformer_forward.6} parent=11 // pred_region
        _
      $region72: #{seq2seq_transformer_forward.6} parent=11 // pred_fallthru
        _
    $region12: #{seq2seq_transformer_forward.6} parent=5 // pred_fallthru
      _
    %p476 = scmp.lt.s32.totalorder %s23, 2
    // Predicated region
    $region73: #{seq2seq_transformer_forward.6} parent=5 // pred_check
      %p477 = pneg %p476
    $region74: #{seq2seq_transformer_forward.6} parent=5 // pred_check_branch
      %479 = sbr.rel (%p477) target = $region76
    $region75: #{seq2seq_transformer_forward.6} parent=5 // pred_region
      // Predicated region
      $region77: #{seq2seq_transformer_forward.6} parent=75 // pred_check
        %p480 = pneg %p43
      $region78: #{seq2seq_transformer_forward.6} parent=75 // pred_check_branch
        %482 = sbr.rel (%p480) target = $region80
      $region79: #{seq2seq_transformer_forward.6} parent=75 // pred_region
        %p483 = scmp.lt.s32.totalorder %s23, 1
        %s484 = scalar_select %p483, %s23, 1
        %s485 = smul.addr %s484, 2
        %s486 = smul.addr %s485, 8
        %s487 = scalar_lea.vmem %s0, %s486
      $region80: #{seq2seq_transformer_forward.6} parent=75 // pred_fallthru
        _
      // Predicated region
      $region81: #{seq2seq_transformer_forward.6} parent=75 // pred_check
        %p488 = pneg %p90
      $region82: #{seq2seq_transformer_forward.6} parent=75 // pred_check_branch
        %490 = sbr.rel (%p488) target = $region84
      $region83: #{seq2seq_transformer_forward.6} parent=75 // pred_region
        %p491 = scmp.lt.s32.totalorder %s23, 1
        %s492 = scalar_select %p491, %s23, 1
        %s493 = scalar_lea.vmem %s2, %s492
      $region84: #{seq2seq_transformer_forward.6} parent=75 // pred_fallthru
        _
    $region76: #{seq2seq_transformer_forward.6} parent=5 // pred_fallthru
      _
    %p494 = scmp.le.s32.totalorder 1, %s23
    %p495 = scmp.lt.s32.totalorder %s23, 3
    %p496 = pnand %p494, %p495
    %p497 = pneg %p496
    // Predicated region
    $region85: #{seq2seq_transformer_forward.6} parent=5 // pred_check
      _
    $region86: #{seq2seq_transformer_forward.6} parent=5 // pred_check_branch
      %499 = sbr.rel (%p496) target = $region88
    $region87: #{seq2seq_transformer_forward.6} parent=5 // pred_region
      %s500 = ssub.s32 %s23, 1
      %p501 = scmp.lt.s32.totalorder %s28, 1
      %s502 = scalar_select %p501, %s28, 1
      %s503 = smul.addr %s502, 2
      %s504 = smul.addr %s503, 8
      %s505 = scalar_lea.vmem %s0, %s504
      %p506 = pneg %p49
      %p507 = pneg %p46
      %p508 = pneg %p70
      %p509 = pneg %p67
      %p510 = scmp.lt.s32.totalorder %s28, 1
      %s511 = scalar_select %p510, %s28, 1
      %s512 = scalar_lea.vmem %s2, %s511
      %p513 = pneg %p96
      %p514 = pneg %p93
      %p515 = pneg %p117
      %p516 = pneg %p114
      %p517 = pneg %p138
      %p518 = pneg %p135
      %p519 = pneg %p159
      %p520 = pneg %p156
      %p521 = pneg %p180
      %p522 = pneg %p177
      %p523 = pneg %p201
      %p524 = pneg %p198
      %p525 = pneg %p222
      %p526 = pneg %p219
      %p527 = pneg %p243
      %p528 = pneg %p240
      %p529 = pneg %p264
      %p530 = pneg %p261
      %p531 = pneg %p285
      %p532 = pneg %p282
      %p533 = pneg %p306
      %p534 = pneg %p303
      %p535 = pneg %p327
      %p536 = pneg %p324
      %p537 = pneg %p348
      %p538 = pneg %p345
      %p539 = pneg %p369
      %p540 = pneg %p366
      %p541 = pneg %p390
      %p542 = pneg %p387
      %p543 = pneg %p416
      %p544 = pneg %p413
      %p545 = scmp.lt.s32.totalorder %s28, 1
      %s546 = scalar_select %p545, %s28, 1
      %s547 = smul.addr %s546, 2
      %s548 = smul.addr %s547, 8
      %s549 = scalar_lea.vmem %s17, %s548
      %p550 = scmp.lt.s32.totalorder %s28, 1
      %s551 = scalar_select %p550, %s28, 1
      %s552 = smul.addr %s551, 2
      %s553 = smul.addr %s552, 8
      %s554 = scalar_lea.vmem %s0, %s553
      %p555 = scmp.lt.s32.totalorder %s28, 1
      %s556 = scalar_select %p555, %s28, 1
      %s557 = scalar_lea.vmem %s2, %s556
      %p558 = scmp.lt.s32.totalorder %s28, 1
      %s559 = scalar_select %p558, %s28, 1
      %s560 = smul.addr %s559, 2
      %s561 = smul.addr %s560, 8
      %s562 = scalar_lea.vmem %s17, %s561
      %v564 = vld [vmem:[%s554] sm:$0xff]
      %v565 = vld [vmem:[%s554 + $0x8] sm:$0x3]
      %v566 = vld [vmem:[%s1] sm:$0xff]
      %v567 = vld [vmem:[%s1 + $0x8] sm:$0x3]
      %v568 = vld [vmem:[%s557] sm:$0x1]
      %v570 = vperm.slane %v568, 0
      %v572 = vadd.f32 %v566, %v570
      %v573 = vadd.f32 %v567, %v570
      %v574 = vpack.c.bf16 %v565, %v564
      %v575 = vld [vmem:[%s3] sm:$0xf]
      %v576 = vld [vmem:[%s3 + $0x4] sm:$0xf]
      %v577 = vld [vmem:[%s3 + $0x8] sm:$0xf]
      %v578 = vld [vmem:[%s3 + $0xc] sm:$0xf]
      %v579 = vld [vmem:[%s4] sm:$0x1]
      %v581 = vperm.slane %v579, 0
      %v587 = vunpack.c.l.b16 %v575
      %v588 = vunpack.c.l.b16 %v576
      %v589 = vunpack.c.l.b16 %v577
      %v590 = vunpack.c.l.b16 %v578
      %v591 = vpack.c.b16 %v588, %v587
      %v592 = vpack.c.b16 %v590, %v589
      %vm595 = vcmask 261120
      %v597 = vsel %vm595, %v574, 0
      %599 = vmatpush.bf16.msra.mxu0 0
      %600 = vmatpush.bf16.msra.mxu0 0
      %601 = vmatpush.bf16.msra.mxu0 0
      %602 = vmatpush.bf16.msra.mxu0 0
      %603 = vmatpush.bf16.msra.mxu0 0
      %604 = vmatpush.bf16.msra.mxu0 0
      %605 = vmatpush.bf16.msra.mxu0 %v592
      %606 = vmatpush.bf16.msra.mxu0 %v591
      %607 = vmatmul.bf16.gmra.mxu0 %v597
      %v608 = vpop.f32.mrf.mxu0
      %v609 = vadd.f32 %v581, %v608
      %v610 = vpop.f32.mrf.mxu0
      %v611 = vadd.f32 %v581, %v610
      %612 = vdwg.mxu0
      %v613 = vld [vmem:[%s5] sm:$0xf]
      %v614 = vld [vmem:[%s5 + $0x4] sm:$0xf]
      %v615 = vld [vmem:[%s5 + $0x8] sm:$0xf]
      %v616 = vld [vmem:[%s5 + $0xc] sm:$0xf]
      %v617 = vpack.c.bf16 %v609, %v609
      %v618 = vpack.c.bf16 %v611, %v611
      %v621 = vunpack.c.l.b16 %v617
      %v622 = vunpack.c.l.b16 %v618
      %v623 = vpack.c.b16 %v622, %v621
      %624 = vrot.lane.b32.xlu0 %v623, 96
      %v625 = vpop.permute.xlu0 %624
      %vm626 = vcmask 64512
      %v628 = vsel %vm626, %v623, 0
      %v631 = vsel %vm626, %v625, 0
      %633 = vmatpush.bf16.xpose.msra.mxu0 0
      %634 = vmatpush.bf16.xpose.msra.mxu0 0
      %635 = vmatpush.bf16.xpose.msra.mxu0 0
      %636 = vmatpush.bf16.xpose.msra.mxu0 0
      %637 = vmatpush.bf16.xpose.msra.mxu0 0
      %638 = vmatpush.bf16.xpose.msra.mxu0 0
      %639 = vmatpush.bf16.xpose.msra.mxu0 0
      %640 = vmatpush.bf16.xpose.msra.mxu0 %v631
      %641 = vmatmul.bf16.gmra.mxu0 %v628
      %v642 = vpop.f32.mrf.mxu0
      %v643 = vadd.f32 0.0, %v642
      %v644 = vpop.f32.mrf.mxu0
      %v645 = vadd.f32 0.0, %v644
      %646 = vdwg.mxu0
      %v647 = vmul.f32 %v643, 0.35355338
      %v648 = vmul.f32 %v645, 0.35355338
      %v649 = vadd.f32 %v647, %v572
      %v650 = vadd.f32 %v648, %v573
      %vm651 = vcmask 80896
      %v652 = vsel %vm651, %v649, -inf
      %653 = vmax.xlane.f32.xlu0 %v652
      %v654 = vpop.xlane.xlu0 %653
      %vm655 = vcmask 74752
      %v656 = vsel %vm655, %v650, -inf
      %657 = vmax.xlane.f32.xlu0 %v656
      %v658 = vpop.xlane.xlu0 %657
      %v659 = vsub.f32 %v649, %v654
      %v660 = vsub.f32 %v650, %v658
      %v661 = vmul.f32 %v659, 1.442695
      %v662 = vpow.pop %v661
      %v663 = vmul.f32 %v660, 1.442695
      %v664 = vpow.pop %v663
      %v665 = vsel %vm651, %v662, 0.0
      %666 = vadd.xlane.f32.xlu0 %v665
      %v667 = vpop.xlane.xlu0 %666
      %v668 = vsel %vm655, %v664, 0.0
      %669 = vadd.xlane.f32.xlu0 %v668
      %v670 = vpop.xlane.xlu0 %669
      %v671 = vrcp.pop %v667
      %v672 = vrcp.pop %v670
      %v673 = vmul.f32 %v662, %v671
      %v674 = vmul.f32 %v664, %v672
      %v675 = vpack.c.bf16 %v674, %v673
      %676 = vrot.lane.b32.xlu0 %v623, 64
      %v677 = vpop.permute.xlu0 %676
      %v679 = vsel %vm651, %v675, 0
      %vm681 = vcmask 1044480
      %v683 = vsel %vm681, %v677, 0
      %685 = vmatpush.bf16.msra.mxu0 0
      %686 = vmatpush.bf16.msra.mxu0 0
      %687 = vmatpush.bf16.msra.mxu0 0
      %688 = vmatpush.bf16.msra.mxu0 0
      %689 = vmatpush.bf16.msra.mxu0 0
      %690 = vmatpush.bf16.msra.mxu0 0
      %691 = vmatpush.bf16.msra.mxu0 0
      %692 = vmatpush.bf16.msra.mxu0 %v683
      %693 = vmatmul.bf16.gmra.mxu0 %v679
      %v694 = vpop.f32.mrf.mxu0
      %v695 = vadd.f32 0.0, %v694
      %v696 = vpop.f32.mrf.mxu0
      %v697 = vadd.f32 0.0, %v696
      %698 = vdwg.mxu0
      %699 = vrot.lane.b32.xlu0 %v623, 120
      %v700 = vpop.permute.xlu0 %699
      %701 = vrot.lane.b32.xlu0 %v623, 88
      %v702 = vpop.permute.xlu0 %701
      %v704 = vsel %vm626, %v700, 0
      %v707 = vsel %vm626, %v702, 0
      %709 = vmatpush.bf16.xpose.msra.mxu0 0
      %710 = vmatpush.bf16.xpose.msra.mxu0 0
      %711 = vmatpush.bf16.xpose.msra.mxu0 0
      %712 = vmatpush.bf16.xpose.msra.mxu0 0
      %713 = vmatpush.bf16.xpose.msra.mxu0 0
      %714 = vmatpush.bf16.xpose.msra.mxu0 0
      %715 = vmatpush.bf16.xpose.msra.mxu0 0
      %716 = vmatpush.bf16.xpose.msra.mxu0 %v707
      %717 = vmatmul.bf16.gmra.mxu0 %v704
      %v718 = vpop.f32.mrf.mxu0
      %v719 = vadd.f32 0.0, %v718
      %v720 = vpop.f32.mrf.mxu0
      %v721 = vadd.f32 0.0, %v720
      %722 = vdwg.mxu0
      %v723 = vmul.f32 %v719, 0.35355338
      %v724 = vmul.f32 %v721, 0.35355338
      %v725 = vadd.f32 %v723, %v572
      %v726 = vadd.f32 %v724, %v573
      %v727 = vsel %vm651, %v725, -inf
      %728 = vmax.xlane.f32.xlu0 %v727
      %v729 = vpop.xlane.xlu0 %728
      %v730 = vsel %vm655, %v726, -inf
      %731 = vmax.xlane.f32.xlu0 %v730
      %v732 = vpop.xlane.xlu0 %731
      %v733 = vsub.f32 %v725, %v729
      %v734 = vsub.f32 %v726, %v732
      %v735 = vmul.f32 %v733, 1.442695
      %v736 = vpow.pop %v735
      %v737 = vmul.f32 %v734, 1.442695
      %v738 = vpow.pop %v737
      %v739 = vsel %vm651, %v736, 0.0
      %740 = vadd.xlane.f32.xlu0 %v739
      %v741 = vpop.xlane.xlu0 %740
      %v742 = vsel %vm655, %v738, 0.0
      %743 = vadd.xlane.f32.xlu0 %v742
      %v744 = vpop.xlane.xlu0 %743
      %v745 = vrcp.pop %v741
      %v746 = vrcp.pop %v744
      %v747 = vmul.f32 %v736, %v745
      %v748 = vmul.f32 %v738, %v746
      %v749 = vpack.c.bf16 %v748, %v747
      %750 = vrot.lane.b32.xlu0 %v623, 56
      %v751 = vpop.permute.xlu0 %750
      %v753 = vsel %vm651, %v749, 0
      %v756 = vsel %vm681, %v751, 0
      %758 = vmatpush.bf16.msra.mxu0 0
      %759 = vmatpush.bf16.msra.mxu0 0
      %760 = vmatpush.bf16.msra.mxu0 0
      %761 = vmatpush.bf16.msra.mxu0 0
      %762 = vmatpush.bf16.msra.mxu0 0
      %763 = vmatpush.bf16.msra.mxu0 0
      %764 = vmatpush.bf16.msra.mxu0 0
      %765 = vmatpush.bf16.msra.mxu0 %v756
      %766 = vmatmul.bf16.gmra.mxu0 %v753
      %v767 = vpop.f32.mrf.mxu0
      %v768 = vadd.f32 0.0, %v767
      %v769 = vpop.f32.mrf.mxu0
      %v770 = vadd.f32 0.0, %v769
      %771 = vdwg.mxu0
      %772 = vrot.lane.b32.xlu0 %v623, 112
      %v773 = vpop.permute.xlu0 %772
      %774 = vrot.lane.b32.xlu0 %v623, 80
      %v775 = vpop.permute.xlu0 %774
      %v777 = vsel %vm626, %v773, 0
      %v780 = vsel %vm626, %v775, 0
      %782 = vmatpush.bf16.xpose.msra.mxu0 0
      %783 = vmatpush.bf16.xpose.msra.mxu0 0
      %784 = vmatpush.bf16.xpose.msra.mxu0 0
      %785 = vmatpush.bf16.xpose.msra.mxu0 0
      %786 = vmatpush.bf16.xpose.msra.mxu0 0
      %787 = vmatpush.bf16.xpose.msra.mxu0 0
      %788 = vmatpush.bf16.xpose.msra.mxu0 0
      %789 = vmatpush.bf16.xpose.msra.mxu0 %v780
      %790 = vmatmul.bf16.gmra.mxu0 %v777
      %v791 = vpop.f32.mrf.mxu0
      %v792 = vadd.f32 0.0, %v791
      %v793 = vpop.f32.mrf.mxu0
      %v794 = vadd.f32 0.0, %v793
      %795 = vdwg.mxu0
      %v796 = vmul.f32 %v792, 0.35355338
      %v797 = vmul.f32 %v794, 0.35355338
      %v798 = vadd.f32 %v796, %v572
      %v799 = vadd.f32 %v797, %v573
      %v800 = vsel %vm651, %v798, -inf
      %801 = vmax.xlane.f32.xlu0 %v800
      %v802 = vpop.xlane.xlu0 %801
      %v803 = vsel %vm655, %v799, -inf
      %804 = vmax.xlane.f32.xlu0 %v803
      %v805 = vpop.xlane.xlu0 %804
      %v806 = vsub.f32 %v798, %v802
      %v807 = vsub.f32 %v799, %v805
      %v808 = vmul.f32 %v806, 1.442695
      %v809 = vpow.pop %v808
      %v810 = vmul.f32 %v807, 1.442695
      %v811 = vpow.pop %v810
      %v812 = vsel %vm651, %v809, 0.0
      %813 = vadd.xlane.f32.xlu0 %v812
      %v814 = vpop.xlane.xlu0 %813
      %v815 = vsel %vm655, %v811, 0.0
      %816 = vadd.xlane.f32.xlu0 %v815
      %v817 = vpop.xlane.xlu0 %816
      %v818 = vrcp.pop %v814
      %v819 = vrcp.pop %v817
      %v820 = vmul.f32 %v809, %v818
      %v821 = vmul.f32 %v811, %v819
      %v822 = vpack.c.bf16 %v821, %v820
      %823 = vrot.lane.b32.xlu0 %v623, 48
      %v824 = vpop.permute.xlu0 %823
      %v826 = vsel %vm651, %v822, 0
      %v829 = vsel %vm681, %v824, 0
      %831 = vmatpush.bf16.msra.mxu0 0
      %832 = vmatpush.bf16.msra.mxu0 0
      %833 = vmatpush.bf16.msra.mxu0 0
      %834 = vmatpush.bf16.msra.mxu0 0
      %835 = vmatpush.bf16.msra.mxu0 0
      %836 = vmatpush.bf16.msra.mxu0 0
      %837 = vmatpush.bf16.msra.mxu0 0
      %838 = vmatpush.bf16.msra.mxu0 %v829
      %839 = vmatmul.bf16.gmra.mxu0 %v826
      %v840 = vpop.f32.mrf.mxu0
      %v841 = vadd.f32 0.0, %v840
      %v842 = vpop.f32.mrf.mxu0
      %v843 = vadd.f32 0.0, %v842
      %844 = vdwg.mxu0
      %845 = vrot.lane.b32.xlu0 %v623, 104
      %v846 = vpop.permute.xlu0 %845
      %847 = vrot.lane.b32.xlu0 %v623, 72
      %v848 = vpop.permute.xlu0 %847
      %v850 = vsel %vm626, %v846, 0
      %v853 = vsel %vm626, %v848, 0
      %855 = vmatpush.bf16.xpose.msra.mxu0 0
      %856 = vmatpush.bf16.xpose.msra.mxu0 0
      %857 = vmatpush.bf16.xpose.msra.mxu0 0
      %858 = vmatpush.bf16.xpose.msra.mxu0 0
      %859 = vmatpush.bf16.xpose.msra.mxu0 0
      %860 = vmatpush.bf16.xpose.msra.mxu0 0
      %861 = vmatpush.bf16.xpose.msra.mxu0 0
      %862 = vmatpush.bf16.xpose.msra.mxu0 %v853
      %863 = vmatmul.bf16.gmra.mxu0 %v850
      %v864 = vpop.f32.mrf.mxu0
      %v865 = vadd.f32 0.0, %v864
      %v866 = vpop.f32.mrf.mxu0
      %v867 = vadd.f32 0.0, %v866
      %868 = vdwg.mxu0
      %v869 = vmul.f32 %v865, 0.35355338
      %v870 = vmul.f32 %v867, 0.35355338
      %v871 = vadd.f32 %v869, %v572
      %v872 = vadd.f32 %v870, %v573
      %v873 = vsel %vm651, %v871, -inf
      %874 = vmax.xlane.f32.xlu0 %v873
      %v875 = vpop.xlane.xlu0 %874
      %v876 = vsel %vm655, %v872, -inf
      %877 = vmax.xlane.f32.xlu0 %v876
      %v878 = vpop.xlane.xlu0 %877
      %v879 = vsub.f32 %v871, %v875
      %v880 = vsub.f32 %v872, %v878
      %v881 = vmul.f32 %v879, 1.442695
      %v882 = vpow.pop %v881
      %v883 = vmul.f32 %v880, 1.442695
      %v884 = vpow.pop %v883
      %v885 = vsel %vm651, %v882, 0.0
      %886 = vadd.xlane.f32.xlu0 %v885
      %v887 = vpop.xlane.xlu0 %886
      %v888 = vsel %vm655, %v884, 0.0
      %889 = vadd.xlane.f32.xlu0 %v888
      %v890 = vpop.xlane.xlu0 %889
      %v891 = vrcp.pop %v887
      %v892 = vrcp.pop %v890
      %v893 = vmul.f32 %v882, %v891
      %v894 = vmul.f32 %v884, %v892
      %v895 = vpack.c.bf16 %v894, %v893
      %896 = vrot.lane.b32.xlu0 %v623, 40
      %v897 = vpop.permute.xlu0 %896
      %v899 = vsel %vm651, %v895, 0
      %v902 = vsel %vm681, %v897, 0
      %904 = vmatpush.bf16.msra.mxu0 0
      %905 = vmatpush.bf16.msra.mxu0 0
      %906 = vmatpush.bf16.msra.mxu0 0
      %907 = vmatpush.bf16.msra.mxu0 0
      %908 = vmatpush.bf16.msra.mxu0 0
      %909 = vmatpush.bf16.msra.mxu0 0
      %910 = vmatpush.bf16.msra.mxu0 0
      %911 = vmatpush.bf16.msra.mxu0 %v902
      %912 = vmatmul.bf16.gmra.mxu0 %v899
      %v913 = vpop.f32.mrf.mxu0
      %v914 = vadd.f32 0.0, %v913
      %v915 = vpop.f32.mrf.mxu0
      %v916 = vadd.f32 0.0, %v915
      %917 = vdwg.mxu0
      %920 = vrot.lane.b32.xlu0 %v768, 8
      %v921 = vpop.permute.xlu0 %920
      %922 = vrot.lane.b32.xlu0 %v770, 8
      %v923 = vpop.permute.xlu0 %922
      %928 = vrot.lane.b32.xlu0 %v841, 16
      %v929 = vpop.permute.xlu0 %928
      %930 = vrot.lane.b32.xlu0 %v843, 16
      %v931 = vpop.permute.xlu0 %930
      %936 = vrot.lane.b32.xlu0 %v914, 24
      %v937 = vpop.permute.xlu0 %936
      %938 = vrot.lane.b32.xlu0 %v916, 24
      %v939 = vpop.permute.xlu0 %938
      %v942 = vsel %vm626, %v695, %v921
      %v943 = vsel %vm626, %v697, %v923
      %vm944 = vcmask 130048
      %v945 = vsel %vm944, %v942, %v929
      %v946 = vsel %vm944, %v943, %v931
      %vm947 = vcmask 195584
      %v948 = vsel %vm947, %v945, %v937
      %v949 = vsel %vm947, %v946, %v939
      %v950 = vpack.c.bf16 %v949, %v948
      %v951 = vld [vmem:[%s6] sm:$0x1]
      %v953 = vperm.slane %v951, 0
      %v959 = vunpack.c.l.b16 %v613
      %v960 = vunpack.c.l.b16 %v614
      %v961 = vunpack.c.l.b16 %v615
      %v962 = vunpack.c.l.b16 %v616
      %v963 = vpack.c.b16 %v960, %v959
      %v964 = vpack.c.b16 %v962, %v961
      %v968 = vsel %vm595, %v950, 0
      %970 = vmatpush.bf16.msra.mxu0 0
      %971 = vmatpush.bf16.msra.mxu0 0
      %972 = vmatpush.bf16.msra.mxu0 0
      %973 = vmatpush.bf16.msra.mxu0 0
      %974 = vmatpush.bf16.msra.mxu0 0
      %975 = vmatpush.bf16.msra.mxu0 0
      %976 = vmatpush.bf16.msra.mxu0 %v964
      %977 = vmatpush.bf16.msra.mxu0 %v963
      %978 = vmatmul.bf16.gmra.mxu0 %v968
      %v979 = vpop.f32.mrf.mxu0
      %v980 = vadd.f32 %v953, %v979
      %v981 = vpop.f32.mrf.mxu0
      %v982 = vadd.f32 %v953, %v981
      %983 = vdwg.mxu0
      %v984 = vadd.f32 %v564, %v980
      %v985 = vadd.f32 %v565, %v982
      %v986 = vld [vmem:[%s7] sm:$0x1]
      %v987 = vld [vmem:[%s8] sm:$0x1]
      %v988 = vsel %vm595, %v984, 0.0
      %989 = vadd.xlane.f32.xlu0 %v988
      %v990 = vpop.xlane.xlu0 %989
      %vm991 = vcmask 254976
      %v992 = vsel %vm991, %v985, 0.0
      %993 = vadd.xlane.f32.xlu0 %v992
      %v994 = vpop.xlane.xlu0 %993
      %v995 = vrcp.pop 32.0
      %v996 = vmul.f32 32.0, %v995
      %v997 = vsub.f32 1.0, %v996
      %v998 = vmul.f32 %v995, %v997
      %v999 = vadd.f32 %v995, %v998
      %vm1000 = vweird.f32 %v995
      %v1001 = vsel %vm1000, %v995, %v999
      %v1002 = vmul.f32 %v990, %v1001
      %v1003 = vmul.f32 %v994, %v1001
      %v1004 = vsub.f32 %v984, %v1002
      %v1005 = vsub.f32 %v985, %v1003
      %v1006 = vmul.f32 %v1004, %v1004
      %v1007 = vmul.f32 %v1005, %v1005
      %v1008 = vsel %vm595, %v1006, 0.0
      %1009 = vadd.xlane.f32.xlu0 %v1008
      %v1010 = vpop.xlane.xlu0 %1009
      %v1011 = vsel %vm991, %v1007, 0.0
      %1012 = vadd.xlane.f32.xlu0 %v1011
      %v1013 = vpop.xlane.xlu0 %1012
      %v1014 = vmul.f32 %v1010, %v1001
      %v1015 = vmul.f32 %v1013, %v1001
      %v1016 = vadd.f32 %v1014, 1e-05
      %v1017 = vadd.f32 %v1015, 1e-05
      %v1018 = vrsqrt.pop %v1016
      %v1019 = vmul.f32 %v1018, %v1016
      %v1020 = vmul.f32 %v1019, %v1018
      %v1021 = vmul.f32 0.5, %v1020
      %v1022 = vsub.f32 1.5, %v1021
      %v1023 = vmul.f32 %v1018, %v1022
      %vm1024 = vweird.f32 %v1016
      %vm1025 = vweird.f32 %v1018
      %vm1026 = vmor %vm1024, %vm1025
      %v1027 = vsel %vm1026, %v1018, %v1023
      %v1028 = vrsqrt.pop %v1017
      %v1029 = vmul.f32 %v1028, %v1017
      %v1030 = vmul.f32 %v1029, %v1028
      %v1031 = vmul.f32 0.5, %v1030
      %v1032 = vsub.f32 1.5, %v1031
      %v1033 = vmul.f32 %v1028, %v1032
      %vm1034 = vweird.f32 %v1017
      %vm1035 = vweird.f32 %v1028
      %vm1036 = vmor %vm1034, %vm1035
      %v1037 = vsel %vm1036, %v1028, %v1033
      %v1038 = vmul.f32 %v1004, %v1027
      %v1039 = vmul.f32 %v1005, %v1037
      %v1041 = vperm.slane %v986, 0
      %v1043 = vmul.f32 %v1038, %v1041
      %v1044 = vmul.f32 %v1039, %v1041
      %v1046 = vperm.slane %v987, 0
      %v1048 = vadd.f32 %v1043, %v1046
      %v1049 = vadd.f32 %v1044, %v1046
      %v1050 = vpack.c.bf16 %v1049, %v1048
      %v1051 = vld [vmem:[%s9] sm:$0xf]
      %v1052 = vld [vmem:[%s9 + $0x4] sm:$0xf]
      %v1053 = vld [vmem:[%s9 + $0x8] sm:$0xf]
      %v1054 = vld [vmem:[%s9 + $0xc] sm:$0xf]
      %v1055 = vld [vmem:[%s10] sm:$0x1]
      %v1057 = vperm.slane %v1055, 0
      %v1063 = vunpack.c.l.b16 %v1051
      %v1064 = vunpack.c.l.b16 %v1052
      %v1065 = vunpack.c.l.b16 %v1053
      %v1066 = vunpack.c.l.b16 %v1054
      %v1067 = vpack.c.b16 %v1064, %v1063
      %v1068 = vpack.c.b16 %v1066, %v1065
      %v1072 = vsel %vm595, %v1050, 0
      %1074 = vmatpush.bf16.msra.mxu0 0
      %1075 = vmatpush.bf16.msra.mxu0 0
      %1076 = vmatpush.bf16.msra.mxu0 0
      %1077 = vmatpush.bf16.msra.mxu0 0
      %1078 = vmatpush.bf16.msra.mxu0 0
      %1079 = vmatpush.bf16.msra.mxu0 0
      %1080 = vmatpush.bf16.msra.mxu0 %v1068
      %1081 = vmatpush.bf16.msra.mxu0 %v1067
      %1082 = vmatmul.bf16.gmra.mxu0 %v1072
      %v1083 = vpop.f32.mrf.mxu0
      %v1084 = vadd.f32 %v1057, %v1083
      %v1085 = vpop.f32.mrf.mxu0
      %v1086 = vadd.f32 %v1057, %v1085
      %1087 = vdwg.mxu0
      %v1088 = vmax.f32 %v1084, 0.0
      %v1089 = vmax.f32 %v1086, 0.0
      %v1090 = vpack.c.bf16 %v1089, %v1088
      %v1091 = vld [vmem:[%s11] sm:$0xf]
      %v1092 = vld [vmem:[%s11 + $0x4] sm:$0xf]
      %v1093 = vld [vmem:[%s11 + $0x8] sm:$0xf]
      %v1094 = vld [vmem:[%s11 + $0xc] sm:$0xf]
      %v1095 = vld [vmem:[%s11 + $0x10] sm:$0xf]
      %v1096 = vld [vmem:[%s11 + $0x14] sm:$0xf]
      %v1097 = vld [vmem:[%s11 + $0x18] sm:$0xf]
      %v1098 = vld [vmem:[%s11 + $0x1c] sm:$0xf]
      %v1099 = vld [vmem:[%s12] sm:$0x1]
      %v1101 = vperm.slane %v1099, 0
      %v1111 = vunpack.c.l.b16 %v1091
      %v1112 = vunpack.c.l.b16 %v1092
      %v1113 = vunpack.c.l.b16 %v1093
      %v1114 = vunpack.c.l.b16 %v1094
      %v1115 = vunpack.c.l.b16 %v1095
      %v1116 = vunpack.c.l.b16 %v1096
      %v1117 = vunpack.c.l.b16 %v1097
      %v1118 = vunpack.c.l.b16 %v1098
      %v1119 = vpack.c.b16 %v1112, %v1111
      %v1120 = vpack.c.b16 %v1114, %v1113
      %v1121 = vpack.c.b16 %v1116, %v1115
      %v1122 = vpack.c.b16 %v1118, %v1117
      %vm1127 = vcmask 523264
      %v1129 = vsel %vm1127, %v1090, 0
      %1131 = vmatpush.bf16.msra.mxu0 0
      %1132 = vmatpush.bf16.msra.mxu0 0
      %1133 = vmatpush.bf16.msra.mxu0 0
      %1134 = vmatpush.bf16.msra.mxu0 0
      %1135 = vmatpush.bf16.msra.mxu0 %v1122
      %1136 = vmatpush.bf16.msra.mxu0 %v1121
      %1137 = vmatpush.bf16.msra.mxu0 %v1120
      %1138 = vmatpush.bf16.msra.mxu0 %v1119
      %1139 = vmatmul.bf16.gmra.mxu0 %v1129
      %v1140 = vpop.f32.mrf.mxu0
      %v1141 = vadd.f32 %v1101, %v1140
      %v1142 = vpop.f32.mrf.mxu0
      %v1143 = vadd.f32 %v1101, %v1142
      %1144 = vdwg.mxu0
      %v1145 = vadd.f32 %v1048, %v1141
      %v1146 = vadd.f32 %v1049, %v1143
      %v1147 = vld [vmem:[%s13] sm:$0x1]
      %v1148 = vld [vmem:[%s14] sm:$0x1]
      %v1149 = vsel %vm595, %v1145, 0.0
      %1150 = vadd.xlane.f32.xlu0 %v1149
      %v1151 = vpop.xlane.xlu0 %1150
      %v1152 = vsel %vm991, %v1146, 0.0
      %1153 = vadd.xlane.f32.xlu0 %v1152
      %v1154 = vpop.xlane.xlu0 %1153
      %v1155 = vmul.f32 %v1151, %v1001
      %v1156 = vmul.f32 %v1154, %v1001
      %v1157 = vsub.f32 %v1145, %v1155
      %v1158 = vsub.f32 %v1146, %v1156
      %v1159 = vmul.f32 %v1157, %v1157
      %v1160 = vmul.f32 %v1158, %v1158
      %v1161 = vsel %vm595, %v1159, 0.0
      %1162 = vadd.xlane.f32.xlu0 %v1161
      %v1163 = vpop.xlane.xlu0 %1162
      %v1164 = vsel %vm991, %v1160, 0.0
      %1165 = vadd.xlane.f32.xlu0 %v1164
      %v1166 = vpop.xlane.xlu0 %1165
      %v1167 = vmul.f32 %v1163, %v1001
      %v1168 = vmul.f32 %v1166, %v1001
      %v1169 = vadd.f32 %v1167, 1e-05
      %v1170 = vadd.f32 %v1168, 1e-05
      %v1171 = vrsqrt.pop %v1169
      %v1172 = vmul.f32 %v1171, %v1169
      %v1173 = vmul.f32 %v1172, %v1171
      %v1174 = vmul.f32 0.5, %v1173
      %v1175 = vsub.f32 1.5, %v1174
      %v1176 = vmul.f32 %v1171, %v1175
      %vm1177 = vweird.f32 %v1169
      %vm1178 = vweird.f32 %v1171
      %vm1179 = vmor %vm1177, %vm1178
      %v1180 = vsel %vm1179, %v1171, %v1176
      %v1181 = vrsqrt.pop %v1170
      %v1182 = vmul.f32 %v1181, %v1170
      %v1183 = vmul.f32 %v1182, %v1181
      %v1184 = vmul.f32 0.5, %v1183
      %v1185 = vsub.f32 1.5, %v1184
      %v1186 = vmul.f32 %v1181, %v1185
      %vm1187 = vweird.f32 %v1170
      %vm1188 = vweird.f32 %v1181
      %vm1189 = vmor %vm1187, %vm1188
      %v1190 = vsel %vm1189, %v1181, %v1186
      %v1191 = vmul.f32 %v1157, %v1180
      %v1192 = vmul.f32 %v1158, %v1190
      %v1194 = vperm.slane %v1147, 0
      %v1196 = vmul.f32 %v1191, %v1194
      %v1197 = vmul.f32 %v1192, %v1194
      %v1199 = vperm.slane %v1148, 0
      %v1201 = vadd.f32 %v1196, %v1199
      %v1202 = vadd.f32 %v1197, %v1199
      %v1203 = vld [vmem:[%s15] sm:$0x1]
      %v1204 = vld [vmem:[%s16] sm:$0x1]
      %v1205 = vsel %vm595, %v1201, 0.0
      %1206 = vadd.xlane.f32.xlu0 %v1205
      %v1207 = vpop.xlane.xlu0 %1206
      %v1208 = vsel %vm991, %v1202, 0.0
      %1209 = vadd.xlane.f32.xlu0 %v1208
      %v1210 = vpop.xlane.xlu0 %1209
      %v1211 = vmul.f32 %v1207, %v1001
      %v1212 = vmul.f32 %v1210, %v1001
      %v1213 = vsub.f32 %v1201, %v1211
      %v1214 = vsub.f32 %v1202, %v1212
      %v1215 = vmul.f32 %v1213, %v1213
      %v1216 = vmul.f32 %v1214, %v1214
      %v1217 = vsel %vm595, %v1215, 0.0
      %1218 = vadd.xlane.f32.xlu0 %v1217
      %v1219 = vpop.xlane.xlu0 %1218
      %v1220 = vsel %vm991, %v1216, 0.0
      %1221 = vadd.xlane.f32.xlu0 %v1220
      %v1222 = vpop.xlane.xlu0 %1221
      %v1223 = vmul.f32 %v1219, %v1001
      %v1224 = vmul.f32 %v1222, %v1001
      %v1225 = vadd.f32 %v1223, 1e-05
      %v1226 = vadd.f32 %v1224, 1e-05
      %v1227 = vrsqrt.pop %v1225
      %v1228 = vmul.f32 %v1227, %v1225
      %v1229 = vmul.f32 %v1228, %v1227
      %v1230 = vmul.f32 0.5, %v1229
      %v1231 = vsub.f32 1.5, %v1230
      %v1232 = vmul.f32 %v1227, %v1231
      %vm1233 = vweird.f32 %v1225
      %vm1234 = vweird.f32 %v1227
      %vm1235 = vmor %vm1233, %vm1234
      %v1236 = vsel %vm1235, %v1227, %v1232
      %v1237 = vrsqrt.pop %v1226
      %v1238 = vmul.f32 %v1237, %v1226
      %v1239 = vmul.f32 %v1238, %v1237
      %v1240 = vmul.f32 0.5, %v1239
      %v1241 = vsub.f32 1.5, %v1240
      %v1242 = vmul.f32 %v1237, %v1241
      %vm1243 = vweird.f32 %v1226
      %vm1244 = vweird.f32 %v1237
      %vm1245 = vmor %vm1243, %vm1244
      %v1246 = vsel %vm1245, %v1237, %v1242
      %v1247 = vmul.f32 %v1213, %v1236
      %v1248 = vmul.f32 %v1214, %v1246
      %v1250 = vperm.slane %v1203, 0
      %v1252 = vmul.f32 %v1247, %v1250
      %v1253 = vmul.f32 %v1248, %v1250
      %v1255 = vperm.slane %v1204, 0
      %v1257 = vadd.f32 %v1252, %v1255
      %v1258 = vadd.f32 %v1253, %v1255
      %1259 = vst.msk [vmem:[%s562] sm:$0xff] %vm595, %v1257
      %1260 = vst.msk [vmem:[%s562 + $0x8] sm:$0x3] %vm991, %v1258
      %p1261 = scmp.lt.s32.totalorder %s28, 1
      %s1262 = scalar_select %p1261, %s28, 1
      %s1263 = smul.addr %s1262, 2
      %s1264 = smul.addr %s1263, 8
      %s1265 = scalar_lea.vmem %s17, %s1264
      // Predicated region
      $region89: #{seq2seq_transformer_forward.6} parent=87 // pred_check
        %p1266 = pneg %p413
      $region90: #{seq2seq_transformer_forward.6} parent=87 // pred_check_branch
        %1268 = sbr.rel (%p1266) target = $region92
      $region91: #{seq2seq_transformer_forward.6} parent=87 // pred_region
        _
      $region92: #{seq2seq_transformer_forward.6} parent=87 // pred_fallthru
        _
    $region88: #{seq2seq_transformer_forward.6} parent=5 // pred_fallthru
      _
    %p1269 = scmp.le.s32.totalorder 2, %s23
    // Predicated region
    $region93: #{seq2seq_transformer_forward.6} parent=5 // pred_check
      %p1270 = pneg %p1269
    $region94: #{seq2seq_transformer_forward.6} parent=5 // pred_check_branch
      %1272 = sbr.rel (%p1270) target = $region96
    $region95: #{seq2seq_transformer_forward.6} parent=5 // pred_region
      %s1273 = ssub.s32 %s23, 2
      // Predicated region
      $region97: #{seq2seq_transformer_forward.6} parent=95 // pred_check
        %p1274 = pneg %p419
      $region98: #{seq2seq_transformer_forward.6} parent=95 // pred_check_branch
        %1276 = sbr.rel (%p1274) target = $region100
      $region99: #{seq2seq_transformer_forward.6} parent=95 // pred_region
        %p1277 = scmp.lt.s32.totalorder %s29, 1
        %s1278 = scalar_select %p1277, %s29, 1
        %s1279 = smul.addr %s1278, 2
        %s1280 = smul.addr %s1279, 8
        %s1281 = scalar_lea.vmem %s17, %s1280
      $region100: #{seq2seq_transformer_forward.6} parent=95 // pred_fallthru
        _
    $region96: #{seq2seq_transformer_forward.6} parent=5 // pred_fallthru
      _
  $region6: #{seq2seq_transformer_forward.6} parent=0 // loop_footer
    %s27 = sadd.s32 1, %s23
  $region7: #{seq2seq_transformer_forward.6} parent=0 // loop_footer_branch
    %22 = sbr.rel target = $region3
  $region8: #{seq2seq_transformer_forward.6} parent=0 // loop_exit
    _

// kernel: seq2seq_transformer_forward.7
$region0: #{seq2seq_transformer_forward.7}
  #allocation0 [shape = 'u32[]', space=smem, size = 0x4, offset = 0x4, fixed_abs, tag = 'smem constant byte address 0x4 - core index']
  #allocation1 [shape = 'u32[72,128]{1,0:T(1,128)}', space=vmem, size = 0x9000, scoped, tag = 'internal scratch']
  %s0 = inlined_call_operand.vmem [shape: f32[2,8,32], index: 0, kind: input, shape index: {}]
  %s1 = inlined_call_operand.vmem [shape: f32[2,10,32], index: 1, kind: input, shape index: {}]
  %s2 = inlined_call_operand.vmem [shape: f32[8,8], index: 2, kind: input, shape index: {}]
  %s3 = inlined_call_operand.vmem [shape: f32[2,1,8], index: 3, kind: input, shape index: {}]
  %s4 = inlined_call_operand.vmem [shape: f32[2,1,10], index: 4, kind: input, shape index: {}]
  %s5 = inlined_call_operand.vmem [shape: bf16[32,96], index: 5, kind: input, shape index: {}]
  %s6 = inlined_call_operand.vmem [shape: f32[1,96], index: 6, kind: input, shape index: {}]
  %s7 = inlined_call_operand.vmem [shape: bf16[32,32], index: 7, kind: input, shape index: {}]
  %s8 = inlined_call_operand.vmem [shape: f32[1,32], index: 8, kind: input, shape index: {}]
  %s9 = inlined_call_operand.vmem [shape: f32[1,32], index: 9, kind: input, shape index: {}]
  %s10 = inlined_call_operand.vmem [shape: f32[1,32], index: 10, kind: input, shape index: {}]
  %s11 = inlined_call_operand.vmem [shape: bf16[32,32], index: 11, kind: input, shape index: {}]
  %s12 = inlined_call_operand.vmem [shape: f32[1,32], index: 12, kind: input, shape index: {}]
  %s13 = inlined_call_operand.vmem [shape: bf16[32,64], index: 13, kind: input, shape index: {}]
  %s14 = inlined_call_operand.vmem [shape: f32[1,64], index: 14, kind: input, shape index: {}]
  %s15 = inlined_call_operand.vmem [shape: bf16[32,32], index: 15, kind: input, shape index: {}]
  %s16 = inlined_call_operand.vmem [shape: f32[1,32], index: 16, kind: input, shape index: {}]
  %s17 = inlined_call_operand.vmem [shape: f32[1,32], index: 17, kind: input, shape index: {}]
  %s18 = inlined_call_operand.vmem [shape: f32[1,32], index: 18, kind: input, shape index: {}]
  %s19 = inlined_call_operand.vmem [shape: bf16[32,64], index: 19, kind: input, shape index: {}]
  %s20 = inlined_call_operand.vmem [shape: f32[1,64], index: 20, kind: input, shape index: {}]
  %s21 = inlined_call_operand.vmem [shape: bf16[64,32], index: 21, kind: input, shape index: {}]
  %s22 = inlined_call_operand.vmem [shape: f32[1,32], index: 22, kind: input, shape index: {}]
  %s23 = inlined_call_operand.vmem [shape: f32[1,32], index: 23, kind: input, shape index: {}]
  %s24 = inlined_call_operand.vmem [shape: f32[1,32], index: 24, kind: input, shape index: {}]
  %s25 = inlined_call_operand.vmem [shape: f32[2,8,32], index: 25, kind: output, shape index: {}]
  %s26 = sld [smem:[#allocation0]]
  $region133: #{seq2seq_transformer_forward.7} parent=0
    _
  %s28 = ssub.s32 1, %s26
  %s29 = scalar_select 0, %s28, %s26
  loop: start=0, step=1, limit=4
  $region2: #{seq2seq_transformer_forward.7} parent=0 // loop_pre_header
    _
  $region3: #{seq2seq_transformer_forward.7} parent=0 // loop_header
    %s31 = sphi 0, %s35
    %p32 = scmp.ge.s32.totalorder %s31, 4
    %s41 = sphi 0, %s43
    %s44 = sphi 0, %s41
    %s45 = sphi 0, %s44
    %s61 = sphi 0, %s45
    %s67 = sphi 0, %s69
    %s70 = sphi 0, %s67
    %s71 = sphi 0, %s70
    %s87 = sphi 0, %s71
    %s91 = sphi 0, %s91
    %s93 = sphi 0, %s91
    %s94 = sphi 0, %s93
    %s108 = sphi 0, %s94
    %s114 = sphi 0, %s116
    %s117 = sphi 0, %s114
    %s118 = sphi 0, %s117
    %s134 = sphi 0, %s118
    %s140 = sphi 0, %s142
    %s143 = sphi 0, %s140
    %s144 = sphi 0, %s143
    %s160 = sphi 0, %s144
    %s164 = sphi 0, %s164
    %s166 = sphi 0, %s164
    %s167 = sphi 0, %s166
    %s181 = sphi 0, %s167
    %s185 = sphi 0, %s185
    %s187 = sphi 0, %s185
    %s188 = sphi 0, %s187
    %s202 = sphi 0, %s188
    %s206 = sphi 0, %s206
    %s208 = sphi 0, %s206
    %s209 = sphi 0, %s208
    %s223 = sphi 0, %s209
    %s227 = sphi 0, %s227
    %s229 = sphi 0, %s227
    %s230 = sphi 0, %s229
    %s244 = sphi 0, %s230
    %s248 = sphi 0, %s248
    %s250 = sphi 0, %s248
    %s251 = sphi 0, %s250
    %s265 = sphi 0, %s251
    %s269 = sphi 0, %s269
    %s271 = sphi 0, %s269
    %s272 = sphi 0, %s271
    %s286 = sphi 0, %s272
    %s290 = sphi 0, %s290
    %s292 = sphi 0, %s290
    %s293 = sphi 0, %s292
    %s307 = sphi 0, %s293
    %s311 = sphi 0, %s311
    %s313 = sphi 0, %s311
    %s314 = sphi 0, %s313
    %s328 = sphi 0, %s314
    %s332 = sphi 0, %s332
    %s334 = sphi 0, %s332
    %s335 = sphi 0, %s334
    %s349 = sphi 0, %s335
    %s353 = sphi 0, %s353
    %s355 = sphi 0, %s353
    %s356 = sphi 0, %s355
    %s370 = sphi 0, %s356
    %s374 = sphi 0, %s374
    %s376 = sphi 0, %s374
    %s377 = sphi 0, %s376
    %s391 = sphi 0, %s377
    %s395 = sphi 0, %s395
    %s397 = sphi 0, %s395
    %s398 = sphi 0, %s397
    %s412 = sphi 0, %s398
    %s416 = sphi 0, %s416
    %s418 = sphi 0, %s416
    %s419 = sphi 0, %s418
    %s433 = sphi 0, %s419
    %s437 = sphi 0, %s437
    %s439 = sphi 0, %s437
    %s440 = sphi 0, %s439
    %s454 = sphi 0, %s440
    %s458 = sphi 0, %s458
    %s460 = sphi 0, %s458
    %s461 = sphi 0, %s460
    %s475 = sphi 0, %s461
    %s479 = sphi 0, %s479
    %s481 = sphi 0, %s479
    %s482 = sphi 0, %s481
    %s496 = sphi 0, %s482
    %s500 = sphi 0, %s500
    %s502 = sphi 0, %s500
    %s503 = sphi 0, %s502
    %s517 = sphi 0, %s503
    %s521 = sphi 0, %s521
    %s523 = sphi 0, %s521
    %s524 = sphi 0, %s523
    %s538 = sphi 0, %s524
    %s542 = sphi 0, %s542
    %s544 = sphi 0, %s542
    %s545 = sphi 0, %s544
    %s559 = sphi 0, %s545
    %s563 = sphi 0, %s563
    %s565 = sphi 0, %s563
    %s566 = sphi 0, %s565
    %s580 = sphi 0, %s566
    %s586 = sphi 0, %s588
    %s589 = sphi 0, %s586
    %s590 = sphi 0, %s589
    %s606 = sphi 0, %s590
  $region4: #{seq2seq_transformer_forward.7} parent=0 // loop_header_branch
    %34 = sbr.rel (%p32) target = $region8
  $region5: #{seq2seq_transformer_forward.7} parent=0 // loop_body
    %s36 = ssub.s32 %s31, 1
    %s37 = ssub.s32 %s31, 2
    %s38 = sadd.s32 %s31, 1
    %s39 = ssub.s32 %s31, %s38
    %p40 = scmp.eq.s32.totalorder %s39, 0
    %s42 = sadd.s32 %s41, 1
    %s43 = scalar_select %p40, %s41, %s42
    %p46 = pneg %p40
    %p47 = scmp.eq.s32.totalorder %s31, 1
    %p48 = por %p46, %p47
    %p49 = scmp.ne.s32.totalorder %s41, %s44
    %p50 = scmp.eq.s32.totalorder %s31, 0
    %p51 = por %p49, %p50
    %p52 = scmp.ne.s32.totalorder %s41, %s44
    %p53 = scmp.eq.s32.totalorder %s36, 1
    %p54 = por %p52, %p53
    %p55 = scmp.ne.s32.totalorder %s44, %s45
    %p56 = scmp.eq.s32.totalorder %s36, 0
    %p57 = por %p55, %p56
    %p58 = scmp.ne.s32.totalorder %s44, %s45
    %p59 = scmp.eq.s32.totalorder %s37, 1
    %p60 = por %p58, %p59
    %p62 = scmp.ne.s32.totalorder %s45, %s61
    %p63 = scmp.eq.s32.totalorder %s37, 0
    %p64 = por %p62, %p63
    %s65 = ssub.s32 %s31, %s38
    %p66 = scmp.eq.s32.totalorder %s65, 0
    %s68 = sadd.s32 %s67, 1
    %s69 = scalar_select %p66, %s67, %s68
    %p72 = pneg %p66
    %p73 = scmp.eq.s32.totalorder %s31, 1
    %p74 = por %p72, %p73
    %p75 = scmp.ne.s32.totalorder %s67, %s70
    %p76 = scmp.eq.s32.totalorder %s31, 0
    %p77 = por %p75, %p76
    %p78 = scmp.ne.s32.totalorder %s67, %s70
    %p79 = scmp.eq.s32.totalorder %s36, 1
    %p80 = por %p78, %p79
    %p81 = scmp.ne.s32.totalorder %s70, %s71
    %p82 = scmp.eq.s32.totalorder %s36, 0
    %p83 = por %p81, %p82
    %p84 = scmp.ne.s32.totalorder %s70, %s71
    %p85 = scmp.eq.s32.totalorder %s37, 1
    %p86 = por %p84, %p85
    %p88 = scmp.ne.s32.totalorder %s71, %s87
    %p89 = scmp.eq.s32.totalorder %s37, 0
    %p90 = por %p88, %p89
    %s92 = sadd.s32 %s91, 1
    %p95 = scmp.eq.s32.totalorder %s31, 1
    %p96 = scmp.ne.s32.totalorder %s91, %s93
    %p97 = scmp.eq.s32.totalorder %s31, 0
    %p98 = por %p96, %p97
    %p99 = scmp.ne.s32.totalorder %s91, %s93
    %p100 = scmp.eq.s32.totalorder %s36, 1
    %p101 = por %p99, %p100
    %p102 = scmp.ne.s32.totalorder %s93, %s94
    %p103 = scmp.eq.s32.totalorder %s36, 0
    %p104 = por %p102, %p103
    %p105 = scmp.ne.s32.totalorder %s93, %s94
    %p106 = scmp.eq.s32.totalorder %s37, 1
    %p107 = por %p105, %p106
    %p109 = scmp.ne.s32.totalorder %s94, %s108
    %p110 = scmp.eq.s32.totalorder %s37, 0
    %p111 = por %p109, %p110
    %s112 = ssub.s32 %s31, %s38
    %p113 = scmp.eq.s32.totalorder %s112, 0
    %s115 = sadd.s32 %s114, 1
    %s116 = scalar_select %p113, %s114, %s115
    %p119 = pneg %p113
    %p120 = scmp.eq.s32.totalorder %s31, 1
    %p121 = por %p119, %p120
    %p122 = scmp.ne.s32.totalorder %s114, %s117
    %p123 = scmp.eq.s32.totalorder %s31, 0
    %p124 = por %p122, %p123
    %p125 = scmp.ne.s32.totalorder %s114, %s117
    %p126 = scmp.eq.s32.totalorder %s36, 1
    %p127 = por %p125, %p126
    %p128 = scmp.ne.s32.totalorder %s117, %s118
    %p129 = scmp.eq.s32.totalorder %s36, 0
    %p130 = por %p128, %p129
    %p131 = scmp.ne.s32.totalorder %s117, %s118
    %p132 = scmp.eq.s32.totalorder %s37, 1
    %p133 = por %p131, %p132
    %p135 = scmp.ne.s32.totalorder %s118, %s134
    %p136 = scmp.eq.s32.totalorder %s37, 0
    %p137 = por %p135, %p136
    %s138 = ssub.s32 %s31, %s38
    %p139 = scmp.eq.s32.totalorder %s138, 0
    %s141 = sadd.s32 %s140, 1
    %s142 = scalar_select %p139, %s140, %s141
    %p145 = pneg %p139
    %p146 = scmp.eq.s32.totalorder %s31, 1
    %p147 = por %p145, %p146
    %p148 = scmp.ne.s32.totalorder %s140, %s143
    %p149 = scmp.eq.s32.totalorder %s31, 0
    %p150 = por %p148, %p149
    %p151 = scmp.ne.s32.totalorder %s140, %s143
    %p152 = scmp.eq.s32.totalorder %s36, 1
    %p153 = por %p151, %p152
    %p154 = scmp.ne.s32.totalorder %s143, %s144
    %p155 = scmp.eq.s32.totalorder %s36, 0
    %p156 = por %p154, %p155
    %p157 = scmp.ne.s32.totalorder %s143, %s144
    %p158 = scmp.eq.s32.totalorder %s37, 1
    %p159 = por %p157, %p158
    %p161 = scmp.ne.s32.totalorder %s144, %s160
    %p162 = scmp.eq.s32.totalorder %s37, 0
    %p163 = por %p161, %p162
    %s165 = sadd.s32 %s164, 1
    %p168 = scmp.eq.s32.totalorder %s31, 1
    %p169 = scmp.ne.s32.totalorder %s164, %s166
    %p170 = scmp.eq.s32.totalorder %s31, 0
    %p171 = por %p169, %p170
    %p172 = scmp.ne.s32.totalorder %s164, %s166
    %p173 = scmp.eq.s32.totalorder %s36, 1
    %p174 = por %p172, %p173
    %p175 = scmp.ne.s32.totalorder %s166, %s167
    %p176 = scmp.eq.s32.totalorder %s36, 0
    %p177 = por %p175, %p176
    %p178 = scmp.ne.s32.totalorder %s166, %s167
    %p179 = scmp.eq.s32.totalorder %s37, 1
    %p180 = por %p178, %p179
    %p182 = scmp.ne.s32.totalorder %s167, %s181
    %p183 = scmp.eq.s32.totalorder %s37, 0
    %p184 = por %p182, %p183
    %s186 = sadd.s32 %s185, 1
    %p189 = scmp.eq.s32.totalorder %s31, 1
    %p190 = scmp.ne.s32.totalorder %s185, %s187
    %p191 = scmp.eq.s32.totalorder %s31, 0
    %p192 = por %p190, %p191
    %p193 = scmp.ne.s32.totalorder %s185, %s187
    %p194 = scmp.eq.s32.totalorder %s36, 1
    %p195 = por %p193, %p194
    %p196 = scmp.ne.s32.totalorder %s187, %s188
    %p197 = scmp.eq.s32.totalorder %s36, 0
    %p198 = por %p196, %p197
    %p199 = scmp.ne.s32.totalorder %s187, %s188
    %p200 = scmp.eq.s32.totalorder %s37, 1
    %p201 = por %p199, %p200
    %p203 = scmp.ne.s32.totalorder %s188, %s202
    %p204 = scmp.eq.s32.totalorder %s37, 0
    %p205 = por %p203, %p204
    %s207 = sadd.s32 %s206, 1
    %p210 = scmp.eq.s32.totalorder %s31, 1
    %p211 = scmp.ne.s32.totalorder %s206, %s208
    %p212 = scmp.eq.s32.totalorder %s31, 0
    %p213 = por %p211, %p212
    %p214 = scmp.ne.s32.totalorder %s206, %s208
    %p215 = scmp.eq.s32.totalorder %s36, 1
    %p216 = por %p214, %p215
    %p217 = scmp.ne.s32.totalorder %s208, %s209
    %p218 = scmp.eq.s32.totalorder %s36, 0
    %p219 = por %p217, %p218
    %p220 = scmp.ne.s32.totalorder %s208, %s209
    %p221 = scmp.eq.s32.totalorder %s37, 1
    %p222 = por %p220, %p221
    %p224 = scmp.ne.s32.totalorder %s209, %s223
    %p225 = scmp.eq.s32.totalorder %s37, 0
    %p226 = por %p224, %p225
    %s228 = sadd.s32 %s227, 1
    %p231 = scmp.eq.s32.totalorder %s31, 1
    %p232 = scmp.ne.s32.totalorder %s227, %s229
    %p233 = scmp.eq.s32.totalorder %s31, 0
    %p234 = por %p232, %p233
    %p235 = scmp.ne.s32.totalorder %s227, %s229
    %p236 = scmp.eq.s32.totalorder %s36, 1
    %p237 = por %p235, %p236
    %p238 = scmp.ne.s32.totalorder %s229, %s230
    %p239 = scmp.eq.s32.totalorder %s36, 0
    %p240 = por %p238, %p239
    %p241 = scmp.ne.s32.totalorder %s229, %s230
    %p242 = scmp.eq.s32.totalorder %s37, 1
    %p243 = por %p241, %p242
    %p245 = scmp.ne.s32.totalorder %s230, %s244
    %p246 = scmp.eq.s32.totalorder %s37, 0
    %p247 = por %p245, %p246
    %s249 = sadd.s32 %s248, 1
    %p252 = scmp.eq.s32.totalorder %s31, 1
    %p253 = scmp.ne.s32.totalorder %s248, %s250
    %p254 = scmp.eq.s32.totalorder %s31, 0
    %p255 = por %p253, %p254
    %p256 = scmp.ne.s32.totalorder %s248, %s250
    %p257 = scmp.eq.s32.totalorder %s36, 1
    %p258 = por %p256, %p257
    %p259 = scmp.ne.s32.totalorder %s250, %s251
    %p260 = scmp.eq.s32.totalorder %s36, 0
    %p261 = por %p259, %p260
    %p262 = scmp.ne.s32.totalorder %s250, %s251
    %p263 = scmp.eq.s32.totalorder %s37, 1
    %p264 = por %p262, %p263
    %p266 = scmp.ne.s32.totalorder %s251, %s265
    %p267 = scmp.eq.s32.totalorder %s37, 0
    %p268 = por %p266, %p267
    %s270 = sadd.s32 %s269, 1
    %p273 = scmp.eq.s32.totalorder %s31, 1
    %p274 = scmp.ne.s32.totalorder %s269, %s271
    %p275 = scmp.eq.s32.totalorder %s31, 0
    %p276 = por %p274, %p275
    %p277 = scmp.ne.s32.totalorder %s269, %s271
    %p278 = scmp.eq.s32.totalorder %s36, 1
    %p279 = por %p277, %p278
    %p280 = scmp.ne.s32.totalorder %s271, %s272
    %p281 = scmp.eq.s32.totalorder %s36, 0
    %p282 = por %p280, %p281
    %p283 = scmp.ne.s32.totalorder %s271, %s272
    %p284 = scmp.eq.s32.totalorder %s37, 1
    %p285 = por %p283, %p284
    %p287 = scmp.ne.s32.totalorder %s272, %s286
    %p288 = scmp.eq.s32.totalorder %s37, 0
    %p289 = por %p287, %p288
    %s291 = sadd.s32 %s290, 1
    %p294 = scmp.eq.s32.totalorder %s31, 1
    %p295 = scmp.ne.s32.totalorder %s290, %s292
    %p296 = scmp.eq.s32.totalorder %s31, 0
    %p297 = por %p295, %p296
    %p298 = scmp.ne.s32.totalorder %s290, %s292
    %p299 = scmp.eq.s32.totalorder %s36, 1
    %p300 = por %p298, %p299
    %p301 = scmp.ne.s32.totalorder %s292, %s293
    %p302 = scmp.eq.s32.totalorder %s36, 0
    %p303 = por %p301, %p302
    %p304 = scmp.ne.s32.totalorder %s292, %s293
    %p305 = scmp.eq.s32.totalorder %s37, 1
    %p306 = por %p304, %p305
    %p308 = scmp.ne.s32.totalorder %s293, %s307
    %p309 = scmp.eq.s32.totalorder %s37, 0
    %p310 = por %p308, %p309
    %s312 = sadd.s32 %s311, 1
    %p315 = scmp.eq.s32.totalorder %s31, 1
    %p316 = scmp.ne.s32.totalorder %s311, %s313
    %p317 = scmp.eq.s32.totalorder %s31, 0
    %p318 = por %p316, %p317
    %p319 = scmp.ne.s32.totalorder %s311, %s313
    %p320 = scmp.eq.s32.totalorder %s36, 1
    %p321 = por %p319, %p320
    %p322 = scmp.ne.s32.totalorder %s313, %s314
    %p323 = scmp.eq.s32.totalorder %s36, 0
    %p324 = por %p322, %p323
    %p325 = scmp.ne.s32.totalorder %s313, %s314
    %p326 = scmp.eq.s32.totalorder %s37, 1
    %p327 = por %p325, %p326
    %p329 = scmp.ne.s32.totalorder %s314, %s328
    %p330 = scmp.eq.s32.totalorder %s37, 0
    %p331 = por %p329, %p330
    %s333 = sadd.s32 %s332, 1
    %p336 = scmp.eq.s32.totalorder %s31, 1
    %p337 = scmp.ne.s32.totalorder %s332, %s334
    %p338 = scmp.eq.s32.totalorder %s31, 0
    %p339 = por %p337, %p338
    %p340 = scmp.ne.s32.totalorder %s332, %s334
    %p341 = scmp.eq.s32.totalorder %s36, 1
    %p342 = por %p340, %p341
    %p343 = scmp.ne.s32.totalorder %s334, %s335
    %p344 = scmp.eq.s32.totalorder %s36, 0
    %p345 = por %p343, %p344
    %p346 = scmp.ne.s32.totalorder %s334, %s335
    %p347 = scmp.eq.s32.totalorder %s37, 1
    %p348 = por %p346, %p347
    %p350 = scmp.ne.s32.totalorder %s335, %s349
    %p351 = scmp.eq.s32.totalorder %s37, 0
    %p352 = por %p350, %p351
    %s354 = sadd.s32 %s353, 1
    %p357 = scmp.eq.s32.totalorder %s31, 1
    %p358 = scmp.ne.s32.totalorder %s353, %s355
    %p359 = scmp.eq.s32.totalorder %s31, 0
    %p360 = por %p358, %p359
    %p361 = scmp.ne.s32.totalorder %s353, %s355
    %p362 = scmp.eq.s32.totalorder %s36, 1
    %p363 = por %p361, %p362
    %p364 = scmp.ne.s32.totalorder %s355, %s356
    %p365 = scmp.eq.s32.totalorder %s36, 0
    %p366 = por %p364, %p365
    %p367 = scmp.ne.s32.totalorder %s355, %s356
    %p368 = scmp.eq.s32.totalorder %s37, 1
    %p369 = por %p367, %p368
    %p371 = scmp.ne.s32.totalorder %s356, %s370
    %p372 = scmp.eq.s32.totalorder %s37, 0
    %p373 = por %p371, %p372
    %s375 = sadd.s32 %s374, 1
    %p378 = scmp.eq.s32.totalorder %s31, 1
    %p379 = scmp.ne.s32.totalorder %s374, %s376
    %p380 = scmp.eq.s32.totalorder %s31, 0
    %p381 = por %p379, %p380
    %p382 = scmp.ne.s32.totalorder %s374, %s376
    %p383 = scmp.eq.s32.totalorder %s36, 1
    %p384 = por %p382, %p383
    %p385 = scmp.ne.s32.totalorder %s376, %s377
    %p386 = scmp.eq.s32.totalorder %s36, 0
    %p387 = por %p385, %p386
    %p388 = scmp.ne.s32.totalorder %s376, %s377
    %p389 = scmp.eq.s32.totalorder %s37, 1
    %p390 = por %p388, %p389
    %p392 = scmp.ne.s32.totalorder %s377, %s391
    %p393 = scmp.eq.s32.totalorder %s37, 0
    %p394 = por %p392, %p393
    %s396 = sadd.s32 %s395, 1
    %p399 = scmp.eq.s32.totalorder %s31, 1
    %p400 = scmp.ne.s32.totalorder %s395, %s397
    %p401 = scmp.eq.s32.totalorder %s31, 0
    %p402 = por %p400, %p401
    %p403 = scmp.ne.s32.totalorder %s395, %s397
    %p404 = scmp.eq.s32.totalorder %s36, 1
    %p405 = por %p403, %p404
    %p406 = scmp.ne.s32.totalorder %s397, %s398
    %p407 = scmp.eq.s32.totalorder %s36, 0
    %p408 = por %p406, %p407
    %p409 = scmp.ne.s32.totalorder %s397, %s398
    %p410 = scmp.eq.s32.totalorder %s37, 1
    %p411 = por %p409, %p410
    %p413 = scmp.ne.s32.totalorder %s398, %s412
    %p414 = scmp.eq.s32.totalorder %s37, 0
    %p415 = por %p413, %p414
    %s417 = sadd.s32 %s416, 1
    %p420 = scmp.eq.s32.totalorder %s31, 1
    %p421 = scmp.ne.s32.totalorder %s416, %s418
    %p422 = scmp.eq.s32.totalorder %s31, 0
    %p423 = por %p421, %p422
    %p424 = scmp.ne.s32.totalorder %s416, %s418
    %p425 = scmp.eq.s32.totalorder %s36, 1
    %p426 = por %p424, %p425
    %p427 = scmp.ne.s32.totalorder %s418, %s419
    %p428 = scmp.eq.s32.totalorder %s36, 0
    %p429 = por %p427, %p428
    %p430 = scmp.ne.s32.totalorder %s418, %s419
    %p431 = scmp.eq.s32.totalorder %s37, 1
    %p432 = por %p430, %p431
    %p434 = scmp.ne.s32.totalorder %s419, %s433
    %p435 = scmp.eq.s32.totalorder %s37, 0
    %p436 = por %p434, %p435
    %s438 = sadd.s32 %s437, 1
    %p441 = scmp.eq.s32.totalorder %s31, 1
    %p442 = scmp.ne.s32.totalorder %s437, %s439
    %p443 = scmp.eq.s32.totalorder %s31, 0
    %p444 = por %p442, %p443
    %p445 = scmp.ne.s32.totalorder %s437, %s439
    %p446 = scmp.eq.s32.totalorder %s36, 1
    %p447 = por %p445, %p446
    %p448 = scmp.ne.s32.totalorder %s439, %s440
    %p449 = scmp.eq.s32.totalorder %s36, 0
    %p450 = por %p448, %p449
    %p451 = scmp.ne.s32.totalorder %s439, %s440
    %p452 = scmp.eq.s32.totalorder %s37, 1
    %p453 = por %p451, %p452
    %p455 = scmp.ne.s32.totalorder %s440, %s454
    %p456 = scmp.eq.s32.totalorder %s37, 0
    %p457 = por %p455, %p456
    %s459 = sadd.s32 %s458, 1
    %p462 = scmp.eq.s32.totalorder %s31, 1
    %p463 = scmp.ne.s32.totalorder %s458, %s460
    %p464 = scmp.eq.s32.totalorder %s31, 0
    %p465 = por %p463, %p464
    %p466 = scmp.ne.s32.totalorder %s458, %s460
    %p467 = scmp.eq.s32.totalorder %s36, 1
    %p468 = por %p466, %p467
    %p469 = scmp.ne.s32.totalorder %s460, %s461
    %p470 = scmp.eq.s32.totalorder %s36, 0
    %p471 = por %p469, %p470
    %p472 = scmp.ne.s32.totalorder %s460, %s461
    %p473 = scmp.eq.s32.totalorder %s37, 1
    %p474 = por %p472, %p473
    %p476 = scmp.ne.s32.totalorder %s461, %s475
    %p477 = scmp.eq.s32.totalorder %s37, 0
    %p478 = por %p476, %p477
    %s480 = sadd.s32 %s479, 1
    %p483 = scmp.eq.s32.totalorder %s31, 1
    %p484 = scmp.ne.s32.totalorder %s479, %s481
    %p485 = scmp.eq.s32.totalorder %s31, 0
    %p486 = por %p484, %p485
    %p487 = scmp.ne.s32.totalorder %s479, %s481
    %p488 = scmp.eq.s32.totalorder %s36, 1
    %p489 = por %p487, %p488
    %p490 = scmp.ne.s32.totalorder %s481, %s482
    %p491 = scmp.eq.s32.totalorder %s36, 0
    %p492 = por %p490, %p491
    %p493 = scmp.ne.s32.totalorder %s481, %s482
    %p494 = scmp.eq.s32.totalorder %s37, 1
    %p495 = por %p493, %p494
    %p497 = scmp.ne.s32.totalorder %s482, %s496
    %p498 = scmp.eq.s32.totalorder %s37, 0
    %p499 = por %p497, %p498
    %s501 = sadd.s32 %s500, 1
    %p504 = scmp.eq.s32.totalorder %s31, 1
    %p505 = scmp.ne.s32.totalorder %s500, %s502
    %p506 = scmp.eq.s32.totalorder %s31, 0
    %p507 = por %p505, %p506
    %p508 = scmp.ne.s32.totalorder %s500, %s502
    %p509 = scmp.eq.s32.totalorder %s36, 1
    %p510 = por %p508, %p509
    %p511 = scmp.ne.s32.totalorder %s502, %s503
    %p512 = scmp.eq.s32.totalorder %s36, 0
    %p513 = por %p511, %p512
    %p514 = scmp.ne.s32.totalorder %s502, %s503
    %p515 = scmp.eq.s32.totalorder %s37, 1
    %p516 = por %p514, %p515
    %p518 = scmp.ne.s32.totalorder %s503, %s517
    %p519 = scmp.eq.s32.totalorder %s37, 0
    %p520 = por %p518, %p519
    %s522 = sadd.s32 %s521, 1
    %p525 = scmp.eq.s32.totalorder %s31, 1
    %p526 = scmp.ne.s32.totalorder %s521, %s523
    %p527 = scmp.eq.s32.totalorder %s31, 0
    %p528 = por %p526, %p527
    %p529 = scmp.ne.s32.totalorder %s521, %s523
    %p530 = scmp.eq.s32.totalorder %s36, 1
    %p531 = por %p529, %p530
    %p532 = scmp.ne.s32.totalorder %s523, %s524
    %p533 = scmp.eq.s32.totalorder %s36, 0
    %p534 = por %p532, %p533
    %p535 = scmp.ne.s32.totalorder %s523, %s524
    %p536 = scmp.eq.s32.totalorder %s37, 1
    %p537 = por %p535, %p536
    %p539 = scmp.ne.s32.totalorder %s524, %s538
    %p540 = scmp.eq.s32.totalorder %s37, 0
    %p541 = por %p539, %p540
    %s543 = sadd.s32 %s542, 1
    %p546 = scmp.eq.s32.totalorder %s31, 1
    %p547 = scmp.ne.s32.totalorder %s542, %s544
    %p548 = scmp.eq.s32.totalorder %s31, 0
    %p549 = por %p547, %p548
    %p550 = scmp.ne.s32.totalorder %s542, %s544
    %p551 = scmp.eq.s32.totalorder %s36, 1
    %p552 = por %p550, %p551
    %p553 = scmp.ne.s32.totalorder %s544, %s545
    %p554 = scmp.eq.s32.totalorder %s36, 0
    %p555 = por %p553, %p554
    %p556 = scmp.ne.s32.totalorder %s544, %s545
    %p557 = scmp.eq.s32.totalorder %s37, 1
    %p558 = por %p556, %p557
    %p560 = scmp.ne.s32.totalorder %s545, %s559
    %p561 = scmp.eq.s32.totalorder %s37, 0
    %p562 = por %p560, %p561
    %s564 = sadd.s32 %s563, 1
    %p567 = scmp.eq.s32.totalorder %s31, 1
    %p568 = scmp.ne.s32.totalorder %s563, %s565
    %p569 = scmp.eq.s32.totalorder %s31, 0
    %p570 = por %p568, %p569
    %p571 = scmp.ne.s32.totalorder %s563, %s565
    %p572 = scmp.eq.s32.totalorder %s36, 1
    %p573 = por %p571, %p572
    %p574 = scmp.ne.s32.totalorder %s565, %s566
    %p575 = scmp.eq.s32.totalorder %s36, 0
    %p576 = por %p574, %p575
    %p577 = scmp.ne.s32.totalorder %s565, %s566
    %p578 = scmp.eq.s32.totalorder %s37, 1
    %p579 = por %p577, %p578
    %p581 = scmp.ne.s32.totalorder %s566, %s580
    %p582 = scmp.eq.s32.totalorder %s37, 0
    %p583 = por %p581, %p582
    %s584 = ssub.s32 %s31, %s38
    %p585 = scmp.eq.s32.totalorder %s584, 0
    %s587 = sadd.s32 %s586, 1
    %s588 = scalar_select %p585, %s586, %s587
    %p591 = pneg %p585
    %p592 = scmp.eq.s32.totalorder %s31, 1
    %p593 = por %p591, %p592
    %p594 = scmp.ne.s32.totalorder %s586, %s589
    %p595 = scmp.eq.s32.totalorder %s31, 0
    %p596 = por %p594, %p595
    %p597 = scmp.ne.s32.totalorder %s586, %s589
    %p598 = scmp.eq.s32.totalorder %s36, 1
    %p599 = por %p597, %p598
    %p600 = scmp.ne.s32.totalorder %s589, %s590
    %p601 = scmp.eq.s32.totalorder %s36, 0
    %p602 = por %p600, %p601
    %p603 = scmp.ne.s32.totalorder %s589, %s590
    %p604 = scmp.eq.s32.totalorder %s37, 1
    %p605 = por %p603, %p604
    %p607 = scmp.ne.s32.totalorder %s590, %s606
    %p608 = scmp.eq.s32.totalorder %s37, 0
    %p609 = por %p607, %p608
    %p610 = scmp.le.s32.totalorder 1, %s31
    %p611 = scmp.lt.s32.totalorder %s31, 3
    %p612 = pnand %p610, %p611
    %p613 = pneg %p612
    // Predicated region
    $region9: #{seq2seq_transformer_forward.7} parent=5 // pred_check
      _
    $region10: #{seq2seq_transformer_forward.7} parent=5 // pred_check_branch
      %615 = sbr.rel (%p612) target = $region12
    $region11: #{seq2seq_transformer_forward.7} parent=5 // pred_region
      %s616 = ssub.s32 %s31, 1
      // Predicated region
      $region13: #{seq2seq_transformer_forward.7} parent=11 // pred_check
        %p617 = pneg %p104
      $region14: #{seq2seq_transformer_forward.7} parent=11 // pred_check_branch
        %619 = sbr.rel (%p617) target = $region16
      $region15: #{seq2seq_transformer_forward.7} parent=11 // pred_region
        _
      $region16: #{seq2seq_transformer_forward.7} parent=11 // pred_fallthru
        _
      // Predicated region
      $region17: #{seq2seq_transformer_forward.7} parent=11 // pred_check
        %p620 = pneg %p177
      $region18: #{seq2seq_transformer_forward.7} parent=11 // pred_check_branch
        %622 = sbr.rel (%p620) target = $region20
      $region19: #{seq2seq_transformer_forward.7} parent=11 // pred_region
        _
      $region20: #{seq2seq_transformer_forward.7} parent=11 // pred_fallthru
        _
      // Predicated region
      $region21: #{seq2seq_transformer_forward.7} parent=11 // pred_check
        %p623 = pneg %p198
      $region22: #{seq2seq_transformer_forward.7} parent=11 // pred_check_branch
        %625 = sbr.rel (%p623) target = $region24
      $region23: #{seq2seq_transformer_forward.7} parent=11 // pred_region
        _
      $region24: #{seq2seq_transformer_forward.7} parent=11 // pred_fallthru
        _
      // Predicated region
      $region25: #{seq2seq_transformer_forward.7} parent=11 // pred_check
        %p626 = pneg %p219
      $region26: #{seq2seq_transformer_forward.7} parent=11 // pred_check_branch
        %628 = sbr.rel (%p626) target = $region28
      $region27: #{seq2seq_transformer_forward.7} parent=11 // pred_region
        _
      $region28: #{seq2seq_transformer_forward.7} parent=11 // pred_fallthru
        _
      // Predicated region
      $region29: #{seq2seq_transformer_forward.7} parent=11 // pred_check
        %p629 = pneg %p240
      $region30: #{seq2seq_transformer_forward.7} parent=11 // pred_check_branch
        %631 = sbr.rel (%p629) target = $region32
      $region31: #{seq2seq_transformer_forward.7} parent=11 // pred_region
        _
      $region32: #{seq2seq_transformer_forward.7} parent=11 // pred_fallthru
        _
      // Predicated region
      $region33: #{seq2seq_transformer_forward.7} parent=11 // pred_check
        %p632 = pneg %p261
      $region34: #{seq2seq_transformer_forward.7} parent=11 // pred_check_branch
        %634 = sbr.rel (%p632) target = $region36
      $region35: #{seq2seq_transformer_forward.7} parent=11 // pred_region
        _
      $region36: #{seq2seq_transformer_forward.7} parent=11 // pred_fallthru
        _
      // Predicated region
      $region37: #{seq2seq_transformer_forward.7} parent=11 // pred_check
        %p635 = pneg %p282
      $region38: #{seq2seq_transformer_forward.7} parent=11 // pred_check_branch
        %637 = sbr.rel (%p635) target = $region40
      $region39: #{seq2seq_transformer_forward.7} parent=11 // pred_region
        _
      $region40: #{seq2seq_transformer_forward.7} parent=11 // pred_fallthru
        _
      // Predicated region
      $region41: #{seq2seq_transformer_forward.7} parent=11 // pred_check
        %p638 = pneg %p303
      $region42: #{seq2seq_transformer_forward.7} parent=11 // pred_check_branch
        %640 = sbr.rel (%p638) target = $region44
      $region43: #{seq2seq_transformer_forward.7} parent=11 // pred_region
        _
      $region44: #{seq2seq_transformer_forward.7} parent=11 // pred_fallthru
        _
      // Predicated region
      $region45: #{seq2seq_transformer_forward.7} parent=11 // pred_check
        %p641 = pneg %p324
      $region46: #{seq2seq_transformer_forward.7} parent=11 // pred_check_branch
        %643 = sbr.rel (%p641) target = $region48
      $region47: #{seq2seq_transformer_forward.7} parent=11 // pred_region
        _
      $region48: #{seq2seq_transformer_forward.7} parent=11 // pred_fallthru
        _
      // Predicated region
      $region49: #{seq2seq_transformer_forward.7} parent=11 // pred_check
        %p644 = pneg %p345
      $region50: #{seq2seq_transformer_forward.7} parent=11 // pred_check_branch
        %646 = sbr.rel (%p644) target = $region52
      $region51: #{seq2seq_transformer_forward.7} parent=11 // pred_region
        _
      $region52: #{seq2seq_transformer_forward.7} parent=11 // pred_fallthru
        _
      // Predicated region
      $region53: #{seq2seq_transformer_forward.7} parent=11 // pred_check
        %p647 = pneg %p366
      $region54: #{seq2seq_transformer_forward.7} parent=11 // pred_check_branch
        %649 = sbr.rel (%p647) target = $region56
      $region55: #{seq2seq_transformer_forward.7} parent=11 // pred_region
        _
      $region56: #{seq2seq_transformer_forward.7} parent=11 // pred_fallthru
        _
      // Predicated region
      $region57: #{seq2seq_transformer_forward.7} parent=11 // pred_check
        %p650 = pneg %p387
      $region58: #{seq2seq_transformer_forward.7} parent=11 // pred_check_branch
        %652 = sbr.rel (%p650) target = $region60
      $region59: #{seq2seq_transformer_forward.7} parent=11 // pred_region
        _
      $region60: #{seq2seq_transformer_forward.7} parent=11 // pred_fallthru
        _
      // Predicated region
      $region61: #{seq2seq_transformer_forward.7} parent=11 // pred_check
        %p653 = pneg %p408
      $region62: #{seq2seq_transformer_forward.7} parent=11 // pred_check_branch
        %655 = sbr.rel (%p653) target = $region64
      $region63: #{seq2seq_transformer_forward.7} parent=11 // pred_region
        _
      $region64: #{seq2seq_transformer_forward.7} parent=11 // pred_fallthru
        _
      // Predicated region
      $region65: #{seq2seq_transformer_forward.7} parent=11 // pred_check
        %p656 = pneg %p429
      $region66: #{seq2seq_transformer_forward.7} parent=11 // pred_check_branch
        %658 = sbr.rel (%p656) target = $region68
      $region67: #{seq2seq_transformer_forward.7} parent=11 // pred_region
        _
      $region68: #{seq2seq_transformer_forward.7} parent=11 // pred_fallthru
        _
      // Predicated region
      $region69: #{seq2seq_transformer_forward.7} parent=11 // pred_check
        %p659 = pneg %p450
      $region70: #{seq2seq_transformer_forward.7} parent=11 // pred_check_branch
        %661 = sbr.rel (%p659) target = $region72
      $region71: #{seq2seq_transformer_forward.7} parent=11 // pred_region
        _
      $region72: #{seq2seq_transformer_forward.7} parent=11 // pred_fallthru
        _
      // Predicated region
      $region73: #{seq2seq_transformer_forward.7} parent=11 // pred_check
        %p662 = pneg %p471
      $region74: #{seq2seq_transformer_forward.7} parent=11 // pred_check_branch
        %664 = sbr.rel (%p662) target = $region76
      $region75: #{seq2seq_transformer_forward.7} parent=11 // pred_region
        _
      $region76: #{seq2seq_transformer_forward.7} parent=11 // pred_fallthru
        _
      // Predicated region
      $region77: #{seq2seq_transformer_forward.7} parent=11 // pred_check
        %p665 = pneg %p492
      $region78: #{seq2seq_transformer_forward.7} parent=11 // pred_check_branch
        %667 = sbr.rel (%p665) target = $region80
      $region79: #{seq2seq_transformer_forward.7} parent=11 // pred_region
        _
      $region80: #{seq2seq_transformer_forward.7} parent=11 // pred_fallthru
        _
      // Predicated region
      $region81: #{seq2seq_transformer_forward.7} parent=11 // pred_check
        %p668 = pneg %p513
      $region82: #{seq2seq_transformer_forward.7} parent=11 // pred_check_branch
        %670 = sbr.rel (%p668) target = $region84
      $region83: #{seq2seq_transformer_forward.7} parent=11 // pred_region
        _
      $region84: #{seq2seq_transformer_forward.7} parent=11 // pred_fallthru
        _
      // Predicated region
      $region85: #{seq2seq_transformer_forward.7} parent=11 // pred_check
        %p671 = pneg %p534
      $region86: #{seq2seq_transformer_forward.7} parent=11 // pred_check_branch
        %673 = sbr.rel (%p671) target = $region88
      $region87: #{seq2seq_transformer_forward.7} parent=11 // pred_region
        _
      $region88: #{seq2seq_transformer_forward.7} parent=11 // pred_fallthru
        _
      // Predicated region
      $region89: #{seq2seq_transformer_forward.7} parent=11 // pred_check
        %p674 = pneg %p555
      $region90: #{seq2seq_transformer_forward.7} parent=11 // pred_check_branch
        %676 = sbr.rel (%p674) target = $region92
      $region91: #{seq2seq_transformer_forward.7} parent=11 // pred_region
        _
      $region92: #{seq2seq_transformer_forward.7} parent=11 // pred_fallthru
        _
      // Predicated region
      $region93: #{seq2seq_transformer_forward.7} parent=11 // pred_check
        %p677 = pneg %p576
      $region94: #{seq2seq_transformer_forward.7} parent=11 // pred_check_branch
        %679 = sbr.rel (%p677) target = $region96
      $region95: #{seq2seq_transformer_forward.7} parent=11 // pred_region
        _
      $region96: #{seq2seq_transformer_forward.7} parent=11 // pred_fallthru
        _
    $region12: #{seq2seq_transformer_forward.7} parent=5 // pred_fallthru
      _
    %p680 = scmp.lt.s32.totalorder %s31, 2
    // Predicated region
    $region97: #{seq2seq_transformer_forward.7} parent=5 // pred_check
      %p681 = pneg %p680
    $region98: #{seq2seq_transformer_forward.7} parent=5 // pred_check_branch
      %683 = sbr.rel (%p681) target = $region100
    $region99: #{seq2seq_transformer_forward.7} parent=5 // pred_region
      // Predicated region
      $region101: #{seq2seq_transformer_forward.7} parent=99 // pred_check
        %p684 = pneg %p51
      $region102: #{seq2seq_transformer_forward.7} parent=99 // pred_check_branch
        %686 = sbr.rel (%p684) target = $region104
      $region103: #{seq2seq_transformer_forward.7} parent=99 // pred_region
        %p687 = scmp.lt.s32.totalorder %s31, 1
        %s688 = scalar_select %p687, %s31, 1
        %s689 = smul.addr %s688, 8
        %s690 = scalar_lea.vmem %s0, %s689
      $region104: #{seq2seq_transformer_forward.7} parent=99 // pred_fallthru
        _
      // Predicated region
      $region105: #{seq2seq_transformer_forward.7} parent=99 // pred_check
        %p691 = pneg %p77
      $region106: #{seq2seq_transformer_forward.7} parent=99 // pred_check_branch
        %693 = sbr.rel (%p691) target = $region108
      $region107: #{seq2seq_transformer_forward.7} parent=99 // pred_region
        %p694 = scmp.lt.s32.totalorder %s31, 1
        %s695 = scalar_select %p694, %s31, 1
        %s696 = smul.addr %s695, 2
        %s697 = smul.addr %s696, 8
        %s698 = scalar_lea.vmem %s1, %s697
      $region108: #{seq2seq_transformer_forward.7} parent=99 // pred_fallthru
        _
      // Predicated region
      $region109: #{seq2seq_transformer_forward.7} parent=99 // pred_check
        %p699 = pneg %p124
      $region110: #{seq2seq_transformer_forward.7} parent=99 // pred_check_branch
        %701 = sbr.rel (%p699) target = $region112
      $region111: #{seq2seq_transformer_forward.7} parent=99 // pred_region
        %p702 = scmp.lt.s32.totalorder %s31, 1
        %s703 = scalar_select %p702, %s31, 1
        %s704 = scalar_lea.vmem %s3, %s703
      $region112: #{seq2seq_transformer_forward.7} parent=99 // pred_fallthru
        _
      // Predicated region
      $region113: #{seq2seq_transformer_forward.7} parent=99 // pred_check
        %p705 = pneg %p150
      $region114: #{seq2seq_transformer_forward.7} parent=99 // pred_check_branch
        %707 = sbr.rel (%p705) target = $region116
      $region115: #{seq2seq_transformer_forward.7} parent=99 // pred_region
        %p708 = scmp.lt.s32.totalorder %s31, 1
        %s709 = scalar_select %p708, %s31, 1
        %s710 = scalar_lea.vmem %s4, %s709
      $region116: #{seq2seq_transformer_forward.7} parent=99 // pred_fallthru
        _
    $region100: #{seq2seq_transformer_forward.7} parent=5 // pred_fallthru
      _
    %p711 = scmp.le.s32.totalorder 1, %s31
    %p712 = scmp.lt.s32.totalorder %s31, 3
    %p713 = pnand %p711, %p712
    %p714 = pneg %p713
    // Predicated region
    $region117: #{seq2seq_transformer_forward.7} parent=5 // pred_check
      _
    $region118: #{seq2seq_transformer_forward.7} parent=5 // pred_check_branch
      %716 = sbr.rel (%p713) target = $region120
    $region119: #{seq2seq_transformer_forward.7} parent=5 // pred_region
      %s717 = ssub.s32 %s31, 1
      %p718 = scmp.lt.s32.totalorder %s36, 1
      %s719 = scalar_select %p718, %s36, 1
      %s720 = smul.addr %s719, 8
      %s721 = scalar_lea.vmem %s0, %s720
      %p722 = pneg %p57
      %p723 = pneg %p54
      %p724 = scmp.lt.s32.totalorder %s36, 1
      %s725 = scalar_select %p724, %s36, 1
      %s726 = smul.addr %s725, 2
      %s727 = smul.addr %s726, 8
      %s728 = scalar_lea.vmem %s1, %s727
      %p729 = pneg %p83
      %p730 = pneg %p80
      %p731 = pneg %p104
      %p732 = pneg %p101
      %p733 = scmp.lt.s32.totalorder %s36, 1
      %s734 = scalar_select %p733, %s36, 1
      %s735 = scalar_lea.vmem %s3, %s734
      %p736 = pneg %p130
      %p737 = pneg %p127
      %p738 = scmp.lt.s32.totalorder %s36, 1
      %s739 = scalar_select %p738, %s36, 1
      %s740 = scalar_lea.vmem %s4, %s739
      %p741 = pneg %p156
      %p742 = pneg %p153
      %p743 = pneg %p177
      %p744 = pneg %p174
      %p745 = pneg %p198
      %p746 = pneg %p195
      %p747 = pneg %p219
      %p748 = pneg %p216
      %p749 = pneg %p240
      %p750 = pneg %p237
      %p751 = pneg %p261
      %p752 = pneg %p258
      %p753 = pneg %p282
      %p754 = pneg %p279
      %p755 = pneg %p303
      %p756 = pneg %p300
      %p757 = pneg %p324
      %p758 = pneg %p321
      %p759 = pneg %p345
      %p760 = pneg %p342
      %p761 = pneg %p366
      %p762 = pneg %p363
      %p763 = pneg %p387
      %p764 = pneg %p384
      %p765 = pneg %p408
      %p766 = pneg %p405
      %p767 = pneg %p429
      %p768 = pneg %p426
      %p769 = pneg %p450
      %p770 = pneg %p447
      %p771 = pneg %p471
      %p772 = pneg %p468
      %p773 = pneg %p492
      %p774 = pneg %p489
      %p775 = pneg %p513
      %p776 = pneg %p510
      %p777 = pneg %p534
      %p778 = pneg %p531
      %p779 = pneg %p555
      %p780 = pneg %p552
      %p781 = pneg %p576
      %p782 = pneg %p573
      %p783 = pneg %p602
      %p784 = pneg %p599
      %p785 = scmp.lt.s32.totalorder %s36, 1
      %s786 = scalar_select %p785, %s36, 1
      %s787 = smul.addr %s786, 8
      %s788 = scalar_lea.vmem %s25, %s787
      %p789 = scmp.lt.s32.totalorder %s36, 1
      %s790 = scalar_select %p789, %s36, 1
      %s791 = smul.addr %s790, 8
      %s792 = scalar_lea.vmem %s0, %s791
      %p793 = scmp.lt.s32.totalorder %s36, 1
      %s794 = scalar_select %p793, %s36, 1
      %s795 = smul.addr %s794, 2
      %s796 = smul.addr %s795, 8
      %s797 = scalar_lea.vmem %s1, %s796
      %p798 = scmp.lt.s32.totalorder %s36, 1
      %s799 = scalar_select %p798, %s36, 1
      %s800 = scalar_lea.vmem %s3, %s799
      %p801 = scmp.lt.s32.totalorder %s36, 1
      %s802 = scalar_select %p801, %s36, 1
      %s803 = scalar_lea.vmem %s4, %s802
      %p804 = scmp.lt.s32.totalorder %s36, 1
      %s805 = scalar_select %p804, %s36, 1
      %s806 = smul.addr %s805, 8
      %s807 = scalar_lea.vmem %s25, %s806
      %v809 = vld [vmem:[%s792] sm:$0xff]
      %v810 = vld [vmem:[%s797] sm:$0xff]
      %v811 = vld [vmem:[%s797 + $0x8] sm:$0x3]
      %v812 = vld [vmem:[%s2] sm:$0xff]
      %v813 = vld [vmem:[%s800] sm:$0x1]
      %v815 = vperm.slane %v813, 0
      %v817 = vadd.f32 %v812, %v815
      %v818 = vld [vmem:[%s803] sm:$0x1]
      %v819 = vpack.c.bf16 %v809, %v809
      %v820 = vld [vmem:[%s5] sm:$0xf]
      %v821 = vld [vmem:[%s5 + $0x4] sm:$0xf]
      %v822 = vld [vmem:[%s5 + $0x8] sm:$0xf]
      %v823 = vld [vmem:[%s5 + $0xc] sm:$0xf]
      %v824 = vld [vmem:[%s6] sm:$0x1]
      %v826 = vperm.slane %v824, 0
      %v832 = vunpack.c.l.b16 %v820
      %v833 = vunpack.c.l.b16 %v821
      %v834 = vunpack.c.l.b16 %v822
      %v835 = vunpack.c.l.b16 %v823
      %v836 = vpack.c.b16 %v833, %v832
      %v837 = vpack.c.b16 %v835, %v834
      %vm840 = vcmask 261120
      %v842 = vsel %vm840, %v819, 0
      %844 = vmatpush.bf16.msra.mxu0 0
      %845 = vmatpush.bf16.msra.mxu0 0
      %846 = vmatpush.bf16.msra.mxu0 0
      %847 = vmatpush.bf16.msra.mxu0 0
      %848 = vmatpush.bf16.msra.mxu0 0
      %849 = vmatpush.bf16.msra.mxu0 0
      %850 = vmatpush.bf16.msra.mxu0 %v837
      %851 = vmatpush.bf16.msra.mxu0 %v836
      %852 = vmatmul.bf16.gmra.mxu0 %v842
      %v853 = vpop.f32.mrf.mxu0
      %v854 = vadd.f32 %v826, %v853
      %v855 = vpop.f32.mrf.mxu0
      %856 = vdwg.mxu0
      %v857 = vld [vmem:[%s7] sm:$0xf]
      %v858 = vld [vmem:[%s7 + $0x4] sm:$0xf]
      %v859 = vld [vmem:[%s7 + $0x8] sm:$0xf]
      %v860 = vld [vmem:[%s7 + $0xc] sm:$0xf]
      %v861 = vpack.c.bf16 %v854, %v854
      %v863 = vunpack.c.l.b16 %v861
      %v864 = vpack.c.b16 %v863, %v863
      %865 = vrot.lane.b32.xlu0 %v864, 96
      %v866 = vpop.permute.xlu0 %865
      %vm867 = vcmask 64512
      %v869 = vsel %vm867, %v861, 0
      %v872 = vsel %vm867, %v866, 0
      %874 = vmatpush.bf16.xpose.msra.mxu0 0
      %875 = vmatpush.bf16.xpose.msra.mxu0 0
      %876 = vmatpush.bf16.xpose.msra.mxu0 0
      %877 = vmatpush.bf16.xpose.msra.mxu0 0
      %878 = vmatpush.bf16.xpose.msra.mxu0 0
      %879 = vmatpush.bf16.xpose.msra.mxu0 0
      %880 = vmatpush.bf16.xpose.msra.mxu0 0
      %881 = vmatpush.bf16.xpose.msra.mxu0 %v872
      %882 = vmatmul.bf16.gmra.mxu0 %v869
      %v883 = vpop.f32.mrf.mxu0
      %v884 = vadd.f32 0.0, %v883
      %v885 = vpop.f32.mrf.mxu0
      %886 = vdwg.mxu0
      %v887 = vmul.f32 %v884, 0.35355338
      %v888 = vadd.f32 %v887, %v817
      %v889 = vsel %vm867, %v888, -inf
      %890 = vmax.xlane.f32.xlu0 %v889
      %v891 = vpop.xlane.xlu0 %890
      %v892 = vsub.f32 %v888, %v891
      %v893 = vmul.f32 %v892, 1.442695
      %v894 = vpow.pop %v893
      %v895 = vsel %vm867, %v894, 0.0
      %896 = vadd.xlane.f32.xlu0 %v895
      %v897 = vpop.xlane.xlu0 %896
      %v898 = vrcp.pop %v897
      %v899 = vmul.f32 %v894, %v898
      %v900 = vpack.c.bf16 %v899, %v899
      %901 = vrot.lane.b32.xlu0 %v864, 64
      %v902 = vpop.permute.xlu0 %901
      %v904 = vsel %vm867, %v900, 0
      %vm906 = vcmask 1043456
      %v908 = vsel %vm906, %v902, 0
      %910 = vmatpush.bf16.msra.mxu0 0
      %911 = vmatpush.bf16.msra.mxu0 0
      %912 = vmatpush.bf16.msra.mxu0 0
      %913 = vmatpush.bf16.msra.mxu0 0
      %914 = vmatpush.bf16.msra.mxu0 0
      %915 = vmatpush.bf16.msra.mxu0 0
      %916 = vmatpush.bf16.msra.mxu0 0
      %917 = vmatpush.bf16.msra.mxu0 %v908
      %918 = vmatmul.bf16.gmra.mxu0 %v904
      %v919 = vpop.f32.mrf.mxu0
      %v920 = vadd.f32 0.0, %v919
      %v921 = vpop.f32.mrf.mxu0
      %922 = vdwg.mxu0
      %923 = vrot.lane.b32.xlu0 %v864, 120
      %v924 = vpop.permute.xlu0 %923
      %925 = vrot.lane.b32.xlu0 %v864, 88
      %v926 = vpop.permute.xlu0 %925
      %v928 = vsel %vm867, %v924, 0
      %v931 = vsel %vm867, %v926, 0
      %933 = vmatpush.bf16.xpose.msra.mxu0 0
      %934 = vmatpush.bf16.xpose.msra.mxu0 0
      %935 = vmatpush.bf16.xpose.msra.mxu0 0
      %936 = vmatpush.bf16.xpose.msra.mxu0 0
      %937 = vmatpush.bf16.xpose.msra.mxu0 0
      %938 = vmatpush.bf16.xpose.msra.mxu0 0
      %939 = vmatpush.bf16.xpose.msra.mxu0 0
      %940 = vmatpush.bf16.xpose.msra.mxu0 %v931
      %941 = vmatmul.bf16.gmra.mxu0 %v928
      %v942 = vpop.f32.mrf.mxu0
      %v943 = vadd.f32 0.0, %v942
      %v944 = vpop.f32.mrf.mxu0
      %945 = vdwg.mxu0
      %v946 = vmul.f32 %v943, 0.35355338
      %v947 = vadd.f32 %v946, %v817
      %v948 = vsel %vm867, %v947, -inf
      %949 = vmax.xlane.f32.xlu0 %v948
      %v950 = vpop.xlane.xlu0 %949
      %v951 = vsub.f32 %v947, %v950
      %v952 = vmul.f32 %v951, 1.442695
      %v953 = vpow.pop %v952
      %v954 = vsel %vm867, %v953, 0.0
      %955 = vadd.xlane.f32.xlu0 %v954
      %v956 = vpop.xlane.xlu0 %955
      %v957 = vrcp.pop %v956
      %v958 = vmul.f32 %v953, %v957
      %v959 = vpack.c.bf16 %v958, %v958
      %960 = vrot.lane.b32.xlu0 %v864, 56
      %v961 = vpop.permute.xlu0 %960
      %v963 = vsel %vm867, %v959, 0
      %v966 = vsel %vm906, %v961, 0
      %968 = vmatpush.bf16.msra.mxu0 0
      %969 = vmatpush.bf16.msra.mxu0 0
      %970 = vmatpush.bf16.msra.mxu0 0
      %971 = vmatpush.bf16.msra.mxu0 0
      %972 = vmatpush.bf16.msra.mxu0 0
      %973 = vmatpush.bf16.msra.mxu0 0
      %974 = vmatpush.bf16.msra.mxu0 0
      %975 = vmatpush.bf16.msra.mxu0 %v966
      %976 = vmatmul.bf16.gmra.mxu0 %v963
      %v977 = vpop.f32.mrf.mxu0
      %v978 = vadd.f32 0.0, %v977
      %v979 = vpop.f32.mrf.mxu0
      %980 = vdwg.mxu0
      %981 = vrot.lane.b32.xlu0 %v864, 112
      %v982 = vpop.permute.xlu0 %981
      %983 = vrot.lane.b32.xlu0 %v864, 80
      %v984 = vpop.permute.xlu0 %983
      %v986 = vsel %vm867, %v982, 0
      %v989 = vsel %vm867, %v984, 0
      %991 = vmatpush.bf16.xpose.msra.mxu0 0
      %992 = vmatpush.bf16.xpose.msra.mxu0 0
      %993 = vmatpush.bf16.xpose.msra.mxu0 0
      %994 = vmatpush.bf16.xpose.msra.mxu0 0
      %995 = vmatpush.bf16.xpose.msra.mxu0 0
      %996 = vmatpush.bf16.xpose.msra.mxu0 0
      %997 = vmatpush.bf16.xpose.msra.mxu0 0
      %998 = vmatpush.bf16.xpose.msra.mxu0 %v989
      %999 = vmatmul.bf16.gmra.mxu0 %v986
      %v1000 = vpop.f32.mrf.mxu0
      %v1001 = vadd.f32 0.0, %v1000
      %v1002 = vpop.f32.mrf.mxu0
      %1003 = vdwg.mxu0
      %v1004 = vmul.f32 %v1001, 0.35355338
      %v1005 = vadd.f32 %v1004, %v817
      %v1006 = vsel %vm867, %v1005, -inf
      %1007 = vmax.xlane.f32.xlu0 %v1006
      %v1008 = vpop.xlane.xlu0 %1007
      %v1009 = vsub.f32 %v1005, %v1008
      %v1010 = vmul.f32 %v1009, 1.442695
      %v1011 = vpow.pop %v1010
      %v1012 = vsel %vm867, %v1011, 0.0
      %1013 = vadd.xlane.f32.xlu0 %v1012
      %v1014 = vpop.xlane.xlu0 %1013
      %v1015 = vrcp.pop %v1014
      %v1016 = vmul.f32 %v1011, %v1015
      %v1017 = vpack.c.bf16 %v1016, %v1016
      %1018 = vrot.lane.b32.xlu0 %v864, 48
      %v1019 = vpop.permute.xlu0 %1018
      %v1021 = vsel %vm867, %v1017, 0
      %v1024 = vsel %vm906, %v1019, 0
      %1026 = vmatpush.bf16.msra.mxu0 0
      %1027 = vmatpush.bf16.msra.mxu0 0
      %1028 = vmatpush.bf16.msra.mxu0 0
      %1029 = vmatpush.bf16.msra.mxu0 0
      %1030 = vmatpush.bf16.msra.mxu0 0
      %1031 = vmatpush.bf16.msra.mxu0 0
      %1032 = vmatpush.bf16.msra.mxu0 0
      %1033 = vmatpush.bf16.msra.mxu0 %v1024
      %1034 = vmatmul.bf16.gmra.mxu0 %v1021
      %v1035 = vpop.f32.mrf.mxu0
      %v1036 = vadd.f32 0.0, %v1035
      %v1037 = vpop.f32.mrf.mxu0
      %1038 = vdwg.mxu0
      %1039 = vrot.lane.b32.xlu0 %v864, 104
      %v1040 = vpop.permute.xlu0 %1039
      %1041 = vrot.lane.b32.xlu0 %v864, 72
      %v1042 = vpop.permute.xlu0 %1041
      %v1044 = vsel %vm867, %v1040, 0
      %v1047 = vsel %vm867, %v1042, 0
      %1049 = vmatpush.bf16.xpose.msra.mxu0 0
      %1050 = vmatpush.bf16.xpose.msra.mxu0 0
      %1051 = vmatpush.bf16.xpose.msra.mxu0 0
      %1052 = vmatpush.bf16.xpose.msra.mxu0 0
      %1053 = vmatpush.bf16.xpose.msra.mxu0 0
      %1054 = vmatpush.bf16.xpose.msra.mxu0 0
      %1055 = vmatpush.bf16.xpose.msra.mxu0 0
      %1056 = vmatpush.bf16.xpose.msra.mxu0 %v1047
      %1057 = vmatmul.bf16.gmra.mxu0 %v1044
      %v1058 = vpop.f32.mrf.mxu0
      %v1059 = vadd.f32 0.0, %v1058
      %v1060 = vpop.f32.mrf.mxu0
      %1061 = vdwg.mxu0
      %v1062 = vmul.f32 %v1059, 0.35355338
      %v1063 = vadd.f32 %v1062, %v817
      %v1064 = vsel %vm867, %v1063, -inf
      %1065 = vmax.xlane.f32.xlu0 %v1064
      %v1066 = vpop.xlane.xlu0 %1065
      %v1067 = vsub.f32 %v1063, %v1066
      %v1068 = vmul.f32 %v1067, 1.442695
      %v1069 = vpow.pop %v1068
      %v1070 = vsel %vm867, %v1069, 0.0
      %1071 = vadd.xlane.f32.xlu0 %v1070
      %v1072 = vpop.xlane.xlu0 %1071
      %v1073 = vrcp.pop %v1072
      %v1074 = vmul.f32 %v1069, %v1073
      %v1075 = vpack.c.bf16 %v1074, %v1074
      %1076 = vrot.lane.b32.xlu0 %v864, 40
      %v1077 = vpop.permute.xlu0 %1076
      %v1079 = vsel %vm867, %v1075, 0
      %v1082 = vsel %vm906, %v1077, 0
      %1084 = vmatpush.bf16.msra.mxu0 0
      %1085 = vmatpush.bf16.msra.mxu0 0
      %1086 = vmatpush.bf16.msra.mxu0 0
      %1087 = vmatpush.bf16.msra.mxu0 0
      %1088 = vmatpush.bf16.msra.mxu0 0
      %1089 = vmatpush.bf16.msra.mxu0 0
      %1090 = vmatpush.bf16.msra.mxu0 0
      %1091 = vmatpush.bf16.msra.mxu0 %v1082
      %1092 = vmatmul.bf16.gmra.mxu0 %v1079
      %v1093 = vpop.f32.mrf.mxu0
      %v1094 = vadd.f32 0.0, %v1093
      %v1095 = vpop.f32.mrf.mxu0
      %1096 = vdwg.mxu0
      %1098 = vrot.lane.b32.xlu0 %v978, 8
      %v1099 = vpop.permute.xlu0 %1098
      %1102 = vrot.lane.b32.xlu0 %v1036, 16
      %v1103 = vpop.permute.xlu0 %1102
      %1106 = vrot.lane.b32.xlu0 %v1094, 24
      %v1107 = vpop.permute.xlu0 %1106
      %v1109 = vsel %vm867, %v920, %v1099
      %vm1110 = vcmask 130048
      %v1111 = vsel %vm1110, %v1109, %v1103
      %vm1112 = vcmask 195584
      %v1113 = vsel %vm1112, %v1111, %v1107
      %v1114 = vpack.c.bf16 %v1113, %v1113
      %v1115 = vld [vmem:[%s8] sm:$0x1]
      %v1117 = vperm.slane %v1115, 0
      %v1123 = vunpack.c.l.b16 %v857
      %v1124 = vunpack.c.l.b16 %v858
      %v1125 = vunpack.c.l.b16 %v859
      %v1126 = vunpack.c.l.b16 %v860
      %v1127 = vpack.c.b16 %v1124, %v1123
      %v1128 = vpack.c.b16 %v1126, %v1125
      %v1132 = vsel %vm840, %v1114, 0
      %1134 = vmatpush.bf16.msra.mxu0 0
      %1135 = vmatpush.bf16.msra.mxu0 0
      %1136 = vmatpush.bf16.msra.mxu0 0
      %1137 = vmatpush.bf16.msra.mxu0 0
      %1138 = vmatpush.bf16.msra.mxu0 0
      %1139 = vmatpush.bf16.msra.mxu0 0
      %1140 = vmatpush.bf16.msra.mxu0 %v1128
      %1141 = vmatpush.bf16.msra.mxu0 %v1127
      %1142 = vmatmul.bf16.gmra.mxu0 %v1132
      %v1143 = vpop.f32.mrf.mxu0
      %v1144 = vadd.f32 %v1117, %v1143
      %v1145 = vpop.f32.mrf.mxu0
      %1146 = vdwg.mxu0
      %v1147 = vadd.f32 %v809, %v1144
      %v1148 = vld [vmem:[%s9] sm:$0x1]
      %v1149 = vld [vmem:[%s10] sm:$0x1]
      %v1150 = vsel %vm840, %v1147, 0.0
      %1151 = vadd.xlane.f32.xlu0 %v1150
      %v1152 = vpop.xlane.xlu0 %1151
      %v1153 = vrcp.pop 32.0
      %v1154 = vmul.f32 32.0, %v1153
      %v1155 = vsub.f32 1.0, %v1154
      %v1156 = vmul.f32 %v1153, %v1155
      %v1157 = vadd.f32 %v1153, %v1156
      %vm1158 = vweird.f32 %v1153
      %v1159 = vsel %vm1158, %v1153, %v1157
      %v1160 = vmul.f32 %v1152, %v1159
      %v1161 = vsub.f32 %v1147, %v1160
      %v1162 = vmul.f32 %v1161, %v1161
      %v1163 = vsel %vm840, %v1162, 0.0
      %1164 = vadd.xlane.f32.xlu0 %v1163
      %v1165 = vpop.xlane.xlu0 %1164
      %v1166 = vmul.f32 %v1165, %v1159
      %v1167 = vadd.f32 %v1166, 1e-05
      %v1168 = vrsqrt.pop %v1167
      %v1169 = vmul.f32 %v1168, %v1167
      %v1170 = vmul.f32 %v1169, %v1168
      %v1171 = vmul.f32 0.5, %v1170
      %v1172 = vsub.f32 1.5, %v1171
      %v1173 = vmul.f32 %v1168, %v1172
      %vm1174 = vweird.f32 %v1167
      %vm1175 = vweird.f32 %v1168
      %vm1176 = vmor %vm1174, %vm1175
      %v1177 = vsel %vm1176, %v1168, %v1173
      %v1178 = vmul.f32 %v1161, %v1177
      %v1180 = vperm.slane %v1148, 0
      %v1182 = vmul.f32 %v1178, %v1180
      %v1184 = vperm.slane %v1149, 0
      %v1186 = vadd.f32 %v1182, %v1184
      %v1187 = vpack.c.bf16 %v1186, %v1186
      %v1188 = vld [vmem:[%s11] sm:$0xf]
      %v1189 = vld [vmem:[%s11 + $0x4] sm:$0xf]
      %v1190 = vld [vmem:[%s11 + $0x8] sm:$0xf]
      %v1191 = vld [vmem:[%s11 + $0xc] sm:$0xf]
      %v1192 = vld [vmem:[%s12] sm:$0x1]
      %v1194 = vperm.slane %v1192, 0
      %v1200 = vunpack.c.l.b16 %v1188
      %v1201 = vunpack.c.l.b16 %v1189
      %v1202 = vunpack.c.l.b16 %v1190
      %v1203 = vunpack.c.l.b16 %v1191
      %v1204 = vpack.c.b16 %v1201, %v1200
      %v1205 = vpack.c.b16 %v1203, %v1202
      %v1209 = vsel %vm840, %v1187, 0
      %1211 = vmatpush.bf16.msra.mxu0 0
      %1212 = vmatpush.bf16.msra.mxu0 0
      %1213 = vmatpush.bf16.msra.mxu0 0
      %1214 = vmatpush.bf16.msra.mxu0 0
      %1215 = vmatpush.bf16.msra.mxu0 0
      %1216 = vmatpush.bf16.msra.mxu0 0
      %1217 = vmatpush.bf16.msra.mxu0 %v1205
      %1218 = vmatpush.bf16.msra.mxu0 %v1204
      %1219 = vmatmul.bf16.gmra.mxu0 %v1209
      %v1220 = vpop.f32.mrf.mxu0
      %v1221 = vadd.f32 %v1194, %v1220
      %v1222 = vpop.f32.mrf.mxu0
      %1223 = vdwg.mxu0
      %v1224 = vpack.c.bf16 %v811, %v810
      %v1225 = vld [vmem:[%s13] sm:$0xf]
      %v1226 = vld [vmem:[%s13 + $0x4] sm:$0xf]
      %v1227 = vld [vmem:[%s13 + $0x8] sm:$0xf]
      %v1228 = vld [vmem:[%s13 + $0xc] sm:$0xf]
      %v1229 = vld [vmem:[%s14] sm:$0x1]
      %v1231 = vperm.slane %v1229, 0
      %v1237 = vunpack.c.l.b16 %v1225
      %v1238 = vunpack.c.l.b16 %v1226
      %v1239 = vunpack.c.l.b16 %v1227
      %v1240 = vunpack.c.l.b16 %v1228
      %v1241 = vpack.c.b16 %v1238, %v1237
      %v1242 = vpack.c.b16 %v1240, %v1239
      %v1246 = vsel %vm840, %v1224, 0
      %1248 = vmatpush.bf16.msra.mxu0 0
      %1249 = vmatpush.bf16.msra.mxu0 0
      %1250 = vmatpush.bf16.msra.mxu0 0
      %1251 = vmatpush.bf16.msra.mxu0 0
      %1252 = vmatpush.bf16.msra.mxu0 0
      %1253 = vmatpush.bf16.msra.mxu0 0
      %1254 = vmatpush.bf16.msra.mxu0 %v1242
      %1255 = vmatpush.bf16.msra.mxu0 %v1241
      %1256 = vmatmul.bf16.gmra.mxu0 %v1246
      %v1257 = vpop.f32.mrf.mxu0
      %v1258 = vadd.f32 %v1231, %v1257
      %v1259 = vpop.f32.mrf.mxu0
      %v1260 = vadd.f32 %v1231, %v1259
      %1261 = vdwg.mxu0
      %v1262 = vld [vmem:[%s15] sm:$0xf]
      %v1263 = vld [vmem:[%s15 + $0x4] sm:$0xf]
      %v1264 = vld [vmem:[%s15 + $0x8] sm:$0xf]
      %v1265 = vld [vmem:[%s15 + $0xc] sm:$0xf]
      %v1266 = vpack.c.bf16 %v1221, %v1221
      %v1267 = vpack.c.bf16 %v1258, %v1258
      %v1268 = vpack.c.bf16 %v1260, %v1260
      %v1271 = vunpack.c.l.b16 %v1267
      %v1272 = vunpack.c.l.b16 %v1268
      %v1273 = vpack.c.b16 %v1272, %v1271
      %v1275 = vsel %vm867, %v1266, 0
      %v1278 = vsel %vm867, %v1273, 0
      %1280 = vmatpush.bf16.xpose.msra.mxu0 0
      %1281 = vmatpush.bf16.xpose.msra.mxu0 0
      %1282 = vmatpush.bf16.xpose.msra.mxu0 0
      %1283 = vmatpush.bf16.xpose.msra.mxu0 0
      %1284 = vmatpush.bf16.xpose.msra.mxu0 0
      %1285 = vmatpush.bf16.xpose.msra.mxu0 0
      %1286 = vmatpush.bf16.xpose.msra.mxu0 0
      %1287 = vmatpush.bf16.xpose.msra.mxu0 %v1278
      %1288 = vmatmul.bf16.gmra.mxu0 %v1275
      %v1289 = vpop.f32.mrf.mxu0
      %v1290 = vadd.f32 0.0, %v1289
      %v1291 = vpop.f32.mrf.mxu0
      %1292 = vdwg.mxu0
      %v1293 = vmul.f32 %v1290, 0.35355338
      %v1295 = vperm.slane %v818, 0
      %v1297 = vadd.f32 %v1293, %v1295
      %vm1298 = vcmask 80896
      %v1299 = vsel %vm1298, %v1297, -inf
      %1300 = vmax.xlane.f32.xlu0 %v1299
      %v1301 = vpop.xlane.xlu0 %1300
      %v1302 = vsub.f32 %v1297, %v1301
      %v1303 = vmul.f32 %v1302, 1.442695
      %v1304 = vpow.pop %v1303
      %v1305 = vsel %vm1298, %v1304, 0.0
      %1306 = vadd.xlane.f32.xlu0 %v1305
      %v1307 = vpop.xlane.xlu0 %1306
      %v1308 = vrcp.pop %v1307
      %v1309 = vmul.f32 %v1304, %v1308
      %v1310 = vpack.c.bf16 %v1309, %v1309
      %1311 = vrot.lane.b32.xlu0 %v1273, 96
      %v1312 = vpop.permute.xlu0 %1311
      %v1314 = vsel %vm1298, %v1310, 0
      %vm1316 = vcmask 1044480
      %v1318 = vsel %vm1316, %v1312, 0
      %1320 = vmatpush.bf16.msra.mxu0 0
      %1321 = vmatpush.bf16.msra.mxu0 0
      %1322 = vmatpush.bf16.msra.mxu0 0
      %1323 = vmatpush.bf16.msra.mxu0 0
      %1324 = vmatpush.bf16.msra.mxu0 0
      %1325 = vmatpush.bf16.msra.mxu0 0
      %1326 = vmatpush.bf16.msra.mxu0 0
      %1327 = vmatpush.bf16.msra.mxu0 %v1318
      %1328 = vmatmul.bf16.gmra.mxu0 %v1314
      %v1329 = vpop.f32.mrf.mxu0
      %v1330 = vadd.f32 0.0, %v1329
      %v1331 = vpop.f32.mrf.mxu0
      %1332 = vdwg.mxu0
      %v1334 = vunpack.c.l.b16 %v1266
      %v1335 = vpack.c.b16 %v1334, %v1334
      %1336 = vrot.lane.b32.xlu0 %v1335, 120
      %v1337 = vpop.permute.xlu0 %1336
      %1338 = vrot.lane.b32.xlu0 %v1273, 120
      %v1339 = vpop.permute.xlu0 %1338
      %v1341 = vsel %vm867, %v1337, 0
      %v1344 = vsel %vm867, %v1339, 0
      %1346 = vmatpush.bf16.xpose.msra.mxu0 0
      %1347 = vmatpush.bf16.xpose.msra.mxu0 0
      %1348 = vmatpush.bf16.xpose.msra.mxu0 0
      %1349 = vmatpush.bf16.xpose.msra.mxu0 0
      %1350 = vmatpush.bf16.xpose.msra.mxu0 0
      %1351 = vmatpush.bf16.xpose.msra.mxu0 0
      %1352 = vmatpush.bf16.xpose.msra.mxu0 0
      %1353 = vmatpush.bf16.xpose.msra.mxu0 %v1344
      %1354 = vmatmul.bf16.gmra.mxu0 %v1341
      %v1355 = vpop.f32.mrf.mxu0
      %v1356 = vadd.f32 0.0, %v1355
      %v1357 = vpop.f32.mrf.mxu0
      %1358 = vdwg.mxu0
      %v1359 = vmul.f32 %v1356, 0.35355338
      %v1360 = vadd.f32 %v1359, %v1295
      %v1361 = vsel %vm1298, %v1360, -inf
      %1362 = vmax.xlane.f32.xlu0 %v1361
      %v1363 = vpop.xlane.xlu0 %1362
      %v1364 = vsub.f32 %v1360, %v1363
      %v1365 = vmul.f32 %v1364, 1.442695
      %v1366 = vpow.pop %v1365
      %v1367 = vsel %vm1298, %v1366, 0.0
      %1368 = vadd.xlane.f32.xlu0 %v1367
      %v1369 = vpop.xlane.xlu0 %1368
      %v1370 = vrcp.pop %v1369
      %v1371 = vmul.f32 %v1366, %v1370
      %v1372 = vpack.c.bf16 %v1371, %v1371
      %1373 = vrot.lane.b32.xlu0 %v1273, 88
      %v1374 = vpop.permute.xlu0 %1373
      %v1376 = vsel %vm1298, %v1372, 0
      %v1379 = vsel %vm1316, %v1374, 0
      %1381 = vmatpush.bf16.msra.mxu0 0
      %1382 = vmatpush.bf16.msra.mxu0 0
      %1383 = vmatpush.bf16.msra.mxu0 0
      %1384 = vmatpush.bf16.msra.mxu0 0
      %1385 = vmatpush.bf16.msra.mxu0 0
      %1386 = vmatpush.bf16.msra.mxu0 0
      %1387 = vmatpush.bf16.msra.mxu0 0
      %1388 = vmatpush.bf16.msra.mxu0 %v1379
      %1389 = vmatmul.bf16.gmra.mxu0 %v1376
      %v1390 = vpop.f32.mrf.mxu0
      %v1391 = vadd.f32 0.0, %v1390
      %v1392 = vpop.f32.mrf.mxu0
      %1393 = vdwg.mxu0
      %1394 = vrot.lane.b32.xlu0 %v1335, 112
      %v1395 = vpop.permute.xlu0 %1394
      %1396 = vrot.lane.b32.xlu0 %v1273, 112
      %v1397 = vpop.permute.xlu0 %1396
      %v1399 = vsel %vm867, %v1395, 0
      %v1402 = vsel %vm867, %v1397, 0
      %1404 = vmatpush.bf16.xpose.msra.mxu0 0
      %1405 = vmatpush.bf16.xpose.msra.mxu0 0
      %1406 = vmatpush.bf16.xpose.msra.mxu0 0
      %1407 = vmatpush.bf16.xpose.msra.mxu0 0
      %1408 = vmatpush.bf16.xpose.msra.mxu0 0
      %1409 = vmatpush.bf16.xpose.msra.mxu0 0
      %1410 = vmatpush.bf16.xpose.msra.mxu0 0
      %1411 = vmatpush.bf16.xpose.msra.mxu0 %v1402
      %1412 = vmatmul.bf16.gmra.mxu0 %v1399
      %v1413 = vpop.f32.mrf.mxu0
      %v1414 = vadd.f32 0.0, %v1413
      %v1415 = vpop.f32.mrf.mxu0
      %1416 = vdwg.mxu0
      %v1417 = vmul.f32 %v1414, 0.35355338
      %v1418 = vadd.f32 %v1417, %v1295
      %v1419 = vsel %vm1298, %v1418, -inf
      %1420 = vmax.xlane.f32.xlu0 %v1419
      %v1421 = vpop.xlane.xlu0 %1420
      %v1422 = vsub.f32 %v1418, %v1421
      %v1423 = vmul.f32 %v1422, 1.442695
      %v1424 = vpow.pop %v1423
      %v1425 = vsel %vm1298, %v1424, 0.0
      %1426 = vadd.xlane.f32.xlu0 %v1425
      %v1427 = vpop.xlane.xlu0 %1426
      %v1428 = vrcp.pop %v1427
      %v1429 = vmul.f32 %v1424, %v1428
      %v1430 = vpack.c.bf16 %v1429, %v1429
      %1431 = vrot.lane.b32.xlu0 %v1273, 80
      %v1432 = vpop.permute.xlu0 %1431
      %v1434 = vsel %vm1298, %v1430, 0
      %v1437 = vsel %vm1316, %v1432, 0
      %1439 = vmatpush.bf16.msra.mxu0 0
      %1440 = vmatpush.bf16.msra.mxu0 0
      %1441 = vmatpush.bf16.msra.mxu0 0
      %1442 = vmatpush.bf16.msra.mxu0 0
      %1443 = vmatpush.bf16.msra.mxu0 0
      %1444 = vmatpush.bf16.msra.mxu0 0
      %1445 = vmatpush.bf16.msra.mxu0 0
      %1446 = vmatpush.bf16.msra.mxu0 %v1437
      %1447 = vmatmul.bf16.gmra.mxu0 %v1434
      %v1448 = vpop.f32.mrf.mxu0
      %v1449 = vadd.f32 0.0, %v1448
      %v1450 = vpop.f32.mrf.mxu0
      %1451 = vdwg.mxu0
      %1452 = vrot.lane.b32.xlu0 %v1335, 104
      %v1453 = vpop.permute.xlu0 %1452
      %1454 = vrot.lane.b32.xlu0 %v1273, 104
      %v1455 = vpop.permute.xlu0 %1454
      %v1457 = vsel %vm867, %v1453, 0
      %v1460 = vsel %vm867, %v1455, 0
      %1462 = vmatpush.bf16.xpose.msra.mxu0 0
      %1463 = vmatpush.bf16.xpose.msra.mxu0 0
      %1464 = vmatpush.bf16.xpose.msra.mxu0 0
      %1465 = vmatpush.bf16.xpose.msra.mxu0 0
      %1466 = vmatpush.bf16.xpose.msra.mxu0 0
      %1467 = vmatpush.bf16.xpose.msra.mxu0 0
      %1468 = vmatpush.bf16.xpose.msra.mxu0 0
      %1469 = vmatpush.bf16.xpose.msra.mxu0 %v1460
      %1470 = vmatmul.bf16.gmra.mxu0 %v1457
      %v1471 = vpop.f32.mrf.mxu0
      %v1472 = vadd.f32 0.0, %v1471
      %v1473 = vpop.f32.mrf.mxu0
      %1474 = vdwg.mxu0
      %v1475 = vmul.f32 %v1472, 0.35355338
      %v1476 = vadd.f32 %v1475, %v1295
      %v1477 = vsel %vm1298, %v1476, -inf
      %1478 = vmax.xlane.f32.xlu0 %v1477
      %v1479 = vpop.xlane.xlu0 %1478
      %v1480 = vsub.f32 %v1476, %v1479
      %v1481 = vmul.f32 %v1480, 1.442695
      %v1482 = vpow.pop %v1481
      %v1483 = vsel %vm1298, %v1482, 0.0
      %1484 = vadd.xlane.f32.xlu0 %v1483
      %v1485 = vpop.xlane.xlu0 %1484
      %v1486 = vrcp.pop %v1485
      %v1487 = vmul.f32 %v1482, %v1486
      %v1488 = vpack.c.bf16 %v1487, %v1487
      %1489 = vrot.lane.b32.xlu0 %v1273, 72
      %v1490 = vpop.permute.xlu0 %1489
      %v1492 = vsel %vm1298, %v1488, 0
      %v1495 = vsel %vm1316, %v1490, 0
      %1497 = vmatpush.bf16.msra.mxu0 0
      %1498 = vmatpush.bf16.msra.mxu0 0
      %1499 = vmatpush.bf16.msra.mxu0 0
      %1500 = vmatpush.bf16.msra.mxu0 0
      %1501 = vmatpush.bf16.msra.mxu0 0
      %1502 = vmatpush.bf16.msra.mxu0 0
      %1503 = vmatpush.bf16.msra.mxu0 0
      %1504 = vmatpush.bf16.msra.mxu0 %v1495
      %1505 = vmatmul.bf16.gmra.mxu0 %v1492
      %v1506 = vpop.f32.mrf.mxu0
      %v1507 = vadd.f32 0.0, %v1506
      %v1508 = vpop.f32.mrf.mxu0
      %1509 = vdwg.mxu0
      %1511 = vrot.lane.b32.xlu0 %v1391, 8
      %v1512 = vpop.permute.xlu0 %1511
      %1515 = vrot.lane.b32.xlu0 %v1449, 16
      %v1516 = vpop.permute.xlu0 %1515
      %1519 = vrot.lane.b32.xlu0 %v1507, 24
      %v1520 = vpop.permute.xlu0 %1519
      %v1522 = vsel %vm867, %v1330, %v1512
      %v1523 = vsel %vm1110, %v1522, %v1516
      %v1524 = vsel %vm1112, %v1523, %v1520
      %v1525 = vpack.c.bf16 %v1524, %v1524
      %v1526 = vld [vmem:[%s16] sm:$0x1]
      %v1528 = vperm.slane %v1526, 0
      %v1534 = vunpack.c.l.b16 %v1262
      %v1535 = vunpack.c.l.b16 %v1263
      %v1536 = vunpack.c.l.b16 %v1264
      %v1537 = vunpack.c.l.b16 %v1265
      %v1538 = vpack.c.b16 %v1535, %v1534
      %v1539 = vpack.c.b16 %v1537, %v1536
      %v1543 = vsel %vm840, %v1525, 0
      %1545 = vmatpush.bf16.msra.mxu0 0
      %1546 = vmatpush.bf16.msra.mxu0 0
      %1547 = vmatpush.bf16.msra.mxu0 0
      %1548 = vmatpush.bf16.msra.mxu0 0
      %1549 = vmatpush.bf16.msra.mxu0 0
      %1550 = vmatpush.bf16.msra.mxu0 0
      %1551 = vmatpush.bf16.msra.mxu0 %v1539
      %1552 = vmatpush.bf16.msra.mxu0 %v1538
      %1553 = vmatmul.bf16.gmra.mxu0 %v1543
      %v1554 = vpop.f32.mrf.mxu0
      %v1555 = vadd.f32 %v1528, %v1554
      %v1556 = vpop.f32.mrf.mxu0
      %1557 = vdwg.mxu0
      %v1558 = vadd.f32 %v1186, %v1555
      %v1559 = vld [vmem:[%s17] sm:$0x1]
      %v1560 = vld [vmem:[%s18] sm:$0x1]
      %v1561 = vsel %vm840, %v1558, 0.0
      %1562 = vadd.xlane.f32.xlu0 %v1561
      %v1563 = vpop.xlane.xlu0 %1562
      %v1564 = vmul.f32 %v1563, %v1159
      %v1565 = vsub.f32 %v1558, %v1564
      %v1566 = vmul.f32 %v1565, %v1565
      %v1567 = vsel %vm840, %v1566, 0.0
      %1568 = vadd.xlane.f32.xlu0 %v1567
      %v1569 = vpop.xlane.xlu0 %1568
      %v1570 = vmul.f32 %v1569, %v1159
      %v1571 = vadd.f32 %v1570, 1e-05
      %v1572 = vrsqrt.pop %v1571
      %v1573 = vmul.f32 %v1572, %v1571
      %v1574 = vmul.f32 %v1573, %v1572
      %v1575 = vmul.f32 0.5, %v1574
      %v1576 = vsub.f32 1.5, %v1575
      %v1577 = vmul.f32 %v1572, %v1576
      %vm1578 = vweird.f32 %v1571
      %vm1579 = vweird.f32 %v1572
      %vm1580 = vmor %vm1578, %vm1579
      %v1581 = vsel %vm1580, %v1572, %v1577
      %v1582 = vmul.f32 %v1565, %v1581
      %v1584 = vperm.slane %v1559, 0
      %v1586 = vmul.f32 %v1582, %v1584
      %v1588 = vperm.slane %v1560, 0
      %v1590 = vadd.f32 %v1586, %v1588
      %v1591 = vpack.c.bf16 %v1590, %v1590
      %v1592 = vld [vmem:[%s19] sm:$0xf]
      %v1593 = vld [vmem:[%s19 + $0x4] sm:$0xf]
      %v1594 = vld [vmem:[%s19 + $0x8] sm:$0xf]
      %v1595 = vld [vmem:[%s19 + $0xc] sm:$0xf]
      %v1596 = vld [vmem:[%s20] sm:$0x1]
      %v1598 = vperm.slane %v1596, 0
      %v1604 = vunpack.c.l.b16 %v1592
      %v1605 = vunpack.c.l.b16 %v1593
      %v1606 = vunpack.c.l.b16 %v1594
      %v1607 = vunpack.c.l.b16 %v1595
      %v1608 = vpack.c.b16 %v1605, %v1604
      %v1609 = vpack.c.b16 %v1607, %v1606
      %v1613 = vsel %vm840, %v1591, 0
      %1615 = vmatpush.bf16.msra.mxu0 0
      %1616 = vmatpush.bf16.msra.mxu0 0
      %1617 = vmatpush.bf16.msra.mxu0 0
      %1618 = vmatpush.bf16.msra.mxu0 0
      %1619 = vmatpush.bf16.msra.mxu0 0
      %1620 = vmatpush.bf16.msra.mxu0 0
      %1621 = vmatpush.bf16.msra.mxu0 %v1609
      %1622 = vmatpush.bf16.msra.mxu0 %v1608
      %1623 = vmatmul.bf16.gmra.mxu0 %v1613
      %v1624 = vpop.f32.mrf.mxu0
      %v1625 = vadd.f32 %v1598, %v1624
      %v1626 = vpop.f32.mrf.mxu0
      %1627 = vdwg.mxu0
      %v1628 = vmax.f32 %v1625, 0.0
      %v1629 = vpack.c.bf16 %v1628, %v1628
      %v1630 = vld [vmem:[%s21] sm:$0xf]
      %v1631 = vld [vmem:[%s21 + $0x4] sm:$0xf]
      %v1632 = vld [vmem:[%s21 + $0x8] sm:$0xf]
      %v1633 = vld [vmem:[%s21 + $0xc] sm:$0xf]
      %v1634 = vld [vmem:[%s21 + $0x10] sm:$0xf]
      %v1635 = vld [vmem:[%s21 + $0x14] sm:$0xf]
      %v1636 = vld [vmem:[%s21 + $0x18] sm:$0xf]
      %v1637 = vld [vmem:[%s21 + $0x1c] sm:$0xf]
      %v1638 = vld [vmem:[%s22] sm:$0x1]
      %v1640 = vperm.slane %v1638, 0
      %v1650 = vunpack.c.l.b16 %v1630
      %v1651 = vunpack.c.l.b16 %v1631
      %v1652 = vunpack.c.l.b16 %v1632
      %v1653 = vunpack.c.l.b16 %v1633
      %v1654 = vunpack.c.l.b16 %v1634
      %v1655 = vunpack.c.l.b16 %v1635
      %v1656 = vunpack.c.l.b16 %v1636
      %v1657 = vunpack.c.l.b16 %v1637
      %v1658 = vpack.c.b16 %v1651, %v1650
      %v1659 = vpack.c.b16 %v1653, %v1652
      %v1660 = vpack.c.b16 %v1655, %v1654
      %v1661 = vpack.c.b16 %v1657, %v1656
      %vm1666 = vcmask 523264
      %v1668 = vsel %vm1666, %v1629, 0
      %1670 = vmatpush.bf16.msra.mxu0 0
      %1671 = vmatpush.bf16.msra.mxu0 0
      %1672 = vmatpush.bf16.msra.mxu0 0
      %1673 = vmatpush.bf16.msra.mxu0 0
      %1674 = vmatpush.bf16.msra.mxu0 %v1661
      %1675 = vmatpush.bf16.msra.mxu0 %v1660
      %1676 = vmatpush.bf16.msra.mxu0 %v1659
      %1677 = vmatpush.bf16.msra.mxu0 %v1658
      %1678 = vmatmul.bf16.gmra.mxu0 %v1668
      %v1679 = vpop.f32.mrf.mxu0
      %v1680 = vadd.f32 %v1640, %v1679
      %v1681 = vpop.f32.mrf.mxu0
      %1682 = vdwg.mxu0
      %v1683 = vadd.f32 %v1590, %v1680
      %v1684 = vld [vmem:[%s23] sm:$0x1]
      %v1685 = vld [vmem:[%s24] sm:$0x1]
      %v1686 = vsel %vm840, %v1683, 0.0
      %1687 = vadd.xlane.f32.xlu0 %v1686
      %v1688 = vpop.xlane.xlu0 %1687
      %v1689 = vmul.f32 %v1688, %v1159
      %v1690 = vsub.f32 %v1683, %v1689
      %v1691 = vmul.f32 %v1690, %v1690
      %v1692 = vsel %vm840, %v1691, 0.0
      %1693 = vadd.xlane.f32.xlu0 %v1692
      %v1694 = vpop.xlane.xlu0 %1693
      %v1695 = vmul.f32 %v1694, %v1159
      %v1696 = vadd.f32 %v1695, 1e-05
      %v1697 = vrsqrt.pop %v1696
      %v1698 = vmul.f32 %v1697, %v1696
      %v1699 = vmul.f32 %v1698, %v1697
      %v1700 = vmul.f32 0.5, %v1699
      %v1701 = vsub.f32 1.5, %v1700
      %v1702 = vmul.f32 %v1697, %v1701
      %vm1703 = vweird.f32 %v1696
      %vm1704 = vweird.f32 %v1697
      %vm1705 = vmor %vm1703, %vm1704
      %v1706 = vsel %vm1705, %v1697, %v1702
      %v1707 = vmul.f32 %v1690, %v1706
      %v1709 = vperm.slane %v1684, 0
      %v1711 = vmul.f32 %v1707, %v1709
      %v1713 = vperm.slane %v1685, 0
      %v1715 = vadd.f32 %v1711, %v1713
      %1716 = vst.msk [vmem:[%s807] sm:$0xff] %vm840, %v1715
      %p1717 = scmp.lt.s32.totalorder %s36, 1
      %s1718 = scalar_select %p1717, %s36, 1
      %s1719 = smul.addr %s1718, 8
      %s1720 = scalar_lea.vmem %s25, %s1719
      // Predicated region
      $region121: #{seq2seq_transformer_forward.7} parent=119 // pred_check
        %p1721 = pneg %p599
      $region122: #{seq2seq_transformer_forward.7} parent=119 // pred_check_branch
        %1723 = sbr.rel (%p1721) target = $region124
      $region123: #{seq2seq_transformer_forward.7} parent=119 // pred_region
        _
      $region124: #{seq2seq_transformer_forward.7} parent=119 // pred_fallthru
        _
    $region120: #{seq2seq_transformer_forward.7} parent=5 // pred_fallthru
      _
    %p1724 = scmp.le.s32.totalorder 2, %s31
    // Predicated region
    $region125: #{seq2seq_transformer_forward.7} parent=5 // pred_check
      %p1725 = pneg %p1724
    $region126: #{seq2seq_transformer_forward.7} parent=5 // pred_check_branch
      %1727 = sbr.rel (%p1725) target = $region128
    $region127: #{seq2seq_transformer_forward.7} parent=5 // pred_region
      %s1728 = ssub.s32 %s31, 2
      // Predicated region
      $region129: #{seq2seq_transformer_forward.7} parent=127 // pred_check
        %p1729 = pneg %p605
      $region130: #{seq2seq_transformer_forward.7} parent=127 // pred_check_branch
        %1731 = sbr.rel (%p1729) target = $region132
      $region131: #{seq2seq_transformer_forward.7} parent=127 // pred_region
        %p1732 = scmp.lt.s32.totalorder %s37, 1
        %s1733 = scalar_select %p1732, %s37, 1
        %s1734 = smul.addr %s1733, 8
        %s1735 = scalar_lea.vmem %s25, %s1734
      $region132: #{seq2seq_transformer_forward.7} parent=127 // pred_fallthru
        _
    $region128: #{seq2seq_transformer_forward.7} parent=5 // pred_fallthru
      _
  $region6: #{seq2seq_transformer_forward.7} parent=0 // loop_footer
    %s35 = sadd.s32 1, %s31
  $region7: #{seq2seq_transformer_forward.7} parent=0 // loop_footer_branch
    %30 = sbr.rel target = $region3
  $region8: #{seq2seq_transformer_forward.7} parent=0 // loop_exit
    _

// kernel: seq2seq_transformer_forward.8
$region0: #{seq2seq_transformer_forward.8}
  #allocation0 [shape = 'u32[]', space=smem, size = 0x4, offset = 0x4, fixed_abs, tag = 'smem constant byte address 0x4 - core index']
  #allocation1 [shape = 'u32[72,128]{1,0:T(1,128)}', space=vmem, size = 0x9000, scoped, tag = 'internal scratch']
  %s0 = inlined_call_operand.vmem [shape: f32[2,8,32], index: 0, kind: input, shape index: {}]
  %s1 = inlined_call_operand.vmem [shape: f32[2,10,32], index: 1, kind: input, shape index: {}]
  %s2 = inlined_call_operand.vmem [shape: f32[8,8], index: 2, kind: input, shape index: {}]
  %s3 = inlined_call_operand.vmem [shape: f32[2,1,8], index: 3, kind: input, shape index: {}]
  %s4 = inlined_call_operand.vmem [shape: f32[2,1,10], index: 4, kind: input, shape index: {}]
  %s5 = inlined_call_operand.vmem [shape: bf16[32,96], index: 5, kind: input, shape index: {}]
  %s6 = inlined_call_operand.vmem [shape: f32[1,96], index: 6, kind: input, shape index: {}]
  %s7 = inlined_call_operand.vmem [shape: bf16[32,32], index: 7, kind: input, shape index: {}]
  %s8 = inlined_call_operand.vmem [shape: f32[1,32], index: 8, kind: input, shape index: {}]
  %s9 = inlined_call_operand.vmem [shape: f32[1,32], index: 9, kind: input, shape index: {}]
  %s10 = inlined_call_operand.vmem [shape: f32[1,32], index: 10, kind: input, shape index: {}]
  %s11 = inlined_call_operand.vmem [shape: bf16[32,32], index: 11, kind: input, shape index: {}]
  %s12 = inlined_call_operand.vmem [shape: f32[1,32], index: 12, kind: input, shape index: {}]
  %s13 = inlined_call_operand.vmem [shape: bf16[32,64], index: 13, kind: input, shape index: {}]
  %s14 = inlined_call_operand.vmem [shape: f32[1,64], index: 14, kind: input, shape index: {}]
  %s15 = inlined_call_operand.vmem [shape: bf16[32,32], index: 15, kind: input, shape index: {}]
  %s16 = inlined_call_operand.vmem [shape: f32[1,32], index: 16, kind: input, shape index: {}]
  %s17 = inlined_call_operand.vmem [shape: f32[1,32], index: 17, kind: input, shape index: {}]
  %s18 = inlined_call_operand.vmem [shape: f32[1,32], index: 18, kind: input, shape index: {}]
  %s19 = inlined_call_operand.vmem [shape: bf16[32,64], index: 19, kind: input, shape index: {}]
  %s20 = inlined_call_operand.vmem [shape: f32[1,64], index: 20, kind: input, shape index: {}]
  %s21 = inlined_call_operand.vmem [shape: bf16[64,32], index: 21, kind: input, shape index: {}]
  %s22 = inlined_call_operand.vmem [shape: f32[1,32], index: 22, kind: input, shape index: {}]
  %s23 = inlined_call_operand.vmem [shape: f32[1,32], index: 23, kind: input, shape index: {}]
  %s24 = inlined_call_operand.hbm [shape: f32[1,32], index: 24, kind: input, shape index: {}]
  %s25 = inlined_call_operand.vmem [shape: f32[2,8,32], index: 25, kind: output, shape index: {}]
  %s26 = sld [smem:[#allocation0]]
  $region137: #{seq2seq_transformer_forward.8} parent=0
    _
  %s28 = ssub.s32 1, %s26
  %s29 = scalar_select 0, %s28, %s26
  $region1: #{seq2seq_transformer_forward.8} parent=0
    #allocation2 [shape = 'u8[512]{0}', space=vmem, size = 0x400, scoped, tag = 'input window, operand 24, single buffered']
    #allocation3 [shape = 's32[2]{0}', space=sflag, size = 0x8, scoped, tag = 'scoped memory for seq2seq_transformer_forward.8']
    %30 = vsyncpa [#allocation3], 0
    loop: start=0, step=1, limit=4
    $region2: #{seq2seq_transformer_forward.8} parent=1 // loop_pre_header
      _
    $region3: #{seq2seq_transformer_forward.8} parent=1 // loop_header
      %s32 = sphi 0, %s36
      %p33 = scmp.ge.s32.totalorder %s32, 4
      %s42 = sphi 0, %s44
      %s45 = sphi 0, %s42
      %s46 = sphi 0, %s45
      %s62 = sphi 0, %s46
      %s68 = sphi 0, %s70
      %s71 = sphi 0, %s68
      %s72 = sphi 0, %s71
      %s88 = sphi 0, %s72
      %s92 = sphi 0, %s92
      %s94 = sphi 0, %s92
      %s95 = sphi 0, %s94
      %s109 = sphi 0, %s95
      %s115 = sphi 0, %s117
      %s118 = sphi 0, %s115
      %s119 = sphi 0, %s118
      %s135 = sphi 0, %s119
      %s141 = sphi 0, %s143
      %s144 = sphi 0, %s141
      %s145 = sphi 0, %s144
      %s161 = sphi 0, %s145
      %s165 = sphi 0, %s165
      %s167 = sphi 0, %s165
      %s168 = sphi 0, %s167
      %s182 = sphi 0, %s168
      %s186 = sphi 0, %s186
      %s188 = sphi 0, %s186
      %s189 = sphi 0, %s188
      %s203 = sphi 0, %s189
      %s207 = sphi 0, %s207
      %s209 = sphi 0, %s207
      %s210 = sphi 0, %s209
      %s224 = sphi 0, %s210
      %s228 = sphi 0, %s228
      %s230 = sphi 0, %s228
      %s231 = sphi 0, %s230
      %s245 = sphi 0, %s231
      %s249 = sphi 0, %s249
      %s251 = sphi 0, %s249
      %s252 = sphi 0, %s251
      %s266 = sphi 0, %s252
      %s270 = sphi 0, %s270
      %s272 = sphi 0, %s270
      %s273 = sphi 0, %s272
      %s287 = sphi 0, %s273
      %s291 = sphi 0, %s291
      %s293 = sphi 0, %s291
      %s294 = sphi 0, %s293
      %s308 = sphi 0, %s294
      %s312 = sphi 0, %s312
      %s314 = sphi 0, %s312
      %s315 = sphi 0, %s314
      %s329 = sphi 0, %s315
      %s333 = sphi 0, %s333
      %s335 = sphi 0, %s333
      %s336 = sphi 0, %s335
      %s350 = sphi 0, %s336
      %s354 = sphi 0, %s354
      %s356 = sphi 0, %s354
      %s357 = sphi 0, %s356
      %s371 = sphi 0, %s357
      %s375 = sphi 0, %s375
      %s377 = sphi 0, %s375
      %s378 = sphi 0, %s377
      %s392 = sphi 0, %s378
      %s396 = sphi 0, %s396
      %s398 = sphi 0, %s396
      %s399 = sphi 0, %s398
      %s413 = sphi 0, %s399
      %s417 = sphi 0, %s417
      %s419 = sphi 0, %s417
      %s420 = sphi 0, %s419
      %s434 = sphi 0, %s420
      %s438 = sphi 0, %s438
      %s440 = sphi 0, %s438
      %s441 = sphi 0, %s440
      %s455 = sphi 0, %s441
      %s459 = sphi 0, %s459
      %s461 = sphi 0, %s459
      %s462 = sphi 0, %s461
      %s476 = sphi 0, %s462
      %s480 = sphi 0, %s480
      %s482 = sphi 0, %s480
      %s483 = sphi 0, %s482
      %s497 = sphi 0, %s483
      %s501 = sphi 0, %s501
      %s503 = sphi 0, %s501
      %s504 = sphi 0, %s503
      %s518 = sphi 0, %s504
      %s522 = sphi 0, %s522
      %s524 = sphi 0, %s522
      %s525 = sphi 0, %s524
      %s539 = sphi 0, %s525
      %s543 = sphi 0, %s543
      %s545 = sphi 0, %s543
      %s546 = sphi 0, %s545
      %s560 = sphi 0, %s546
      %s564 = sphi 0, %s564
      %s566 = sphi 0, %s564
      %s567 = sphi 0, %s566
      %s581 = sphi 0, %s567
      %s587 = sphi 0, %s589
      %s590 = sphi 0, %s587
      %s591 = sphi 0, %s590
      %s607 = sphi 0, %s591
    $region4: #{seq2seq_transformer_forward.8} parent=1 // loop_header_branch
      %35 = sbr.rel (%p33) target = $region8
    $region5: #{seq2seq_transformer_forward.8} parent=1 // loop_body
      %s37 = ssub.s32 %s32, 1
      %s38 = ssub.s32 %s32, 2
      %s39 = sadd.s32 %s32, 1
      %s40 = ssub.s32 %s32, %s39
      %p41 = scmp.eq.s32.totalorder %s40, 0
      %s43 = sadd.s32 %s42, 1
      %s44 = scalar_select %p41, %s42, %s43
      %p47 = pneg %p41
      %p48 = scmp.eq.s32.totalorder %s32, 1
      %p49 = por %p47, %p48
      %p50 = scmp.ne.s32.totalorder %s42, %s45
      %p51 = scmp.eq.s32.totalorder %s32, 0
      %p52 = por %p50, %p51
      %p53 = scmp.ne.s32.totalorder %s42, %s45
      %p54 = scmp.eq.s32.totalorder %s37, 1
      %p55 = por %p53, %p54
      %p56 = scmp.ne.s32.totalorder %s45, %s46
      %p57 = scmp.eq.s32.totalorder %s37, 0
      %p58 = por %p56, %p57
      %p59 = scmp.ne.s32.totalorder %s45, %s46
      %p60 = scmp.eq.s32.totalorder %s38, 1
      %p61 = por %p59, %p60
      %p63 = scmp.ne.s32.totalorder %s46, %s62
      %p64 = scmp.eq.s32.totalorder %s38, 0
      %p65 = por %p63, %p64
      %s66 = ssub.s32 %s32, %s39
      %p67 = scmp.eq.s32.totalorder %s66, 0
      %s69 = sadd.s32 %s68, 1
      %s70 = scalar_select %p67, %s68, %s69
      %p73 = pneg %p67
      %p74 = scmp.eq.s32.totalorder %s32, 1
      %p75 = por %p73, %p74
      %p76 = scmp.ne.s32.totalorder %s68, %s71
      %p77 = scmp.eq.s32.totalorder %s32, 0
      %p78 = por %p76, %p77
      %p79 = scmp.ne.s32.totalorder %s68, %s71
      %p80 = scmp.eq.s32.totalorder %s37, 1
      %p81 = por %p79, %p80
      %p82 = scmp.ne.s32.totalorder %s71, %s72
      %p83 = scmp.eq.s32.totalorder %s37, 0
      %p84 = por %p82, %p83
      %p85 = scmp.ne.s32.totalorder %s71, %s72
      %p86 = scmp.eq.s32.totalorder %s38, 1
      %p87 = por %p85, %p86
      %p89 = scmp.ne.s32.totalorder %s72, %s88
      %p90 = scmp.eq.s32.totalorder %s38, 0
      %p91 = por %p89, %p90
      %s93 = sadd.s32 %s92, 1
      %p96 = scmp.eq.s32.totalorder %s32, 1
      %p97 = scmp.ne.s32.totalorder %s92, %s94
      %p98 = scmp.eq.s32.totalorder %s32, 0
      %p99 = por %p97, %p98
      %p100 = scmp.ne.s32.totalorder %s92, %s94
      %p101 = scmp.eq.s32.totalorder %s37, 1
      %p102 = por %p100, %p101
      %p103 = scmp.ne.s32.totalorder %s94, %s95
      %p104 = scmp.eq.s32.totalorder %s37, 0
      %p105 = por %p103, %p104
      %p106 = scmp.ne.s32.totalorder %s94, %s95
      %p107 = scmp.eq.s32.totalorder %s38, 1
      %p108 = por %p106, %p107
      %p110 = scmp.ne.s32.totalorder %s95, %s109
      %p111 = scmp.eq.s32.totalorder %s38, 0
      %p112 = por %p110, %p111
      %s113 = ssub.s32 %s32, %s39
      %p114 = scmp.eq.s32.totalorder %s113, 0
      %s116 = sadd.s32 %s115, 1
      %s117 = scalar_select %p114, %s115, %s116
      %p120 = pneg %p114
      %p121 = scmp.eq.s32.totalorder %s32, 1
      %p122 = por %p120, %p121
      %p123 = scmp.ne.s32.totalorder %s115, %s118
      %p124 = scmp.eq.s32.totalorder %s32, 0
      %p125 = por %p123, %p124
      %p126 = scmp.ne.s32.totalorder %s115, %s118
      %p127 = scmp.eq.s32.totalorder %s37, 1
      %p128 = por %p126, %p127
      %p129 = scmp.ne.s32.totalorder %s118, %s119
      %p130 = scmp.eq.s32.totalorder %s37, 0
      %p131 = por %p129, %p130
      %p132 = scmp.ne.s32.totalorder %s118, %s119
      %p133 = scmp.eq.s32.totalorder %s38, 1
      %p134 = por %p132, %p133
      %p136 = scmp.ne.s32.totalorder %s119, %s135
      %p137 = scmp.eq.s32.totalorder %s38, 0
      %p138 = por %p136, %p137
      %s139 = ssub.s32 %s32, %s39
      %p140 = scmp.eq.s32.totalorder %s139, 0
      %s142 = sadd.s32 %s141, 1
      %s143 = scalar_select %p140, %s141, %s142
      %p146 = pneg %p140
      %p147 = scmp.eq.s32.totalorder %s32, 1
      %p148 = por %p146, %p147
      %p149 = scmp.ne.s32.totalorder %s141, %s144
      %p150 = scmp.eq.s32.totalorder %s32, 0
      %p151 = por %p149, %p150
      %p152 = scmp.ne.s32.totalorder %s141, %s144
      %p153 = scmp.eq.s32.totalorder %s37, 1
      %p154 = por %p152, %p153
      %p155 = scmp.ne.s32.totalorder %s144, %s145
      %p156 = scmp.eq.s32.totalorder %s37, 0
      %p157 = por %p155, %p156
      %p158 = scmp.ne.s32.totalorder %s144, %s145
      %p159 = scmp.eq.s32.totalorder %s38, 1
      %p160 = por %p158, %p159
      %p162 = scmp.ne.s32.totalorder %s145, %s161
      %p163 = scmp.eq.s32.totalorder %s38, 0
      %p164 = por %p162, %p163
      %s166 = sadd.s32 %s165, 1
      %p169 = scmp.eq.s32.totalorder %s32, 1
      %p170 = scmp.ne.s32.totalorder %s165, %s167
      %p171 = scmp.eq.s32.totalorder %s32, 0
      %p172 = por %p170, %p171
      %p173 = scmp.ne.s32.totalorder %s165, %s167
      %p174 = scmp.eq.s32.totalorder %s37, 1
      %p175 = por %p173, %p174
      %p176 = scmp.ne.s32.totalorder %s167, %s168
      %p177 = scmp.eq.s32.totalorder %s37, 0
      %p178 = por %p176, %p177
      %p179 = scmp.ne.s32.totalorder %s167, %s168
      %p180 = scmp.eq.s32.totalorder %s38, 1
      %p181 = por %p179, %p180
      %p183 = scmp.ne.s32.totalorder %s168, %s182
      %p184 = scmp.eq.s32.totalorder %s38, 0
      %p185 = por %p183, %p184
      %s187 = sadd.s32 %s186, 1
      %p190 = scmp.eq.s32.totalorder %s32, 1
      %p191 = scmp.ne.s32.totalorder %s186, %s188
      %p192 = scmp.eq.s32.totalorder %s32, 0
      %p193 = por %p191, %p192
      %p194 = scmp.ne.s32.totalorder %s186, %s188
      %p195 = scmp.eq.s32.totalorder %s37, 1
      %p196 = por %p194, %p195
      %p197 = scmp.ne.s32.totalorder %s188, %s189
      %p198 = scmp.eq.s32.totalorder %s37, 0
      %p199 = por %p197, %p198
      %p200 = scmp.ne.s32.totalorder %s188, %s189
      %p201 = scmp.eq.s32.totalorder %s38, 1
      %p202 = por %p200, %p201
      %p204 = scmp.ne.s32.totalorder %s189, %s203
      %p205 = scmp.eq.s32.totalorder %s38, 0
      %p206 = por %p204, %p205
      %s208 = sadd.s32 %s207, 1
      %p211 = scmp.eq.s32.totalorder %s32, 1
      %p212 = scmp.ne.s32.totalorder %s207, %s209
      %p213 = scmp.eq.s32.totalorder %s32, 0
      %p214 = por %p212, %p213
      %p215 = scmp.ne.s32.totalorder %s207, %s209
      %p216 = scmp.eq.s32.totalorder %s37, 1
      %p217 = por %p215, %p216
      %p218 = scmp.ne.s32.totalorder %s209, %s210
      %p219 = scmp.eq.s32.totalorder %s37, 0
      %p220 = por %p218, %p219
      %p221 = scmp.ne.s32.totalorder %s209, %s210
      %p222 = scmp.eq.s32.totalorder %s38, 1
      %p223 = por %p221, %p222
      %p225 = scmp.ne.s32.totalorder %s210, %s224
      %p226 = scmp.eq.s32.totalorder %s38, 0
      %p227 = por %p225, %p226
      %s229 = sadd.s32 %s228, 1
      %p232 = scmp.eq.s32.totalorder %s32, 1
      %p233 = scmp.ne.s32.totalorder %s228, %s230
      %p234 = scmp.eq.s32.totalorder %s32, 0
      %p235 = por %p233, %p234
      %p236 = scmp.ne.s32.totalorder %s228, %s230
      %p237 = scmp.eq.s32.totalorder %s37, 1
      %p238 = por %p236, %p237
      %p239 = scmp.ne.s32.totalorder %s230, %s231
      %p240 = scmp.eq.s32.totalorder %s37, 0
      %p241 = por %p239, %p240
      %p242 = scmp.ne.s32.totalorder %s230, %s231
      %p243 = scmp.eq.s32.totalorder %s38, 1
      %p244 = por %p242, %p243
      %p246 = scmp.ne.s32.totalorder %s231, %s245
      %p247 = scmp.eq.s32.totalorder %s38, 0
      %p248 = por %p246, %p247
      %s250 = sadd.s32 %s249, 1
      %p253 = scmp.eq.s32.totalorder %s32, 1
      %p254 = scmp.ne.s32.totalorder %s249, %s251
      %p255 = scmp.eq.s32.totalorder %s32, 0
      %p256 = por %p254, %p255
      %p257 = scmp.ne.s32.totalorder %s249, %s251
      %p258 = scmp.eq.s32.totalorder %s37, 1
      %p259 = por %p257, %p258
      %p260 = scmp.ne.s32.totalorder %s251, %s252
      %p261 = scmp.eq.s32.totalorder %s37, 0
      %p262 = por %p260, %p261
      %p263 = scmp.ne.s32.totalorder %s251, %s252
      %p264 = scmp.eq.s32.totalorder %s38, 1
      %p265 = por %p263, %p264
      %p267 = scmp.ne.s32.totalorder %s252, %s266
      %p268 = scmp.eq.s32.totalorder %s38, 0
      %p269 = por %p267, %p268
      %s271 = sadd.s32 %s270, 1
      %p274 = scmp.eq.s32.totalorder %s32, 1
      %p275 = scmp.ne.s32.totalorder %s270, %s272
      %p276 = scmp.eq.s32.totalorder %s32, 0
      %p277 = por %p275, %p276
      %p278 = scmp.ne.s32.totalorder %s270, %s272
      %p279 = scmp.eq.s32.totalorder %s37, 1
      %p280 = por %p278, %p279
      %p281 = scmp.ne.s32.totalorder %s272, %s273
      %p282 = scmp.eq.s32.totalorder %s37, 0
      %p283 = por %p281, %p282
      %p284 = scmp.ne.s32.totalorder %s272, %s273
      %p285 = scmp.eq.s32.totalorder %s38, 1
      %p286 = por %p284, %p285
      %p288 = scmp.ne.s32.totalorder %s273, %s287
      %p289 = scmp.eq.s32.totalorder %s38, 0
      %p290 = por %p288, %p289
      %s292 = sadd.s32 %s291, 1
      %p295 = scmp.eq.s32.totalorder %s32, 1
      %p296 = scmp.ne.s32.totalorder %s291, %s293
      %p297 = scmp.eq.s32.totalorder %s32, 0
      %p298 = por %p296, %p297
      %p299 = scmp.ne.s32.totalorder %s291, %s293
      %p300 = scmp.eq.s32.totalorder %s37, 1
      %p301 = por %p299, %p300
      %p302 = scmp.ne.s32.totalorder %s293, %s294
      %p303 = scmp.eq.s32.totalorder %s37, 0
      %p304 = por %p302, %p303
      %p305 = scmp.ne.s32.totalorder %s293, %s294
      %p306 = scmp.eq.s32.totalorder %s38, 1
      %p307 = por %p305, %p306
      %p309 = scmp.ne.s32.totalorder %s294, %s308
      %p310 = scmp.eq.s32.totalorder %s38, 0
      %p311 = por %p309, %p310
      %s313 = sadd.s32 %s312, 1
      %p316 = scmp.eq.s32.totalorder %s32, 1
      %p317 = scmp.ne.s32.totalorder %s312, %s314
      %p318 = scmp.eq.s32.totalorder %s32, 0
      %p319 = por %p317, %p318
      %p320 = scmp.ne.s32.totalorder %s312, %s314
      %p321 = scmp.eq.s32.totalorder %s37, 1
      %p322 = por %p320, %p321
      %p323 = scmp.ne.s32.totalorder %s314, %s315
      %p324 = scmp.eq.s32.totalorder %s37, 0
      %p325 = por %p323, %p324
      %p326 = scmp.ne.s32.totalorder %s314, %s315
      %p327 = scmp.eq.s32.totalorder %s38, 1
      %p328 = por %p326, %p327
      %p330 = scmp.ne.s32.totalorder %s315, %s329
      %p331 = scmp.eq.s32.totalorder %s38, 0
      %p332 = por %p330, %p331
      %s334 = sadd.s32 %s333, 1
      %p337 = scmp.eq.s32.totalorder %s32, 1
      %p338 = scmp.ne.s32.totalorder %s333, %s335
      %p339 = scmp.eq.s32.totalorder %s32, 0
      %p340 = por %p338, %p339
      %p341 = scmp.ne.s32.totalorder %s333, %s335
      %p342 = scmp.eq.s32.totalorder %s37, 1
      %p343 = por %p341, %p342
      %p344 = scmp.ne.s32.totalorder %s335, %s336
      %p345 = scmp.eq.s32.totalorder %s37, 0
      %p346 = por %p344, %p345
      %p347 = scmp.ne.s32.totalorder %s335, %s336
      %p348 = scmp.eq.s32.totalorder %s38, 1
      %p349 = por %p347, %p348
      %p351 = scmp.ne.s32.totalorder %s336, %s350
      %p352 = scmp.eq.s32.totalorder %s38, 0
      %p353 = por %p351, %p352
      %s355 = sadd.s32 %s354, 1
      %p358 = scmp.eq.s32.totalorder %s32, 1
      %p359 = scmp.ne.s32.totalorder %s354, %s356
      %p360 = scmp.eq.s32.totalorder %s32, 0
      %p361 = por %p359, %p360
      %p362 = scmp.ne.s32.totalorder %s354, %s356
      %p363 = scmp.eq.s32.totalorder %s37, 1
      %p364 = por %p362, %p363
      %p365 = scmp.ne.s32.totalorder %s356, %s357
      %p366 = scmp.eq.s32.totalorder %s37, 0
      %p367 = por %p365, %p366
      %p368 = scmp.ne.s32.totalorder %s356, %s357
      %p369 = scmp.eq.s32.totalorder %s38, 1
      %p370 = por %p368, %p369
      %p372 = scmp.ne.s32.totalorder %s357, %s371
      %p373 = scmp.eq.s32.totalorder %s38, 0
      %p374 = por %p372, %p373
      %s376 = sadd.s32 %s375, 1
      %p379 = scmp.eq.s32.totalorder %s32, 1
      %p380 = scmp.ne.s32.totalorder %s375, %s377
      %p381 = scmp.eq.s32.totalorder %s32, 0
      %p382 = por %p380, %p381
      %p383 = scmp.ne.s32.totalorder %s375, %s377
      %p384 = scmp.eq.s32.totalorder %s37, 1
      %p385 = por %p383, %p384
      %p386 = scmp.ne.s32.totalorder %s377, %s378
      %p387 = scmp.eq.s32.totalorder %s37, 0
      %p388 = por %p386, %p387
      %p389 = scmp.ne.s32.totalorder %s377, %s378
      %p390 = scmp.eq.s32.totalorder %s38, 1
      %p391 = por %p389, %p390
      %p393 = scmp.ne.s32.totalorder %s378, %s392
      %p394 = scmp.eq.s32.totalorder %s38, 0
      %p395 = por %p393, %p394
      %s397 = sadd.s32 %s396, 1
      %p400 = scmp.eq.s32.totalorder %s32, 1
      %p401 = scmp.ne.s32.totalorder %s396, %s398
      %p402 = scmp.eq.s32.totalorder %s32, 0
      %p403 = por %p401, %p402
      %p404 = scmp.ne.s32.totalorder %s396, %s398
      %p405 = scmp.eq.s32.totalorder %s37, 1
      %p406 = por %p404, %p405
      %p407 = scmp.ne.s32.totalorder %s398, %s399
      %p408 = scmp.eq.s32.totalorder %s37, 0
      %p409 = por %p407, %p408
      %p410 = scmp.ne.s32.totalorder %s398, %s399
      %p411 = scmp.eq.s32.totalorder %s38, 1
      %p412 = por %p410, %p411
      %p414 = scmp.ne.s32.totalorder %s399, %s413
      %p415 = scmp.eq.s32.totalorder %s38, 0
      %p416 = por %p414, %p415
      %s418 = sadd.s32 %s417, 1
      %p421 = scmp.eq.s32.totalorder %s32, 1
      %p422 = scmp.ne.s32.totalorder %s417, %s419
      %p423 = scmp.eq.s32.totalorder %s32, 0
      %p424 = por %p422, %p423
      %p425 = scmp.ne.s32.totalorder %s417, %s419
      %p426 = scmp.eq.s32.totalorder %s37, 1
      %p427 = por %p425, %p426
      %p428 = scmp.ne.s32.totalorder %s419, %s420
      %p429 = scmp.eq.s32.totalorder %s37, 0
      %p430 = por %p428, %p429
      %p431 = scmp.ne.s32.totalorder %s419, %s420
      %p432 = scmp.eq.s32.totalorder %s38, 1
      %p433 = por %p431, %p432
      %p435 = scmp.ne.s32.totalorder %s420, %s434
      %p436 = scmp.eq.s32.totalorder %s38, 0
      %p437 = por %p435, %p436
      %s439 = sadd.s32 %s438, 1
      %p442 = scmp.eq.s32.totalorder %s32, 1
      %p443 = scmp.ne.s32.totalorder %s438, %s440
      %p444 = scmp.eq.s32.totalorder %s32, 0
      %p445 = por %p443, %p444
      %p446 = scmp.ne.s32.totalorder %s438, %s440
      %p447 = scmp.eq.s32.totalorder %s37, 1
      %p448 = por %p446, %p447
      %p449 = scmp.ne.s32.totalorder %s440, %s441
      %p450 = scmp.eq.s32.totalorder %s37, 0
      %p451 = por %p449, %p450
      %p452 = scmp.ne.s32.totalorder %s440, %s441
      %p453 = scmp.eq.s32.totalorder %s38, 1
      %p454 = por %p452, %p453
      %p456 = scmp.ne.s32.totalorder %s441, %s455
      %p457 = scmp.eq.s32.totalorder %s38, 0
      %p458 = por %p456, %p457
      %s460 = sadd.s32 %s459, 1
      %p463 = scmp.eq.s32.totalorder %s32, 1
      %p464 = scmp.ne.s32.totalorder %s459, %s461
      %p465 = scmp.eq.s32.totalorder %s32, 0
      %p466 = por %p464, %p465
      %p467 = scmp.ne.s32.totalorder %s459, %s461
      %p468 = scmp.eq.s32.totalorder %s37, 1
      %p469 = por %p467, %p468
      %p470 = scmp.ne.s32.totalorder %s461, %s462
      %p471 = scmp.eq.s32.totalorder %s37, 0
      %p472 = por %p470, %p471
      %p473 = scmp.ne.s32.totalorder %s461, %s462
      %p474 = scmp.eq.s32.totalorder %s38, 1
      %p475 = por %p473, %p474
      %p477 = scmp.ne.s32.totalorder %s462, %s476
      %p478 = scmp.eq.s32.totalorder %s38, 0
      %p479 = por %p477, %p478
      %s481 = sadd.s32 %s480, 1
      %p484 = scmp.eq.s32.totalorder %s32, 1
      %p485 = scmp.ne.s32.totalorder %s480, %s482
      %p486 = scmp.eq.s32.totalorder %s32, 0
      %p487 = por %p485, %p486
      %p488 = scmp.ne.s32.totalorder %s480, %s482
      %p489 = scmp.eq.s32.totalorder %s37, 1
      %p490 = por %p488, %p489
      %p491 = scmp.ne.s32.totalorder %s482, %s483
      %p492 = scmp.eq.s32.totalorder %s37, 0
      %p493 = por %p491, %p492
      %p494 = scmp.ne.s32.totalorder %s482, %s483
      %p495 = scmp.eq.s32.totalorder %s38, 1
      %p496 = por %p494, %p495
      %p498 = scmp.ne.s32.totalorder %s483, %s497
      %p499 = scmp.eq.s32.totalorder %s38, 0
      %p500 = por %p498, %p499
      %s502 = sadd.s32 %s501, 1
      %p505 = scmp.eq.s32.totalorder %s32, 1
      %p506 = scmp.ne.s32.totalorder %s501, %s503
      %p507 = scmp.eq.s32.totalorder %s32, 0
      %p508 = por %p506, %p507
      %p509 = scmp.ne.s32.totalorder %s501, %s503
      %p510 = scmp.eq.s32.totalorder %s37, 1
      %p511 = por %p509, %p510
      %p512 = scmp.ne.s32.totalorder %s503, %s504
      %p513 = scmp.eq.s32.totalorder %s37, 0
      %p514 = por %p512, %p513
      %p515 = scmp.ne.s32.totalorder %s503, %s504
      %p516 = scmp.eq.s32.totalorder %s38, 1
      %p517 = por %p515, %p516
      %p519 = scmp.ne.s32.totalorder %s504, %s518
      %p520 = scmp.eq.s32.totalorder %s38, 0
      %p521 = por %p519, %p520
      %s523 = sadd.s32 %s522, 1
      %p526 = scmp.eq.s32.totalorder %s32, 1
      %p527 = scmp.ne.s32.totalorder %s522, %s524
      %p528 = scmp.eq.s32.totalorder %s32, 0
      %p529 = por %p527, %p528
      %p530 = scmp.ne.s32.totalorder %s522, %s524
      %p531 = scmp.eq.s32.totalorder %s37, 1
      %p532 = por %p530, %p531
      %p533 = scmp.ne.s32.totalorder %s524, %s525
      %p534 = scmp.eq.s32.totalorder %s37, 0
      %p535 = por %p533, %p534
      %p536 = scmp.ne.s32.totalorder %s524, %s525
      %p537 = scmp.eq.s32.totalorder %s38, 1
      %p538 = por %p536, %p537
      %p540 = scmp.ne.s32.totalorder %s525, %s539
      %p541 = scmp.eq.s32.totalorder %s38, 0
      %p542 = por %p540, %p541
      %s544 = sadd.s32 %s543, 1
      %p547 = scmp.eq.s32.totalorder %s32, 1
      %p548 = scmp.ne.s32.totalorder %s543, %s545
      %p549 = scmp.eq.s32.totalorder %s32, 0
      %p550 = por %p548, %p549
      %p551 = scmp.ne.s32.totalorder %s543, %s545
      %p552 = scmp.eq.s32.totalorder %s37, 1
      %p553 = por %p551, %p552
      %p554 = scmp.ne.s32.totalorder %s545, %s546
      %p555 = scmp.eq.s32.totalorder %s37, 0
      %p556 = por %p554, %p555
      %p557 = scmp.ne.s32.totalorder %s545, %s546
      %p558 = scmp.eq.s32.totalorder %s38, 1
      %p559 = por %p557, %p558
      %p561 = scmp.ne.s32.totalorder %s546, %s560
      %p562 = scmp.eq.s32.totalorder %s38, 0
      %p563 = por %p561, %p562
      %s565 = sadd.s32 %s564, 1
      %p568 = scmp.eq.s32.totalorder %s32, 1
      %p569 = scmp.ne.s32.totalorder %s564, %s566
      %p570 = scmp.eq.s32.totalorder %s32, 0
      %p571 = por %p569, %p570
      %p572 = scmp.ne.s32.totalorder %s564, %s566
      %p573 = scmp.eq.s32.totalorder %s37, 1
      %p574 = por %p572, %p573
      %p575 = scmp.ne.s32.totalorder %s566, %s567
      %p576 = scmp.eq.s32.totalorder %s37, 0
      %p577 = por %p575, %p576
      %p578 = scmp.ne.s32.totalorder %s566, %s567
      %p579 = scmp.eq.s32.totalorder %s38, 1
      %p580 = por %p578, %p579
      %p582 = scmp.ne.s32.totalorder %s567, %s581
      %p583 = scmp.eq.s32.totalorder %s38, 0
      %p584 = por %p582, %p583
      %s585 = ssub.s32 %s32, %s39
      %p586 = scmp.eq.s32.totalorder %s585, 0
      %s588 = sadd.s32 %s587, 1
      %s589 = scalar_select %p586, %s587, %s588
      %p592 = pneg %p586
      %p593 = scmp.eq.s32.totalorder %s32, 1
      %p594 = por %p592, %p593
      %p595 = scmp.ne.s32.totalorder %s587, %s590
      %p596 = scmp.eq.s32.totalorder %s32, 0
      %p597 = por %p595, %p596
      %p598 = scmp.ne.s32.totalorder %s587, %s590
      %p599 = scmp.eq.s32.totalorder %s37, 1
      %p600 = por %p598, %p599
      %p601 = scmp.ne.s32.totalorder %s590, %s591
      %p602 = scmp.eq.s32.totalorder %s37, 0
      %p603 = por %p601, %p602
      %p604 = scmp.ne.s32.totalorder %s590, %s591
      %p605 = scmp.eq.s32.totalorder %s38, 1
      %p606 = por %p604, %p605
      %p608 = scmp.ne.s32.totalorder %s591, %s607
      %p609 = scmp.eq.s32.totalorder %s38, 0
      %p610 = por %p608, %p609
      %p611 = scmp.le.s32.totalorder 1, %s32
      %p612 = scmp.lt.s32.totalorder %s32, 3
      %p613 = pnand %p611, %p612
      %p614 = pneg %p613
      // Predicated region
      $region9: #{seq2seq_transformer_forward.8} parent=5 // pred_check
        _
      $region10: #{seq2seq_transformer_forward.8} parent=5 // pred_check_branch
        %616 = sbr.rel (%p613) target = $region12
      $region11: #{seq2seq_transformer_forward.8} parent=5 // pred_region
        %s617 = ssub.s32 %s32, 1
        // Predicated region
        $region13: #{seq2seq_transformer_forward.8} parent=11 // pred_check
          %p618 = pneg %p105
        $region14: #{seq2seq_transformer_forward.8} parent=11 // pred_check_branch
          %620 = sbr.rel (%p618) target = $region16
        $region15: #{seq2seq_transformer_forward.8} parent=11 // pred_region
          _
        $region16: #{seq2seq_transformer_forward.8} parent=11 // pred_fallthru
          _
        // Predicated region
        $region17: #{seq2seq_transformer_forward.8} parent=11 // pred_check
          %p621 = pneg %p178
        $region18: #{seq2seq_transformer_forward.8} parent=11 // pred_check_branch
          %623 = sbr.rel (%p621) target = $region20
        $region19: #{seq2seq_transformer_forward.8} parent=11 // pred_region
          _
        $region20: #{seq2seq_transformer_forward.8} parent=11 // pred_fallthru
          _
        // Predicated region
        $region21: #{seq2seq_transformer_forward.8} parent=11 // pred_check
          %p624 = pneg %p199
        $region22: #{seq2seq_transformer_forward.8} parent=11 // pred_check_branch
          %626 = sbr.rel (%p624) target = $region24
        $region23: #{seq2seq_transformer_forward.8} parent=11 // pred_region
          _
        $region24: #{seq2seq_transformer_forward.8} parent=11 // pred_fallthru
          _
        // Predicated region
        $region25: #{seq2seq_transformer_forward.8} parent=11 // pred_check
          %p627 = pneg %p220
        $region26: #{seq2seq_transformer_forward.8} parent=11 // pred_check_branch
          %629 = sbr.rel (%p627) target = $region28
        $region27: #{seq2seq_transformer_forward.8} parent=11 // pred_region
          _
        $region28: #{seq2seq_transformer_forward.8} parent=11 // pred_fallthru
          _
        // Predicated region
        $region29: #{seq2seq_transformer_forward.8} parent=11 // pred_check
          %p630 = pneg %p241
        $region30: #{seq2seq_transformer_forward.8} parent=11 // pred_check_branch
          %632 = sbr.rel (%p630) target = $region32
        $region31: #{seq2seq_transformer_forward.8} parent=11 // pred_region
          _
        $region32: #{seq2seq_transformer_forward.8} parent=11 // pred_fallthru
          _
        // Predicated region
        $region33: #{seq2seq_transformer_forward.8} parent=11 // pred_check
          %p633 = pneg %p262
        $region34: #{seq2seq_transformer_forward.8} parent=11 // pred_check_branch
          %635 = sbr.rel (%p633) target = $region36
        $region35: #{seq2seq_transformer_forward.8} parent=11 // pred_region
          _
        $region36: #{seq2seq_transformer_forward.8} parent=11 // pred_fallthru
          _
        // Predicated region
        $region37: #{seq2seq_transformer_forward.8} parent=11 // pred_check
          %p636 = pneg %p283
        $region38: #{seq2seq_transformer_forward.8} parent=11 // pred_check_branch
          %638 = sbr.rel (%p636) target = $region40
        $region39: #{seq2seq_transformer_forward.8} parent=11 // pred_region
          _
        $region40: #{seq2seq_transformer_forward.8} parent=11 // pred_fallthru
          _
        // Predicated region
        $region41: #{seq2seq_transformer_forward.8} parent=11 // pred_check
          %p639 = pneg %p304
        $region42: #{seq2seq_transformer_forward.8} parent=11 // pred_check_branch
          %641 = sbr.rel (%p639) target = $region44
        $region43: #{seq2seq_transformer_forward.8} parent=11 // pred_region
          _
        $region44: #{seq2seq_transformer_forward.8} parent=11 // pred_fallthru
          _
        // Predicated region
        $region45: #{seq2seq_transformer_forward.8} parent=11 // pred_check
          %p642 = pneg %p325
        $region46: #{seq2seq_transformer_forward.8} parent=11 // pred_check_branch
          %644 = sbr.rel (%p642) target = $region48
        $region47: #{seq2seq_transformer_forward.8} parent=11 // pred_region
          _
        $region48: #{seq2seq_transformer_forward.8} parent=11 // pred_fallthru
          _
        // Predicated region
        $region49: #{seq2seq_transformer_forward.8} parent=11 // pred_check
          %p645 = pneg %p346
        $region50: #{seq2seq_transformer_forward.8} parent=11 // pred_check_branch
          %647 = sbr.rel (%p645) target = $region52
        $region51: #{seq2seq_transformer_forward.8} parent=11 // pred_region
          _
        $region52: #{seq2seq_transformer_forward.8} parent=11 // pred_fallthru
          _
        // Predicated region
        $region53: #{seq2seq_transformer_forward.8} parent=11 // pred_check
          %p648 = pneg %p367
        $region54: #{seq2seq_transformer_forward.8} parent=11 // pred_check_branch
          %650 = sbr.rel (%p648) target = $region56
        $region55: #{seq2seq_transformer_forward.8} parent=11 // pred_region
          _
        $region56: #{seq2seq_transformer_forward.8} parent=11 // pred_fallthru
          _
        // Predicated region
        $region57: #{seq2seq_transformer_forward.8} parent=11 // pred_check
          %p651 = pneg %p388
        $region58: #{seq2seq_transformer_forward.8} parent=11 // pred_check_branch
          %653 = sbr.rel (%p651) target = $region60
        $region59: #{seq2seq_transformer_forward.8} parent=11 // pred_region
          _
        $region60: #{seq2seq_transformer_forward.8} parent=11 // pred_fallthru
          _
        // Predicated region
        $region61: #{seq2seq_transformer_forward.8} parent=11 // pred_check
          %p654 = pneg %p409
        $region62: #{seq2seq_transformer_forward.8} parent=11 // pred_check_branch
          %656 = sbr.rel (%p654) target = $region64
        $region63: #{seq2seq_transformer_forward.8} parent=11 // pred_region
          _
        $region64: #{seq2seq_transformer_forward.8} parent=11 // pred_fallthru
          _
        // Predicated region
        $region65: #{seq2seq_transformer_forward.8} parent=11 // pred_check
          %p657 = pneg %p430
        $region66: #{seq2seq_transformer_forward.8} parent=11 // pred_check_branch
          %659 = sbr.rel (%p657) target = $region68
        $region67: #{seq2seq_transformer_forward.8} parent=11 // pred_region
          _
        $region68: #{seq2seq_transformer_forward.8} parent=11 // pred_fallthru
          _
        // Predicated region
        $region69: #{seq2seq_transformer_forward.8} parent=11 // pred_check
          %p660 = pneg %p451
        $region70: #{seq2seq_transformer_forward.8} parent=11 // pred_check_branch
          %662 = sbr.rel (%p660) target = $region72
        $region71: #{seq2seq_transformer_forward.8} parent=11 // pred_region
          _
        $region72: #{seq2seq_transformer_forward.8} parent=11 // pred_fallthru
          _
        // Predicated region
        $region73: #{seq2seq_transformer_forward.8} parent=11 // pred_check
          %p663 = pneg %p472
        $region74: #{seq2seq_transformer_forward.8} parent=11 // pred_check_branch
          %665 = sbr.rel (%p663) target = $region76
        $region75: #{seq2seq_transformer_forward.8} parent=11 // pred_region
          _
        $region76: #{seq2seq_transformer_forward.8} parent=11 // pred_fallthru
          _
        // Predicated region
        $region77: #{seq2seq_transformer_forward.8} parent=11 // pred_check
          %p666 = pneg %p493
        $region78: #{seq2seq_transformer_forward.8} parent=11 // pred_check_branch
          %668 = sbr.rel (%p666) target = $region80
        $region79: #{seq2seq_transformer_forward.8} parent=11 // pred_region
          _
        $region80: #{seq2seq_transformer_forward.8} parent=11 // pred_fallthru
          _
        // Predicated region
        $region81: #{seq2seq_transformer_forward.8} parent=11 // pred_check
          %p669 = pneg %p514
        $region82: #{seq2seq_transformer_forward.8} parent=11 // pred_check_branch
          %671 = sbr.rel (%p669) target = $region84
        $region83: #{seq2seq_transformer_forward.8} parent=11 // pred_region
          _
        $region84: #{seq2seq_transformer_forward.8} parent=11 // pred_fallthru
          _
        // Predicated region
        $region85: #{seq2seq_transformer_forward.8} parent=11 // pred_check
          %p672 = pneg %p535
        $region86: #{seq2seq_transformer_forward.8} parent=11 // pred_check_branch
          %674 = sbr.rel (%p672) target = $region88
        $region87: #{seq2seq_transformer_forward.8} parent=11 // pred_region
          _
        $region88: #{seq2seq_transformer_forward.8} parent=11 // pred_fallthru
          _
        // Predicated region
        $region89: #{seq2seq_transformer_forward.8} parent=11 // pred_check
          %p675 = pneg %p556
        $region90: #{seq2seq_transformer_forward.8} parent=11 // pred_check_branch
          %677 = sbr.rel (%p675) target = $region92
        $region91: #{seq2seq_transformer_forward.8} parent=11 // pred_region
          _
        $region92: #{seq2seq_transformer_forward.8} parent=11 // pred_fallthru
          _
        // Predicated region
        $region93: #{seq2seq_transformer_forward.8} parent=11 // pred_check
          %p678 = pneg %p577
        $region94: #{seq2seq_transformer_forward.8} parent=11 // pred_check_branch
          %680 = sbr.rel (%p678) target = $region96
        $region95: #{seq2seq_transformer_forward.8} parent=11 // pred_region
          %682 = vsyncadd [#allocation3], 0
          %s684 = sshll.u32 %s24, 4
          %s685 = int_to_ptr.hbm [resolvable:$true] %s684
          %s686 = sshll.u32 [#allocation2], 4
          %s687 = int_to_ptr.vmem [resolvable:$true] %s686
          %689 = dma.hbm_to_vmem [thread:$0]  %s685, 16, %s687, [#allocation3]
        $region96: #{seq2seq_transformer_forward.8} parent=11 // pred_fallthru
          _
      $region12: #{seq2seq_transformer_forward.8} parent=5 // pred_fallthru
        _
      %p690 = scmp.lt.s32.totalorder %s32, 2
      // Predicated region
      $region97: #{seq2seq_transformer_forward.8} parent=5 // pred_check
        %p691 = pneg %p690
      $region98: #{seq2seq_transformer_forward.8} parent=5 // pred_check_branch
        %693 = sbr.rel (%p691) target = $region100
      $region99: #{seq2seq_transformer_forward.8} parent=5 // pred_region
        // Predicated region
        $region101: #{seq2seq_transformer_forward.8} parent=99 // pred_check
          %p694 = pneg %p52
        $region102: #{seq2seq_transformer_forward.8} parent=99 // pred_check_branch
          %696 = sbr.rel (%p694) target = $region104
        $region103: #{seq2seq_transformer_forward.8} parent=99 // pred_region
          %p697 = scmp.lt.s32.totalorder %s32, 1
          %s698 = scalar_select %p697, %s32, 1
          %s699 = smul.addr %s698, 8
          %s700 = scalar_lea.vmem %s0, %s699
        $region104: #{seq2seq_transformer_forward.8} parent=99 // pred_fallthru
          _
        // Predicated region
        $region105: #{seq2seq_transformer_forward.8} parent=99 // pred_check
          %p701 = pneg %p78
        $region106: #{seq2seq_transformer_forward.8} parent=99 // pred_check_branch
          %703 = sbr.rel (%p701) target = $region108
        $region107: #{seq2seq_transformer_forward.8} parent=99 // pred_region
          %p704 = scmp.lt.s32.totalorder %s32, 1
          %s705 = scalar_select %p704, %s32, 1
          %s706 = smul.addr %s705, 2
          %s707 = smul.addr %s706, 8
          %s708 = scalar_lea.vmem %s1, %s707
        $region108: #{seq2seq_transformer_forward.8} parent=99 // pred_fallthru
          _
        // Predicated region
        $region109: #{seq2seq_transformer_forward.8} parent=99 // pred_check
          %p709 = pneg %p125
        $region110: #{seq2seq_transformer_forward.8} parent=99 // pred_check_branch
          %711 = sbr.rel (%p709) target = $region112
        $region111: #{seq2seq_transformer_forward.8} parent=99 // pred_region
          %p712 = scmp.lt.s32.totalorder %s32, 1
          %s713 = scalar_select %p712, %s32, 1
          %s714 = scalar_lea.vmem %s3, %s713
        $region112: #{seq2seq_transformer_forward.8} parent=99 // pred_fallthru
          _
        // Predicated region
        $region113: #{seq2seq_transformer_forward.8} parent=99 // pred_check
          %p715 = pneg %p151
        $region114: #{seq2seq_transformer_forward.8} parent=99 // pred_check_branch
          %717 = sbr.rel (%p715) target = $region116
        $region115: #{seq2seq_transformer_forward.8} parent=99 // pred_region
          %p718 = scmp.lt.s32.totalorder %s32, 1
          %s719 = scalar_select %p718, %s32, 1
          %s720 = scalar_lea.vmem %s4, %s719
        $region116: #{seq2seq_transformer_forward.8} parent=99 // pred_fallthru
          _
      $region100: #{seq2seq_transformer_forward.8} parent=5 // pred_fallthru
        _
      %p721 = scmp.le.s32.totalorder 1, %s32
      %p722 = scmp.lt.s32.totalorder %s32, 3
      %p723 = pnand %p721, %p722
      %p724 = pneg %p723
      // Predicated region
      $region117: #{seq2seq_transformer_forward.8} parent=5 // pred_check
        _
      $region118: #{seq2seq_transformer_forward.8} parent=5 // pred_check_branch
        %726 = sbr.rel (%p723) target = $region120
      $region119: #{seq2seq_transformer_forward.8} parent=5 // pred_region
        %s727 = ssub.s32 %s32, 1
        // Predicated region
        $region121: #{seq2seq_transformer_forward.8} parent=119 // pred_check
          %p728 = pneg %p577
        $region122: #{seq2seq_transformer_forward.8} parent=119 // pred_check_branch
          %730 = sbr.rel (%p728) target = $region124
        $region123: #{seq2seq_transformer_forward.8} parent=119 // pred_region
          %732 = dma.done [#allocation3], 16
        $region124: #{seq2seq_transformer_forward.8} parent=119 // pred_fallthru
          _
        %p733 = scmp.lt.s32.totalorder %s37, 1
        %s734 = scalar_select %p733, %s37, 1
        %s735 = smul.addr %s734, 8
        %s736 = scalar_lea.vmem %s0, %s735
        %p737 = pneg %p58
        %p738 = pneg %p55
        %p739 = scmp.lt.s32.totalorder %s37, 1
        %s740 = scalar_select %p739, %s37, 1
        %s741 = smul.addr %s740, 2
        %s742 = smul.addr %s741, 8
        %s743 = scalar_lea.vmem %s1, %s742
        %p744 = pneg %p84
        %p745 = pneg %p81
        %p746 = pneg %p105
        %p747 = pneg %p102
        %p748 = scmp.lt.s32.totalorder %s37, 1
        %s749 = scalar_select %p748, %s37, 1
        %s750 = scalar_lea.vmem %s3, %s749
        %p751 = pneg %p131
        %p752 = pneg %p128
        %p753 = scmp.lt.s32.totalorder %s37, 1
        %s754 = scalar_select %p753, %s37, 1
        %s755 = scalar_lea.vmem %s4, %s754
        %p756 = pneg %p157
        %p757 = pneg %p154
        %p758 = pneg %p178
        %p759 = pneg %p175
        %p760 = pneg %p199
        %p761 = pneg %p196
        %p762 = pneg %p220
        %p763 = pneg %p217
        %p764 = pneg %p241
        %p765 = pneg %p238
        %p766 = pneg %p262
        %p767 = pneg %p259
        %p768 = pneg %p283
        %p769 = pneg %p280
        %p770 = pneg %p304
        %p771 = pneg %p301
        %p772 = pneg %p325
        %p773 = pneg %p322
        %p774 = pneg %p346
        %p775 = pneg %p343
        %p776 = pneg %p367
        %p777 = pneg %p364
        %p778 = pneg %p388
        %p779 = pneg %p385
        %p780 = pneg %p409
        %p781 = pneg %p406
        %p782 = pneg %p430
        %p783 = pneg %p427
        %p784 = pneg %p451
        %p785 = pneg %p448
        %p786 = pneg %p472
        %p787 = pneg %p469
        %p788 = pneg %p493
        %p789 = pneg %p490
        %p790 = pneg %p514
        %p791 = pneg %p511
        %p792 = pneg %p535
        %p793 = pneg %p532
        %p794 = pneg %p556
        %p795 = pneg %p553
        %p796 = pneg %p577
        %p797 = pneg %p574
        %p798 = pneg %p603
        %p799 = pneg %p600
        %p800 = scmp.lt.s32.totalorder %s37, 1
        %s801 = scalar_select %p800, %s37, 1
        %s802 = smul.addr %s801, 8
        %s803 = scalar_lea.vmem %s25, %s802
        %p804 = scmp.lt.s32.totalorder %s37, 1
        %s805 = scalar_select %p804, %s37, 1
        %s806 = smul.addr %s805, 8
        %s807 = scalar_lea.vmem %s0, %s806
        %p808 = scmp.lt.s32.totalorder %s37, 1
        %s809 = scalar_select %p808, %s37, 1
        %s810 = smul.addr %s809, 2
        %s811 = smul.addr %s810, 8
        %s812 = scalar_lea.vmem %s1, %s811
        %p813 = scmp.lt.s32.totalorder %s37, 1
        %s814 = scalar_select %p813, %s37, 1
        %s815 = scalar_lea.vmem %s3, %s814
        %p816 = scmp.lt.s32.totalorder %s37, 1
        %s817 = scalar_select %p816, %s37, 1
        %s818 = scalar_lea.vmem %s4, %s817
        %p819 = scmp.lt.s32.totalorder %s37, 1
        %s820 = scalar_select %p819, %s37, 1
        %s821 = smul.addr %s820, 8
        %s822 = scalar_lea.vmem %s25, %s821
        %v824 = vld [vmem:[%s807] sm:$0xff]
        %v825 = vld [vmem:[%s812] sm:$0xff]
        %v826 = vld [vmem:[%s812 + $0x8] sm:$0x3]
        %v827 = vld [vmem:[%s2] sm:$0xff]
        %v828 = vld [vmem:[%s815] sm:$0x1]
        %v830 = vperm.slane %v828, 0
        %v832 = vadd.f32 %v827, %v830
        %v833 = vld [vmem:[%s818] sm:$0x1]
        %v834 = vpack.c.bf16 %v824, %v824
        %v835 = vld [vmem:[%s5] sm:$0xf]
        %v836 = vld [vmem:[%s5 + $0x4] sm:$0xf]
        %v837 = vld [vmem:[%s5 + $0x8] sm:$0xf]
        %v838 = vld [vmem:[%s5 + $0xc] sm:$0xf]
        %v839 = vld [vmem:[%s6] sm:$0x1]
        %v841 = vperm.slane %v839, 0
        %v847 = vunpack.c.l.b16 %v835
        %v848 = vunpack.c.l.b16 %v836
        %v849 = vunpack.c.l.b16 %v837
        %v850 = vunpack.c.l.b16 %v838
        %v851 = vpack.c.b16 %v848, %v847
        %v852 = vpack.c.b16 %v850, %v849
        %vm855 = vcmask 261120
        %v857 = vsel %vm855, %v834, 0
        %859 = vmatpush.bf16.msra.mxu0 0
        %860 = vmatpush.bf16.msra.mxu0 0
        %861 = vmatpush.bf16.msra.mxu0 0
        %862 = vmatpush.bf16.msra.mxu0 0
        %863 = vmatpush.bf16.msra.mxu0 0
        %864 = vmatpush.bf16.msra.mxu0 0
        %865 = vmatpush.bf16.msra.mxu0 %v852
        %866 = vmatpush.bf16.msra.mxu0 %v851
        %867 = vmatmul.bf16.gmra.mxu0 %v857
        %v868 = vpop.f32.mrf.mxu0
        %v869 = vadd.f32 %v841, %v868
        %v870 = vpop.f32.mrf.mxu0
        %871 = vdwg.mxu0
        %v872 = vld [vmem:[%s7] sm:$0xf]
        %v873 = vld [vmem:[%s7 + $0x4] sm:$0xf]
        %v874 = vld [vmem:[%s7 + $0x8] sm:$0xf]
        %v875 = vld [vmem:[%s7 + $0xc] sm:$0xf]
        %v876 = vpack.c.bf16 %v869, %v869
        %v878 = vunpack.c.l.b16 %v876
        %v879 = vpack.c.b16 %v878, %v878
        %880 = vrot.lane.b32.xlu0 %v879, 96
        %v881 = vpop.permute.xlu0 %880
        %vm882 = vcmask 64512
        %v884 = vsel %vm882, %v876, 0
        %v887 = vsel %vm882, %v881, 0
        %889 = vmatpush.bf16.xpose.msra.mxu0 0
        %890 = vmatpush.bf16.xpose.msra.mxu0 0
        %891 = vmatpush.bf16.xpose.msra.mxu0 0
        %892 = vmatpush.bf16.xpose.msra.mxu0 0
        %893 = vmatpush.bf16.xpose.msra.mxu0 0
        %894 = vmatpush.bf16.xpose.msra.mxu0 0
        %895 = vmatpush.bf16.xpose.msra.mxu0 0
        %896 = vmatpush.bf16.xpose.msra.mxu0 %v887
        %897 = vmatmul.bf16.gmra.mxu0 %v884
        %v898 = vpop.f32.mrf.mxu0
        %v899 = vadd.f32 0.0, %v898
        %v900 = vpop.f32.mrf.mxu0
        %901 = vdwg.mxu0
        %v902 = vmul.f32 %v899, 0.35355338
        %v903 = vadd.f32 %v902, %v832
        %v904 = vsel %vm882, %v903, -inf
        %905 = vmax.xlane.f32.xlu0 %v904
        %v906 = vpop.xlane.xlu0 %905
        %v907 = vsub.f32 %v903, %v906
        %v908 = vmul.f32 %v907, 1.442695
        %v909 = vpow.pop %v908
        %v910 = vsel %vm882, %v909, 0.0
        %911 = vadd.xlane.f32.xlu0 %v910
        %v912 = vpop.xlane.xlu0 %911
        %v913 = vrcp.pop %v912
        %v914 = vmul.f32 %v909, %v913
        %v915 = vpack.c.bf16 %v914, %v914
        %916 = vrot.lane.b32.xlu0 %v879, 64
        %v917 = vpop.permute.xlu0 %916
        %v919 = vsel %vm882, %v915, 0
        %vm921 = vcmask 1043456
        %v923 = vsel %vm921, %v917, 0
        %925 = vmatpush.bf16.msra.mxu0 0
        %926 = vmatpush.bf16.msra.mxu0 0
        %927 = vmatpush.bf16.msra.mxu0 0
        %928 = vmatpush.bf16.msra.mxu0 0
        %929 = vmatpush.bf16.msra.mxu0 0
        %930 = vmatpush.bf16.msra.mxu0 0
        %931 = vmatpush.bf16.msra.mxu0 0
        %932 = vmatpush.bf16.msra.mxu0 %v923
        %933 = vmatmul.bf16.gmra.mxu0 %v919
        %v934 = vpop.f32.mrf.mxu0
        %v935 = vadd.f32 0.0, %v934
        %v936 = vpop.f32.mrf.mxu0
        %937 = vdwg.mxu0
        %938 = vrot.lane.b32.xlu0 %v879, 120
        %v939 = vpop.permute.xlu0 %938
        %940 = vrot.lane.b32.xlu0 %v879, 88
        %v941 = vpop.permute.xlu0 %940
        %v943 = vsel %vm882, %v939, 0
        %v946 = vsel %vm882, %v941, 0
        %948 = vmatpush.bf16.xpose.msra.mxu0 0
        %949 = vmatpush.bf16.xpose.msra.mxu0 0
        %950 = vmatpush.bf16.xpose.msra.mxu0 0
        %951 = vmatpush.bf16.xpose.msra.mxu0 0
        %952 = vmatpush.bf16.xpose.msra.mxu0 0
        %953 = vmatpush.bf16.xpose.msra.mxu0 0
        %954 = vmatpush.bf16.xpose.msra.mxu0 0
        %955 = vmatpush.bf16.xpose.msra.mxu0 %v946
        %956 = vmatmul.bf16.gmra.mxu0 %v943
        %v957 = vpop.f32.mrf.mxu0
        %v958 = vadd.f32 0.0, %v957
        %v959 = vpop.f32.mrf.mxu0
        %960 = vdwg.mxu0
        %v961 = vmul.f32 %v958, 0.35355338
        %v962 = vadd.f32 %v961, %v832
        %v963 = vsel %vm882, %v962, -inf
        %964 = vmax.xlane.f32.xlu0 %v963
        %v965 = vpop.xlane.xlu0 %964
        %v966 = vsub.f32 %v962, %v965
        %v967 = vmul.f32 %v966, 1.442695
        %v968 = vpow.pop %v967
        %v969 = vsel %vm882, %v968, 0.0
        %970 = vadd.xlane.f32.xlu0 %v969
        %v971 = vpop.xlane.xlu0 %970
        %v972 = vrcp.pop %v971
        %v973 = vmul.f32 %v968, %v972
        %v974 = vpack.c.bf16 %v973, %v973
        %975 = vrot.lane.b32.xlu0 %v879, 56
        %v976 = vpop.permute.xlu0 %975
        %v978 = vsel %vm882, %v974, 0
        %v981 = vsel %vm921, %v976, 0
        %983 = vmatpush.bf16.msra.mxu0 0
        %984 = vmatpush.bf16.msra.mxu0 0
        %985 = vmatpush.bf16.msra.mxu0 0
        %986 = vmatpush.bf16.msra.mxu0 0
        %987 = vmatpush.bf16.msra.mxu0 0
        %988 = vmatpush.bf16.msra.mxu0 0
        %989 = vmatpush.bf16.msra.mxu0 0
        %990 = vmatpush.bf16.msra.mxu0 %v981
        %991 = vmatmul.bf16.gmra.mxu0 %v978
        %v992 = vpop.f32.mrf.mxu0
        %v993 = vadd.f32 0.0, %v992
        %v994 = vpop.f32.mrf.mxu0
        %995 = vdwg.mxu0
        %996 = vrot.lane.b32.xlu0 %v879, 112
        %v997 = vpop.permute.xlu0 %996
        %998 = vrot.lane.b32.xlu0 %v879, 80
        %v999 = vpop.permute.xlu0 %998
        %v1001 = vsel %vm882, %v997, 0
        %v1004 = vsel %vm882, %v999, 0
        %1006 = vmatpush.bf16.xpose.msra.mxu0 0
        %1007 = vmatpush.bf16.xpose.msra.mxu0 0
        %1008 = vmatpush.bf16.xpose.msra.mxu0 0
        %1009 = vmatpush.bf16.xpose.msra.mxu0 0
        %1010 = vmatpush.bf16.xpose.msra.mxu0 0
        %1011 = vmatpush.bf16.xpose.msra.mxu0 0
        %1012 = vmatpush.bf16.xpose.msra.mxu0 0
        %1013 = vmatpush.bf16.xpose.msra.mxu0 %v1004
        %1014 = vmatmul.bf16.gmra.mxu0 %v1001
        %v1015 = vpop.f32.mrf.mxu0
        %v1016 = vadd.f32 0.0, %v1015
        %v1017 = vpop.f32.mrf.mxu0
        %1018 = vdwg.mxu0
        %v1019 = vmul.f32 %v1016, 0.35355338
        %v1020 = vadd.f32 %v1019, %v832
        %v1021 = vsel %vm882, %v1020, -inf
        %1022 = vmax.xlane.f32.xlu0 %v1021
        %v1023 = vpop.xlane.xlu0 %1022
        %v1024 = vsub.f32 %v1020, %v1023
        %v1025 = vmul.f32 %v1024, 1.442695
        %v1026 = vpow.pop %v1025
        %v1027 = vsel %vm882, %v1026, 0.0
        %1028 = vadd.xlane.f32.xlu0 %v1027
        %v1029 = vpop.xlane.xlu0 %1028
        %v1030 = vrcp.pop %v1029
        %v1031 = vmul.f32 %v1026, %v1030
        %v1032 = vpack.c.bf16 %v1031, %v1031
        %1033 = vrot.lane.b32.xlu0 %v879, 48
        %v1034 = vpop.permute.xlu0 %1033
        %v1036 = vsel %vm882, %v1032, 0
        %v1039 = vsel %vm921, %v1034, 0
        %1041 = vmatpush.bf16.msra.mxu0 0
        %1042 = vmatpush.bf16.msra.mxu0 0
        %1043 = vmatpush.bf16.msra.mxu0 0
        %1044 = vmatpush.bf16.msra.mxu0 0
        %1045 = vmatpush.bf16.msra.mxu0 0
        %1046 = vmatpush.bf16.msra.mxu0 0
        %1047 = vmatpush.bf16.msra.mxu0 0
        %1048 = vmatpush.bf16.msra.mxu0 %v1039
        %1049 = vmatmul.bf16.gmra.mxu0 %v1036
        %v1050 = vpop.f32.mrf.mxu0
        %v1051 = vadd.f32 0.0, %v1050
        %v1052 = vpop.f32.mrf.mxu0
        %1053 = vdwg.mxu0
        %1054 = vrot.lane.b32.xlu0 %v879, 104
        %v1055 = vpop.permute.xlu0 %1054
        %1056 = vrot.lane.b32.xlu0 %v879, 72
        %v1057 = vpop.permute.xlu0 %1056
        %v1059 = vsel %vm882, %v1055, 0
        %v1062 = vsel %vm882, %v1057, 0
        %1064 = vmatpush.bf16.xpose.msra.mxu0 0
        %1065 = vmatpush.bf16.xpose.msra.mxu0 0
        %1066 = vmatpush.bf16.xpose.msra.mxu0 0
        %1067 = vmatpush.bf16.xpose.msra.mxu0 0
        %1068 = vmatpush.bf16.xpose.msra.mxu0 0
        %1069 = vmatpush.bf16.xpose.msra.mxu0 0
        %1070 = vmatpush.bf16.xpose.msra.mxu0 0
        %1071 = vmatpush.bf16.xpose.msra.mxu0 %v1062
        %1072 = vmatmul.bf16.gmra.mxu0 %v1059
        %v1073 = vpop.f32.mrf.mxu0
        %v1074 = vadd.f32 0.0, %v1073
        %v1075 = vpop.f32.mrf.mxu0
        %1076 = vdwg.mxu0
        %v1077 = vmul.f32 %v1074, 0.35355338
        %v1078 = vadd.f32 %v1077, %v832
        %v1079 = vsel %vm882, %v1078, -inf
        %1080 = vmax.xlane.f32.xlu0 %v1079
        %v1081 = vpop.xlane.xlu0 %1080
        %v1082 = vsub.f32 %v1078, %v1081
        %v1083 = vmul.f32 %v1082, 1.442695
        %v1084 = vpow.pop %v1083
        %v1085 = vsel %vm882, %v1084, 0.0
        %1086 = vadd.xlane.f32.xlu0 %v1085
        %v1087 = vpop.xlane.xlu0 %1086
        %v1088 = vrcp.pop %v1087
        %v1089 = vmul.f32 %v1084, %v1088
        %v1090 = vpack.c.bf16 %v1089, %v1089
        %1091 = vrot.lane.b32.xlu0 %v879, 40
        %v1092 = vpop.permute.xlu0 %1091
        %v1094 = vsel %vm882, %v1090, 0
        %v1097 = vsel %vm921, %v1092, 0
        %1099 = vmatpush.bf16.msra.mxu0 0
        %1100 = vmatpush.bf16.msra.mxu0 0
        %1101 = vmatpush.bf16.msra.mxu0 0
        %1102 = vmatpush.bf16.msra.mxu0 0
        %1103 = vmatpush.bf16.msra.mxu0 0
        %1104 = vmatpush.bf16.msra.mxu0 0
        %1105 = vmatpush.bf16.msra.mxu0 0
        %1106 = vmatpush.bf16.msra.mxu0 %v1097
        %1107 = vmatmul.bf16.gmra.mxu0 %v1094
        %v1108 = vpop.f32.mrf.mxu0
        %v1109 = vadd.f32 0.0, %v1108
        %v1110 = vpop.f32.mrf.mxu0
        %1111 = vdwg.mxu0
        %1113 = vrot.lane.b32.xlu0 %v993, 8
        %v1114 = vpop.permute.xlu0 %1113
        %1117 = vrot.lane.b32.xlu0 %v1051, 16
        %v1118 = vpop.permute.xlu0 %1117
        %1121 = vrot.lane.b32.xlu0 %v1109, 24
        %v1122 = vpop.permute.xlu0 %1121
        %v1124 = vsel %vm882, %v935, %v1114
        %vm1125 = vcmask 130048
        %v1126 = vsel %vm1125, %v1124, %v1118
        %vm1127 = vcmask 195584
        %v1128 = vsel %vm1127, %v1126, %v1122
        %v1129 = vpack.c.bf16 %v1128, %v1128
        %v1130 = vld [vmem:[%s8] sm:$0x1]
        %v1132 = vperm.slane %v1130, 0
        %v1138 = vunpack.c.l.b16 %v872
        %v1139 = vunpack.c.l.b16 %v873
        %v1140 = vunpack.c.l.b16 %v874
        %v1141 = vunpack.c.l.b16 %v875
        %v1142 = vpack.c.b16 %v1139, %v1138
        %v1143 = vpack.c.b16 %v1141, %v1140
        %v1147 = vsel %vm855, %v1129, 0
        %1149 = vmatpush.bf16.msra.mxu0 0
        %1150 = vmatpush.bf16.msra.mxu0 0
        %1151 = vmatpush.bf16.msra.mxu0 0
        %1152 = vmatpush.bf16.msra.mxu0 0
        %1153 = vmatpush.bf16.msra.mxu0 0
        %1154 = vmatpush.bf16.msra.mxu0 0
        %1155 = vmatpush.bf16.msra.mxu0 %v1143
        %1156 = vmatpush.bf16.msra.mxu0 %v1142
        %1157 = vmatmul.bf16.gmra.mxu0 %v1147
        %v1158 = vpop.f32.mrf.mxu0
        %v1159 = vadd.f32 %v1132, %v1158
        %v1160 = vpop.f32.mrf.mxu0
        %1161 = vdwg.mxu0
        %v1162 = vadd.f32 %v824, %v1159
        %v1163 = vld [vmem:[%s9] sm:$0x1]
        %v1164 = vld [vmem:[%s10] sm:$0x1]
        %v1165 = vsel %vm855, %v1162, 0.0
        %1166 = vadd.xlane.f32.xlu0 %v1165
        %v1167 = vpop.xlane.xlu0 %1166
        %v1168 = vrcp.pop 32.0
        %v1169 = vmul.f32 32.0, %v1168
        %v1170 = vsub.f32 1.0, %v1169
        %v1171 = vmul.f32 %v1168, %v1170
        %v1172 = vadd.f32 %v1168, %v1171
        %vm1173 = vweird.f32 %v1168
        %v1174 = vsel %vm1173, %v1168, %v1172
        %v1175 = vmul.f32 %v1167, %v1174
        %v1176 = vsub.f32 %v1162, %v1175
        %v1177 = vmul.f32 %v1176, %v1176
        %v1178 = vsel %vm855, %v1177, 0.0
        %1179 = vadd.xlane.f32.xlu0 %v1178
        %v1180 = vpop.xlane.xlu0 %1179
        %v1181 = vmul.f32 %v1180, %v1174
        %v1182 = vadd.f32 %v1181, 1e-05
        %v1183 = vrsqrt.pop %v1182
        %v1184 = vmul.f32 %v1183, %v1182
        %v1185 = vmul.f32 %v1184, %v1183
        %v1186 = vmul.f32 0.5, %v1185
        %v1187 = vsub.f32 1.5, %v1186
        %v1188 = vmul.f32 %v1183, %v1187
        %vm1189 = vweird.f32 %v1182
        %vm1190 = vweird.f32 %v1183
        %vm1191 = vmor %vm1189, %vm1190
        %v1192 = vsel %vm1191, %v1183, %v1188
        %v1193 = vmul.f32 %v1176, %v1192
        %v1195 = vperm.slane %v1163, 0
        %v1197 = vmul.f32 %v1193, %v1195
        %v1199 = vperm.slane %v1164, 0
        %v1201 = vadd.f32 %v1197, %v1199
        %v1202 = vpack.c.bf16 %v1201, %v1201
        %v1203 = vld [vmem:[%s11] sm:$0xf]
        %v1204 = vld [vmem:[%s11 + $0x4] sm:$0xf]
        %v1205 = vld [vmem:[%s11 + $0x8] sm:$0xf]
        %v1206 = vld [vmem:[%s11 + $0xc] sm:$0xf]
        %v1207 = vld [vmem:[%s12] sm:$0x1]
        %v1209 = vperm.slane %v1207, 0
        %v1215 = vunpack.c.l.b16 %v1203
        %v1216 = vunpack.c.l.b16 %v1204
        %v1217 = vunpack.c.l.b16 %v1205
        %v1218 = vunpack.c.l.b16 %v1206
        %v1219 = vpack.c.b16 %v1216, %v1215
        %v1220 = vpack.c.b16 %v1218, %v1217
        %v1224 = vsel %vm855, %v1202, 0
        %1226 = vmatpush.bf16.msra.mxu0 0
        %1227 = vmatpush.bf16.msra.mxu0 0
        %1228 = vmatpush.bf16.msra.mxu0 0
        %1229 = vmatpush.bf16.msra.mxu0 0
        %1230 = vmatpush.bf16.msra.mxu0 0
        %1231 = vmatpush.bf16.msra.mxu0 0
        %1232 = vmatpush.bf16.msra.mxu0 %v1220
        %1233 = vmatpush.bf16.msra.mxu0 %v1219
        %1234 = vmatmul.bf16.gmra.mxu0 %v1224
        %v1235 = vpop.f32.mrf.mxu0
        %v1236 = vadd.f32 %v1209, %v1235
        %v1237 = vpop.f32.mrf.mxu0
        %1238 = vdwg.mxu0
        %v1239 = vpack.c.bf16 %v826, %v825
        %v1240 = vld [vmem:[%s13] sm:$0xf]
        %v1241 = vld [vmem:[%s13 + $0x4] sm:$0xf]
        %v1242 = vld [vmem:[%s13 + $0x8] sm:$0xf]
        %v1243 = vld [vmem:[%s13 + $0xc] sm:$0xf]
        %v1244 = vld [vmem:[%s14] sm:$0x1]
        %v1246 = vperm.slane %v1244, 0
        %v1252 = vunpack.c.l.b16 %v1240
        %v1253 = vunpack.c.l.b16 %v1241
        %v1254 = vunpack.c.l.b16 %v1242
        %v1255 = vunpack.c.l.b16 %v1243
        %v1256 = vpack.c.b16 %v1253, %v1252
        %v1257 = vpack.c.b16 %v1255, %v1254
        %v1261 = vsel %vm855, %v1239, 0
        %1263 = vmatpush.bf16.msra.mxu0 0
        %1264 = vmatpush.bf16.msra.mxu0 0
        %1265 = vmatpush.bf16.msra.mxu0 0
        %1266 = vmatpush.bf16.msra.mxu0 0
        %1267 = vmatpush.bf16.msra.mxu0 0
        %1268 = vmatpush.bf16.msra.mxu0 0
        %1269 = vmatpush.bf16.msra.mxu0 %v1257
        %1270 = vmatpush.bf16.msra.mxu0 %v1256
        %1271 = vmatmul.bf16.gmra.mxu0 %v1261
        %v1272 = vpop.f32.mrf.mxu0
        %v1273 = vadd.f32 %v1246, %v1272
        %v1274 = vpop.f32.mrf.mxu0
        %v1275 = vadd.f32 %v1246, %v1274
        %1276 = vdwg.mxu0
        %v1277 = vld [vmem:[%s15] sm:$0xf]
        %v1278 = vld [vmem:[%s15 + $0x4] sm:$0xf]
        %v1279 = vld [vmem:[%s15 + $0x8] sm:$0xf]
        %v1280 = vld [vmem:[%s15 + $0xc] sm:$0xf]
        %v1281 = vpack.c.bf16 %v1236, %v1236
        %v1282 = vpack.c.bf16 %v1273, %v1273
        %v1283 = vpack.c.bf16 %v1275, %v1275
        %v1286 = vunpack.c.l.b16 %v1282
        %v1287 = vunpack.c.l.b16 %v1283
        %v1288 = vpack.c.b16 %v1287, %v1286
        %v1290 = vsel %vm882, %v1281, 0
        %v1293 = vsel %vm882, %v1288, 0
        %1295 = vmatpush.bf16.xpose.msra.mxu0 0
        %1296 = vmatpush.bf16.xpose.msra.mxu0 0
        %1297 = vmatpush.bf16.xpose.msra.mxu0 0
        %1298 = vmatpush.bf16.xpose.msra.mxu0 0
        %1299 = vmatpush.bf16.xpose.msra.mxu0 0
        %1300 = vmatpush.bf16.xpose.msra.mxu0 0
        %1301 = vmatpush.bf16.xpose.msra.mxu0 0
        %1302 = vmatpush.bf16.xpose.msra.mxu0 %v1293
        %1303 = vmatmul.bf16.gmra.mxu0 %v1290
        %v1304 = vpop.f32.mrf.mxu0
        %v1305 = vadd.f32 0.0, %v1304
        %v1306 = vpop.f32.mrf.mxu0
        %1307 = vdwg.mxu0
        %v1308 = vmul.f32 %v1305, 0.35355338
        %v1310 = vperm.slane %v833, 0
        %v1312 = vadd.f32 %v1308, %v1310
        %vm1313 = vcmask 80896
        %v1314 = vsel %vm1313, %v1312, -inf
        %1315 = vmax.xlane.f32.xlu0 %v1314
        %v1316 = vpop.xlane.xlu0 %1315
        %v1317 = vsub.f32 %v1312, %v1316
        %v1318 = vmul.f32 %v1317, 1.442695
        %v1319 = vpow.pop %v1318
        %v1320 = vsel %vm1313, %v1319, 0.0
        %1321 = vadd.xlane.f32.xlu0 %v1320
        %v1322 = vpop.xlane.xlu0 %1321
        %v1323 = vrcp.pop %v1322
        %v1324 = vmul.f32 %v1319, %v1323
        %v1325 = vpack.c.bf16 %v1324, %v1324
        %1326 = vrot.lane.b32.xlu0 %v1288, 96
        %v1327 = vpop.permute.xlu0 %1326
        %v1329 = vsel %vm1313, %v1325, 0
        %vm1331 = vcmask 1044480
        %v1333 = vsel %vm1331, %v1327, 0
        %1335 = vmatpush.bf16.msra.mxu0 0
        %1336 = vmatpush.bf16.msra.mxu0 0
        %1337 = vmatpush.bf16.msra.mxu0 0
        %1338 = vmatpush.bf16.msra.mxu0 0
        %1339 = vmatpush.bf16.msra.mxu0 0
        %1340 = vmatpush.bf16.msra.mxu0 0
        %1341 = vmatpush.bf16.msra.mxu0 0
        %1342 = vmatpush.bf16.msra.mxu0 %v1333
        %1343 = vmatmul.bf16.gmra.mxu0 %v1329
        %v1344 = vpop.f32.mrf.mxu0
        %v1345 = vadd.f32 0.0, %v1344
        %v1346 = vpop.f32.mrf.mxu0
        %1347 = vdwg.mxu0
        %v1349 = vunpack.c.l.b16 %v1281
        %v1350 = vpack.c.b16 %v1349, %v1349
        %1351 = vrot.lane.b32.xlu0 %v1350, 120
        %v1352 = vpop.permute.xlu0 %1351
        %1353 = vrot.lane.b32.xlu0 %v1288, 120
        %v1354 = vpop.permute.xlu0 %1353
        %v1356 = vsel %vm882, %v1352, 0
        %v1359 = vsel %vm882, %v1354, 0
        %1361 = vmatpush.bf16.xpose.msra.mxu0 0
        %1362 = vmatpush.bf16.xpose.msra.mxu0 0
        %1363 = vmatpush.bf16.xpose.msra.mxu0 0
        %1364 = vmatpush.bf16.xpose.msra.mxu0 0
        %1365 = vmatpush.bf16.xpose.msra.mxu0 0
        %1366 = vmatpush.bf16.xpose.msra.mxu0 0
        %1367 = vmatpush.bf16.xpose.msra.mxu0 0
        %1368 = vmatpush.bf16.xpose.msra.mxu0 %v1359
        %1369 = vmatmul.bf16.gmra.mxu0 %v1356
        %v1370 = vpop.f32.mrf.mxu0
        %v1371 = vadd.f32 0.0, %v1370
        %v1372 = vpop.f32.mrf.mxu0
        %1373 = vdwg.mxu0
        %v1374 = vmul.f32 %v1371, 0.35355338
        %v1375 = vadd.f32 %v1374, %v1310
        %v1376 = vsel %vm1313, %v1375, -inf
        %1377 = vmax.xlane.f32.xlu0 %v1376
        %v1378 = vpop.xlane.xlu0 %1377
        %v1379 = vsub.f32 %v1375, %v1378
        %v1380 = vmul.f32 %v1379, 1.442695
        %v1381 = vpow.pop %v1380
        %v1382 = vsel %vm1313, %v1381, 0.0
        %1383 = vadd.xlane.f32.xlu0 %v1382
        %v1384 = vpop.xlane.xlu0 %1383
        %v1385 = vrcp.pop %v1384
        %v1386 = vmul.f32 %v1381, %v1385
        %v1387 = vpack.c.bf16 %v1386, %v1386
        %1388 = vrot.lane.b32.xlu0 %v1288, 88
        %v1389 = vpop.permute.xlu0 %1388
        %v1391 = vsel %vm1313, %v1387, 0
        %v1394 = vsel %vm1331, %v1389, 0
        %1396 = vmatpush.bf16.msra.mxu0 0
        %1397 = vmatpush.bf16.msra.mxu0 0
        %1398 = vmatpush.bf16.msra.mxu0 0
        %1399 = vmatpush.bf16.msra.mxu0 0
        %1400 = vmatpush.bf16.msra.mxu0 0
        %1401 = vmatpush.bf16.msra.mxu0 0
        %1402 = vmatpush.bf16.msra.mxu0 0
        %1403 = vmatpush.bf16.msra.mxu0 %v1394
        %1404 = vmatmul.bf16.gmra.mxu0 %v1391
        %v1405 = vpop.f32.mrf.mxu0
        %v1406 = vadd.f32 0.0, %v1405
        %v1407 = vpop.f32.mrf.mxu0
        %1408 = vdwg.mxu0
        %1409 = vrot.lane.b32.xlu0 %v1350, 112
        %v1410 = vpop.permute.xlu0 %1409
        %1411 = vrot.lane.b32.xlu0 %v1288, 112
        %v1412 = vpop.permute.xlu0 %1411
        %v1414 = vsel %vm882, %v1410, 0
        %v1417 = vsel %vm882, %v1412, 0
        %1419 = vmatpush.bf16.xpose.msra.mxu0 0
        %1420 = vmatpush.bf16.xpose.msra.mxu0 0
        %1421 = vmatpush.bf16.xpose.msra.mxu0 0
        %1422 = vmatpush.bf16.xpose.msra.mxu0 0
        %1423 = vmatpush.bf16.xpose.msra.mxu0 0
        %1424 = vmatpush.bf16.xpose.msra.mxu0 0
        %1425 = vmatpush.bf16.xpose.msra.mxu0 0
        %1426 = vmatpush.bf16.xpose.msra.mxu0 %v1417
        %1427 = vmatmul.bf16.gmra.mxu0 %v1414
        %v1428 = vpop.f32.mrf.mxu0
        %v1429 = vadd.f32 0.0, %v1428
        %v1430 = vpop.f32.mrf.mxu0
        %1431 = vdwg.mxu0
        %v1432 = vmul.f32 %v1429, 0.35355338
        %v1433 = vadd.f32 %v1432, %v1310
        %v1434 = vsel %vm1313, %v1433, -inf
        %1435 = vmax.xlane.f32.xlu0 %v1434
        %v1436 = vpop.xlane.xlu0 %1435
        %v1437 = vsub.f32 %v1433, %v1436
        %v1438 = vmul.f32 %v1437, 1.442695
        %v1439 = vpow.pop %v1438
        %v1440 = vsel %vm1313, %v1439, 0.0
        %1441 = vadd.xlane.f32.xlu0 %v1440
        %v1442 = vpop.xlane.xlu0 %1441
        %v1443 = vrcp.pop %v1442
        %v1444 = vmul.f32 %v1439, %v1443
        %v1445 = vpack.c.bf16 %v1444, %v1444
        %1446 = vrot.lane.b32.xlu0 %v1288, 80
        %v1447 = vpop.permute.xlu0 %1446
        %v1449 = vsel %vm1313, %v1445, 0
        %v1452 = vsel %vm1331, %v1447, 0
        %1454 = vmatpush.bf16.msra.mxu0 0
        %1455 = vmatpush.bf16.msra.mxu0 0
        %1456 = vmatpush.bf16.msra.mxu0 0
        %1457 = vmatpush.bf16.msra.mxu0 0
        %1458 = vmatpush.bf16.msra.mxu0 0
        %1459 = vmatpush.bf16.msra.mxu0 0
        %1460 = vmatpush.bf16.msra.mxu0 0
        %1461 = vmatpush.bf16.msra.mxu0 %v1452
        %1462 = vmatmul.bf16.gmra.mxu0 %v1449
        %v1463 = vpop.f32.mrf.mxu0
        %v1464 = vadd.f32 0.0, %v1463
        %v1465 = vpop.f32.mrf.mxu0
        %1466 = vdwg.mxu0
        %1467 = vrot.lane.b32.xlu0 %v1350, 104
        %v1468 = vpop.permute.xlu0 %1467
        %1469 = vrot.lane.b32.xlu0 %v1288, 104
        %v1470 = vpop.permute.xlu0 %1469
        %v1472 = vsel %vm882, %v1468, 0
        %v1475 = vsel %vm882, %v1470, 0
        %1477 = vmatpush.bf16.xpose.msra.mxu0 0
        %1478 = vmatpush.bf16.xpose.msra.mxu0 0
        %1479 = vmatpush.bf16.xpose.msra.mxu0 0
        %1480 = vmatpush.bf16.xpose.msra.mxu0 0
        %1481 = vmatpush.bf16.xpose.msra.mxu0 0
        %1482 = vmatpush.bf16.xpose.msra.mxu0 0
        %1483 = vmatpush.bf16.xpose.msra.mxu0 0
        %1484 = vmatpush.bf16.xpose.msra.mxu0 %v1475
        %1485 = vmatmul.bf16.gmra.mxu0 %v1472
        %v1486 = vpop.f32.mrf.mxu0
        %v1487 = vadd.f32 0.0, %v1486
        %v1488 = vpop.f32.mrf.mxu0
        %1489 = vdwg.mxu0
        %v1490 = vmul.f32 %v1487, 0.35355338
        %v1491 = vadd.f32 %v1490, %v1310
        %v1492 = vsel %vm1313, %v1491, -inf
        %1493 = vmax.xlane.f32.xlu0 %v1492
        %v1494 = vpop.xlane.xlu0 %1493
        %v1495 = vsub.f32 %v1491, %v1494
        %v1496 = vmul.f32 %v1495, 1.442695
        %v1497 = vpow.pop %v1496
        %v1498 = vsel %vm1313, %v1497, 0.0
        %1499 = vadd.xlane.f32.xlu0 %v1498
        %v1500 = vpop.xlane.xlu0 %1499
        %v1501 = vrcp.pop %v1500
        %v1502 = vmul.f32 %v1497, %v1501
        %v1503 = vpack.c.bf16 %v1502, %v1502
        %1504 = vrot.lane.b32.xlu0 %v1288, 72
        %v1505 = vpop.permute.xlu0 %1504
        %v1507 = vsel %vm1313, %v1503, 0
        %v1510 = vsel %vm1331, %v1505, 0
        %1512 = vmatpush.bf16.msra.mxu0 0
        %1513 = vmatpush.bf16.msra.mxu0 0
        %1514 = vmatpush.bf16.msra.mxu0 0
        %1515 = vmatpush.bf16.msra.mxu0 0
        %1516 = vmatpush.bf16.msra.mxu0 0
        %1517 = vmatpush.bf16.msra.mxu0 0
        %1518 = vmatpush.bf16.msra.mxu0 0
        %1519 = vmatpush.bf16.msra.mxu0 %v1510
        %1520 = vmatmul.bf16.gmra.mxu0 %v1507
        %v1521 = vpop.f32.mrf.mxu0
        %v1522 = vadd.f32 0.0, %v1521
        %v1523 = vpop.f32.mrf.mxu0
        %1524 = vdwg.mxu0
        %1526 = vrot.lane.b32.xlu0 %v1406, 8
        %v1527 = vpop.permute.xlu0 %1526
        %1530 = vrot.lane.b32.xlu0 %v1464, 16
        %v1531 = vpop.permute.xlu0 %1530
        %1534 = vrot.lane.b32.xlu0 %v1522, 24
        %v1535 = vpop.permute.xlu0 %1534
        %v1537 = vsel %vm882, %v1345, %v1527
        %v1538 = vsel %vm1125, %v1537, %v1531
        %v1539 = vsel %vm1127, %v1538, %v1535
        %v1540 = vpack.c.bf16 %v1539, %v1539
        %v1541 = vld [vmem:[%s16] sm:$0x1]
        %v1543 = vperm.slane %v1541, 0
        %v1549 = vunpack.c.l.b16 %v1277
        %v1550 = vunpack.c.l.b16 %v1278
        %v1551 = vunpack.c.l.b16 %v1279
        %v1552 = vunpack.c.l.b16 %v1280
        %v1553 = vpack.c.b16 %v1550, %v1549
        %v1554 = vpack.c.b16 %v1552, %v1551
        %v1558 = vsel %vm855, %v1540, 0
        %1560 = vmatpush.bf16.msra.mxu0 0
        %1561 = vmatpush.bf16.msra.mxu0 0
        %1562 = vmatpush.bf16.msra.mxu0 0
        %1563 = vmatpush.bf16.msra.mxu0 0
        %1564 = vmatpush.bf16.msra.mxu0 0
        %1565 = vmatpush.bf16.msra.mxu0 0
        %1566 = vmatpush.bf16.msra.mxu0 %v1554
        %1567 = vmatpush.bf16.msra.mxu0 %v1553
        %1568 = vmatmul.bf16.gmra.mxu0 %v1558
        %v1569 = vpop.f32.mrf.mxu0
        %v1570 = vadd.f32 %v1543, %v1569
        %v1571 = vpop.f32.mrf.mxu0
        %1572 = vdwg.mxu0
        %v1573 = vadd.f32 %v1201, %v1570
        %v1574 = vld [vmem:[%s17] sm:$0x1]
        %v1575 = vld [vmem:[%s18] sm:$0x1]
        %v1576 = vsel %vm855, %v1573, 0.0
        %1577 = vadd.xlane.f32.xlu0 %v1576
        %v1578 = vpop.xlane.xlu0 %1577
        %v1579 = vmul.f32 %v1578, %v1174
        %v1580 = vsub.f32 %v1573, %v1579
        %v1581 = vmul.f32 %v1580, %v1580
        %v1582 = vsel %vm855, %v1581, 0.0
        %1583 = vadd.xlane.f32.xlu0 %v1582
        %v1584 = vpop.xlane.xlu0 %1583
        %v1585 = vmul.f32 %v1584, %v1174
        %v1586 = vadd.f32 %v1585, 1e-05
        %v1587 = vrsqrt.pop %v1586
        %v1588 = vmul.f32 %v1587, %v1586
        %v1589 = vmul.f32 %v1588, %v1587
        %v1590 = vmul.f32 0.5, %v1589
        %v1591 = vsub.f32 1.5, %v1590
        %v1592 = vmul.f32 %v1587, %v1591
        %vm1593 = vweird.f32 %v1586
        %vm1594 = vweird.f32 %v1587
        %vm1595 = vmor %vm1593, %vm1594
        %v1596 = vsel %vm1595, %v1587, %v1592
        %v1597 = vmul.f32 %v1580, %v1596
        %v1599 = vperm.slane %v1574, 0
        %v1601 = vmul.f32 %v1597, %v1599
        %v1603 = vperm.slane %v1575, 0
        %v1605 = vadd.f32 %v1601, %v1603
        %v1606 = vpack.c.bf16 %v1605, %v1605
        %v1607 = vld [vmem:[%s19] sm:$0xf]
        %v1608 = vld [vmem:[%s19 + $0x4] sm:$0xf]
        %v1609 = vld [vmem:[%s19 + $0x8] sm:$0xf]
        %v1610 = vld [vmem:[%s19 + $0xc] sm:$0xf]
        %v1611 = vld [vmem:[%s20] sm:$0x1]
        %v1613 = vperm.slane %v1611, 0
        %v1619 = vunpack.c.l.b16 %v1607
        %v1620 = vunpack.c.l.b16 %v1608
        %v1621 = vunpack.c.l.b16 %v1609
        %v1622 = vunpack.c.l.b16 %v1610
        %v1623 = vpack.c.b16 %v1620, %v1619
        %v1624 = vpack.c.b16 %v1622, %v1621
        %v1628 = vsel %vm855, %v1606, 0
        %1630 = vmatpush.bf16.msra.mxu0 0
        %1631 = vmatpush.bf16.msra.mxu0 0
        %1632 = vmatpush.bf16.msra.mxu0 0
        %1633 = vmatpush.bf16.msra.mxu0 0
        %1634 = vmatpush.bf16.msra.mxu0 0
        %1635 = vmatpush.bf16.msra.mxu0 0
        %1636 = vmatpush.bf16.msra.mxu0 %v1624
        %1637 = vmatpush.bf16.msra.mxu0 %v1623
        %1638 = vmatmul.bf16.gmra.mxu0 %v1628
        %v1639 = vpop.f32.mrf.mxu0
        %v1640 = vadd.f32 %v1613, %v1639
        %v1641 = vpop.f32.mrf.mxu0
        %1642 = vdwg.mxu0
        %v1643 = vmax.f32 %v1640, 0.0
        %v1644 = vpack.c.bf16 %v1643, %v1643
        %v1645 = vld [vmem:[%s21] sm:$0xf]
        %v1646 = vld [vmem:[%s21 + $0x4] sm:$0xf]
        %v1647 = vld [vmem:[%s21 + $0x8] sm:$0xf]
        %v1648 = vld [vmem:[%s21 + $0xc] sm:$0xf]
        %v1649 = vld [vmem:[%s21 + $0x10] sm:$0xf]
        %v1650 = vld [vmem:[%s21 + $0x14] sm:$0xf]
        %v1651 = vld [vmem:[%s21 + $0x18] sm:$0xf]
        %v1652 = vld [vmem:[%s21 + $0x1c] sm:$0xf]
        %v1653 = vld [vmem:[%s22] sm:$0x1]
        %v1655 = vperm.slane %v1653, 0
        %v1665 = vunpack.c.l.b16 %v1645
        %v1666 = vunpack.c.l.b16 %v1646
        %v1667 = vunpack.c.l.b16 %v1647
        %v1668 = vunpack.c.l.b16 %v1648
        %v1669 = vunpack.c.l.b16 %v1649
        %v1670 = vunpack.c.l.b16 %v1650
        %v1671 = vunpack.c.l.b16 %v1651
        %v1672 = vunpack.c.l.b16 %v1652
        %v1673 = vpack.c.b16 %v1666, %v1665
        %v1674 = vpack.c.b16 %v1668, %v1667
        %v1675 = vpack.c.b16 %v1670, %v1669
        %v1676 = vpack.c.b16 %v1672, %v1671
        %vm1681 = vcmask 523264
        %v1683 = vsel %vm1681, %v1644, 0
        %1685 = vmatpush.bf16.msra.mxu0 0
        %1686 = vmatpush.bf16.msra.mxu0 0
        %1687 = vmatpush.bf16.msra.mxu0 0
        %1688 = vmatpush.bf16.msra.mxu0 0
        %1689 = vmatpush.bf16.msra.mxu0 %v1676
        %1690 = vmatpush.bf16.msra.mxu0 %v1675
        %1691 = vmatpush.bf16.msra.mxu0 %v1674
        %1692 = vmatpush.bf16.msra.mxu0 %v1673
        %1693 = vmatmul.bf16.gmra.mxu0 %v1683
        %v1694 = vpop.f32.mrf.mxu0
        %v1695 = vadd.f32 %v1655, %v1694
        %v1696 = vpop.f32.mrf.mxu0
        %1697 = vdwg.mxu0
        %v1698 = vadd.f32 %v1605, %v1695
        %v1699 = vld [vmem:[%s23] sm:$0x1]
        %v1700 = vld [vmem:[#allocation2] sm:$0x1]
        %v1701 = vsel %vm855, %v1698, 0.0
        %1702 = vadd.xlane.f32.xlu0 %v1701
        %v1703 = vpop.xlane.xlu0 %1702
        %v1704 = vmul.f32 %v1703, %v1174
        %v1705 = vsub.f32 %v1698, %v1704
        %v1706 = vmul.f32 %v1705, %v1705
        %v1707 = vsel %vm855, %v1706, 0.0
        %1708 = vadd.xlane.f32.xlu0 %v1707
        %v1709 = vpop.xlane.xlu0 %1708
        %v1710 = vmul.f32 %v1709, %v1174
        %v1711 = vadd.f32 %v1710, 1e-05
        %v1712 = vrsqrt.pop %v1711
        %v1713 = vmul.f32 %v1712, %v1711
        %v1714 = vmul.f32 %v1713, %v1712
        %v1715 = vmul.f32 0.5, %v1714
        %v1716 = vsub.f32 1.5, %v1715
        %v1717 = vmul.f32 %v1712, %v1716
        %vm1718 = vweird.f32 %v1711
        %vm1719 = vweird.f32 %v1712
        %vm1720 = vmor %vm1718, %vm1719
        %v1721 = vsel %vm1720, %v1712, %v1717
        %v1722 = vmul.f32 %v1705, %v1721
        %v1724 = vperm.slane %v1699, 0
        %v1726 = vmul.f32 %v1722, %v1724
        %v1728 = vperm.slane %v1700, 0
        %v1730 = vadd.f32 %v1726, %v1728
        %1731 = vst.msk [vmem:[%s822] sm:$0xff] %vm855, %v1730
        %p1732 = scmp.lt.s32.totalorder %s37, 1
        %s1733 = scalar_select %p1732, %s37, 1
        %s1734 = smul.addr %s1733, 8
        %s1735 = scalar_lea.vmem %s25, %s1734
        // Predicated region
        $region125: #{seq2seq_transformer_forward.8} parent=119 // pred_check
          %p1736 = pneg %p600
        $region126: #{seq2seq_transformer_forward.8} parent=119 // pred_check_branch
          %1738 = sbr.rel (%p1736) target = $region128
        $region127: #{seq2seq_transformer_forward.8} parent=119 // pred_region
          _
        $region128: #{seq2seq_transformer_forward.8} parent=119 // pred_fallthru
          _
      $region120: #{seq2seq_transformer_forward.8} parent=5 // pred_fallthru
        _
      %p1739 = scmp.le.s32.totalorder 2, %s32
      // Predicated region
      $region129: #{seq2seq_transformer_forward.8} parent=5 // pred_check
        %p1740 = pneg %p1739
      $region130: #{seq2seq_transformer_forward.8} parent=5 // pred_check_branch
        %1742 = sbr.rel (%p1740) target = $region132
      $region131: #{seq2seq_transformer_forward.8} parent=5 // pred_region
        %s1743 = ssub.s32 %s32, 2
        // Predicated region
        $region133: #{seq2seq_transformer_forward.8} parent=131 // pred_check
          %p1744 = pneg %p606
        $region134: #{seq2seq_transformer_forward.8} parent=131 // pred_check_branch
          %1746 = sbr.rel (%p1744) target = $region136
        $region135: #{seq2seq_transformer_forward.8} parent=131 // pred_region
          %p1747 = scmp.lt.s32.totalorder %s38, 1
          %s1748 = scalar_select %p1747, %s38, 1
          %s1749 = smul.addr %s1748, 8
          %s1750 = scalar_lea.vmem %s25, %s1749
        $region136: #{seq2seq_transformer_forward.8} parent=131 // pred_fallthru
          _
      $region132: #{seq2seq_transformer_forward.8} parent=5 // pred_fallthru
        _
    $region6: #{seq2seq_transformer_forward.8} parent=1 // loop_footer
      %s36 = sadd.s32 1, %s32
    $region7: #{seq2seq_transformer_forward.8} parent=1 // loop_footer_branch
      %31 = sbr.rel target = $region3
    $region8: #{seq2seq_transformer_forward.8} parent=1 // loop_exit
      _
    %1751 = vsyncpa [#allocation3], 1
    %s1752 = scalar_lea.sflag [#allocation3], 1
    %1753 = vsyncpa %s1752, 1

// kernel: seq2seq_transformer_forward.9
$region0: #{seq2seq_transformer_forward.9}
  #allocation0 [shape = 'u32[]', space=smem, size = 0x4, offset = 0x4, fixed_abs, tag = 'smem constant byte address 0x4 - core index']
  #allocation1 [shape = 'u32[72,128]{1,0:T(1,128)}', space=vmem, size = 0x9000, scoped, tag = 'internal scratch']
  %s0 = inlined_call_operand.vmem [shape: f32[16,32], index: 0, kind: input, shape index: {}]
  %s1 = inlined_call_operand.vmem [shape: f32[1,32], index: 1, kind: input, shape index: {}]
  %s2 = inlined_call_operand.vmem [shape: f32[1,32], index: 2, kind: input, shape index: {}]
  %s3 = inlined_call_operand.vmem [shape: bf16[32,128], index: 3, kind: input, shape index: {}]
  %s4 = inlined_call_operand.vmem [shape: f32[1,128], index: 4, kind: input, shape index: {}]
  %s5 = inlined_call_operand.vmem [shape: f32[16,128], index: 5, kind: output, shape index: {}]
  %s6 = sld [smem:[#allocation0]]
  $region30: #{seq2seq_transformer_forward.9} parent=0
    _
  %s8 = ssub.s32 1, %s6
  %s9 = scalar_select 0, %s8, %s6
  // Predicated region
  $region2: #{seq2seq_transformer_forward.9} parent=0 // pred_check
    _
  $region3: #{seq2seq_transformer_forward.9} parent=0 // pred_check_branch
    %11 = sbr.rel (0) target = $region5
  $region4: #{seq2seq_transformer_forward.9} parent=0 // pred_region
    _
  $region5: #{seq2seq_transformer_forward.9} parent=0 // pred_fallthru
    _
  // Predicated region
  $region6: #{seq2seq_transformer_forward.9} parent=0 // pred_check
    _
  $region7: #{seq2seq_transformer_forward.9} parent=0 // pred_check_branch
    %13 = sbr.rel (0) target = $region9
  $region8: #{seq2seq_transformer_forward.9} parent=0 // pred_region
    _
  $region9: #{seq2seq_transformer_forward.9} parent=0 // pred_fallthru
    _
  // Predicated region
  $region10: #{seq2seq_transformer_forward.9} parent=0 // pred_check
    _
  $region11: #{seq2seq_transformer_forward.9} parent=0 // pred_check_branch
    %15 = sbr.rel (0) target = $region13
  $region12: #{seq2seq_transformer_forward.9} parent=0 // pred_region
    _
  $region13: #{seq2seq_transformer_forward.9} parent=0 // pred_fallthru
    _
  // Predicated region
  $region14: #{seq2seq_transformer_forward.9} parent=0 // pred_check
    _
  $region15: #{seq2seq_transformer_forward.9} parent=0 // pred_check_branch
    %17 = sbr.rel (0) target = $region17
  $region16: #{seq2seq_transformer_forward.9} parent=0 // pred_region
    _
  $region17: #{seq2seq_transformer_forward.9} parent=0 // pred_fallthru
    _
  // Predicated region
  $region18: #{seq2seq_transformer_forward.9} parent=0 // pred_check
    _
  $region19: #{seq2seq_transformer_forward.9} parent=0 // pred_check_branch
    %19 = sbr.rel (0) target = $region21
  $region20: #{seq2seq_transformer_forward.9} parent=0 // pred_region
    _
  $region21: #{seq2seq_transformer_forward.9} parent=0 // pred_fallthru
    _
  %v21 = vld [vmem:[%s0] sm:$0xff]
  %v22 = vld [vmem:[%s0 + $0x8] sm:$0xff]
  %v23 = vld [vmem:[%s1] sm:$0x1]
  %v24 = vld [vmem:[%s2] sm:$0x1]
  %vm25 = vcmask 261120
  %v26 = vsel %vm25, %v21, 0.0
  %27 = vadd.xlane.f32.xlu0 %v26
  %v28 = vpop.xlane.xlu0 %27
  %v29 = vsel %vm25, %v22, 0.0
  %30 = vadd.xlane.f32.xlu0 %v29
  %v31 = vpop.xlane.xlu0 %30
  %v32 = vrcp.pop 32.0
  %v33 = vmul.f32 32.0, %v32
  %v34 = vsub.f32 1.0, %v33
  %v35 = vmul.f32 %v32, %v34
  %v36 = vadd.f32 %v32, %v35
  %vm37 = vweird.f32 %v32
  %v38 = vsel %vm37, %v32, %v36
  %v39 = vmul.f32 %v28, %v38
  %v40 = vmul.f32 %v31, %v38
  %v41 = vsub.f32 %v21, %v39
  %v42 = vsub.f32 %v22, %v40
  %v43 = vmul.f32 %v41, %v41
  %v44 = vmul.f32 %v42, %v42
  %v45 = vsel %vm25, %v43, 0.0
  %46 = vadd.xlane.f32.xlu0 %v45
  %v47 = vpop.xlane.xlu0 %46
  %v48 = vsel %vm25, %v44, 0.0
  %49 = vadd.xlane.f32.xlu0 %v48
  %v50 = vpop.xlane.xlu0 %49
  %v51 = vmul.f32 %v47, %v38
  %v52 = vmul.f32 %v50, %v38
  %v53 = vadd.f32 %v51, 1e-05
  %v54 = vadd.f32 %v52, 1e-05
  %v55 = vrsqrt.pop %v53
  %v56 = vmul.f32 %v55, %v53
  %v57 = vmul.f32 %v56, %v55
  %v58 = vmul.f32 0.5, %v57
  %v59 = vsub.f32 1.5, %v58
  %v60 = vmul.f32 %v55, %v59
  %vm61 = vweird.f32 %v53
  %vm62 = vweird.f32 %v55
  %vm63 = vmor %vm61, %vm62
  %v64 = vsel %vm63, %v55, %v60
  %v65 = vrsqrt.pop %v54
  %v66 = vmul.f32 %v65, %v54
  %v67 = vmul.f32 %v66, %v65
  %v68 = vmul.f32 0.5, %v67
  %v69 = vsub.f32 1.5, %v68
  %v70 = vmul.f32 %v65, %v69
  %vm71 = vweird.f32 %v54
  %vm72 = vweird.f32 %v65
  %vm73 = vmor %vm71, %vm72
  %v74 = vsel %vm73, %v65, %v70
  %v75 = vmul.f32 %v41, %v64
  %v76 = vmul.f32 %v42, %v74
  %v78 = vperm.slane %v23, 0
  %v80 = vmul.f32 %v75, %v78
  %v81 = vmul.f32 %v76, %v78
  %v83 = vperm.slane %v24, 0
  %v85 = vadd.f32 %v80, %v83
  %v86 = vadd.f32 %v81, %v83
  %v87 = vpack.c.bf16 %v86, %v85
  %v88 = vld [vmem:[%s3] sm:$0xf]
  %v89 = vld [vmem:[%s3 + $0x4] sm:$0xf]
  %v90 = vld [vmem:[%s3 + $0x8] sm:$0xf]
  %v91 = vld [vmem:[%s3 + $0xc] sm:$0xf]
  %v92 = vld [vmem:[%s4] sm:$0x1]
  %v94 = vperm.slane %v92, 0
  %v100 = vunpack.c.l.b16 %v88
  %v101 = vunpack.c.l.b16 %v89
  %v102 = vunpack.c.l.b16 %v90
  %v103 = vunpack.c.l.b16 %v91
  %v104 = vpack.c.b16 %v101, %v100
  %v105 = vpack.c.b16 %v103, %v102
  %v109 = vsel %vm25, %v87, 0
  %111 = vmatpush.bf16.msra.mxu0 0
  %112 = vmatpush.bf16.msra.mxu0 0
  %113 = vmatpush.bf16.msra.mxu0 0
  %114 = vmatpush.bf16.msra.mxu0 0
  %115 = vmatpush.bf16.msra.mxu0 0
  %116 = vmatpush.bf16.msra.mxu0 0
  %117 = vmatpush.bf16.msra.mxu0 %v105
  %118 = vmatpush.bf16.msra.mxu0 %v104
  %119 = vmatmul.bf16.gmra.mxu0 %v109
  %v120 = vpop.f32.mrf.mxu0
  %v121 = vadd.f32 %v94, %v120
  %v122 = vpop.f32.mrf.mxu0
  %v123 = vadd.f32 %v94, %v122
  %124 = vdwg.mxu0
  %125 = vst [vmem:[%s5] sm:$0xff] %v121
  %126 = vst [vmem:[%s5 + $0x8] sm:$0xff] %v123
  // Predicated region
  $region22: #{seq2seq_transformer_forward.9} parent=0 // pred_check
    _
  $region23: #{seq2seq_transformer_forward.9} parent=0 // pred_check_branch
    %128 = sbr.rel (0) target = $region25
  $region24: #{seq2seq_transformer_forward.9} parent=0 // pred_region
    _
  $region25: #{seq2seq_transformer_forward.9} parent=0 // pred_fallthru
    _
  // Predicated region
  $region26: #{seq2seq_transformer_forward.9} parent=0 // pred_check
    _
  $region27: #{seq2seq_transformer_forward.9} parent=0 // pred_check_branch
    %130 = sbr.rel (0) target = $region29
  $region28: #{seq2seq_transformer_forward.9} parent=0 // pred_region
    _
  $region29: #{seq2seq_transformer_forward.9} parent=0 // pred_fallthru
    _

</llo_original>
